<compile_context>
chip_gen: v7x
topology: tpu7x:2x2x1
jax: 0.10.0
libtpu: 0.0.40
codegen_flags: <defaults>
</compile_context>

<pallas_src>
import functools

import jax
import jax.numpy as jnp
from jax import lax
from jax.experimental import pallas as pl
from jax.experimental.pallas import tpu as pltpu

EPS = 1e-5


# ------------------------------ Pallas kernel ------------------------------- #

def _kn_matmul(xr, w, b, cs, compute_dtype):
    """kernel_norm(xr) @ w + b, normalization folded into a post-matmul scale/shift.

    xr: (M, K) relu'd rows, f32.   w: (K, Cout) compute_dtype.
    b, cs: (1, Cout) f32, cs = column-sum of w (precomputed in f32).
    kn(x) @ w = inv * (x @ w) - (mu * inv) * colsum(w),  inv = rsqrt(var + eps).
    Mean/var use one fused pass (sum / sum-of-squares); matmul accumulates in f32.
    """
    K = xr.shape[-1]
    s1 = jnp.sum(xr, axis=-1, keepdims=True)
    s2 = jnp.sum(xr * xr, axis=-1, keepdims=True)
    mu = s1 * (1.0 / K)
    var = jnp.maximum(s2 * (1.0 / K) - mu * mu, 0.0)
    inv = lax.rsqrt(var + EPS)
    y = jnp.dot(xr.astype(compute_dtype), w, preferred_element_type=jnp.float32)
    return inv * y + (b - (mu * inv) * cs)


def _box3(p, H, Wi):
    """Separable 3x3 box sum of a padded (Hp, Wp, 1) map -> (H, Wi, 1)."""
    r = p[:, 0:Wi, :] + p[:, 1:Wi + 1, :] + p[:, 2:Wi + 2, :]
    return r[0:H] + r[1:H + 1] + r[2:H + 2]


def _bottleneck_kernel(x_ref, w1_ref, b1_ref, cs1_ref, w2_ref, b2_ref, cs2_ref,
                       w3_ref, b3_ref, cs3_ref, o_ref, *, H, W, Wi, C, CI,
                       compute_dtype):
    f32 = jnp.float32
    Hp, Wp, _ = x_ref.shape
    M = H * Wi

    xp = x_ref[...].astype(f32)                          # (Hp, Wp, C); halo/pad cols = 0

    # ---- relu1 + conv1 (1x1 KN conv) over the whole padded grid.  Halo/pad rows are
    # cheap (K=C) and zeroed just below so they act as conv2's zero padding and
    # contribute zeros to the 3x3 kernel-norm statistics (matches the reference).
    # TODO(synk): interior-only conv1 (skips ~15% halo rows at production sizes) needs
    #             an in-kernel scatter/pad of h1; kept full-grid for lowering robustness.
    xr = jnp.maximum(xp.reshape(Hp * Wp, C), 0.0)
    h1 = _kn_matmul(xr, w1_ref[...], b1_ref[...], cs1_ref[...], compute_dtype)
    h1r = jnp.maximum(h1, 0.0)                           # relu2

    ii = lax.broadcasted_iota(jnp.int32, (Hp, Wp, 1), 0)
    jj = lax.broadcasted_iota(jnp.int32, (Hp, Wp, 1), 1)
    interior = (ii >= 1) & (ii <= H) & (jj >= 1) & (jj <= W)
    h1p = jnp.where(interior, h1r.reshape(Hp, Wp, CI), 0.0)   # f32, zero halo

    # ---- conv2 (3x3 KN) statistics via a box filter over per-pixel channel sums:
    # ONE square + TWO cross-lane reductions + a few (.,.,1) adds, instead of
    # 9 squares + 18 (M,CI) reductions.  Exact-math equivalent; stays in f32.
    p1 = jnp.sum(h1p, axis=-1, keepdims=True)            # (Hp, Wp, 1)
    p2 = jnp.sum(h1p * h1p, axis=-1, keepdims=True)      # (Hp, Wp, 1)
    s1 = _box3(p1, H, Wi).reshape(M, 1)
    s2 = _box3(p2, H, Wi).reshape(M, 1)

    # ---- conv2 matmuls = 9 shifted in-VMEM matmuls (no im2col array).  The dj
    # (sublane) shifts are hoisted out of the tap loop and cast to the MXU operand
    # dtype once per dj; di slices are major-dim offsets (free) feeding the MXU.
    hj = [h1p[:, dj:dj + Wi, :].astype(compute_dtype) for dj in range(3)]
    acc = jnp.zeros((M, CI), f32)
    for di in range(3):                                  # static unroll: 9 taps
        for dj in range(3):
            win = hj[dj][di:di + H].reshape(M, CI)
            acc = acc + jnp.dot(win, w2_ref[di * 3 + dj],
                                preferred_element_type=f32)
    K2 = 9 * CI
    mu2 = s1 * (1.0 / K2)
    var2 = jnp.maximum(s2 * (1.0 / K2) - mu2 * mu2, 0.0)
    inv2 = lax.rsqrt(var2 + EPS)
    h2 = inv2 * acc + (b2_ref[...] - (mu2 * inv2) * cs2_ref[...])

    # ---- relu3 + conv3 (1x1 KN conv) + residual add, fused.
    h2r = jnp.maximum(h2, 0.0)
    h3 = _kn_matmul(h2r, w3_ref[...], b3_ref[...], cs3_ref[...], compute_dtype)
    xin = xp[1:H + 1, 1:Wi + 1, :].reshape(M, C)         # raw (pre-relu) residual rows
    out = (h3 + xin).reshape(H, Wi, C)
    # Store the full padded-width tile (no in-kernel W slice); wrapper trims to W.
    o_ref[...] = out.astype(o_ref.dtype)


# -------------------------------- wrapper ------------------------------------ #

@functools.partial(jax.jit, static_argnames=("compute_dtype",))
def residual_bottleneck_kn1x1(x_nchw, params, compute_dtype=jnp.float32):
    """Forward pass matching ResidualBottleneckKN1x1.forward (eval mode)."""
    N, C, H, W = x_nchw.shape
    CI = params["w1"].shape[1]
    f32 = jnp.float32

    # NHWC + zero halo.  W is padded (1 col left, >=1 right) up to Wp = roundup(W,8)+8
    # so every in-kernel reshape keeps a sublane-aligned second-minor dim.  The pad
    # fuses with the NCHW->NHWC transpose, so it adds no extra HBM pass.
    Wi = ((W + 7) // 8) * 8
    Hp, Wp = H + 2, Wi + 8
    M = H * Wi
    x_nhwc = jnp.transpose(x_nchw, (0, 2, 3, 1))
    x_pad = jnp.pad(x_nhwc, ((0, 0), (1, 1), (1, Wp - W - 1), (0, 0)))

    w1 = params["w1"].astype(compute_dtype)                        # (C, CI)
    w2 = params["w2"].reshape(9, CI, CI).astype(compute_dtype)     # (kh*kw, Cin, Cout)
    w3 = params["w3"].astype(compute_dtype)                        # (CI, C)
    b1 = params["b1"].astype(f32)
    b2 = params["b2"].astype(f32)
    b3 = params["b3"].astype(f32)
    # Column sums of the f32 weights: fold the kernel-normalization into the output.
    cs1 = jnp.sum(params["w1"].astype(f32), axis=0, keepdims=True)           # (1, CI)
    cs2 = jnp.sum(params["w2"].astype(f32), axis=(0, 1, 2)).reshape(1, CI)   # (1, CI)
    cs3 = jnp.sum(params["w3"].astype(f32), axis=0, keepdims=True)           # (1, C)

    kernel = functools.partial(_bottleneck_kernel, H=H, W=W, Wi=Wi, C=C, CI=CI,
                               compute_dtype=compute_dtype)

    # Advisory cost estimate so XLA schedules surrounding transpose/pad work sensibly.
    in_item = x_nchw.dtype.itemsize
    c_item = jnp.dtype(compute_dtype).itemsize
    cost = pl.CostEstimate(
        flops=int(2 * N * M * (C * CI + 9 * CI * CI + CI * C)),
        transcendentals=int(3 * N * M),
        bytes_accessed=int(N * Hp * Wp * C * in_item + N * H * Wi * C * in_item
                           + (w1.size + w2.size + w3.size) * c_item),
    )

    # Rough per-image VMEM working set; raise the scoped limit only when needed
    # (v5e default is 16 MiB).  Stays None for small shapes -> default behavior.
    est = (2 * Hp * Wp * C * in_item                # double-buffered input block
           + Hp * Wp * CI * (4 + 3 * c_item)        # h1p (f32) + hoisted dj slices
           + 3 * M * CI * 4                         # acc / h2 / scratch values (f32)
           + 2 * H * Wi * C * in_item)              # double-buffered output block
    vmem_limit = None
    if est > 12 * 2**20:
        vmem_limit = int(min(110 * 2**20, max(32 * 2**20, 2 * est)))

    res2 = lambda n: (0, 0)          # weights/biases/colsums stay VMEM-resident
    res3 = lambda n: (0, 0, 0)
    out_nhwc = pl.pallas_call(
        kernel,
        out_shape=jax.ShapeDtypeStruct((N, H, Wi, C), x_nchw.dtype),
        grid=(N,),
        in_specs=[
            pl.BlockSpec((None, Hp, Wp, C), lambda n: (n, 0, 0, 0)),
            pl.BlockSpec((C, CI), res2),        # w1
            pl.BlockSpec((1, CI), res2),        # b1
            pl.BlockSpec((1, CI), res2),        # colsum(w1)
            pl.BlockSpec((9, CI, CI), res3),    # w2: one (Cin, Cout) slab per 3x3 tap
            pl.BlockSpec((1, CI), res2),        # b2
            pl.BlockSpec((1, CI), res2),        # colsum(w2)
            pl.BlockSpec((CI, C), res2),        # w3
            pl.BlockSpec((1, C), res2),         # b3
            pl.BlockSpec((1, C), res2),         # colsum(w3)
        ],
        out_specs=pl.BlockSpec((None, H, Wi, C), lambda n: (n, 0, 0, 0)),
        compiler_params=pltpu.CompilerParams(
            # Batch images are independent -> shard the grid across TensorCores (v7x).
            dimension_semantics=("parallel",),
            vmem_limit_bytes=vmem_limit,
        ),
        cost_estimate=cost,
    )(x_pad, w1, b1, cs1, w2, b2, cs2, w3, b3, cs3)

    # Trim the padded width and go back to NCHW (slice fuses with the transpose pass).
    return jnp.transpose(out_nhwc[:, :, :W, :], (0, 3, 1, 2))


# --------------------------- params + pure-JAX reference --------------------- #

def init_params(key, channels, inter_channels, dtype=jnp.float32):
    k1, k2, k3 = jax.random.split(key, 3)
    w1 = jax.random.normal(k1, (channels, inter_channels), dtype) * 0.1      # (Cin, Cout)
    b1 = jnp.full((1, inter_channels), 0.01, dtype)
    w2 = jax.random.normal(k2, (3, 3, inter_channels, inter_channels), dtype) * 0.1
    b2 = jnp.full((1, inter_channels), 0.02, dtype)                          # (kh,kw,Cin,Cout)
    w3 = jax.random.normal(k3, (inter_channels, channels), dtype) * 0.1
    b3 = jnp.full((1, channels), 0.03, dtype)
    return dict(w1=w1, b1=b1, w2=w2, b2=b2, w3=w3, b3=b3)


def _im2col_3x3(x_nhwc):
    N, H, W, C = x_nhwc.shape
    xp = jnp.pad(x_nhwc, ((0, 0), (1, 1), (1, 1), (0, 0)))
    patches = [xp[:, i:i + H, j:j + W, :] for i in range(3) for j in range(3)]
    return jnp.concatenate(patches, axis=-1)


def _ref_forward(x_nchw, params):
    def kn(x_rows, w, b):
        x = jnp.maximum(x_rows, 0.0)
        mu = jnp.mean(x, axis=-1, keepdims=True)
        var = jnp.mean((x - mu) ** 2, axis=-1, keepdims=True)
        xn = (x - mu) / jnp.sqrt(var + EPS)
        return xn @ w + b

    N, C, H, W = x_nchw.shape
    CI = params["w1"].shape[1]
    x_nhwc = jnp.transpose(x_nchw, (0, 2, 3, 1))
    rows = x_nhwc.reshape(N * H * W, C)
    h1 = kn(rows, params["w1"], params["b1"])
    patches = _im2col_3x3(h1.reshape(N, H, W, CI)).reshape(N * H * W, 9 * CI)
    h2 = kn(patches, params["w2"].reshape(9 * CI, CI), params["b2"])
    h3 = kn(h2, params["w3"], params["b3"]) + rows
    return jnp.transpose(h3.reshape(N, H, W, C), (0, 3, 1, 2))


# ----------------------------------- main ------------------------------------ #

if __name__ == "__main__":
    key = jax.random.PRNGKey(0)
    kx, kp = jax.random.split(key)

    N, C, H, W = 2, 4, 16, 16
    inter = 8
    x = jax.random.normal(kx, (N, C, H, W), jnp.float32)
    params = init_params(kp, C, inter)

    # f32 MXU-operand path: tight check against the pure-JAX reference.
    out = jax.block_until_ready(residual_bottleneck_kn1x1(x, params))
    ref = _ref_forward(x, params)
    assert out.shape == (N, C, H, W)
    assert jnp.allclose(out, ref, atol=2e-4, rtol=2e-4), "mismatch vs JAX reference"

    # bf16 MXU-operand path (stats + accumulation stay f32) -- the v6e/v7x setting.
    out_bf16 = jax.block_until_ready(
        residual_bottleneck_kn1x1(x, params, compute_dtype=jnp.bfloat16))
    assert float(jnp.max(jnp.abs(out_bf16 - ref))) < 0.25, "bf16 path diverged"

    print("KERNEL_OK")
</pallas_src>

<mosaic_0001>
module attributes {stable_mosaic.version = 11 : i64} {
  func.func @_bottleneck_kernel(%arg0: i32, %arg1: memref<1x18x24x4xf32, #tpu.memory_space<vmem>>, %arg2: memref<4x8xf32, #tpu.memory_space<vmem>>, %arg3: memref<1x8xf32, #tpu.memory_space<vmem>>, %arg4: memref<1x8xf32, #tpu.memory_space<vmem>>, %arg5: memref<9x8x8xf32, #tpu.memory_space<vmem>>, %arg6: memref<1x8xf32, #tpu.memory_space<vmem>>, %arg7: memref<1x8xf32, #tpu.memory_space<vmem>>, %arg8: memref<8x4xf32, #tpu.memory_space<vmem>>, %arg9: memref<1x4xf32, #tpu.memory_space<vmem>>, %arg10: memref<1x4xf32, #tpu.memory_space<vmem>>, %arg11: memref<1x16x16x4xf32, #tpu.memory_space<vmem>>) attributes {dimension_semantics = [#tpu.dimension_semantics<parallel>], iteration_bounds = array<i64: 2>, scalar_prefetch = 0 : i64, scratch_operands = 0 : i64, tpu.core_type = #tpu.core_type<tc>, window_params = [{transform_indices = @transform_0, window_bounds = array<i64: 1, 18, 24, 4>}, {pipeline_mode = #tpu.pipeline_mode<synchronous>, transform_indices = @transform_1, window_bounds = array<i64: 4, 8>}, {pipeline_mode = #tpu.pipeline_mode<synchronous>, transform_indices = @transform_2, window_bounds = array<i64: 1, 8>}, {pipeline_mode = #tpu.pipeline_mode<synchronous>, transform_indices = @transform_3, window_bounds = array<i64: 1, 8>}, {pipeline_mode = #tpu.pipeline_mode<synchronous>, transform_indices = @transform_4, window_bounds = array<i64: 9, 8, 8>}, {pipeline_mode = #tpu.pipeline_mode<synchronous>, transform_indices = @transform_5, window_bounds = array<i64: 1, 8>}, {pipeline_mode = #tpu.pipeline_mode<synchronous>, transform_indices = @transform_6, window_bounds = array<i64: 1, 8>}, {pipeline_mode = #tpu.pipeline_mode<synchronous>, transform_indices = @transform_7, window_bounds = array<i64: 8, 4>}, {pipeline_mode = #tpu.pipeline_mode<synchronous>, transform_indices = @transform_8, window_bounds = array<i64: 1, 4>}, {pipeline_mode = #tpu.pipeline_mode<synchronous>, transform_indices = @transform_9, window_bounds = array<i64: 1, 4>}, {transform_indices = @transform_10, window_bounds = array<i64: 1, 16, 16, 4>}]} {
    %c0 = arith.constant 0 : index
    %c0_0 = arith.constant 0 : index
    %c0_1 = arith.constant 0 : index
    %c0_2 = arith.constant 0 : index
    %0 = vector.load %arg1[%c0, %c0_0, %c0_1, %c0_2] : memref<1x18x24x4xf32, #tpu.memory_space<vmem>>, vector<1x18x24x4xf32>
    %1 = vector.shape_cast %0 : vector<1x18x24x4xf32> to vector<18x24x4xf32>
    %2 = vector.shape_cast %1 : vector<18x24x4xf32> to vector<432x4xf32>
    %cst = arith.constant 0.000000e+00 : f32
    %3 = vector.broadcast %cst : f32 to vector<432x4xf32>
    %4 = arith.maximumf %2, %3 : vector<432x4xf32>
    %c0_3 = arith.constant 0 : index
    %c0_4 = arith.constant 0 : index
    %5 = vector.load %arg2[%c0_3, %c0_4] : memref<4x8xf32, #tpu.memory_space<vmem>>, vector<4x8xf32>
    %c0_5 = arith.constant 0 : index
    %c0_6 = arith.constant 0 : index
    %6 = vector.load %arg3[%c0_5, %c0_6] : memref<1x8xf32, #tpu.memory_space<vmem>>, vector<1x8xf32>
    %c0_7 = arith.constant 0 : index
    %c0_8 = arith.constant 0 : index
    %7 = vector.load %arg4[%c0_7, %c0_8] : memref<1x8xf32, #tpu.memory_space<vmem>>, vector<1x8xf32>
    %cst_9 = arith.constant dense<0.000000e+00> : vector<432xf32>
    %8 = vector.multi_reduction <add>, %4, %cst_9 [1] : vector<432x4xf32> to vector<432xf32>
    %9 = vector.shape_cast %8 : vector<432xf32> to vector<432x1xf32>
    %10 = arith.mulf %4, %4 : vector<432x4xf32>
    %cst_10 = arith.constant dense<0.000000e+00> : vector<432xf32>
    %11 = vector.multi_reduction <add>, %10, %cst_10 [1] : vector<432x4xf32> to vector<432xf32>
    %12 = vector.shape_cast %11 : vector<432xf32> to vector<432x1xf32>
    %cst_11 = arith.constant 2.500000e-01 : f32
    %13 = vector.broadcast %cst_11 : f32 to vector<432x1xf32>
    %14 = arith.mulf %9, %13 : vector<432x1xf32>
    %cst_12 = arith.constant 2.500000e-01 : f32
    %15 = vector.broadcast %cst_12 : f32 to vector<432x1xf32>
    %16 = arith.mulf %12, %15 : vector<432x1xf32>
    %17 = arith.mulf %14, %14 : vector<432x1xf32>
    %18 = arith.subf %16, %17 : vector<432x1xf32>
    %cst_13 = arith.constant 0.000000e+00 : f32
    %19 = vector.broadcast %cst_13 : f32 to vector<432x1xf32>
    %20 = arith.maximumf %18, %19 : vector<432x1xf32>
    %cst_14 = arith.constant 9.99999974E-6 : f32
    %21 = vector.broadcast %cst_14 : f32 to vector<432x1xf32>
    %22 = arith.addf %20, %21 : vector<432x1xf32>
    %23 = math.rsqrt %22 : vector<432x1xf32>
    %cst_15 = arith.constant dense<0.000000e+00> : vector<432x8xf32>
    %24 = tpu.matmul %4, %5, %cst_15 {dimension_numbers = #tpu.dot_dimension_numbers<[1], [0], [0], [1], [0, 0, 1, 1], [], []>} : vector<432x4xf32>, vector<4x8xf32>, vector<432x8xf32> -> vector<432x8xf32>
    %25 = vector.broadcast %23 : vector<432x1xf32> to vector<432x8xf32>
    %26 = arith.mulf %25, %24 : vector<432x8xf32>
    %27 = arith.mulf %14, %23 : vector<432x1xf32>
    %28 = vector.broadcast %27 : vector<432x1xf32> to vector<432x8xf32>
    %29 = vector.broadcast %7 : vector<1x8xf32> to vector<432x8xf32>
    %30 = arith.mulf %28, %29 : vector<432x8xf32>
    %31 = vector.broadcast %6 : vector<1x8xf32> to vector<432x8xf32>
    %32 = arith.subf %31, %30 : vector<432x8xf32>
    %33 = arith.addf %26, %32 : vector<432x8xf32>
    %cst_16 = arith.constant 0.000000e+00 : f32
    %34 = vector.broadcast %cst_16 : f32 to vector<432x8xf32>
    %35 = arith.maximumf %33, %34 : vector<432x8xf32>
    %36 = tpu.iota {dimensions = array<i32: 0>} : vector<18x24x1xi32>
    %37 = tpu.iota {dimensions = array<i32: 1>} : vector<18x24x1xi32>
    %c1_i32 = arith.constant 1 : i32
    %38 = vector.broadcast %c1_i32 : i32 to vector<18x24x1xi32>
    %39 = arith.cmpi sge, %36, %38 : vector<18x24x1xi32>
    %c16_i32 = arith.constant 16 : i32
    %40 = vector.broadcast %c16_i32 : i32 to vector<18x24x1xi32>
    %41 = arith.cmpi sle, %36, %40 : vector<18x24x1xi32>
    %42 = arith.andi %39, %41 : vector<18x24x1xi1>
    %c1_i32_17 = arith.constant 1 : i32
    %43 = vector.broadcast %c1_i32_17 : i32 to vector<18x24x1xi32>
    %44 = arith.cmpi sge, %37, %43 : vector<18x24x1xi32>
    %45 = arith.andi %42, %44 : vector<18x24x1xi1>
    %c16_i32_18 = arith.constant 16 : i32
    %46 = vector.broadcast %c16_i32_18 : i32 to vector<18x24x1xi32>
    %47 = arith.cmpi sle, %37, %46 : vector<18x24x1xi32>
    %48 = arith.andi %45, %47 : vector<18x24x1xi1>
    %49 = vector.shape_cast %35 : vector<432x8xf32> to vector<18x24x8xf32>
    %cst_19 = arith.constant 0.000000e+00 : f32
    %50 = vector.shape_cast %48 : vector<18x24x1xi1> to vector<18x24x1xi1>
    %51 = vector.broadcast %50 : vector<18x24x1xi1> to vector<18x24x8xi1>
    %52 = vector.broadcast %cst_19 : f32 to vector<18x24x8xf32>
    %53 = arith.select %51, %49, %52 : vector<18x24x8xi1>, vector<18x24x8xf32>
    %cst_20 = arith.constant dense<0.000000e+00> : vector<18x24xf32>
    %54 = vector.multi_reduction <add>, %53, %cst_20 [2] : vector<18x24x8xf32> to vector<18x24xf32>
    %55 = vector.shape_cast %54 : vector<18x24xf32> to vector<18x24x1xf32>
    %56 = arith.mulf %53, %53 : vector<18x24x8xf32>
    %cst_21 = arith.constant dense<0.000000e+00> : vector<18x24xf32>
    %57 = vector.multi_reduction <add>, %56, %cst_21 [2] : vector<18x24x8xf32> to vector<18x24xf32>
    %58 = vector.shape_cast %57 : vector<18x24xf32> to vector<18x24x1xf32>
    %59 = vector.extract_strided_slice %55 {offsets = [0, 0, 0], sizes = [18, 16, 1], strides = [1, 1, 1]} : vector<18x24x1xf32> to vector<18x16x1xf32>
    %60 = vector.extract_strided_slice %55 {offsets = [0, 1, 0], sizes = [18, 16, 1], strides = [1, 1, 1]} : vector<18x24x1xf32> to vector<18x16x1xf32>
    %61 = arith.addf %59, %60 : vector<18x16x1xf32>
    %62 = vector.extract_strided_slice %55 {offsets = [0, 2, 0], sizes = [18, 16, 1], strides = [1, 1, 1]} : vector<18x24x1xf32> to vector<18x16x1xf32>
    %63 = arith.addf %61, %62 : vector<18x16x1xf32>
    %64 = vector.extract_strided_slice %63 {offsets = [0, 0, 0], sizes = [16, 16, 1], strides = [1, 1, 1]} : vector<18x16x1xf32> to vector<16x16x1xf32>
    %65 = vector.extract_strided_slice %63 {offsets = [1, 0, 0], sizes = [16, 16, 1], strides = [1, 1, 1]} : vector<18x16x1xf32> to vector<16x16x1xf32>
    %66 = arith.addf %64, %65 : vector<16x16x1xf32>
    %67 = vector.extract_strided_slice %63 {offsets = [2, 0, 0], sizes = [16, 16, 1], strides = [1, 1, 1]} : vector<18x16x1xf32> to vector<16x16x1xf32>
    %68 = arith.addf %66, %67 : vector<16x16x1xf32>
    %69 = vector.shape_cast %68 : vector<16x16x1xf32> to vector<256x1xf32>
    %70 = vector.extract_strided_slice %58 {offsets = [0, 0, 0], sizes = [18, 16, 1], strides = [1, 1, 1]} : vector<18x24x1xf32> to vector<18x16x1xf32>
    %71 = vector.extract_strided_slice %58 {offsets = [0, 1, 0], sizes = [18, 16, 1], strides = [1, 1, 1]} : vector<18x24x1xf32> to vector<18x16x1xf32>
    %72 = arith.addf %70, %71 : vector<18x16x1xf32>
    %73 = vector.extract_strided_slice %58 {offsets = [0, 2, 0], sizes = [18, 16, 1], strides = [1, 1, 1]} : vector<18x24x1xf32> to vector<18x16x1xf32>
    %74 = arith.addf %72, %73 : vector<18x16x1xf32>
    %75 = vector.extract_strided_slice %74 {offsets = [0, 0, 0], sizes = [16, 16, 1], strides = [1, 1, 1]} : vector<18x16x1xf32> to vector<16x16x1xf32>
    %76 = vector.extract_strided_slice %74 {offsets = [1, 0, 0], sizes = [16, 16, 1], strides = [1, 1, 1]} : vector<18x16x1xf32> to vector<16x16x1xf32>
    %77 = arith.addf %75, %76 : vector<16x16x1xf32>
    %78 = vector.extract_strided_slice %74 {offsets = [2, 0, 0], sizes = [16, 16, 1], strides = [1, 1, 1]} : vector<18x16x1xf32> to vector<16x16x1xf32>
    %79 = arith.addf %77, %78 : vector<16x16x1xf32>
    %80 = vector.shape_cast %79 : vector<16x16x1xf32> to vector<256x1xf32>
    %81 = vector.extract_strided_slice %53 {offsets = [0, 0, 0], sizes = [18, 16, 8], strides = [1, 1, 1]} : vector<18x24x8xf32> to vector<18x16x8xf32>
    %82 = vector.extract_strided_slice %53 {offsets = [0, 1, 0], sizes = [18, 16, 8], strides = [1, 1, 1]} : vector<18x24x8xf32> to vector<18x16x8xf32>
    %83 = vector.extract_strided_slice %53 {offsets = [0, 2, 0], sizes = [18, 16, 8], strides = [1, 1, 1]} : vector<18x24x8xf32> to vector<18x16x8xf32>
    %cst_22 = arith.constant 0.000000e+00 : f32
    %84 = vector.broadcast %cst_22 : f32 to vector<256x8xf32>
    %85 = vector.extract_strided_slice %81 {offsets = [0, 0, 0], sizes = [16, 16, 8], strides = [1, 1, 1]} : vector<18x16x8xf32> to vector<16x16x8xf32>
    %86 = vector.shape_cast %85 : vector<16x16x8xf32> to vector<256x8xf32>
    %c0_23 = arith.constant 0 : index
    %c0_24 = arith.constant 0 : index
    %c0_25 = arith.constant 0 : index
    %87 = vector.load %arg5[%c0_23, %c0_24, %c0_25] : memref<9x8x8xf32, #tpu.memory_space<vmem>>, vector<1x8x8xf32>
    %88 = vector.shape_cast %87 : vector<1x8x8xf32> to vector<8x8xf32>
    %cst_26 = arith.constant dense<0.000000e+00> : vector<256x8xf32>
    %89 = tpu.matmul %86, %88, %cst_26 {dimension_numbers = #tpu.dot_dimension_numbers<[1], [0], [0], [1], [0, 0, 1, 1], [], []>} : vector<256x8xf32>, vector<8x8xf32>, vector<256x8xf32> -> vector<256x8xf32>
    %90 = arith.addf %84, %89 : vector<256x8xf32>
    %91 = vector.extract_strided_slice %82 {offsets = [0, 0, 0], sizes = [16, 16, 8], strides = [1, 1, 1]} : vector<18x16x8xf32> to vector<16x16x8xf32>
    %92 = vector.shape_cast %91 : vector<16x16x8xf32> to vector<256x8xf32>
    %c1 = arith.constant 1 : index
    %c0_27 = arith.constant 0 : index
    %c0_28 = arith.constant 0 : index
    %93 = vector.load %arg5[%c1, %c0_27, %c0_28] : memref<9x8x8xf32, #tpu.memory_space<vmem>>, vector<1x8x8xf32>
    %94 = vector.shape_cast %93 : vector<1x8x8xf32> to vector<8x8xf32>
    %cst_29 = arith.constant dense<0.000000e+00> : vector<256x8xf32>
    %95 = tpu.matmul %92, %94, %cst_29 {dimension_numbers = #tpu.dot_dimension_numbers<[1], [0], [0], [1], [0, 0, 1, 1], [], []>} : vector<256x8xf32>, vector<8x8xf32>, vector<256x8xf32> -> vector<256x8xf32>
    %96 = arith.addf %90, %95 : vector<256x8xf32>
    %97 = vector.extract_strided_slice %83 {offsets = [0, 0, 0], sizes = [16, 16, 8], strides = [1, 1, 1]} : vector<18x16x8xf32> to vector<16x16x8xf32>
    %98 = vector.shape_cast %97 : vector<16x16x8xf32> to vector<256x8xf32>
    %c2 = arith.constant 2 : index
    %c0_30 = arith.constant 0 : index
    %c0_31 = arith.constant 0 : index
    %99 = vector.load %arg5[%c2, %c0_30, %c0_31] : memref<9x8x8xf32, #tpu.memory_space<vmem>>, vector<1x8x8xf32>
    %100 = vector.shape_cast %99 : vector<1x8x8xf32> to vector<8x8xf32>
    %cst_32 = arith.constant dense<0.000000e+00> : vector<256x8xf32>
    %101 = tpu.matmul %98, %100, %cst_32 {dimension_numbers = #tpu.dot_dimension_numbers<[1], [0], [0], [1], [0, 0, 1, 1], [], []>} : vector<256x8xf32>, vector<8x8xf32>, vector<256x8xf32> -> vector<256x8xf32>
    %102 = arith.addf %96, %101 : vector<256x8xf32>
    %103 = vector.extract_strided_slice %81 {offsets = [1, 0, 0], sizes = [16, 16, 8], strides = [1, 1, 1]} : vector<18x16x8xf32> to vector<16x16x8xf32>
    %104 = vector.shape_cast %103 : vector<16x16x8xf32> to vector<256x8xf32>
    %c3 = arith.constant 3 : index
    %c0_33 = arith.constant 0 : index
    %c0_34 = arith.constant 0 : index
    %105 = vector.load %arg5[%c3, %c0_33, %c0_34] : memref<9x8x8xf32, #tpu.memory_space<vmem>>, vector<1x8x8xf32>
    %106 = vector.shape_cast %105 : vector<1x8x8xf32> to vector<8x8xf32>
    %cst_35 = arith.constant dense<0.000000e+00> : vector<256x8xf32>
    %107 = tpu.matmul %104, %106, %cst_35 {dimension_numbers = #tpu.dot_dimension_numbers<[1], [0], [0], [1], [0, 0, 1, 1], [], []>} : vector<256x8xf32>, vector<8x8xf32>, vector<256x8xf32> -> vector<256x8xf32>
    %108 = arith.addf %102, %107 : vector<256x8xf32>
    %109 = vector.extract_strided_slice %82 {offsets = [1, 0, 0], sizes = [16, 16, 8], strides = [1, 1, 1]} : vector<18x16x8xf32> to vector<16x16x8xf32>
    %110 = vector.shape_cast %109 : vector<16x16x8xf32> to vector<256x8xf32>
    %c4 = arith.constant 4 : index
    %c0_36 = arith.constant 0 : index
    %c0_37 = arith.constant 0 : index
    %111 = vector.load %arg5[%c4, %c0_36, %c0_37] : memref<9x8x8xf32, #tpu.memory_space<vmem>>, vector<1x8x8xf32>
    %112 = vector.shape_cast %111 : vector<1x8x8xf32> to vector<8x8xf32>
    %cst_38 = arith.constant dense<0.000000e+00> : vector<256x8xf32>
    %113 = tpu.matmul %110, %112, %cst_38 {dimension_numbers = #tpu.dot_dimension_numbers<[1], [0], [0], [1], [0, 0, 1, 1], [], []>} : vector<256x8xf32>, vector<8x8xf32>, vector<256x8xf32> -> vector<256x8xf32>
    %114 = arith.addf %108, %113 : vector<256x8xf32>
    %115 = vector.extract_strided_slice %83 {offsets = [1, 0, 0], sizes = [16, 16, 8], strides = [1, 1, 1]} : vector<18x16x8xf32> to vector<16x16x8xf32>
    %116 = vector.shape_cast %115 : vector<16x16x8xf32> to vector<256x8xf32>
    %c5 = arith.constant 5 : index
    %c0_39 = arith.constant 0 : index
    %c0_40 = arith.constant 0 : index
    %117 = vector.load %arg5[%c5, %c0_39, %c0_40] : memref<9x8x8xf32, #tpu.memory_space<vmem>>, vector<1x8x8xf32>
    %118 = vector.shape_cast %117 : vector<1x8x8xf32> to vector<8x8xf32>
    %cst_41 = arith.constant dense<0.000000e+00> : vector<256x8xf32>
    %119 = tpu.matmul %116, %118, %cst_41 {dimension_numbers = #tpu.dot_dimension_numbers<[1], [0], [0], [1], [0, 0, 1, 1], [], []>} : vector<256x8xf32>, vector<8x8xf32>, vector<256x8xf32> -> vector<256x8xf32>
    %120 = arith.addf %114, %119 : vector<256x8xf32>
    %121 = vector.extract_strided_slice %81 {offsets = [2, 0, 0], sizes = [16, 16, 8], strides = [1, 1, 1]} : vector<18x16x8xf32> to vector<16x16x8xf32>
    %122 = vector.shape_cast %121 : vector<16x16x8xf32> to vector<256x8xf32>
    %c6 = arith.constant 6 : index
    %c0_42 = arith.constant 0 : index
    %c0_43 = arith.constant 0 : index
    %123 = vector.load %arg5[%c6, %c0_42, %c0_43] : memref<9x8x8xf32, #tpu.memory_space<vmem>>, vector<1x8x8xf32>
    %124 = vector.shape_cast %123 : vector<1x8x8xf32> to vector<8x8xf32>
    %cst_44 = arith.constant dense<0.000000e+00> : vector<256x8xf32>
    %125 = tpu.matmul %122, %124, %cst_44 {dimension_numbers = #tpu.dot_dimension_numbers<[1], [0], [0], [1], [0, 0, 1, 1], [], []>} : vector<256x8xf32>, vector<8x8xf32>, vector<256x8xf32> -> vector<256x8xf32>
    %126 = arith.addf %120, %125 : vector<256x8xf32>
    %127 = vector.extract_strided_slice %82 {offsets = [2, 0, 0], sizes = [16, 16, 8], strides = [1, 1, 1]} : vector<18x16x8xf32> to vector<16x16x8xf32>
    %128 = vector.shape_cast %127 : vector<16x16x8xf32> to vector<256x8xf32>
    %c7 = arith.constant 7 : index
    %c0_45 = arith.constant 0 : index
    %c0_46 = arith.constant 0 : index
    %129 = vector.load %arg5[%c7, %c0_45, %c0_46] : memref<9x8x8xf32, #tpu.memory_space<vmem>>, vector<1x8x8xf32>
    %130 = vector.shape_cast %129 : vector<1x8x8xf32> to vector<8x8xf32>
    %cst_47 = arith.constant dense<0.000000e+00> : vector<256x8xf32>
    %131 = tpu.matmul %128, %130, %cst_47 {dimension_numbers = #tpu.dot_dimension_numbers<[1], [0], [0], [1], [0, 0, 1, 1], [], []>} : vector<256x8xf32>, vector<8x8xf32>, vector<256x8xf32> -> vector<256x8xf32>
    %132 = arith.addf %126, %131 : vector<256x8xf32>
    %133 = vector.extract_strided_slice %83 {offsets = [2, 0, 0], sizes = [16, 16, 8], strides = [1, 1, 1]} : vector<18x16x8xf32> to vector<16x16x8xf32>
    %134 = vector.shape_cast %133 : vector<16x16x8xf32> to vector<256x8xf32>
    %c8 = arith.constant 8 : index
    %c0_48 = arith.constant 0 : index
    %c0_49 = arith.constant 0 : index
    %135 = vector.load %arg5[%c8, %c0_48, %c0_49] : memref<9x8x8xf32, #tpu.memory_space<vmem>>, vector<1x8x8xf32>
    %136 = vector.shape_cast %135 : vector<1x8x8xf32> to vector<8x8xf32>
    %cst_50 = arith.constant dense<0.000000e+00> : vector<256x8xf32>
    %137 = tpu.matmul %134, %136, %cst_50 {dimension_numbers = #tpu.dot_dimension_numbers<[1], [0], [0], [1], [0, 0, 1, 1], [], []>} : vector<256x8xf32>, vector<8x8xf32>, vector<256x8xf32> -> vector<256x8xf32>
    %138 = arith.addf %132, %137 : vector<256x8xf32>
    %cst_51 = arith.constant 0.013888889 : f32
    %139 = vector.broadcast %cst_51 : f32 to vector<256x1xf32>
    %140 = arith.mulf %69, %139 : vector<256x1xf32>
    %cst_52 = arith.constant 0.013888889 : f32
    %141 = vector.broadcast %cst_52 : f32 to vector<256x1xf32>
    %142 = arith.mulf %80, %141 : vector<256x1xf32>
    %143 = arith.mulf %140, %140 : vector<256x1xf32>
    %144 = arith.subf %142, %143 : vector<256x1xf32>
    %cst_53 = arith.constant 0.000000e+00 : f32
    %145 = vector.broadcast %cst_53 : f32 to vector<256x1xf32>
    %146 = arith.maximumf %144, %145 : vector<256x1xf32>
    %cst_54 = arith.constant 9.99999974E-6 : f32
    %147 = vector.broadcast %cst_54 : f32 to vector<256x1xf32>
    %148 = arith.addf %146, %147 : vector<256x1xf32>
    %149 = math.rsqrt %148 : vector<256x1xf32>
    %150 = vector.broadcast %149 : vector<256x1xf32> to vector<256x8xf32>
    %151 = arith.mulf %150, %138 : vector<256x8xf32>
    %c0_55 = arith.constant 0 : index
    %c0_56 = arith.constant 0 : index
    %152 = vector.load %arg6[%c0_55, %c0_56] : memref<1x8xf32, #tpu.memory_space<vmem>>, vector<1x8xf32>
    %153 = arith.mulf %140, %149 : vector<256x1xf32>
    %c0_57 = arith.constant 0 : index
    %c0_58 = arith.constant 0 : index
    %154 = vector.load %arg7[%c0_57, %c0_58] : memref<1x8xf32, #tpu.memory_space<vmem>>, vector<1x8xf32>
    %155 = vector.broadcast %153 : vector<256x1xf32> to vector<256x8xf32>
    %156 = vector.broadcast %154 : vector<1x8xf32> to vector<256x8xf32>
    %157 = arith.mulf %155, %156 : vector<256x8xf32>
    %158 = vector.broadcast %152 : vector<1x8xf32> to vector<256x8xf32>
    %159 = arith.subf %158, %157 : vector<256x8xf32>
    %160 = arith.addf %151, %159 : vector<256x8xf32>
    %cst_59 = arith.constant 0.000000e+00 : f32
    %161 = vector.broadcast %cst_59 : f32 to vector<256x8xf32>
    %162 = arith.maximumf %160, %161 : vector<256x8xf32>
    %c0_60 = arith.constant 0 : index
    %c0_61 = arith.constant 0 : index
    %163 = vector.load %arg8[%c0_60, %c0_61] : memref<8x4xf32, #tpu.memory_space<vmem>>, vector<8x4xf32>
    %c0_62 = arith.constant 0 : index
    %c0_63 = arith.constant 0 : index
    %164 = vector.load %arg9[%c0_62, %c0_63] : memref<1x4xf32, #tpu.memory_space<vmem>>, vector<1x4xf32>
    %c0_64 = arith.constant 0 : index
    %c0_65 = arith.constant 0 : index
    %165 = vector.load %arg10[%c0_64, %c0_65] : memref<1x4xf32, #tpu.memory_space<vmem>>, vector<1x4xf32>
    %cst_66 = arith.constant dense<0.000000e+00> : vector<256xf32>
    %166 = vector.multi_reduction <add>, %162, %cst_66 [1] : vector<256x8xf32> to vector<256xf32>
    %167 = vector.shape_cast %166 : vector<256xf32> to vector<256x1xf32>
    %168 = arith.mulf %162, %162 : vector<256x8xf32>
    %cst_67 = arith.constant dense<0.000000e+00> : vector<256xf32>
    %169 = vector.multi_reduction <add>, %168, %cst_67 [1] : vector<256x8xf32> to vector<256xf32>
    %170 = vector.shape_cast %169 : vector<256xf32> to vector<256x1xf32>
    %cst_68 = arith.constant 1.250000e-01 : f32
    %171 = vector.broadcast %cst_68 : f32 to vector<256x1xf32>
    %172 = arith.mulf %167, %171 : vector<256x1xf32>
    %cst_69 = arith.constant 1.250000e-01 : f32
    %173 = vector.broadcast %cst_69 : f32 to vector<256x1xf32>
    %174 = arith.mulf %170, %173 : vector<256x1xf32>
    %175 = arith.mulf %172, %172 : vector<256x1xf32>
    %176 = arith.subf %174, %175 : vector<256x1xf32>
    %cst_70 = arith.constant 0.000000e+00 : f32
    %177 = vector.broadcast %cst_70 : f32 to vector<256x1xf32>
    %178 = arith.maximumf %176, %177 : vector<256x1xf32>
    %cst_71 = arith.constant 9.99999974E-6 : f32
    %179 = vector.broadcast %cst_71 : f32 to vector<256x1xf32>
    %180 = arith.addf %178, %179 : vector<256x1xf32>
    %181 = math.rsqrt %180 : vector<256x1xf32>
    %cst_72 = arith.constant dense<0.000000e+00> : vector<256x4xf32>
    %182 = tpu.matmul %162, %163, %cst_72 {dimension_numbers = #tpu.dot_dimension_numbers<[1], [0], [0], [1], [0, 0, 1, 1], [], []>} : vector<256x8xf32>, vector<8x4xf32>, vector<256x4xf32> -> vector<256x4xf32>
    %183 = vector.broadcast %181 : vector<256x1xf32> to vector<256x4xf32>
    %184 = arith.mulf %183, %182 : vector<256x4xf32>
    %185 = arith.mulf %172, %181 : vector<256x1xf32>
    %186 = vector.broadcast %185 : vector<256x1xf32> to vector<256x4xf32>
    %187 = vector.broadcast %165 : vector<1x4xf32> to vector<256x4xf32>
    %188 = arith.mulf %186, %187 : vector<256x4xf32>
    %189 = vector.broadcast %164 : vector<1x4xf32> to vector<256x4xf32>
    %190 = arith.subf %189, %188 : vector<256x4xf32>
    %191 = arith.addf %184, %190 : vector<256x4xf32>
    %192 = vector.extract_strided_slice %1 {offsets = [1, 1, 0], sizes = [16, 16, 4], strides = [1, 1, 1]} : vector<18x24x4xf32> to vector<16x16x4xf32>
    %193 = vector.shape_cast %192 : vector<16x16x4xf32> to vector<256x4xf32>
    %194 = arith.addf %191, %193 : vector<256x4xf32>
    %195 = vector.shape_cast %194 : vector<256x4xf32> to vector<16x16x4xf32>
    %c0_73 = arith.constant 0 : index
    %c0_74 = arith.constant 0 : index
    %c0_75 = arith.constant 0 : index
    %c0_76 = arith.constant 0 : index
    %196 = vector.load %arg11[%c0_73, %c0_74, %c0_75, %c0_76] : memref<1x16x16x4xf32, #tpu.memory_space<vmem>>, vector<1x16x16x4xf32>
    %197 = vector.shape_cast %196 : vector<1x16x16x4xf32> to vector<16x16x4xf32>
    %198 = vector.shape_cast %195 : vector<16x16x4xf32> to vector<1x16x16x4xf32>
    tpu.vector_store %arg11[%c0_73, %c0_74, %c0_75, %c0_76], %198 {strides = array<i32>} : memref<1x16x16x4xf32, #tpu.memory_space<vmem>>, vector<1x16x16x4xf32>,
    return
  }
  func.func @transform_0(%arg0: i32) -> (i32, i32, i32, i32) {
    %c0_i32 = arith.constant 0 : i32
    %c0_i32_0 = arith.constant 0 : i32
    %c0_i32_1 = arith.constant 0 : i32
    %c0_i32_2 = arith.constant 0 : i32
    return %arg0, %c0_i32, %c0_i32_0, %c0_i32_1 : i32, i32, i32, i32
  }
  func.func @transform_1(%arg0: i32) -> (i32, i32) {
    %c0_i32 = arith.constant 0 : i32
    %c0_i32_0 = arith.constant 0 : i32
    %c0_i32_1 = arith.constant 0 : i32
    return %c0_i32, %c0_i32_0 : i32, i32
  }
  func.func @transform_2(%arg0: i32) -> (i32, i32) {
    %c0_i32 = arith.constant 0 : i32
    %c0_i32_0 = arith.constant 0 : i32
    %c0_i32_1 = arith.constant 0 : i32
    return %c0_i32, %c0_i32_0 : i32, i32
  }
  func.func @transform_3(%arg0: i32) -> (i32, i32) {
    %c0_i32 = arith.constant 0 : i32
    %c0_i32_0 = arith.constant 0 : i32
    %c0_i32_1 = arith.constant 0 : i32
    return %c0_i32, %c0_i32_0 : i32, i32
  }
  func.func @transform_4(%arg0: i32) -> (i32, i32, i32) {
    %c0_i32 = arith.constant 0 : i32
    %c0_i32_0 = arith.constant 0 : i32
    %c0_i32_1 = arith.constant 0 : i32
    %c0_i32_2 = arith.constant 0 : i32
    return %c0_i32, %c0_i32_0, %c0_i32_1 : i32, i32, i32
  }
  func.func @transform_5(%arg0: i32) -> (i32, i32) {
    %c0_i32 = arith.constant 0 : i32
    %c0_i32_0 = arith.constant 0 : i32
    %c0_i32_1 = arith.constant 0 : i32
    return %c0_i32, %c0_i32_0 : i32, i32
  }
  func.func @transform_6(%arg0: i32) -> (i32, i32) {
    %c0_i32 = arith.constant 0 : i32
    %c0_i32_0 = arith.constant 0 : i32
    %c0_i32_1 = arith.constant 0 : i32
    return %c0_i32, %c0_i32_0 : i32, i32
  }
  func.func @transform_7(%arg0: i32) -> (i32, i32) {
    %c0_i32 = arith.constant 0 : i32
    %c0_i32_0 = arith.constant 0 : i32
    %c0_i32_1 = arith.constant 0 : i32
    return %c0_i32, %c0_i32_0 : i32, i32
  }
  func.func @transform_8(%arg0: i32) -> (i32, i32) {
    %c0_i32 = arith.constant 0 : i32
    %c0_i32_0 = arith.constant 0 : i32
    %c0_i32_1 = arith.constant 0 : i32
    return %c0_i32, %c0_i32_0 : i32, i32
  }
  func.func @transform_9(%arg0: i32) -> (i32, i32) {
    %c0_i32 = arith.constant 0 : i32
    %c0_i32_0 = arith.constant 0 : i32
    %c0_i32_1 = arith.constant 0 : i32
    return %c0_i32, %c0_i32_0 : i32, i32
  }
  func.func @transform_10(%arg0: i32) -> (i32, i32, i32, i32) {
    %c0_i32 = arith.constant 0 : i32
    %c0_i32_0 = arith.constant 0 : i32
    %c0_i32_1 = arith.constant 0 : i32
    %c0_i32_2 = arith.constant 0 : i32
    return %arg0, %c0_i32, %c0_i32_0, %c0_i32_1 : i32, i32, i32, i32
  }
}

</mosaic_0001>

<llo_original>
// kernel: residual_bottleneck_kn1x1.1
$region0: #{residual_bottleneck_kn1x1.1}
  #allocation0 [shape = 'u32[]', space=smem, size = 0x4, offset = 0x4, fixed_abs, tag = 'smem constant byte address 0x4 - core index']
  #allocation1 [shape = 'u32[144,128]{1,0:T(1,128)}', space=vmem, size = 0x12000, scoped, tag = 'internal scratch']
  %s0 = inlined_call_operand.vmem [shape: f32[2,18,24,4], index: 0, kind: input, shape index: {}]
  %s1 = inlined_call_operand.vmem [shape: f32[4,8], index: 1, kind: input, shape index: {}]
  %s2 = inlined_call_operand.vmem [shape: f32[1,8], index: 2, kind: input, shape index: {}]
  %s3 = inlined_call_operand.vmem [shape: f32[1,8], index: 3, kind: input, shape index: {}]
  %s4 = inlined_call_operand.vmem [shape: f32[9,8,8], index: 4, kind: input, shape index: {}]
  %s5 = inlined_call_operand.vmem [shape: f32[1,8], index: 5, kind: input, shape index: {}]
  %s6 = inlined_call_operand.vmem [shape: f32[1,8], index: 6, kind: input, shape index: {}]
  %s7 = inlined_call_operand.vmem [shape: f32[8,4], index: 7, kind: input, shape index: {}]
  %s8 = inlined_call_operand.vmem [shape: f32[1,4], index: 8, kind: input, shape index: {}]
  %s9 = inlined_call_operand.vmem [shape: f32[1,4], index: 9, kind: input, shape index: {}]
  %s10 = inlined_call_operand.vmem [shape: f32[2,16,16,4], index: 10, kind: output, shape index: {}]
  %s11 = sld [smem:[#allocation0]]
  $region73: #{residual_bottleneck_kn1x1.1} parent=0
    _
  %s13 = ssub.s32 1, %s11
  %s14 = scalar_select 0, %s13, %s11
  loop: start=0, step=1, limit=4
  $region2: #{residual_bottleneck_kn1x1.1} parent=0 // loop_pre_header
    _
  $region3: #{residual_bottleneck_kn1x1.1} parent=0 // loop_header
    %s16 = sphi 0, %s20
    %p17 = scmp.ge.s32.totalorder %s16, 4
    %s26 = sphi 0, %s28
    %s29 = sphi 0, %s26
    %s30 = sphi 0, %s29
    %s46 = sphi 0, %s30
    %s50 = sphi 0, %s50
    %s52 = sphi 0, %s50
    %s53 = sphi 0, %s52
    %s67 = sphi 0, %s53
    %s71 = sphi 0, %s71
    %s73 = sphi 0, %s71
    %s74 = sphi 0, %s73
    %s88 = sphi 0, %s74
    %s92 = sphi 0, %s92
    %s94 = sphi 0, %s92
    %s95 = sphi 0, %s94
    %s109 = sphi 0, %s95
    %s113 = sphi 0, %s113
    %s115 = sphi 0, %s113
    %s116 = sphi 0, %s115
    %s130 = sphi 0, %s116
    %s134 = sphi 0, %s134
    %s136 = sphi 0, %s134
    %s137 = sphi 0, %s136
    %s151 = sphi 0, %s137
    %s155 = sphi 0, %s155
    %s157 = sphi 0, %s155
    %s158 = sphi 0, %s157
    %s172 = sphi 0, %s158
    %s176 = sphi 0, %s176
    %s178 = sphi 0, %s176
    %s179 = sphi 0, %s178
    %s193 = sphi 0, %s179
    %s197 = sphi 0, %s197
    %s199 = sphi 0, %s197
    %s200 = sphi 0, %s199
    %s214 = sphi 0, %s200
    %s218 = sphi 0, %s218
    %s220 = sphi 0, %s218
    %s221 = sphi 0, %s220
    %s235 = sphi 0, %s221
    %s241 = sphi 0, %s243
    %s244 = sphi 0, %s241
    %s245 = sphi 0, %s244
    %s261 = sphi 0, %s245
  $region4: #{residual_bottleneck_kn1x1.1} parent=0 // loop_header_branch
    %19 = sbr.rel (%p17) target = $region8
  $region5: #{residual_bottleneck_kn1x1.1} parent=0 // loop_body
    %s21 = ssub.s32 %s16, 1
    %s22 = ssub.s32 %s16, 2
    %s23 = sadd.s32 %s16, 1
    %s24 = ssub.s32 %s16, %s23
    %p25 = scmp.eq.s32.totalorder %s24, 0
    %s27 = sadd.s32 %s26, 1
    %s28 = scalar_select %p25, %s26, %s27
    %p31 = pneg %p25
    %p32 = scmp.eq.s32.totalorder %s16, 1
    %p33 = por %p31, %p32
    %p34 = scmp.ne.s32.totalorder %s26, %s29
    %p35 = scmp.eq.s32.totalorder %s16, 0
    %p36 = por %p34, %p35
    %p37 = scmp.ne.s32.totalorder %s26, %s29
    %p38 = scmp.eq.s32.totalorder %s21, 1
    %p39 = por %p37, %p38
    %p40 = scmp.ne.s32.totalorder %s29, %s30
    %p41 = scmp.eq.s32.totalorder %s21, 0
    %p42 = por %p40, %p41
    %p43 = scmp.ne.s32.totalorder %s29, %s30
    %p44 = scmp.eq.s32.totalorder %s22, 1
    %p45 = por %p43, %p44
    %p47 = scmp.ne.s32.totalorder %s30, %s46
    %p48 = scmp.eq.s32.totalorder %s22, 0
    %p49 = por %p47, %p48
    %s51 = sadd.s32 %s50, 1
    %p54 = scmp.eq.s32.totalorder %s16, 1
    %p55 = scmp.ne.s32.totalorder %s50, %s52
    %p56 = scmp.eq.s32.totalorder %s16, 0
    %p57 = por %p55, %p56
    %p58 = scmp.ne.s32.totalorder %s50, %s52
    %p59 = scmp.eq.s32.totalorder %s21, 1
    %p60 = por %p58, %p59
    %p61 = scmp.ne.s32.totalorder %s52, %s53
    %p62 = scmp.eq.s32.totalorder %s21, 0
    %p63 = por %p61, %p62
    %p64 = scmp.ne.s32.totalorder %s52, %s53
    %p65 = scmp.eq.s32.totalorder %s22, 1
    %p66 = por %p64, %p65
    %p68 = scmp.ne.s32.totalorder %s53, %s67
    %p69 = scmp.eq.s32.totalorder %s22, 0
    %p70 = por %p68, %p69
    %s72 = sadd.s32 %s71, 1
    %p75 = scmp.eq.s32.totalorder %s16, 1
    %p76 = scmp.ne.s32.totalorder %s71, %s73
    %p77 = scmp.eq.s32.totalorder %s16, 0
    %p78 = por %p76, %p77
    %p79 = scmp.ne.s32.totalorder %s71, %s73
    %p80 = scmp.eq.s32.totalorder %s21, 1
    %p81 = por %p79, %p80
    %p82 = scmp.ne.s32.totalorder %s73, %s74
    %p83 = scmp.eq.s32.totalorder %s21, 0
    %p84 = por %p82, %p83
    %p85 = scmp.ne.s32.totalorder %s73, %s74
    %p86 = scmp.eq.s32.totalorder %s22, 1
    %p87 = por %p85, %p86
    %p89 = scmp.ne.s32.totalorder %s74, %s88
    %p90 = scmp.eq.s32.totalorder %s22, 0
    %p91 = por %p89, %p90
    %s93 = sadd.s32 %s92, 1
    %p96 = scmp.eq.s32.totalorder %s16, 1
    %p97 = scmp.ne.s32.totalorder %s92, %s94
    %p98 = scmp.eq.s32.totalorder %s16, 0
    %p99 = por %p97, %p98
    %p100 = scmp.ne.s32.totalorder %s92, %s94
    %p101 = scmp.eq.s32.totalorder %s21, 1
    %p102 = por %p100, %p101
    %p103 = scmp.ne.s32.totalorder %s94, %s95
    %p104 = scmp.eq.s32.totalorder %s21, 0
    %p105 = por %p103, %p104
    %p106 = scmp.ne.s32.totalorder %s94, %s95
    %p107 = scmp.eq.s32.totalorder %s22, 1
    %p108 = por %p106, %p107
    %p110 = scmp.ne.s32.totalorder %s95, %s109
    %p111 = scmp.eq.s32.totalorder %s22, 0
    %p112 = por %p110, %p111
    %s114 = sadd.s32 %s113, 1
    %p117 = scmp.eq.s32.totalorder %s16, 1
    %p118 = scmp.ne.s32.totalorder %s113, %s115
    %p119 = scmp.eq.s32.totalorder %s16, 0
    %p120 = por %p118, %p119
    %p121 = scmp.ne.s32.totalorder %s113, %s115
    %p122 = scmp.eq.s32.totalorder %s21, 1
    %p123 = por %p121, %p122
    %p124 = scmp.ne.s32.totalorder %s115, %s116
    %p125 = scmp.eq.s32.totalorder %s21, 0
    %p126 = por %p124, %p125
    %p127 = scmp.ne.s32.totalorder %s115, %s116
    %p128 = scmp.eq.s32.totalorder %s22, 1
    %p129 = por %p127, %p128
    %p131 = scmp.ne.s32.totalorder %s116, %s130
    %p132 = scmp.eq.s32.totalorder %s22, 0
    %p133 = por %p131, %p132
    %s135 = sadd.s32 %s134, 1
    %p138 = scmp.eq.s32.totalorder %s16, 1
    %p139 = scmp.ne.s32.totalorder %s134, %s136
    %p140 = scmp.eq.s32.totalorder %s16, 0
    %p141 = por %p139, %p140
    %p142 = scmp.ne.s32.totalorder %s134, %s136
    %p143 = scmp.eq.s32.totalorder %s21, 1
    %p144 = por %p142, %p143
    %p145 = scmp.ne.s32.totalorder %s136, %s137
    %p146 = scmp.eq.s32.totalorder %s21, 0
    %p147 = por %p145, %p146
    %p148 = scmp.ne.s32.totalorder %s136, %s137
    %p149 = scmp.eq.s32.totalorder %s22, 1
    %p150 = por %p148, %p149
    %p152 = scmp.ne.s32.totalorder %s137, %s151
    %p153 = scmp.eq.s32.totalorder %s22, 0
    %p154 = por %p152, %p153
    %s156 = sadd.s32 %s155, 1
    %p159 = scmp.eq.s32.totalorder %s16, 1
    %p160 = scmp.ne.s32.totalorder %s155, %s157
    %p161 = scmp.eq.s32.totalorder %s16, 0
    %p162 = por %p160, %p161
    %p163 = scmp.ne.s32.totalorder %s155, %s157
    %p164 = scmp.eq.s32.totalorder %s21, 1
    %p165 = por %p163, %p164
    %p166 = scmp.ne.s32.totalorder %s157, %s158
    %p167 = scmp.eq.s32.totalorder %s21, 0
    %p168 = por %p166, %p167
    %p169 = scmp.ne.s32.totalorder %s157, %s158
    %p170 = scmp.eq.s32.totalorder %s22, 1
    %p171 = por %p169, %p170
    %p173 = scmp.ne.s32.totalorder %s158, %s172
    %p174 = scmp.eq.s32.totalorder %s22, 0
    %p175 = por %p173, %p174
    %s177 = sadd.s32 %s176, 1
    %p180 = scmp.eq.s32.totalorder %s16, 1
    %p181 = scmp.ne.s32.totalorder %s176, %s178
    %p182 = scmp.eq.s32.totalorder %s16, 0
    %p183 = por %p181, %p182
    %p184 = scmp.ne.s32.totalorder %s176, %s178
    %p185 = scmp.eq.s32.totalorder %s21, 1
    %p186 = por %p184, %p185
    %p187 = scmp.ne.s32.totalorder %s178, %s179
    %p188 = scmp.eq.s32.totalorder %s21, 0
    %p189 = por %p187, %p188
    %p190 = scmp.ne.s32.totalorder %s178, %s179
    %p191 = scmp.eq.s32.totalorder %s22, 1
    %p192 = por %p190, %p191
    %p194 = scmp.ne.s32.totalorder %s179, %s193
    %p195 = scmp.eq.s32.totalorder %s22, 0
    %p196 = por %p194, %p195
    %s198 = sadd.s32 %s197, 1
    %p201 = scmp.eq.s32.totalorder %s16, 1
    %p202 = scmp.ne.s32.totalorder %s197, %s199
    %p203 = scmp.eq.s32.totalorder %s16, 0
    %p204 = por %p202, %p203
    %p205 = scmp.ne.s32.totalorder %s197, %s199
    %p206 = scmp.eq.s32.totalorder %s21, 1
    %p207 = por %p205, %p206
    %p208 = scmp.ne.s32.totalorder %s199, %s200
    %p209 = scmp.eq.s32.totalorder %s21, 0
    %p210 = por %p208, %p209
    %p211 = scmp.ne.s32.totalorder %s199, %s200
    %p212 = scmp.eq.s32.totalorder %s22, 1
    %p213 = por %p211, %p212
    %p215 = scmp.ne.s32.totalorder %s200, %s214
    %p216 = scmp.eq.s32.totalorder %s22, 0
    %p217 = por %p215, %p216
    %s219 = sadd.s32 %s218, 1
    %p222 = scmp.eq.s32.totalorder %s16, 1
    %p223 = scmp.ne.s32.totalorder %s218, %s220
    %p224 = scmp.eq.s32.totalorder %s16, 0
    %p225 = por %p223, %p224
    %p226 = scmp.ne.s32.totalorder %s218, %s220
    %p227 = scmp.eq.s32.totalorder %s21, 1
    %p228 = por %p226, %p227
    %p229 = scmp.ne.s32.totalorder %s220, %s221
    %p230 = scmp.eq.s32.totalorder %s21, 0
    %p231 = por %p229, %p230
    %p232 = scmp.ne.s32.totalorder %s220, %s221
    %p233 = scmp.eq.s32.totalorder %s22, 1
    %p234 = por %p232, %p233
    %p236 = scmp.ne.s32.totalorder %s221, %s235
    %p237 = scmp.eq.s32.totalorder %s22, 0
    %p238 = por %p236, %p237
    %s239 = ssub.s32 %s16, %s23
    %p240 = scmp.eq.s32.totalorder %s239, 0
    %s242 = sadd.s32 %s241, 1
    %s243 = scalar_select %p240, %s241, %s242
    %p246 = pneg %p240
    %p247 = scmp.eq.s32.totalorder %s16, 1
    %p248 = por %p246, %p247
    %p249 = scmp.ne.s32.totalorder %s241, %s244
    %p250 = scmp.eq.s32.totalorder %s16, 0
    %p251 = por %p249, %p250
    %p252 = scmp.ne.s32.totalorder %s241, %s244
    %p253 = scmp.eq.s32.totalorder %s21, 1
    %p254 = por %p252, %p253
    %p255 = scmp.ne.s32.totalorder %s244, %s245
    %p256 = scmp.eq.s32.totalorder %s21, 0
    %p257 = por %p255, %p256
    %p258 = scmp.ne.s32.totalorder %s244, %s245
    %p259 = scmp.eq.s32.totalorder %s22, 1
    %p260 = por %p258, %p259
    %p262 = scmp.ne.s32.totalorder %s245, %s261
    %p263 = scmp.eq.s32.totalorder %s22, 0
    %p264 = por %p262, %p263
    %p265 = scmp.le.s32.totalorder 1, %s16
    %p266 = scmp.lt.s32.totalorder %s16, 3
    %p267 = pnand %p265, %p266
    %p268 = pneg %p267
    // Predicated region
    $region9: #{residual_bottleneck_kn1x1.1} parent=5 // pred_check
      _
    $region10: #{residual_bottleneck_kn1x1.1} parent=5 // pred_check_branch
      %270 = sbr.rel (%p267) target = $region12
    $region11: #{residual_bottleneck_kn1x1.1} parent=5 // pred_region
      %s271 = ssub.s32 %s16, 1
      // Predicated region
      $region13: #{residual_bottleneck_kn1x1.1} parent=11 // pred_check
        %p272 = pneg %p63
      $region14: #{residual_bottleneck_kn1x1.1} parent=11 // pred_check_branch
        %274 = sbr.rel (%p272) target = $region16
      $region15: #{residual_bottleneck_kn1x1.1} parent=11 // pred_region
        _
      $region16: #{residual_bottleneck_kn1x1.1} parent=11 // pred_fallthru
        _
      // Predicated region
      $region17: #{residual_bottleneck_kn1x1.1} parent=11 // pred_check
        %p275 = pneg %p84
      $region18: #{residual_bottleneck_kn1x1.1} parent=11 // pred_check_branch
        %277 = sbr.rel (%p275) target = $region20
      $region19: #{residual_bottleneck_kn1x1.1} parent=11 // pred_region
        _
      $region20: #{residual_bottleneck_kn1x1.1} parent=11 // pred_fallthru
        _
      // Predicated region
      $region21: #{residual_bottleneck_kn1x1.1} parent=11 // pred_check
        %p278 = pneg %p105
      $region22: #{residual_bottleneck_kn1x1.1} parent=11 // pred_check_branch
        %280 = sbr.rel (%p278) target = $region24
      $region23: #{residual_bottleneck_kn1x1.1} parent=11 // pred_region
        _
      $region24: #{residual_bottleneck_kn1x1.1} parent=11 // pred_fallthru
        _
      // Predicated region
      $region25: #{residual_bottleneck_kn1x1.1} parent=11 // pred_check
        %p281 = pneg %p126
      $region26: #{residual_bottleneck_kn1x1.1} parent=11 // pred_check_branch
        %283 = sbr.rel (%p281) target = $region28
      $region27: #{residual_bottleneck_kn1x1.1} parent=11 // pred_region
        _
      $region28: #{residual_bottleneck_kn1x1.1} parent=11 // pred_fallthru
        _
      // Predicated region
      $region29: #{residual_bottleneck_kn1x1.1} parent=11 // pred_check
        %p284 = pneg %p147
      $region30: #{residual_bottleneck_kn1x1.1} parent=11 // pred_check_branch
        %286 = sbr.rel (%p284) target = $region32
      $region31: #{residual_bottleneck_kn1x1.1} parent=11 // pred_region
        _
      $region32: #{residual_bottleneck_kn1x1.1} parent=11 // pred_fallthru
        _
      // Predicated region
      $region33: #{residual_bottleneck_kn1x1.1} parent=11 // pred_check
        %p287 = pneg %p168
      $region34: #{residual_bottleneck_kn1x1.1} parent=11 // pred_check_branch
        %289 = sbr.rel (%p287) target = $region36
      $region35: #{residual_bottleneck_kn1x1.1} parent=11 // pred_region
        _
      $region36: #{residual_bottleneck_kn1x1.1} parent=11 // pred_fallthru
        _
      // Predicated region
      $region37: #{residual_bottleneck_kn1x1.1} parent=11 // pred_check
        %p290 = pneg %p189
      $region38: #{residual_bottleneck_kn1x1.1} parent=11 // pred_check_branch
        %292 = sbr.rel (%p290) target = $region40
      $region39: #{residual_bottleneck_kn1x1.1} parent=11 // pred_region
        _
      $region40: #{residual_bottleneck_kn1x1.1} parent=11 // pred_fallthru
        _
      // Predicated region
      $region41: #{residual_bottleneck_kn1x1.1} parent=11 // pred_check
        %p293 = pneg %p210
      $region42: #{residual_bottleneck_kn1x1.1} parent=11 // pred_check_branch
        %295 = sbr.rel (%p293) target = $region44
      $region43: #{residual_bottleneck_kn1x1.1} parent=11 // pred_region
        _
      $region44: #{residual_bottleneck_kn1x1.1} parent=11 // pred_fallthru
        _
      // Predicated region
      $region45: #{residual_bottleneck_kn1x1.1} parent=11 // pred_check
        %p296 = pneg %p231
      $region46: #{residual_bottleneck_kn1x1.1} parent=11 // pred_check_branch
        %298 = sbr.rel (%p296) target = $region48
      $region47: #{residual_bottleneck_kn1x1.1} parent=11 // pred_region
        _
      $region48: #{residual_bottleneck_kn1x1.1} parent=11 // pred_fallthru
        _
    $region12: #{residual_bottleneck_kn1x1.1} parent=5 // pred_fallthru
      _
    %p299 = scmp.lt.s32.totalorder %s16, 2
    // Predicated region
    $region49: #{residual_bottleneck_kn1x1.1} parent=5 // pred_check
      %p300 = pneg %p299
    $region50: #{residual_bottleneck_kn1x1.1} parent=5 // pred_check_branch
      %302 = sbr.rel (%p300) target = $region52
    $region51: #{residual_bottleneck_kn1x1.1} parent=5 // pred_region
      // Predicated region
      $region53: #{residual_bottleneck_kn1x1.1} parent=51 // pred_check
        %p303 = pneg %p36
      $region54: #{residual_bottleneck_kn1x1.1} parent=51 // pred_check_branch
        %305 = sbr.rel (%p303) target = $region56
      $region55: #{residual_bottleneck_kn1x1.1} parent=51 // pred_region
        %p306 = scmp.lt.s32.totalorder %s16, 1
        %s307 = scalar_select %p306, %s16, 1
        %s308 = smul.addr %s307, 54
        %s309 = smul.addr %s308, 8
        %s310 = scalar_lea.vmem %s0, %s309
      $region56: #{residual_bottleneck_kn1x1.1} parent=51 // pred_fallthru
        _
    $region52: #{residual_bottleneck_kn1x1.1} parent=5 // pred_fallthru
      _
    %p311 = scmp.le.s32.totalorder 1, %s16
    %p312 = scmp.lt.s32.totalorder %s16, 3
    %p313 = pnand %p311, %p312
    %p314 = pneg %p313
    // Predicated region
    $region57: #{residual_bottleneck_kn1x1.1} parent=5 // pred_check
      _
    $region58: #{residual_bottleneck_kn1x1.1} parent=5 // pred_check_branch
      %316 = sbr.rel (%p313) target = $region60
    $region59: #{residual_bottleneck_kn1x1.1} parent=5 // pred_region
      %s317 = ssub.s32 %s16, 1
      %p318 = scmp.lt.s32.totalorder %s21, 1
      %s319 = scalar_select %p318, %s21, 1
      %s320 = smul.addr %s319, 54
      %s321 = smul.addr %s320, 8
      %s322 = scalar_lea.vmem %s0, %s321
      %p323 = pneg %p42
      %p324 = pneg %p39
      %p325 = pneg %p63
      %p326 = pneg %p60
      %p327 = pneg %p84
      %p328 = pneg %p81
      %p329 = pneg %p105
      %p330 = pneg %p102
      %p331 = pneg %p126
      %p332 = pneg %p123
      %p333 = pneg %p147
      %p334 = pneg %p144
      %p335 = pneg %p168
      %p336 = pneg %p165
      %p337 = pneg %p189
      %p338 = pneg %p186
      %p339 = pneg %p210
      %p340 = pneg %p207
      %p341 = pneg %p231
      %p342 = pneg %p228
      %p343 = pneg %p257
      %p344 = pneg %p254
      %p345 = scmp.lt.s32.totalorder %s21, 1
      %s346 = scalar_select %p345, %s21, 1
      %s347 = smul.addr %s346, 32
      %s348 = smul.addr %s347, 8
      %s349 = scalar_lea.vmem %s10, %s348
      %p350 = scmp.lt.s32.totalorder %s21, 1
      %s351 = scalar_select %p350, %s21, 1
      %s352 = smul.addr %s351, 54
      %s353 = smul.addr %s352, 8
      %s354 = scalar_lea.vmem %s0, %s353
      %p355 = scmp.lt.s32.totalorder %s21, 1
      %s356 = scalar_select %p355, %s21, 1
      %s357 = smul.addr %s356, 32
      %s358 = smul.addr %s357, 8
      %s359 = scalar_lea.vmem %s10, %s358
      %v360 = vld [vmem:[%s354] sm:$0xff]
      %v361 = vld [vmem:[%s354 + $0x8] sm:$0xff]
      %v362 = vld [vmem:[%s354 + $0x10] sm:$0xff]
      %v363 = vld [vmem:[%s354 + $0x18] sm:$0xff]
      %v364 = vld [vmem:[%s354 + $0x20] sm:$0xff]
      %v365 = vld [vmem:[%s354 + $0x28] sm:$0xff]
      %v366 = vld [vmem:[%s354 + $0x30] sm:$0xff]
      %v367 = vld [vmem:[%s354 + $0x38] sm:$0xff]
      %v368 = vld [vmem:[%s354 + $0x40] sm:$0xff]
      %v369 = vld [vmem:[%s354 + $0x48] sm:$0xff]
      %v370 = vld [vmem:[%s354 + $0x50] sm:$0xff]
      %v371 = vld [vmem:[%s354 + $0x58] sm:$0xff]
      %v372 = vld [vmem:[%s354 + $0x60] sm:$0xff]
      %v373 = vld [vmem:[%s354 + $0x68] sm:$0xff]
      %v374 = vld [vmem:[%s354 + $0x70] sm:$0xff]
      %v375 = vld [vmem:[%s354 + $0x78] sm:$0xff]
      %v376 = vld [vmem:[%s354 + $0x80] sm:$0xff]
      %v377 = vld [vmem:[%s354 + $0x88] sm:$0xff]
      %v378 = vld [vmem:[%s354 + $0x90] sm:$0xff]
      %v379 = vld [vmem:[%s354 + $0x98] sm:$0xff]
      %v380 = vld [vmem:[%s354 + $0xa0] sm:$0xff]
      %v381 = vld [vmem:[%s354 + $0xa8] sm:$0xff]
      %v382 = vld [vmem:[%s354 + $0xb0] sm:$0xff]
      %v383 = vld [vmem:[%s354 + $0xb8] sm:$0xff]
      %v384 = vld [vmem:[%s354 + $0xc0] sm:$0xff]
      %v385 = vld [vmem:[%s354 + $0xc8] sm:$0xff]
      %v386 = vld [vmem:[%s354 + $0xd0] sm:$0xff]
      %v387 = vld [vmem:[%s354 + $0xd8] sm:$0xff]
      %v388 = vld [vmem:[%s354 + $0xe0] sm:$0xff]
      %v389 = vld [vmem:[%s354 + $0xe8] sm:$0xff]
      %v390 = vld [vmem:[%s354 + $0xf0] sm:$0xff]
      %v391 = vld [vmem:[%s354 + $0xf8] sm:$0xff]
      %v392 = vld [vmem:[%s354 + $0x100] sm:$0xff]
      %v393 = vld [vmem:[%s354 + $0x108] sm:$0xff]
      %v394 = vld [vmem:[%s354 + $0x110] sm:$0xff]
      %v395 = vld [vmem:[%s354 + $0x118] sm:$0xff]
      %v396 = vld [vmem:[%s354 + $0x120] sm:$0xff]
      %v397 = vld [vmem:[%s354 + $0x128] sm:$0xff]
      %v398 = vld [vmem:[%s354 + $0x130] sm:$0xff]
      %v399 = vld [vmem:[%s354 + $0x138] sm:$0xff]
      %v400 = vld [vmem:[%s354 + $0x140] sm:$0xff]
      %v401 = vld [vmem:[%s354 + $0x148] sm:$0xff]
      %v402 = vld [vmem:[%s354 + $0x150] sm:$0xff]
      %v403 = vld [vmem:[%s354 + $0x158] sm:$0xff]
      %v404 = vld [vmem:[%s354 + $0x160] sm:$0xff]
      %v405 = vld [vmem:[%s354 + $0x168] sm:$0xff]
      %v406 = vld [vmem:[%s354 + $0x170] sm:$0xff]
      %v407 = vld [vmem:[%s354 + $0x178] sm:$0xff]
      %v408 = vld [vmem:[%s354 + $0x180] sm:$0xff]
      %v409 = vld [vmem:[%s354 + $0x188] sm:$0xff]
      %v410 = vld [vmem:[%s354 + $0x190] sm:$0xff]
      %v411 = vld [vmem:[%s354 + $0x198] sm:$0xff]
      %v412 = vld [vmem:[%s354 + $0x1a0] sm:$0xff]
      %v413 = vld [vmem:[%s354 + $0x1a8] sm:$0xff]
      %v414 = vmax.f32 %v360, 0.0
      %v415 = vmax.f32 %v361, 0.0
      %v416 = vmax.f32 %v362, 0.0
      %v417 = vmax.f32 %v363, 0.0
      %v418 = vmax.f32 %v364, 0.0
      %v419 = vmax.f32 %v365, 0.0
      %v420 = vmax.f32 %v366, 0.0
      %v421 = vmax.f32 %v367, 0.0
      %v422 = vmax.f32 %v368, 0.0
      %v423 = vmax.f32 %v369, 0.0
      %v424 = vmax.f32 %v370, 0.0
      %v425 = vmax.f32 %v371, 0.0
      %v426 = vmax.f32 %v372, 0.0
      %v427 = vmax.f32 %v373, 0.0
      %v428 = vmax.f32 %v374, 0.0
      %v429 = vmax.f32 %v375, 0.0
      %v430 = vmax.f32 %v376, 0.0
      %v431 = vmax.f32 %v377, 0.0
      %v432 = vmax.f32 %v378, 0.0
      %v433 = vmax.f32 %v379, 0.0
      %v434 = vmax.f32 %v380, 0.0
      %v435 = vmax.f32 %v381, 0.0
      %v436 = vmax.f32 %v382, 0.0
      %v437 = vmax.f32 %v383, 0.0
      %v438 = vmax.f32 %v384, 0.0
      %v439 = vmax.f32 %v385, 0.0
      %v440 = vmax.f32 %v386, 0.0
      %v441 = vmax.f32 %v387, 0.0
      %v442 = vmax.f32 %v388, 0.0
      %v443 = vmax.f32 %v389, 0.0
      %v444 = vmax.f32 %v390, 0.0
      %v445 = vmax.f32 %v391, 0.0
      %v446 = vmax.f32 %v392, 0.0
      %v447 = vmax.f32 %v393, 0.0
      %v448 = vmax.f32 %v394, 0.0
      %v449 = vmax.f32 %v395, 0.0
      %v450 = vmax.f32 %v396, 0.0
      %v451 = vmax.f32 %v397, 0.0
      %v452 = vmax.f32 %v398, 0.0
      %v453 = vmax.f32 %v399, 0.0
      %v454 = vmax.f32 %v400, 0.0
      %v455 = vmax.f32 %v401, 0.0
      %v456 = vmax.f32 %v402, 0.0
      %v457 = vmax.f32 %v403, 0.0
      %v458 = vmax.f32 %v404, 0.0
      %v459 = vmax.f32 %v405, 0.0
      %v460 = vmax.f32 %v406, 0.0
      %v461 = vmax.f32 %v407, 0.0
      %v462 = vmax.f32 %v408, 0.0
      %v463 = vmax.f32 %v409, 0.0
      %v464 = vmax.f32 %v410, 0.0
      %v465 = vmax.f32 %v411, 0.0
      %v466 = vmax.f32 %v412, 0.0
      %v467 = vmax.f32 %v413, 0.0
      %v468 = vld [vmem:[%s1] sm:$0xf]
      %v469 = vld [vmem:[%s2] sm:$0x1]
      %v470 = vld [vmem:[%s3] sm:$0x1]
      %vm471 = vcmask 31744
      %v472 = vsel %vm471, %v414, 0.0
      %473 = vadd.xlane.f32.xlu0 %v472
      %v474 = vpop.xlane.xlu0 %473
      %v475 = vsel %vm471, %v415, 0.0
      %476 = vadd.xlane.f32.xlu0 %v475
      %v477 = vpop.xlane.xlu0 %476
      %v478 = vsel %vm471, %v416, 0.0
      %479 = vadd.xlane.f32.xlu0 %v478
      %v480 = vpop.xlane.xlu0 %479
      %v481 = vsel %vm471, %v417, 0.0
      %482 = vadd.xlane.f32.xlu0 %v481
      %v483 = vpop.xlane.xlu0 %482
      %v484 = vsel %vm471, %v418, 0.0
      %485 = vadd.xlane.f32.xlu0 %v484
      %v486 = vpop.xlane.xlu0 %485
      %v487 = vsel %vm471, %v419, 0.0
      %488 = vadd.xlane.f32.xlu0 %v487
      %v489 = vpop.xlane.xlu0 %488
      %v490 = vsel %vm471, %v420, 0.0
      %491 = vadd.xlane.f32.xlu0 %v490
      %v492 = vpop.xlane.xlu0 %491
      %v493 = vsel %vm471, %v421, 0.0
      %494 = vadd.xlane.f32.xlu0 %v493
      %v495 = vpop.xlane.xlu0 %494
      %v496 = vsel %vm471, %v422, 0.0
      %497 = vadd.xlane.f32.xlu0 %v496
      %v498 = vpop.xlane.xlu0 %497
      %v499 = vsel %vm471, %v423, 0.0
      %500 = vadd.xlane.f32.xlu0 %v499
      %v501 = vpop.xlane.xlu0 %500
      %v502 = vsel %vm471, %v424, 0.0
      %503 = vadd.xlane.f32.xlu0 %v502
      %v504 = vpop.xlane.xlu0 %503
      %v505 = vsel %vm471, %v425, 0.0
      %506 = vadd.xlane.f32.xlu0 %v505
      %v507 = vpop.xlane.xlu0 %506
      %v508 = vsel %vm471, %v426, 0.0
      %509 = vadd.xlane.f32.xlu0 %v508
      %v510 = vpop.xlane.xlu0 %509
      %v511 = vsel %vm471, %v427, 0.0
      %512 = vadd.xlane.f32.xlu0 %v511
      %v513 = vpop.xlane.xlu0 %512
      %v514 = vsel %vm471, %v428, 0.0
      %515 = vadd.xlane.f32.xlu0 %v514
      %v516 = vpop.xlane.xlu0 %515
      %v517 = vsel %vm471, %v429, 0.0
      %518 = vadd.xlane.f32.xlu0 %v517
      %v519 = vpop.xlane.xlu0 %518
      %v520 = vsel %vm471, %v430, 0.0
      %521 = vadd.xlane.f32.xlu0 %v520
      %v522 = vpop.xlane.xlu0 %521
      %v523 = vsel %vm471, %v431, 0.0
      %524 = vadd.xlane.f32.xlu0 %v523
      %v525 = vpop.xlane.xlu0 %524
      %v526 = vsel %vm471, %v432, 0.0
      %527 = vadd.xlane.f32.xlu0 %v526
      %v528 = vpop.xlane.xlu0 %527
      %v529 = vsel %vm471, %v433, 0.0
      %530 = vadd.xlane.f32.xlu0 %v529
      %v531 = vpop.xlane.xlu0 %530
      %v532 = vsel %vm471, %v434, 0.0
      %533 = vadd.xlane.f32.xlu0 %v532
      %v534 = vpop.xlane.xlu0 %533
      %v535 = vsel %vm471, %v435, 0.0
      %536 = vadd.xlane.f32.xlu0 %v535
      %v537 = vpop.xlane.xlu0 %536
      %v538 = vsel %vm471, %v436, 0.0
      %539 = vadd.xlane.f32.xlu0 %v538
      %v540 = vpop.xlane.xlu0 %539
      %v541 = vsel %vm471, %v437, 0.0
      %542 = vadd.xlane.f32.xlu0 %v541
      %v543 = vpop.xlane.xlu0 %542
      %v544 = vsel %vm471, %v438, 0.0
      %545 = vadd.xlane.f32.xlu0 %v544
      %v546 = vpop.xlane.xlu0 %545
      %v547 = vsel %vm471, %v439, 0.0
      %548 = vadd.xlane.f32.xlu0 %v547
      %v549 = vpop.xlane.xlu0 %548
      %v550 = vsel %vm471, %v440, 0.0
      %551 = vadd.xlane.f32.xlu0 %v550
      %v552 = vpop.xlane.xlu0 %551
      %v553 = vsel %vm471, %v441, 0.0
      %554 = vadd.xlane.f32.xlu0 %v553
      %v555 = vpop.xlane.xlu0 %554
      %v556 = vsel %vm471, %v442, 0.0
      %557 = vadd.xlane.f32.xlu0 %v556
      %v558 = vpop.xlane.xlu0 %557
      %v559 = vsel %vm471, %v443, 0.0
      %560 = vadd.xlane.f32.xlu0 %v559
      %v561 = vpop.xlane.xlu0 %560
      %v562 = vsel %vm471, %v444, 0.0
      %563 = vadd.xlane.f32.xlu0 %v562
      %v564 = vpop.xlane.xlu0 %563
      %v565 = vsel %vm471, %v445, 0.0
      %566 = vadd.xlane.f32.xlu0 %v565
      %v567 = vpop.xlane.xlu0 %566
      %v568 = vsel %vm471, %v446, 0.0
      %569 = vadd.xlane.f32.xlu0 %v568
      %v570 = vpop.xlane.xlu0 %569
      %v571 = vsel %vm471, %v447, 0.0
      %572 = vadd.xlane.f32.xlu0 %v571
      %v573 = vpop.xlane.xlu0 %572
      %v574 = vsel %vm471, %v448, 0.0
      %575 = vadd.xlane.f32.xlu0 %v574
      %v576 = vpop.xlane.xlu0 %575
      %v577 = vsel %vm471, %v449, 0.0
      %578 = vadd.xlane.f32.xlu0 %v577
      %v579 = vpop.xlane.xlu0 %578
      %v580 = vsel %vm471, %v450, 0.0
      %581 = vadd.xlane.f32.xlu0 %v580
      %v582 = vpop.xlane.xlu0 %581
      %v583 = vsel %vm471, %v451, 0.0
      %584 = vadd.xlane.f32.xlu0 %v583
      %v585 = vpop.xlane.xlu0 %584
      %v586 = vsel %vm471, %v452, 0.0
      %587 = vadd.xlane.f32.xlu0 %v586
      %v588 = vpop.xlane.xlu0 %587
      %v589 = vsel %vm471, %v453, 0.0
      %590 = vadd.xlane.f32.xlu0 %v589
      %v591 = vpop.xlane.xlu0 %590
      %v592 = vsel %vm471, %v454, 0.0
      %593 = vadd.xlane.f32.xlu0 %v592
      %v594 = vpop.xlane.xlu0 %593
      %v595 = vsel %vm471, %v455, 0.0
      %596 = vadd.xlane.f32.xlu0 %v595
      %v597 = vpop.xlane.xlu0 %596
      %v598 = vsel %vm471, %v456, 0.0
      %599 = vadd.xlane.f32.xlu0 %v598
      %v600 = vpop.xlane.xlu0 %599
      %v601 = vsel %vm471, %v457, 0.0
      %602 = vadd.xlane.f32.xlu0 %v601
      %v603 = vpop.xlane.xlu0 %602
      %v604 = vsel %vm471, %v458, 0.0
      %605 = vadd.xlane.f32.xlu0 %v604
      %v606 = vpop.xlane.xlu0 %605
      %v607 = vsel %vm471, %v459, 0.0
      %608 = vadd.xlane.f32.xlu0 %v607
      %v609 = vpop.xlane.xlu0 %608
      %v610 = vsel %vm471, %v460, 0.0
      %611 = vadd.xlane.f32.xlu0 %v610
      %v612 = vpop.xlane.xlu0 %611
      %v613 = vsel %vm471, %v461, 0.0
      %614 = vadd.xlane.f32.xlu0 %v613
      %v615 = vpop.xlane.xlu0 %614
      %v616 = vsel %vm471, %v462, 0.0
      %617 = vadd.xlane.f32.xlu0 %v616
      %v618 = vpop.xlane.xlu0 %617
      %v619 = vsel %vm471, %v463, 0.0
      %620 = vadd.xlane.f32.xlu0 %v619
      %v621 = vpop.xlane.xlu0 %620
      %v622 = vsel %vm471, %v464, 0.0
      %623 = vadd.xlane.f32.xlu0 %v622
      %v624 = vpop.xlane.xlu0 %623
      %v625 = vsel %vm471, %v465, 0.0
      %626 = vadd.xlane.f32.xlu0 %v625
      %v627 = vpop.xlane.xlu0 %626
      %v628 = vsel %vm471, %v466, 0.0
      %629 = vadd.xlane.f32.xlu0 %v628
      %v630 = vpop.xlane.xlu0 %629
      %v631 = vsel %vm471, %v467, 0.0
      %632 = vadd.xlane.f32.xlu0 %v631
      %v633 = vpop.xlane.xlu0 %632
      %v634 = vmul.f32 %v414, %v414
      %v635 = vmul.f32 %v415, %v415
      %v636 = vmul.f32 %v416, %v416
      %v637 = vmul.f32 %v417, %v417
      %v638 = vmul.f32 %v418, %v418
      %v639 = vmul.f32 %v419, %v419
      %v640 = vmul.f32 %v420, %v420
      %v641 = vmul.f32 %v421, %v421
      %v642 = vmul.f32 %v422, %v422
      %v643 = vmul.f32 %v423, %v423
      %v644 = vmul.f32 %v424, %v424
      %v645 = vmul.f32 %v425, %v425
      %v646 = vmul.f32 %v426, %v426
      %v647 = vmul.f32 %v427, %v427
      %v648 = vmul.f32 %v428, %v428
      %v649 = vmul.f32 %v429, %v429
      %v650 = vmul.f32 %v430, %v430
      %v651 = vmul.f32 %v431, %v431
      %v652 = vmul.f32 %v432, %v432
      %v653 = vmul.f32 %v433, %v433
      %v654 = vmul.f32 %v434, %v434
      %v655 = vmul.f32 %v435, %v435
      %v656 = vmul.f32 %v436, %v436
      %v657 = vmul.f32 %v437, %v437
      %v658 = vmul.f32 %v438, %v438
      %v659 = vmul.f32 %v439, %v439
      %v660 = vmul.f32 %v440, %v440
      %v661 = vmul.f32 %v441, %v441
      %v662 = vmul.f32 %v442, %v442
      %v663 = vmul.f32 %v443, %v443
      %v664 = vmul.f32 %v444, %v444
      %v665 = vmul.f32 %v445, %v445
      %v666 = vmul.f32 %v446, %v446
      %v667 = vmul.f32 %v447, %v447
      %v668 = vmul.f32 %v448, %v448
      %v669 = vmul.f32 %v449, %v449
      %v670 = vmul.f32 %v450, %v450
      %v671 = vmul.f32 %v451, %v451
      %v672 = vmul.f32 %v452, %v452
      %v673 = vmul.f32 %v453, %v453
      %v674 = vmul.f32 %v454, %v454
      %v675 = vmul.f32 %v455, %v455
      %v676 = vmul.f32 %v456, %v456
      %v677 = vmul.f32 %v457, %v457
      %v678 = vmul.f32 %v458, %v458
      %v679 = vmul.f32 %v459, %v459
      %v680 = vmul.f32 %v460, %v460
      %v681 = vmul.f32 %v461, %v461
      %v682 = vmul.f32 %v462, %v462
      %v683 = vmul.f32 %v463, %v463
      %v684 = vmul.f32 %v464, %v464
      %v685 = vmul.f32 %v465, %v465
      %v686 = vmul.f32 %v466, %v466
      %v687 = vmul.f32 %v467, %v467
      %v688 = vsel %vm471, %v634, 0.0
      %689 = vadd.xlane.f32.xlu0 %v688
      %v690 = vpop.xlane.xlu0 %689
      %v691 = vsel %vm471, %v635, 0.0
      %692 = vadd.xlane.f32.xlu0 %v691
      %v693 = vpop.xlane.xlu0 %692
      %v694 = vsel %vm471, %v636, 0.0
      %695 = vadd.xlane.f32.xlu0 %v694
      %v696 = vpop.xlane.xlu0 %695
      %v697 = vsel %vm471, %v637, 0.0
      %698 = vadd.xlane.f32.xlu0 %v697
      %v699 = vpop.xlane.xlu0 %698
      %v700 = vsel %vm471, %v638, 0.0
      %701 = vadd.xlane.f32.xlu0 %v700
      %v702 = vpop.xlane.xlu0 %701
      %v703 = vsel %vm471, %v639, 0.0
      %704 = vadd.xlane.f32.xlu0 %v703
      %v705 = vpop.xlane.xlu0 %704
      %v706 = vsel %vm471, %v640, 0.0
      %707 = vadd.xlane.f32.xlu0 %v706
      %v708 = vpop.xlane.xlu0 %707
      %v709 = vsel %vm471, %v641, 0.0
      %710 = vadd.xlane.f32.xlu0 %v709
      %v711 = vpop.xlane.xlu0 %710
      %v712 = vsel %vm471, %v642, 0.0
      %713 = vadd.xlane.f32.xlu0 %v712
      %v714 = vpop.xlane.xlu0 %713
      %v715 = vsel %vm471, %v643, 0.0
      %716 = vadd.xlane.f32.xlu0 %v715
      %v717 = vpop.xlane.xlu0 %716
      %v718 = vsel %vm471, %v644, 0.0
      %719 = vadd.xlane.f32.xlu0 %v718
      %v720 = vpop.xlane.xlu0 %719
      %v721 = vsel %vm471, %v645, 0.0
      %722 = vadd.xlane.f32.xlu0 %v721
      %v723 = vpop.xlane.xlu0 %722
      %v724 = vsel %vm471, %v646, 0.0
      %725 = vadd.xlane.f32.xlu0 %v724
      %v726 = vpop.xlane.xlu0 %725
      %v727 = vsel %vm471, %v647, 0.0
      %728 = vadd.xlane.f32.xlu0 %v727
      %v729 = vpop.xlane.xlu0 %728
      %v730 = vsel %vm471, %v648, 0.0
      %731 = vadd.xlane.f32.xlu0 %v730
      %v732 = vpop.xlane.xlu0 %731
      %v733 = vsel %vm471, %v649, 0.0
      %734 = vadd.xlane.f32.xlu0 %v733
      %v735 = vpop.xlane.xlu0 %734
      %v736 = vsel %vm471, %v650, 0.0
      %737 = vadd.xlane.f32.xlu0 %v736
      %v738 = vpop.xlane.xlu0 %737
      %v739 = vsel %vm471, %v651, 0.0
      %740 = vadd.xlane.f32.xlu0 %v739
      %v741 = vpop.xlane.xlu0 %740
      %v742 = vsel %vm471, %v652, 0.0
      %743 = vadd.xlane.f32.xlu0 %v742
      %v744 = vpop.xlane.xlu0 %743
      %v745 = vsel %vm471, %v653, 0.0
      %746 = vadd.xlane.f32.xlu0 %v745
      %v747 = vpop.xlane.xlu0 %746
      %v748 = vsel %vm471, %v654, 0.0
      %749 = vadd.xlane.f32.xlu0 %v748
      %v750 = vpop.xlane.xlu0 %749
      %v751 = vsel %vm471, %v655, 0.0
      %752 = vadd.xlane.f32.xlu0 %v751
      %v753 = vpop.xlane.xlu0 %752
      %v754 = vsel %vm471, %v656, 0.0
      %755 = vadd.xlane.f32.xlu0 %v754
      %v756 = vpop.xlane.xlu0 %755
      %v757 = vsel %vm471, %v657, 0.0
      %758 = vadd.xlane.f32.xlu0 %v757
      %v759 = vpop.xlane.xlu0 %758
      %v760 = vsel %vm471, %v658, 0.0
      %761 = vadd.xlane.f32.xlu0 %v760
      %v762 = vpop.xlane.xlu0 %761
      %v763 = vsel %vm471, %v659, 0.0
      %764 = vadd.xlane.f32.xlu0 %v763
      %v765 = vpop.xlane.xlu0 %764
      %v766 = vsel %vm471, %v660, 0.0
      %767 = vadd.xlane.f32.xlu0 %v766
      %v768 = vpop.xlane.xlu0 %767
      %v769 = vsel %vm471, %v661, 0.0
      %770 = vadd.xlane.f32.xlu0 %v769
      %v771 = vpop.xlane.xlu0 %770
      %v772 = vsel %vm471, %v662, 0.0
      %773 = vadd.xlane.f32.xlu0 %v772
      %v774 = vpop.xlane.xlu0 %773
      %v775 = vsel %vm471, %v663, 0.0
      %776 = vadd.xlane.f32.xlu0 %v775
      %v777 = vpop.xlane.xlu0 %776
      %v778 = vsel %vm471, %v664, 0.0
      %779 = vadd.xlane.f32.xlu0 %v778
      %v780 = vpop.xlane.xlu0 %779
      %v781 = vsel %vm471, %v665, 0.0
      %782 = vadd.xlane.f32.xlu0 %v781
      %v783 = vpop.xlane.xlu0 %782
      %v784 = vsel %vm471, %v666, 0.0
      %785 = vadd.xlane.f32.xlu0 %v784
      %v786 = vpop.xlane.xlu0 %785
      %v787 = vsel %vm471, %v667, 0.0
      %788 = vadd.xlane.f32.xlu0 %v787
      %v789 = vpop.xlane.xlu0 %788
      %v790 = vsel %vm471, %v668, 0.0
      %791 = vadd.xlane.f32.xlu0 %v790
      %v792 = vpop.xlane.xlu0 %791
      %v793 = vsel %vm471, %v669, 0.0
      %794 = vadd.xlane.f32.xlu0 %v793
      %v795 = vpop.xlane.xlu0 %794
      %v796 = vsel %vm471, %v670, 0.0
      %797 = vadd.xlane.f32.xlu0 %v796
      %v798 = vpop.xlane.xlu0 %797
      %v799 = vsel %vm471, %v671, 0.0
      %800 = vadd.xlane.f32.xlu0 %v799
      %v801 = vpop.xlane.xlu0 %800
      %v802 = vsel %vm471, %v672, 0.0
      %803 = vadd.xlane.f32.xlu0 %v802
      %v804 = vpop.xlane.xlu0 %803
      %v805 = vsel %vm471, %v673, 0.0
      %806 = vadd.xlane.f32.xlu0 %v805
      %v807 = vpop.xlane.xlu0 %806
      %v808 = vsel %vm471, %v674, 0.0
      %809 = vadd.xlane.f32.xlu0 %v808
      %v810 = vpop.xlane.xlu0 %809
      %v811 = vsel %vm471, %v675, 0.0
      %812 = vadd.xlane.f32.xlu0 %v811
      %v813 = vpop.xlane.xlu0 %812
      %v814 = vsel %vm471, %v676, 0.0
      %815 = vadd.xlane.f32.xlu0 %v814
      %v816 = vpop.xlane.xlu0 %815
      %v817 = vsel %vm471, %v677, 0.0
      %818 = vadd.xlane.f32.xlu0 %v817
      %v819 = vpop.xlane.xlu0 %818
      %v820 = vsel %vm471, %v678, 0.0
      %821 = vadd.xlane.f32.xlu0 %v820
      %v822 = vpop.xlane.xlu0 %821
      %v823 = vsel %vm471, %v679, 0.0
      %824 = vadd.xlane.f32.xlu0 %v823
      %v825 = vpop.xlane.xlu0 %824
      %v826 = vsel %vm471, %v680, 0.0
      %827 = vadd.xlane.f32.xlu0 %v826
      %v828 = vpop.xlane.xlu0 %827
      %v829 = vsel %vm471, %v681, 0.0
      %830 = vadd.xlane.f32.xlu0 %v829
      %v831 = vpop.xlane.xlu0 %830
      %v832 = vsel %vm471, %v682, 0.0
      %833 = vadd.xlane.f32.xlu0 %v832
      %v834 = vpop.xlane.xlu0 %833
      %v835 = vsel %vm471, %v683, 0.0
      %836 = vadd.xlane.f32.xlu0 %v835
      %v837 = vpop.xlane.xlu0 %836
      %v838 = vsel %vm471, %v684, 0.0
      %839 = vadd.xlane.f32.xlu0 %v838
      %v840 = vpop.xlane.xlu0 %839
      %v841 = vsel %vm471, %v685, 0.0
      %842 = vadd.xlane.f32.xlu0 %v841
      %v843 = vpop.xlane.xlu0 %842
      %v844 = vsel %vm471, %v686, 0.0
      %845 = vadd.xlane.f32.xlu0 %v844
      %v846 = vpop.xlane.xlu0 %845
      %v847 = vsel %vm471, %v687, 0.0
      %848 = vadd.xlane.f32.xlu0 %v847
      %v849 = vpop.xlane.xlu0 %848
      %v850 = vmul.f32 %v474, 0.25
      %v851 = vmul.f32 %v477, 0.25
      %v852 = vmul.f32 %v480, 0.25
      %v853 = vmul.f32 %v483, 0.25
      %v854 = vmul.f32 %v486, 0.25
      %v855 = vmul.f32 %v489, 0.25
      %v856 = vmul.f32 %v492, 0.25
      %v857 = vmul.f32 %v495, 0.25
      %v858 = vmul.f32 %v498, 0.25
      %v859 = vmul.f32 %v501, 0.25
      %v860 = vmul.f32 %v504, 0.25
      %v861 = vmul.f32 %v507, 0.25
      %v862 = vmul.f32 %v510, 0.25
      %v863 = vmul.f32 %v513, 0.25
      %v864 = vmul.f32 %v516, 0.25
      %v865 = vmul.f32 %v519, 0.25
      %v866 = vmul.f32 %v522, 0.25
      %v867 = vmul.f32 %v525, 0.25
      %v868 = vmul.f32 %v528, 0.25
      %v869 = vmul.f32 %v531, 0.25
      %v870 = vmul.f32 %v534, 0.25
      %v871 = vmul.f32 %v537, 0.25
      %v872 = vmul.f32 %v540, 0.25
      %v873 = vmul.f32 %v543, 0.25
      %v874 = vmul.f32 %v546, 0.25
      %v875 = vmul.f32 %v549, 0.25
      %v876 = vmul.f32 %v552, 0.25
      %v877 = vmul.f32 %v555, 0.25
      %v878 = vmul.f32 %v558, 0.25
      %v879 = vmul.f32 %v561, 0.25
      %v880 = vmul.f32 %v564, 0.25
      %v881 = vmul.f32 %v567, 0.25
      %v882 = vmul.f32 %v570, 0.25
      %v883 = vmul.f32 %v573, 0.25
      %v884 = vmul.f32 %v576, 0.25
      %v885 = vmul.f32 %v579, 0.25
      %v886 = vmul.f32 %v582, 0.25
      %v887 = vmul.f32 %v585, 0.25
      %v888 = vmul.f32 %v588, 0.25
      %v889 = vmul.f32 %v591, 0.25
      %v890 = vmul.f32 %v594, 0.25
      %v891 = vmul.f32 %v597, 0.25
      %v892 = vmul.f32 %v600, 0.25
      %v893 = vmul.f32 %v603, 0.25
      %v894 = vmul.f32 %v606, 0.25
      %v895 = vmul.f32 %v609, 0.25
      %v896 = vmul.f32 %v612, 0.25
      %v897 = vmul.f32 %v615, 0.25
      %v898 = vmul.f32 %v618, 0.25
      %v899 = vmul.f32 %v621, 0.25
      %v900 = vmul.f32 %v624, 0.25
      %v901 = vmul.f32 %v627, 0.25
      %v902 = vmul.f32 %v630, 0.25
      %v903 = vmul.f32 %v633, 0.25
      %v904 = vmul.f32 %v690, 0.25
      %v905 = vmul.f32 %v693, 0.25
      %v906 = vmul.f32 %v696, 0.25
      %v907 = vmul.f32 %v699, 0.25
      %v908 = vmul.f32 %v702, 0.25
      %v909 = vmul.f32 %v705, 0.25
      %v910 = vmul.f32 %v708, 0.25
      %v911 = vmul.f32 %v711, 0.25
      %v912 = vmul.f32 %v714, 0.25
      %v913 = vmul.f32 %v717, 0.25
      %v914 = vmul.f32 %v720, 0.25
      %v915 = vmul.f32 %v723, 0.25
      %v916 = vmul.f32 %v726, 0.25
      %v917 = vmul.f32 %v729, 0.25
      %v918 = vmul.f32 %v732, 0.25
      %v919 = vmul.f32 %v735, 0.25
      %v920 = vmul.f32 %v738, 0.25
      %v921 = vmul.f32 %v741, 0.25
      %v922 = vmul.f32 %v744, 0.25
      %v923 = vmul.f32 %v747, 0.25
      %v924 = vmul.f32 %v750, 0.25
      %v925 = vmul.f32 %v753, 0.25
      %v926 = vmul.f32 %v756, 0.25
      %v927 = vmul.f32 %v759, 0.25
      %v928 = vmul.f32 %v762, 0.25
      %v929 = vmul.f32 %v765, 0.25
      %v930 = vmul.f32 %v768, 0.25
      %v931 = vmul.f32 %v771, 0.25
      %v932 = vmul.f32 %v774, 0.25
      %v933 = vmul.f32 %v777, 0.25
      %v934 = vmul.f32 %v780, 0.25
      %v935 = vmul.f32 %v783, 0.25
      %v936 = vmul.f32 %v786, 0.25
      %v937 = vmul.f32 %v789, 0.25
      %v938 = vmul.f32 %v792, 0.25
      %v939 = vmul.f32 %v795, 0.25
      %v940 = vmul.f32 %v798, 0.25
      %v941 = vmul.f32 %v801, 0.25
      %v942 = vmul.f32 %v804, 0.25
      %v943 = vmul.f32 %v807, 0.25
      %v944 = vmul.f32 %v810, 0.25
      %v945 = vmul.f32 %v813, 0.25
      %v946 = vmul.f32 %v816, 0.25
      %v947 = vmul.f32 %v819, 0.25
      %v948 = vmul.f32 %v822, 0.25
      %v949 = vmul.f32 %v825, 0.25
      %v950 = vmul.f32 %v828, 0.25
      %v951 = vmul.f32 %v831, 0.25
      %v952 = vmul.f32 %v834, 0.25
      %v953 = vmul.f32 %v837, 0.25
      %v954 = vmul.f32 %v840, 0.25
      %v955 = vmul.f32 %v843, 0.25
      %v956 = vmul.f32 %v846, 0.25
      %v957 = vmul.f32 %v849, 0.25
      %v958 = vmul.f32 %v850, %v850
      %v959 = vmul.f32 %v851, %v851
      %v960 = vmul.f32 %v852, %v852
      %v961 = vmul.f32 %v853, %v853
      %v962 = vmul.f32 %v854, %v854
      %v963 = vmul.f32 %v855, %v855
      %v964 = vmul.f32 %v856, %v856
      %v965 = vmul.f32 %v857, %v857
      %v966 = vmul.f32 %v858, %v858
      %v967 = vmul.f32 %v859, %v859
      %v968 = vmul.f32 %v860, %v860
      %v969 = vmul.f32 %v861, %v861
      %v970 = vmul.f32 %v862, %v862
      %v971 = vmul.f32 %v863, %v863
      %v972 = vmul.f32 %v864, %v864
      %v973 = vmul.f32 %v865, %v865
      %v974 = vmul.f32 %v866, %v866
      %v975 = vmul.f32 %v867, %v867
      %v976 = vmul.f32 %v868, %v868
      %v977 = vmul.f32 %v869, %v869
      %v978 = vmul.f32 %v870, %v870
      %v979 = vmul.f32 %v871, %v871
      %v980 = vmul.f32 %v872, %v872
      %v981 = vmul.f32 %v873, %v873
      %v982 = vmul.f32 %v874, %v874
      %v983 = vmul.f32 %v875, %v875
      %v984 = vmul.f32 %v876, %v876
      %v985 = vmul.f32 %v877, %v877
      %v986 = vmul.f32 %v878, %v878
      %v987 = vmul.f32 %v879, %v879
      %v988 = vmul.f32 %v880, %v880
      %v989 = vmul.f32 %v881, %v881
      %v990 = vmul.f32 %v882, %v882
      %v991 = vmul.f32 %v883, %v883
      %v992 = vmul.f32 %v884, %v884
      %v993 = vmul.f32 %v885, %v885
      %v994 = vmul.f32 %v886, %v886
      %v995 = vmul.f32 %v887, %v887
      %v996 = vmul.f32 %v888, %v888
      %v997 = vmul.f32 %v889, %v889
      %v998 = vmul.f32 %v890, %v890
      %v999 = vmul.f32 %v891, %v891
      %v1000 = vmul.f32 %v892, %v892
      %v1001 = vmul.f32 %v893, %v893
      %v1002 = vmul.f32 %v894, %v894
      %v1003 = vmul.f32 %v895, %v895
      %v1004 = vmul.f32 %v896, %v896
      %v1005 = vmul.f32 %v897, %v897
      %v1006 = vmul.f32 %v898, %v898
      %v1007 = vmul.f32 %v899, %v899
      %v1008 = vmul.f32 %v900, %v900
      %v1009 = vmul.f32 %v901, %v901
      %v1010 = vmul.f32 %v902, %v902
      %v1011 = vmul.f32 %v903, %v903
      %v1012 = vsub.f32 %v904, %v958
      %v1013 = vsub.f32 %v905, %v959
      %v1014 = vsub.f32 %v906, %v960
      %v1015 = vsub.f32 %v907, %v961
      %v1016 = vsub.f32 %v908, %v962
      %v1017 = vsub.f32 %v909, %v963
      %v1018 = vsub.f32 %v910, %v964
      %v1019 = vsub.f32 %v911, %v965
      %v1020 = vsub.f32 %v912, %v966
      %v1021 = vsub.f32 %v913, %v967
      %v1022 = vsub.f32 %v914, %v968
      %v1023 = vsub.f32 %v915, %v969
      %v1024 = vsub.f32 %v916, %v970
      %v1025 = vsub.f32 %v917, %v971
      %v1026 = vsub.f32 %v918, %v972
      %v1027 = vsub.f32 %v919, %v973
      %v1028 = vsub.f32 %v920, %v974
      %v1029 = vsub.f32 %v921, %v975
      %v1030 = vsub.f32 %v922, %v976
      %v1031 = vsub.f32 %v923, %v977
      %v1032 = vsub.f32 %v924, %v978
      %v1033 = vsub.f32 %v925, %v979
      %v1034 = vsub.f32 %v926, %v980
      %v1035 = vsub.f32 %v927, %v981
      %v1036 = vsub.f32 %v928, %v982
      %v1037 = vsub.f32 %v929, %v983
      %v1038 = vsub.f32 %v930, %v984
      %v1039 = vsub.f32 %v931, %v985
      %v1040 = vsub.f32 %v932, %v986
      %v1041 = vsub.f32 %v933, %v987
      %v1042 = vsub.f32 %v934, %v988
      %v1043 = vsub.f32 %v935, %v989
      %v1044 = vsub.f32 %v936, %v990
      %v1045 = vsub.f32 %v937, %v991
      %v1046 = vsub.f32 %v938, %v992
      %v1047 = vsub.f32 %v939, %v993
      %v1048 = vsub.f32 %v940, %v994
      %v1049 = vsub.f32 %v941, %v995
      %v1050 = vsub.f32 %v942, %v996
      %v1051 = vsub.f32 %v943, %v997
      %v1052 = vsub.f32 %v944, %v998
      %v1053 = vsub.f32 %v945, %v999
      %v1054 = vsub.f32 %v946, %v1000
      %v1055 = vsub.f32 %v947, %v1001
      %v1056 = vsub.f32 %v948, %v1002
      %v1057 = vsub.f32 %v949, %v1003
      %v1058 = vsub.f32 %v950, %v1004
      %v1059 = vsub.f32 %v951, %v1005
      %v1060 = vsub.f32 %v952, %v1006
      %v1061 = vsub.f32 %v953, %v1007
      %v1062 = vsub.f32 %v954, %v1008
      %v1063 = vsub.f32 %v955, %v1009
      %v1064 = vsub.f32 %v956, %v1010
      %v1065 = vsub.f32 %v957, %v1011
      %v1066 = vmax.f32 %v1012, 0.0
      %v1067 = vmax.f32 %v1013, 0.0
      %v1068 = vmax.f32 %v1014, 0.0
      %v1069 = vmax.f32 %v1015, 0.0
      %v1070 = vmax.f32 %v1016, 0.0
      %v1071 = vmax.f32 %v1017, 0.0
      %v1072 = vmax.f32 %v1018, 0.0
      %v1073 = vmax.f32 %v1019, 0.0
      %v1074 = vmax.f32 %v1020, 0.0
      %v1075 = vmax.f32 %v1021, 0.0
      %v1076 = vmax.f32 %v1022, 0.0
      %v1077 = vmax.f32 %v1023, 0.0
      %v1078 = vmax.f32 %v1024, 0.0
      %v1079 = vmax.f32 %v1025, 0.0
      %v1080 = vmax.f32 %v1026, 0.0
      %v1081 = vmax.f32 %v1027, 0.0
      %v1082 = vmax.f32 %v1028, 0.0
      %v1083 = vmax.f32 %v1029, 0.0
      %v1084 = vmax.f32 %v1030, 0.0
      %v1085 = vmax.f32 %v1031, 0.0
      %v1086 = vmax.f32 %v1032, 0.0
      %v1087 = vmax.f32 %v1033, 0.0
      %v1088 = vmax.f32 %v1034, 0.0
      %v1089 = vmax.f32 %v1035, 0.0
      %v1090 = vmax.f32 %v1036, 0.0
      %v1091 = vmax.f32 %v1037, 0.0
      %v1092 = vmax.f32 %v1038, 0.0
      %v1093 = vmax.f32 %v1039, 0.0
      %v1094 = vmax.f32 %v1040, 0.0
      %v1095 = vmax.f32 %v1041, 0.0
      %v1096 = vmax.f32 %v1042, 0.0
      %v1097 = vmax.f32 %v1043, 0.0
      %v1098 = vmax.f32 %v1044, 0.0
      %v1099 = vmax.f32 %v1045, 0.0
      %v1100 = vmax.f32 %v1046, 0.0
      %v1101 = vmax.f32 %v1047, 0.0
      %v1102 = vmax.f32 %v1048, 0.0
      %v1103 = vmax.f32 %v1049, 0.0
      %v1104 = vmax.f32 %v1050, 0.0
      %v1105 = vmax.f32 %v1051, 0.0
      %v1106 = vmax.f32 %v1052, 0.0
      %v1107 = vmax.f32 %v1053, 0.0
      %v1108 = vmax.f32 %v1054, 0.0
      %v1109 = vmax.f32 %v1055, 0.0
      %v1110 = vmax.f32 %v1056, 0.0
      %v1111 = vmax.f32 %v1057, 0.0
      %v1112 = vmax.f32 %v1058, 0.0
      %v1113 = vmax.f32 %v1059, 0.0
      %v1114 = vmax.f32 %v1060, 0.0
      %v1115 = vmax.f32 %v1061, 0.0
      %v1116 = vmax.f32 %v1062, 0.0
      %v1117 = vmax.f32 %v1063, 0.0
      %v1118 = vmax.f32 %v1064, 0.0
      %v1119 = vmax.f32 %v1065, 0.0
      %v1120 = vadd.f32 %v1066, 1e-05
      %v1121 = vadd.f32 %v1067, 1e-05
      %v1122 = vadd.f32 %v1068, 1e-05
      %v1123 = vadd.f32 %v1069, 1e-05
      %v1124 = vadd.f32 %v1070, 1e-05
      %v1125 = vadd.f32 %v1071, 1e-05
      %v1126 = vadd.f32 %v1072, 1e-05
      %v1127 = vadd.f32 %v1073, 1e-05
      %v1128 = vadd.f32 %v1074, 1e-05
      %v1129 = vadd.f32 %v1075, 1e-05
      %v1130 = vadd.f32 %v1076, 1e-05
      %v1131 = vadd.f32 %v1077, 1e-05
      %v1132 = vadd.f32 %v1078, 1e-05
      %v1133 = vadd.f32 %v1079, 1e-05
      %v1134 = vadd.f32 %v1080, 1e-05
      %v1135 = vadd.f32 %v1081, 1e-05
      %v1136 = vadd.f32 %v1082, 1e-05
      %v1137 = vadd.f32 %v1083, 1e-05
      %v1138 = vadd.f32 %v1084, 1e-05
      %v1139 = vadd.f32 %v1085, 1e-05
      %v1140 = vadd.f32 %v1086, 1e-05
      %v1141 = vadd.f32 %v1087, 1e-05
      %v1142 = vadd.f32 %v1088, 1e-05
      %v1143 = vadd.f32 %v1089, 1e-05
      %v1144 = vadd.f32 %v1090, 1e-05
      %v1145 = vadd.f32 %v1091, 1e-05
      %v1146 = vadd.f32 %v1092, 1e-05
      %v1147 = vadd.f32 %v1093, 1e-05
      %v1148 = vadd.f32 %v1094, 1e-05
      %v1149 = vadd.f32 %v1095, 1e-05
      %v1150 = vadd.f32 %v1096, 1e-05
      %v1151 = vadd.f32 %v1097, 1e-05
      %v1152 = vadd.f32 %v1098, 1e-05
      %v1153 = vadd.f32 %v1099, 1e-05
      %v1154 = vadd.f32 %v1100, 1e-05
      %v1155 = vadd.f32 %v1101, 1e-05
      %v1156 = vadd.f32 %v1102, 1e-05
      %v1157 = vadd.f32 %v1103, 1e-05
      %v1158 = vadd.f32 %v1104, 1e-05
      %v1159 = vadd.f32 %v1105, 1e-05
      %v1160 = vadd.f32 %v1106, 1e-05
      %v1161 = vadd.f32 %v1107, 1e-05
      %v1162 = vadd.f32 %v1108, 1e-05
      %v1163 = vadd.f32 %v1109, 1e-05
      %v1164 = vadd.f32 %v1110, 1e-05
      %v1165 = vadd.f32 %v1111, 1e-05
      %v1166 = vadd.f32 %v1112, 1e-05
      %v1167 = vadd.f32 %v1113, 1e-05
      %v1168 = vadd.f32 %v1114, 1e-05
      %v1169 = vadd.f32 %v1115, 1e-05
      %v1170 = vadd.f32 %v1116, 1e-05
      %v1171 = vadd.f32 %v1117, 1e-05
      %v1172 = vadd.f32 %v1118, 1e-05
      %v1173 = vadd.f32 %v1119, 1e-05
      %v1174 = vrsqrt.pop %v1120
      %v1175 = vrsqrt.pop %v1121
      %v1176 = vrsqrt.pop %v1122
      %v1177 = vrsqrt.pop %v1123
      %v1178 = vrsqrt.pop %v1124
      %v1179 = vrsqrt.pop %v1125
      %v1180 = vrsqrt.pop %v1126
      %v1181 = vrsqrt.pop %v1127
      %v1182 = vrsqrt.pop %v1128
      %v1183 = vrsqrt.pop %v1129
      %v1184 = vrsqrt.pop %v1130
      %v1185 = vrsqrt.pop %v1131
      %v1186 = vrsqrt.pop %v1132
      %v1187 = vrsqrt.pop %v1133
      %v1188 = vrsqrt.pop %v1134
      %v1189 = vrsqrt.pop %v1135
      %v1190 = vrsqrt.pop %v1136
      %v1191 = vrsqrt.pop %v1137
      %v1192 = vrsqrt.pop %v1138
      %v1193 = vrsqrt.pop %v1139
      %v1194 = vrsqrt.pop %v1140
      %v1195 = vrsqrt.pop %v1141
      %v1196 = vrsqrt.pop %v1142
      %v1197 = vrsqrt.pop %v1143
      %v1198 = vrsqrt.pop %v1144
      %v1199 = vrsqrt.pop %v1145
      %v1200 = vrsqrt.pop %v1146
      %v1201 = vrsqrt.pop %v1147
      %v1202 = vrsqrt.pop %v1148
      %v1203 = vrsqrt.pop %v1149
      %v1204 = vrsqrt.pop %v1150
      %v1205 = vrsqrt.pop %v1151
      %v1206 = vrsqrt.pop %v1152
      %v1207 = vrsqrt.pop %v1153
      %v1208 = vrsqrt.pop %v1154
      %v1209 = vrsqrt.pop %v1155
      %v1210 = vrsqrt.pop %v1156
      %v1211 = vrsqrt.pop %v1157
      %v1212 = vrsqrt.pop %v1158
      %v1213 = vrsqrt.pop %v1159
      %v1214 = vrsqrt.pop %v1160
      %v1215 = vrsqrt.pop %v1161
      %v1216 = vrsqrt.pop %v1162
      %v1217 = vrsqrt.pop %v1163
      %v1218 = vrsqrt.pop %v1164
      %v1219 = vrsqrt.pop %v1165
      %v1220 = vrsqrt.pop %v1166
      %v1221 = vrsqrt.pop %v1167
      %v1222 = vrsqrt.pop %v1168
      %v1223 = vrsqrt.pop %v1169
      %v1224 = vrsqrt.pop %v1170
      %v1225 = vrsqrt.pop %v1171
      %v1226 = vrsqrt.pop %v1172
      %v1227 = vrsqrt.pop %v1173
      %v1229 = vsel %vm471, %v414, 0
      %v1232 = vsel %vm471, %v415, 0
      %v1235 = vsel %vm471, %v416, 0
      %v1238 = vsel %vm471, %v417, 0
      %v1241 = vsel %vm471, %v418, 0
      %v1244 = vsel %vm471, %v419, 0
      %v1247 = vsel %vm471, %v420, 0
      %v1250 = vsel %vm471, %v421, 0
      %v1253 = vsel %vm471, %v422, 0
      %v1256 = vsel %vm471, %v423, 0
      %v1259 = vsel %vm471, %v424, 0
      %v1262 = vsel %vm471, %v425, 0
      %v1265 = vsel %vm471, %v426, 0
      %v1268 = vsel %vm471, %v427, 0
      %v1271 = vsel %vm471, %v428, 0
      %v1274 = vsel %vm471, %v429, 0
      %v1277 = vsel %vm471, %v430, 0
      %v1280 = vsel %vm471, %v431, 0
      %v1283 = vsel %vm471, %v432, 0
      %v1286 = vsel %vm471, %v433, 0
      %v1289 = vsel %vm471, %v434, 0
      %v1292 = vsel %vm471, %v435, 0
      %v1295 = vsel %vm471, %v436, 0
      %v1298 = vsel %vm471, %v437, 0
      %v1301 = vsel %vm471, %v438, 0
      %v1304 = vsel %vm471, %v439, 0
      %v1307 = vsel %vm471, %v440, 0
      %v1310 = vsel %vm471, %v441, 0
      %v1313 = vsel %vm471, %v442, 0
      %v1316 = vsel %vm471, %v443, 0
      %v1319 = vsel %vm471, %v444, 0
      %v1322 = vsel %vm471, %v445, 0
      %v1325 = vsel %vm471, %v446, 0
      %v1328 = vsel %vm471, %v447, 0
      %v1331 = vsel %vm471, %v448, 0
      %v1334 = vsel %vm471, %v449, 0
      %v1337 = vsel %vm471, %v450, 0
      %v1340 = vsel %vm471, %v451, 0
      %v1343 = vsel %vm471, %v452, 0
      %v1346 = vsel %vm471, %v453, 0
      %v1349 = vsel %vm471, %v454, 0
      %v1352 = vsel %vm471, %v455, 0
      %v1355 = vsel %vm471, %v456, 0
      %v1358 = vsel %vm471, %v457, 0
      %v1361 = vsel %vm471, %v458, 0
      %v1364 = vsel %vm471, %v459, 0
      %v1367 = vsel %vm471, %v460, 0
      %v1370 = vsel %vm471, %v461, 0
      %v1373 = vsel %vm471, %v462, 0
      %v1376 = vsel %vm471, %v463, 0
      %v1379 = vsel %vm471, %v464, 0
      %v1382 = vsel %vm471, %v465, 0
      %v1385 = vsel %vm471, %v466, 0
      %v1388 = vsel %vm471, %v467, 0
      %vm1390 = vcmask 1043456
      %v1392 = vsel %vm1390, %v468, 0
      %1394 = vmatprep.subr.mxu0 0.0
      %1395 = vmatpush1.msra.mxu0 %v1392
      %1396 = vmatprep.subr.mxu0 0.0
      %1397 = vmatpush1.msra.mxu0 0.0
      %1398 = vmatprep.subr.mxu0 0.0
      %1399 = vmatpush1.msra.mxu0 0.0
      %1400 = vmatprep.subr.mxu0 0.0
      %1401 = vmatpush1.msra.mxu0 0.0
      %1402 = vmatprep.subr.mxu0 0.0
      %1403 = vmatpush1.msra.mxu0 0.0
      %1404 = vmatprep.subr.mxu0 0.0
      %1405 = vmatpush1.msra.mxu0 0.0
      %1406 = vmatprep.subr.mxu0 0.0
      %1407 = vmatpush1.msra.mxu0 0.0
      %1408 = vmatprep.subr.mxu0 0.0
      %1409 = vmatpush1.msra.mxu0 0.0
      %1410 = vmatprep.subr.mxu0 0.0
      %1411 = vmatpush1.msra.mxu0 0.0
      %1412 = vmatprep.subr.mxu0 0.0
      %1413 = vmatpush1.msra.mxu0 0.0
      %1414 = vmatprep.subr.mxu0 0.0
      %1415 = vmatpush1.msra.mxu0 0.0
      %1416 = vmatprep.subr.mxu0 0.0
      %1417 = vmatpush1.msra.mxu0 0.0
      %1418 = vmatprep.subr.mxu0 0.0
      %1419 = vmatpush1.msra.mxu0 0.0
      %1420 = vmatprep.subr.mxu0 0.0
      %1421 = vmatpush1.msra.mxu0 0.0
      %1422 = vmatprep.subr.mxu0 0.0
      %1423 = vmatpush1.msra.mxu0 0.0
      %1424 = vmatprep.subr.mxu0 0.0
      %1425 = vmatpush1.msra.mxu0 0.0
      %1426 = vmatprep.subr.mxu0 0.0
      %1427 = vmatpush1.msra.mxu0 0.0
      %1428 = vmatprep.subr.mxu0 0.0
      %1429 = vmatpush1.msra.mxu0 0.0
      %1430 = vmatprep.subr.mxu0 0.0
      %1431 = vmatpush1.msra.mxu0 0.0
      %1432 = vmatprep.subr.mxu0 0.0
      %1433 = vmatpush1.msra.mxu0 0.0
      %1434 = vmatprep.subr.mxu0 0.0
      %1435 = vmatpush1.msra.mxu0 0.0
      %1436 = vmatprep.subr.mxu0 0.0
      %1437 = vmatpush1.msra.mxu0 0.0
      %1438 = vmatprep.subr.mxu0 0.0
      %1439 = vmatpush1.msra.mxu0 0.0
      %1440 = vmatprep.subr.mxu0 0.0
      %1441 = vmatpush1.msra.mxu0 0.0
      %1442 = vmatprep.subr.mxu0 0.0
      %1443 = vmatpush1.msra.mxu0 0.0
      %1444 = vmatprep.subr.mxu0 0.0
      %1445 = vmatpush1.msra.mxu0 0.0
      %1446 = vmatprep.subr.mxu0 0.0
      %1447 = vmatpush1.msra.mxu0 0.0
      %1448 = vmatprep.subr.mxu0 0.0
      %1449 = vmatpush1.msra.mxu0 0.0
      %1450 = vmatprep.subr.mxu0 0.0
      %1451 = vmatpush1.msra.mxu0 0.0
      %1452 = vmatprep.subr.mxu0 0.0
      %1453 = vmatpush1.msra.mxu0 0.0
      %1454 = vmatprep.subr.mxu0 0.0
      %1455 = vmatpush1.msra.mxu0 0.0
      %1456 = vmatprep.subr.mxu0 0.0
      %1457 = vmatpush1.msra.mxu0 0.0
      %1458 = vmatprep.mubr.f32.mxu0 0.0
      %1459 = vmatmul.mubr.f32.gmra.mrb[0].mxu0 %v1229
      %v1460 = vpop.f32.mrb[0].mxu0
      %v1461 = vadd.f32 0.0, %v1460
      %v1462 = vpop.f32.mrb[0].mxu0
      %1463 = vmatprep.mubr.f32.mxu0 0.0
      %1464 = vmatmul.mubr.f32.gmra.mrb[0].mxu0 %v1232
      %v1465 = vpop.f32.mrb[0].mxu0
      %v1466 = vadd.f32 0.0, %v1465
      %v1467 = vpop.f32.mrb[0].mxu0
      %1468 = vmatprep.mubr.f32.mxu0 0.0
      %1469 = vmatmul.mubr.f32.gmra.mrb[0].mxu0 %v1235
      %v1470 = vpop.f32.mrb[0].mxu0
      %v1471 = vadd.f32 0.0, %v1470
      %v1472 = vpop.f32.mrb[0].mxu0
      %1473 = vmatprep.mubr.f32.mxu0 0.0
      %1474 = vmatmul.mubr.f32.gmra.mrb[0].mxu0 %v1238
      %v1475 = vpop.f32.mrb[0].mxu0
      %v1476 = vadd.f32 0.0, %v1475
      %v1477 = vpop.f32.mrb[0].mxu0
      %1478 = vmatprep.mubr.f32.mxu0 0.0
      %1479 = vmatmul.mubr.f32.gmra.mrb[0].mxu0 %v1241
      %v1480 = vpop.f32.mrb[0].mxu0
      %v1481 = vadd.f32 0.0, %v1480
      %v1482 = vpop.f32.mrb[0].mxu0
      %1483 = vmatprep.mubr.f32.mxu0 0.0
      %1484 = vmatmul.mubr.f32.gmra.mrb[0].mxu0 %v1244
      %v1485 = vpop.f32.mrb[0].mxu0
      %v1486 = vadd.f32 0.0, %v1485
      %v1487 = vpop.f32.mrb[0].mxu0
      %1488 = vmatprep.mubr.f32.mxu0 0.0
      %1489 = vmatmul.mubr.f32.gmra.mrb[0].mxu0 %v1247
      %v1490 = vpop.f32.mrb[0].mxu0
      %v1491 = vadd.f32 0.0, %v1490
      %v1492 = vpop.f32.mrb[0].mxu0
      %1493 = vmatprep.mubr.f32.mxu0 0.0
      %1494 = vmatmul.mubr.f32.gmra.mrb[0].mxu0 %v1250
      %v1495 = vpop.f32.mrb[0].mxu0
      %v1496 = vadd.f32 0.0, %v1495
      %v1497 = vpop.f32.mrb[0].mxu0
      %1498 = vmatprep.mubr.f32.mxu0 0.0
      %1499 = vmatmul.mubr.f32.gmra.mrb[0].mxu0 %v1253
      %v1500 = vpop.f32.mrb[0].mxu0
      %v1501 = vadd.f32 0.0, %v1500
      %v1502 = vpop.f32.mrb[0].mxu0
      %1503 = vmatprep.mubr.f32.mxu0 0.0
      %1504 = vmatmul.mubr.f32.gmra.mrb[0].mxu0 %v1256
      %v1505 = vpop.f32.mrb[0].mxu0
      %v1506 = vadd.f32 0.0, %v1505
      %v1507 = vpop.f32.mrb[0].mxu0
      %1508 = vmatprep.mubr.f32.mxu0 0.0
      %1509 = vmatmul.mubr.f32.gmra.mrb[0].mxu0 %v1259
      %v1510 = vpop.f32.mrb[0].mxu0
      %v1511 = vadd.f32 0.0, %v1510
      %v1512 = vpop.f32.mrb[0].mxu0
      %1513 = vmatprep.mubr.f32.mxu0 0.0
      %1514 = vmatmul.mubr.f32.gmra.mrb[0].mxu0 %v1262
      %v1515 = vpop.f32.mrb[0].mxu0
      %v1516 = vadd.f32 0.0, %v1515
      %v1517 = vpop.f32.mrb[0].mxu0
      %1518 = vmatprep.mubr.f32.mxu0 0.0
      %1519 = vmatmul.mubr.f32.gmra.mrb[0].mxu0 %v1265
      %v1520 = vpop.f32.mrb[0].mxu0
      %v1521 = vadd.f32 0.0, %v1520
      %v1522 = vpop.f32.mrb[0].mxu0
      %1523 = vmatprep.mubr.f32.mxu0 0.0
      %1524 = vmatmul.mubr.f32.gmra.mrb[0].mxu0 %v1268
      %v1525 = vpop.f32.mrb[0].mxu0
      %v1526 = vadd.f32 0.0, %v1525
      %v1527 = vpop.f32.mrb[0].mxu0
      %1528 = vmatprep.mubr.f32.mxu0 0.0
      %1529 = vmatmul.mubr.f32.gmra.mrb[0].mxu0 %v1271
      %v1530 = vpop.f32.mrb[0].mxu0
      %v1531 = vadd.f32 0.0, %v1530
      %v1532 = vpop.f32.mrb[0].mxu0
      %1533 = vmatprep.mubr.f32.mxu0 0.0
      %1534 = vmatmul.mubr.f32.gmra.mrb[0].mxu0 %v1274
      %v1535 = vpop.f32.mrb[0].mxu0
      %v1536 = vadd.f32 0.0, %v1535
      %v1537 = vpop.f32.mrb[0].mxu0
      %1538 = vmatprep.mubr.f32.mxu0 0.0
      %1539 = vmatmul.mubr.f32.gmra.mrb[0].mxu0 %v1277
      %v1540 = vpop.f32.mrb[0].mxu0
      %v1541 = vadd.f32 0.0, %v1540
      %v1542 = vpop.f32.mrb[0].mxu0
      %1543 = vmatprep.mubr.f32.mxu0 0.0
      %1544 = vmatmul.mubr.f32.gmra.mrb[0].mxu0 %v1280
      %v1545 = vpop.f32.mrb[0].mxu0
      %v1546 = vadd.f32 0.0, %v1545
      %v1547 = vpop.f32.mrb[0].mxu0
      %1548 = vmatprep.mubr.f32.mxu0 0.0
      %1549 = vmatmul.mubr.f32.gmra.mrb[0].mxu0 %v1283
      %v1550 = vpop.f32.mrb[0].mxu0
      %v1551 = vadd.f32 0.0, %v1550
      %v1552 = vpop.f32.mrb[0].mxu0
      %1553 = vmatprep.mubr.f32.mxu0 0.0
      %1554 = vmatmul.mubr.f32.gmra.mrb[0].mxu0 %v1286
      %v1555 = vpop.f32.mrb[0].mxu0
      %v1556 = vadd.f32 0.0, %v1555
      %v1557 = vpop.f32.mrb[0].mxu0
      %1558 = vmatprep.mubr.f32.mxu0 0.0
      %1559 = vmatmul.mubr.f32.gmra.mrb[0].mxu0 %v1289
      %v1560 = vpop.f32.mrb[0].mxu0
      %v1561 = vadd.f32 0.0, %v1560
      %v1562 = vpop.f32.mrb[0].mxu0
      %1563 = vmatprep.mubr.f32.mxu0 0.0
      %1564 = vmatmul.mubr.f32.gmra.mrb[0].mxu0 %v1292
      %v1565 = vpop.f32.mrb[0].mxu0
      %v1566 = vadd.f32 0.0, %v1565
      %v1567 = vpop.f32.mrb[0].mxu0
      %1568 = vmatprep.mubr.f32.mxu0 0.0
      %1569 = vmatmul.mubr.f32.gmra.mrb[0].mxu0 %v1295
      %v1570 = vpop.f32.mrb[0].mxu0
      %v1571 = vadd.f32 0.0, %v1570
      %v1572 = vpop.f32.mrb[0].mxu0
      %1573 = vmatprep.mubr.f32.mxu0 0.0
      %1574 = vmatmul.mubr.f32.gmra.mrb[0].mxu0 %v1298
      %v1575 = vpop.f32.mrb[0].mxu0
      %v1576 = vadd.f32 0.0, %v1575
      %v1577 = vpop.f32.mrb[0].mxu0
      %1578 = vmatprep.mubr.f32.mxu0 0.0
      %1579 = vmatmul.mubr.f32.gmra.mrb[0].mxu0 %v1301
      %v1580 = vpop.f32.mrb[0].mxu0
      %v1581 = vadd.f32 0.0, %v1580
      %v1582 = vpop.f32.mrb[0].mxu0
      %1583 = vmatprep.mubr.f32.mxu0 0.0
      %1584 = vmatmul.mubr.f32.gmra.mrb[0].mxu0 %v1304
      %v1585 = vpop.f32.mrb[0].mxu0
      %v1586 = vadd.f32 0.0, %v1585
      %v1587 = vpop.f32.mrb[0].mxu0
      %1588 = vmatprep.mubr.f32.mxu0 0.0
      %1589 = vmatmul.mubr.f32.gmra.mrb[0].mxu0 %v1307
      %v1590 = vpop.f32.mrb[0].mxu0
      %v1591 = vadd.f32 0.0, %v1590
      %v1592 = vpop.f32.mrb[0].mxu0
      %1593 = vmatprep.mubr.f32.mxu0 0.0
      %1594 = vmatmul.mubr.f32.gmra.mrb[0].mxu0 %v1310
      %v1595 = vpop.f32.mrb[0].mxu0
      %v1596 = vadd.f32 0.0, %v1595
      %v1597 = vpop.f32.mrb[0].mxu0
      %1598 = vmatprep.mubr.f32.mxu0 0.0
      %1599 = vmatmul.mubr.f32.gmra.mrb[0].mxu0 %v1313
      %v1600 = vpop.f32.mrb[0].mxu0
      %v1601 = vadd.f32 0.0, %v1600
      %v1602 = vpop.f32.mrb[0].mxu0
      %1603 = vmatprep.mubr.f32.mxu0 0.0
      %1604 = vmatmul.mubr.f32.gmra.mrb[0].mxu0 %v1316
      %v1605 = vpop.f32.mrb[0].mxu0
      %v1606 = vadd.f32 0.0, %v1605
      %v1607 = vpop.f32.mrb[0].mxu0
      %1608 = vmatprep.mubr.f32.mxu0 0.0
      %1609 = vmatmul.mubr.f32.gmra.mrb[0].mxu0 %v1319
      %v1610 = vpop.f32.mrb[0].mxu0
      %v1611 = vadd.f32 0.0, %v1610
      %v1612 = vpop.f32.mrb[0].mxu0
      %1613 = vmatprep.mubr.f32.mxu0 0.0
      %1614 = vmatmul.mubr.f32.gmra.mrb[0].mxu0 %v1322
      %v1615 = vpop.f32.mrb[0].mxu0
      %v1616 = vadd.f32 0.0, %v1615
      %v1617 = vpop.f32.mrb[0].mxu0
      %1618 = vmatprep.mubr.f32.mxu0 0.0
      %1619 = vmatmul.mubr.f32.gmra.mrb[0].mxu0 %v1325
      %v1620 = vpop.f32.mrb[0].mxu0
      %v1621 = vadd.f32 0.0, %v1620
      %v1622 = vpop.f32.mrb[0].mxu0
      %1623 = vmatprep.mubr.f32.mxu0 0.0
      %1624 = vmatmul.mubr.f32.gmra.mrb[0].mxu0 %v1328
      %v1625 = vpop.f32.mrb[0].mxu0
      %v1626 = vadd.f32 0.0, %v1625
      %v1627 = vpop.f32.mrb[0].mxu0
      %1628 = vmatprep.mubr.f32.mxu0 0.0
      %1629 = vmatmul.mubr.f32.gmra.mrb[0].mxu0 %v1331
      %v1630 = vpop.f32.mrb[0].mxu0
      %v1631 = vadd.f32 0.0, %v1630
      %v1632 = vpop.f32.mrb[0].mxu0
      %1633 = vmatprep.mubr.f32.mxu0 0.0
      %1634 = vmatmul.mubr.f32.gmra.mrb[0].mxu0 %v1334
      %v1635 = vpop.f32.mrb[0].mxu0
      %v1636 = vadd.f32 0.0, %v1635
      %v1637 = vpop.f32.mrb[0].mxu0
      %1638 = vmatprep.mubr.f32.mxu0 0.0
      %1639 = vmatmul.mubr.f32.gmra.mrb[0].mxu0 %v1337
      %v1640 = vpop.f32.mrb[0].mxu0
      %v1641 = vadd.f32 0.0, %v1640
      %v1642 = vpop.f32.mrb[0].mxu0
      %1643 = vmatprep.mubr.f32.mxu0 0.0
      %1644 = vmatmul.mubr.f32.gmra.mrb[0].mxu0 %v1340
      %v1645 = vpop.f32.mrb[0].mxu0
      %v1646 = vadd.f32 0.0, %v1645
      %v1647 = vpop.f32.mrb[0].mxu0
      %1648 = vmatprep.mubr.f32.mxu0 0.0
      %1649 = vmatmul.mubr.f32.gmra.mrb[0].mxu0 %v1343
      %v1650 = vpop.f32.mrb[0].mxu0
      %v1651 = vadd.f32 0.0, %v1650
      %v1652 = vpop.f32.mrb[0].mxu0
      %1653 = vmatprep.mubr.f32.mxu0 0.0
      %1654 = vmatmul.mubr.f32.gmra.mrb[0].mxu0 %v1346
      %v1655 = vpop.f32.mrb[0].mxu0
      %v1656 = vadd.f32 0.0, %v1655
      %v1657 = vpop.f32.mrb[0].mxu0
      %1658 = vmatprep.mubr.f32.mxu0 0.0
      %1659 = vmatmul.mubr.f32.gmra.mrb[0].mxu0 %v1349
      %v1660 = vpop.f32.mrb[0].mxu0
      %v1661 = vadd.f32 0.0, %v1660
      %v1662 = vpop.f32.mrb[0].mxu0
      %1663 = vmatprep.mubr.f32.mxu0 0.0
      %1664 = vmatmul.mubr.f32.gmra.mrb[0].mxu0 %v1352
      %v1665 = vpop.f32.mrb[0].mxu0
      %v1666 = vadd.f32 0.0, %v1665
      %v1667 = vpop.f32.mrb[0].mxu0
      %1668 = vmatprep.mubr.f32.mxu0 0.0
      %1669 = vmatmul.mubr.f32.gmra.mrb[0].mxu0 %v1355
      %v1670 = vpop.f32.mrb[0].mxu0
      %v1671 = vadd.f32 0.0, %v1670
      %v1672 = vpop.f32.mrb[0].mxu0
      %1673 = vmatprep.mubr.f32.mxu0 0.0
      %1674 = vmatmul.mubr.f32.gmra.mrb[0].mxu0 %v1358
      %v1675 = vpop.f32.mrb[0].mxu0
      %v1676 = vadd.f32 0.0, %v1675
      %v1677 = vpop.f32.mrb[0].mxu0
      %1678 = vmatprep.mubr.f32.mxu0 0.0
      %1679 = vmatmul.mubr.f32.gmra.mrb[0].mxu0 %v1361
      %v1680 = vpop.f32.mrb[0].mxu0
      %v1681 = vadd.f32 0.0, %v1680
      %v1682 = vpop.f32.mrb[0].mxu0
      %1683 = vmatprep.mubr.f32.mxu0 0.0
      %1684 = vmatmul.mubr.f32.gmra.mrb[0].mxu0 %v1364
      %v1685 = vpop.f32.mrb[0].mxu0
      %v1686 = vadd.f32 0.0, %v1685
      %v1687 = vpop.f32.mrb[0].mxu0
      %1688 = vmatprep.mubr.f32.mxu0 0.0
      %1689 = vmatmul.mubr.f32.gmra.mrb[0].mxu0 %v1367
      %v1690 = vpop.f32.mrb[0].mxu0
      %v1691 = vadd.f32 0.0, %v1690
      %v1692 = vpop.f32.mrb[0].mxu0
      %1693 = vmatprep.mubr.f32.mxu0 0.0
      %1694 = vmatmul.mubr.f32.gmra.mrb[0].mxu0 %v1370
      %v1695 = vpop.f32.mrb[0].mxu0
      %v1696 = vadd.f32 0.0, %v1695
      %v1697 = vpop.f32.mrb[0].mxu0
      %1698 = vmatprep.mubr.f32.mxu0 0.0
      %1699 = vmatmul.mubr.f32.gmra.mrb[0].mxu0 %v1373
      %v1700 = vpop.f32.mrb[0].mxu0
      %v1701 = vadd.f32 0.0, %v1700
      %v1702 = vpop.f32.mrb[0].mxu0
      %1703 = vmatprep.mubr.f32.mxu0 0.0
      %1704 = vmatmul.mubr.f32.gmra.mrb[0].mxu0 %v1376
      %v1705 = vpop.f32.mrb[0].mxu0
      %v1706 = vadd.f32 0.0, %v1705
      %v1707 = vpop.f32.mrb[0].mxu0
      %1708 = vmatprep.mubr.f32.mxu0 0.0
      %1709 = vmatmul.mubr.f32.gmra.mrb[0].mxu0 %v1379
      %v1710 = vpop.f32.mrb[0].mxu0
      %v1711 = vadd.f32 0.0, %v1710
      %v1712 = vpop.f32.mrb[0].mxu0
      %1713 = vmatprep.mubr.f32.mxu0 0.0
      %1714 = vmatmul.mubr.f32.gmra.mrb[0].mxu0 %v1382
      %v1715 = vpop.f32.mrb[0].mxu0
      %v1716 = vadd.f32 0.0, %v1715
      %v1717 = vpop.f32.mrb[0].mxu0
      %1718 = vmatprep.mubr.f32.mxu0 0.0
      %1719 = vmatmul.mubr.f32.gmra.mrb[0].mxu0 %v1385
      %v1720 = vpop.f32.mrb[0].mxu0
      %v1721 = vadd.f32 0.0, %v1720
      %v1722 = vpop.f32.mrb[0].mxu0
      %1723 = vmatprep.mubr.f32.mxu0 0.0
      %1724 = vmatmul.mubr.f32.gmra.mrb[0].mxu0 %v1388
      %v1725 = vpop.f32.mrb[0].mxu0
      %v1726 = vadd.f32 0.0, %v1725
      %v1727 = vpop.f32.mrb[0].mxu0
      %1728 = vdwg.mxu0
      %v1729 = vmul.f32 %v1174, %v1461
      %v1730 = vmul.f32 %v1175, %v1466
      %v1731 = vmul.f32 %v1176, %v1471
      %v1732 = vmul.f32 %v1177, %v1476
      %v1733 = vmul.f32 %v1178, %v1481
      %v1734 = vmul.f32 %v1179, %v1486
      %v1735 = vmul.f32 %v1180, %v1491
      %v1736 = vmul.f32 %v1181, %v1496
      %v1737 = vmul.f32 %v1182, %v1501
      %v1738 = vmul.f32 %v1183, %v1506
      %v1739 = vmul.f32 %v1184, %v1511
      %v1740 = vmul.f32 %v1185, %v1516
      %v1741 = vmul.f32 %v1186, %v1521
      %v1742 = vmul.f32 %v1187, %v1526
      %v1743 = vmul.f32 %v1188, %v1531
      %v1744 = vmul.f32 %v1189, %v1536
      %v1745 = vmul.f32 %v1190, %v1541
      %v1746 = vmul.f32 %v1191, %v1546
      %v1747 = vmul.f32 %v1192, %v1551
      %v1748 = vmul.f32 %v1193, %v1556
      %v1749 = vmul.f32 %v1194, %v1561
      %v1750 = vmul.f32 %v1195, %v1566
      %v1751 = vmul.f32 %v1196, %v1571
      %v1752 = vmul.f32 %v1197, %v1576
      %v1753 = vmul.f32 %v1198, %v1581
      %v1754 = vmul.f32 %v1199, %v1586
      %v1755 = vmul.f32 %v1200, %v1591
      %v1756 = vmul.f32 %v1201, %v1596
      %v1757 = vmul.f32 %v1202, %v1601
      %v1758 = vmul.f32 %v1203, %v1606
      %v1759 = vmul.f32 %v1204, %v1611
      %v1760 = vmul.f32 %v1205, %v1616
      %v1761 = vmul.f32 %v1206, %v1621
      %v1762 = vmul.f32 %v1207, %v1626
      %v1763 = vmul.f32 %v1208, %v1631
      %v1764 = vmul.f32 %v1209, %v1636
      %v1765 = vmul.f32 %v1210, %v1641
      %v1766 = vmul.f32 %v1211, %v1646
      %v1767 = vmul.f32 %v1212, %v1651
      %v1768 = vmul.f32 %v1213, %v1656
      %v1769 = vmul.f32 %v1214, %v1661
      %v1770 = vmul.f32 %v1215, %v1666
      %v1771 = vmul.f32 %v1216, %v1671
      %v1772 = vmul.f32 %v1217, %v1676
      %v1773 = vmul.f32 %v1218, %v1681
      %v1774 = vmul.f32 %v1219, %v1686
      %v1775 = vmul.f32 %v1220, %v1691
      %v1776 = vmul.f32 %v1221, %v1696
      %v1777 = vmul.f32 %v1222, %v1701
      %v1778 = vmul.f32 %v1223, %v1706
      %v1779 = vmul.f32 %v1224, %v1711
      %v1780 = vmul.f32 %v1225, %v1716
      %v1781 = vmul.f32 %v1226, %v1721
      %v1782 = vmul.f32 %v1227, %v1726
      %v1783 = vmul.f32 %v850, %v1174
      %v1784 = vmul.f32 %v851, %v1175
      %v1785 = vmul.f32 %v852, %v1176
      %v1786 = vmul.f32 %v853, %v1177
      %v1787 = vmul.f32 %v854, %v1178
      %v1788 = vmul.f32 %v855, %v1179
      %v1789 = vmul.f32 %v856, %v1180
      %v1790 = vmul.f32 %v857, %v1181
      %v1791 = vmul.f32 %v858, %v1182
      %v1792 = vmul.f32 %v859, %v1183
      %v1793 = vmul.f32 %v860, %v1184
      %v1794 = vmul.f32 %v861, %v1185
      %v1795 = vmul.f32 %v862, %v1186
      %v1796 = vmul.f32 %v863, %v1187
      %v1797 = vmul.f32 %v864, %v1188
      %v1798 = vmul.f32 %v865, %v1189
      %v1799 = vmul.f32 %v866, %v1190
      %v1800 = vmul.f32 %v867, %v1191
      %v1801 = vmul.f32 %v868, %v1192
      %v1802 = vmul.f32 %v869, %v1193
      %v1803 = vmul.f32 %v870, %v1194
      %v1804 = vmul.f32 %v871, %v1195
      %v1805 = vmul.f32 %v872, %v1196
      %v1806 = vmul.f32 %v873, %v1197
      %v1807 = vmul.f32 %v874, %v1198
      %v1808 = vmul.f32 %v875, %v1199
      %v1809 = vmul.f32 %v876, %v1200
      %v1810 = vmul.f32 %v877, %v1201
      %v1811 = vmul.f32 %v878, %v1202
      %v1812 = vmul.f32 %v879, %v1203
      %v1813 = vmul.f32 %v880, %v1204
      %v1814 = vmul.f32 %v881, %v1205
      %v1815 = vmul.f32 %v882, %v1206
      %v1816 = vmul.f32 %v883, %v1207
      %v1817 = vmul.f32 %v884, %v1208
      %v1818 = vmul.f32 %v885, %v1209
      %v1819 = vmul.f32 %v886, %v1210
      %v1820 = vmul.f32 %v887, %v1211
      %v1821 = vmul.f32 %v888, %v1212
      %v1822 = vmul.f32 %v889, %v1213
      %v1823 = vmul.f32 %v890, %v1214
      %v1824 = vmul.f32 %v891, %v1215
      %v1825 = vmul.f32 %v892, %v1216
      %v1826 = vmul.f32 %v893, %v1217
      %v1827 = vmul.f32 %v894, %v1218
      %v1828 = vmul.f32 %v895, %v1219
      %v1829 = vmul.f32 %v896, %v1220
      %v1830 = vmul.f32 %v897, %v1221
      %v1831 = vmul.f32 %v898, %v1222
      %v1832 = vmul.f32 %v899, %v1223
      %v1833 = vmul.f32 %v900, %v1224
      %v1834 = vmul.f32 %v901, %v1225
      %v1835 = vmul.f32 %v902, %v1226
      %v1836 = vmul.f32 %v903, %v1227
      %v1838 = vlaneseq
      %v1839 = vshrl.u32 %v1838, 7
      %v1840 = vsub.s32 0, %v1839
      %v1841 = vrot.slane %v470, %v1840
      %v1843 = vmul.f32 %v1783, %v1841
      %v1844 = vmul.f32 %v1784, %v1841
      %v1845 = vmul.f32 %v1785, %v1841
      %v1846 = vmul.f32 %v1786, %v1841
      %v1847 = vmul.f32 %v1787, %v1841
      %v1848 = vmul.f32 %v1788, %v1841
      %v1849 = vmul.f32 %v1789, %v1841
      %v1850 = vmul.f32 %v1790, %v1841
      %v1851 = vmul.f32 %v1791, %v1841
      %v1852 = vmul.f32 %v1792, %v1841
      %v1853 = vmul.f32 %v1793, %v1841
      %v1854 = vmul.f32 %v1794, %v1841
      %v1855 = vmul.f32 %v1795, %v1841
      %v1856 = vmul.f32 %v1796, %v1841
      %v1857 = vmul.f32 %v1797, %v1841
      %v1858 = vmul.f32 %v1798, %v1841
      %v1859 = vmul.f32 %v1799, %v1841
      %v1860 = vmul.f32 %v1800, %v1841
      %v1861 = vmul.f32 %v1801, %v1841
      %v1862 = vmul.f32 %v1802, %v1841
      %v1863 = vmul.f32 %v1803, %v1841
      %v1864 = vmul.f32 %v1804, %v1841
      %v1865 = vmul.f32 %v1805, %v1841
      %v1866 = vmul.f32 %v1806, %v1841
      %v1867 = vmul.f32 %v1807, %v1841
      %v1868 = vmul.f32 %v1808, %v1841
      %v1869 = vmul.f32 %v1809, %v1841
      %v1870 = vmul.f32 %v1810, %v1841
      %v1871 = vmul.f32 %v1811, %v1841
      %v1872 = vmul.f32 %v1812, %v1841
      %v1873 = vmul.f32 %v1813, %v1841
      %v1874 = vmul.f32 %v1814, %v1841
      %v1875 = vmul.f32 %v1815, %v1841
      %v1876 = vmul.f32 %v1816, %v1841
      %v1877 = vmul.f32 %v1817, %v1841
      %v1878 = vmul.f32 %v1818, %v1841
      %v1879 = vmul.f32 %v1819, %v1841
      %v1880 = vmul.f32 %v1820, %v1841
      %v1881 = vmul.f32 %v1821, %v1841
      %v1882 = vmul.f32 %v1822, %v1841
      %v1883 = vmul.f32 %v1823, %v1841
      %v1884 = vmul.f32 %v1824, %v1841
      %v1885 = vmul.f32 %v1825, %v1841
      %v1886 = vmul.f32 %v1826, %v1841
      %v1887 = vmul.f32 %v1827, %v1841
      %v1888 = vmul.f32 %v1828, %v1841
      %v1889 = vmul.f32 %v1829, %v1841
      %v1890 = vmul.f32 %v1830, %v1841
      %v1891 = vmul.f32 %v1831, %v1841
      %v1892 = vmul.f32 %v1832, %v1841
      %v1893 = vmul.f32 %v1833, %v1841
      %v1894 = vmul.f32 %v1834, %v1841
      %v1895 = vmul.f32 %v1835, %v1841
      %v1896 = vmul.f32 %v1836, %v1841
      %v1898 = vlaneseq
      %v1899 = vshrl.u32 %v1898, 7
      %v1900 = vsub.s32 0, %v1899
      %v1901 = vrot.slane %v469, %v1900
      %v1903 = vsub.f32 %v1901, %v1843
      %v1904 = vsub.f32 %v1901, %v1844
      %v1905 = vsub.f32 %v1901, %v1845
      %v1906 = vsub.f32 %v1901, %v1846
      %v1907 = vsub.f32 %v1901, %v1847
      %v1908 = vsub.f32 %v1901, %v1848
      %v1909 = vsub.f32 %v1901, %v1849
      %v1910 = vsub.f32 %v1901, %v1850
      %v1911 = vsub.f32 %v1901, %v1851
      %v1912 = vsub.f32 %v1901, %v1852
      %v1913 = vsub.f32 %v1901, %v1853
      %v1914 = vsub.f32 %v1901, %v1854
      %v1915 = vsub.f32 %v1901, %v1855
      %v1916 = vsub.f32 %v1901, %v1856
      %v1917 = vsub.f32 %v1901, %v1857
      %v1918 = vsub.f32 %v1901, %v1858
      %v1919 = vsub.f32 %v1901, %v1859
      %v1920 = vsub.f32 %v1901, %v1860
      %v1921 = vsub.f32 %v1901, %v1861
      %v1922 = vsub.f32 %v1901, %v1862
      %v1923 = vsub.f32 %v1901, %v1863
      %v1924 = vsub.f32 %v1901, %v1864
      %v1925 = vsub.f32 %v1901, %v1865
      %v1926 = vsub.f32 %v1901, %v1866
      %v1927 = vsub.f32 %v1901, %v1867
      %v1928 = vsub.f32 %v1901, %v1868
      %v1929 = vsub.f32 %v1901, %v1869
      %v1930 = vsub.f32 %v1901, %v1870
      %v1931 = vsub.f32 %v1901, %v1871
      %v1932 = vsub.f32 %v1901, %v1872
      %v1933 = vsub.f32 %v1901, %v1873
      %v1934 = vsub.f32 %v1901, %v1874
      %v1935 = vsub.f32 %v1901, %v1875
      %v1936 = vsub.f32 %v1901, %v1876
      %v1937 = vsub.f32 %v1901, %v1877
      %v1938 = vsub.f32 %v1901, %v1878
      %v1939 = vsub.f32 %v1901, %v1879
      %v1940 = vsub.f32 %v1901, %v1880
      %v1941 = vsub.f32 %v1901, %v1881
      %v1942 = vsub.f32 %v1901, %v1882
      %v1943 = vsub.f32 %v1901, %v1883
      %v1944 = vsub.f32 %v1901, %v1884
      %v1945 = vsub.f32 %v1901, %v1885
      %v1946 = vsub.f32 %v1901, %v1886
      %v1947 = vsub.f32 %v1901, %v1887
      %v1948 = vsub.f32 %v1901, %v1888
      %v1949 = vsub.f32 %v1901, %v1889
      %v1950 = vsub.f32 %v1901, %v1890
      %v1951 = vsub.f32 %v1901, %v1891
      %v1952 = vsub.f32 %v1901, %v1892
      %v1953 = vsub.f32 %v1901, %v1893
      %v1954 = vsub.f32 %v1901, %v1894
      %v1955 = vsub.f32 %v1901, %v1895
      %v1956 = vsub.f32 %v1901, %v1896
      %v1957 = vadd.f32 %v1729, %v1903
      %v1958 = vadd.f32 %v1730, %v1904
      %v1959 = vadd.f32 %v1731, %v1905
      %v1960 = vadd.f32 %v1732, %v1906
      %v1961 = vadd.f32 %v1733, %v1907
      %v1962 = vadd.f32 %v1734, %v1908
      %v1963 = vadd.f32 %v1735, %v1909
      %v1964 = vadd.f32 %v1736, %v1910
      %v1965 = vadd.f32 %v1737, %v1911
      %v1966 = vadd.f32 %v1738, %v1912
      %v1967 = vadd.f32 %v1739, %v1913
      %v1968 = vadd.f32 %v1740, %v1914
      %v1969 = vadd.f32 %v1741, %v1915
      %v1970 = vadd.f32 %v1742, %v1916
      %v1971 = vadd.f32 %v1743, %v1917
      %v1972 = vadd.f32 %v1744, %v1918
      %v1973 = vadd.f32 %v1745, %v1919
      %v1974 = vadd.f32 %v1746, %v1920
      %v1975 = vadd.f32 %v1747, %v1921
      %v1976 = vadd.f32 %v1748, %v1922
      %v1977 = vadd.f32 %v1749, %v1923
      %v1978 = vadd.f32 %v1750, %v1924
      %v1979 = vadd.f32 %v1751, %v1925
      %v1980 = vadd.f32 %v1752, %v1926
      %v1981 = vadd.f32 %v1753, %v1927
      %v1982 = vadd.f32 %v1754, %v1928
      %v1983 = vadd.f32 %v1755, %v1929
      %v1984 = vadd.f32 %v1756, %v1930
      %v1985 = vadd.f32 %v1757, %v1931
      %v1986 = vadd.f32 %v1758, %v1932
      %v1987 = vadd.f32 %v1759, %v1933
      %v1988 = vadd.f32 %v1760, %v1934
      %v1989 = vadd.f32 %v1761, %v1935
      %v1990 = vadd.f32 %v1762, %v1936
      %v1991 = vadd.f32 %v1763, %v1937
      %v1992 = vadd.f32 %v1764, %v1938
      %v1993 = vadd.f32 %v1765, %v1939
      %v1994 = vadd.f32 %v1766, %v1940
      %v1995 = vadd.f32 %v1767, %v1941
      %v1996 = vadd.f32 %v1768, %v1942
      %v1997 = vadd.f32 %v1769, %v1943
      %v1998 = vadd.f32 %v1770, %v1944
      %v1999 = vadd.f32 %v1771, %v1945
      %v2000 = vadd.f32 %v1772, %v1946
      %v2001 = vadd.f32 %v1773, %v1947
      %v2002 = vadd.f32 %v1774, %v1948
      %v2003 = vadd.f32 %v1775, %v1949
      %v2004 = vadd.f32 %v1776, %v1950
      %v2005 = vadd.f32 %v1777, %v1951
      %v2006 = vadd.f32 %v1778, %v1952
      %v2007 = vadd.f32 %v1779, %v1953
      %v2008 = vadd.f32 %v1780, %v1954
      %v2009 = vadd.f32 %v1781, %v1955
      %v2010 = vadd.f32 %v1782, %v1956
      %v2011 = vmax.f32 %v1957, 0.0
      %v2012 = vmax.f32 %v1958, 0.0
      %v2013 = vmax.f32 %v1959, 0.0
      %v2014 = vmax.f32 %v1960, 0.0
      %v2015 = vmax.f32 %v1961, 0.0
      %v2016 = vmax.f32 %v1962, 0.0
      %v2017 = vmax.f32 %v1963, 0.0
      %v2018 = vmax.f32 %v1964, 0.0
      %v2019 = vmax.f32 %v1965, 0.0
      %v2020 = vmax.f32 %v1966, 0.0
      %v2021 = vmax.f32 %v1967, 0.0
      %v2022 = vmax.f32 %v1968, 0.0
      %v2023 = vmax.f32 %v1969, 0.0
      %v2024 = vmax.f32 %v1970, 0.0
      %v2025 = vmax.f32 %v1971, 0.0
      %v2026 = vmax.f32 %v1972, 0.0
      %v2027 = vmax.f32 %v1973, 0.0
      %v2028 = vmax.f32 %v1974, 0.0
      %v2029 = vmax.f32 %v1975, 0.0
      %v2030 = vmax.f32 %v1976, 0.0
      %v2031 = vmax.f32 %v1977, 0.0
      %v2032 = vmax.f32 %v1978, 0.0
      %v2033 = vmax.f32 %v1979, 0.0
      %v2034 = vmax.f32 %v1980, 0.0
      %v2035 = vmax.f32 %v1981, 0.0
      %v2036 = vmax.f32 %v1982, 0.0
      %v2037 = vmax.f32 %v1983, 0.0
      %v2038 = vmax.f32 %v1984, 0.0
      %v2039 = vmax.f32 %v1985, 0.0
      %v2040 = vmax.f32 %v1986, 0.0
      %v2041 = vmax.f32 %v1987, 0.0
      %v2042 = vmax.f32 %v1988, 0.0
      %v2043 = vmax.f32 %v1989, 0.0
      %v2044 = vmax.f32 %v1990, 0.0
      %v2045 = vmax.f32 %v1991, 0.0
      %v2046 = vmax.f32 %v1992, 0.0
      %v2047 = vmax.f32 %v1993, 0.0
      %v2048 = vmax.f32 %v1994, 0.0
      %v2049 = vmax.f32 %v1995, 0.0
      %v2050 = vmax.f32 %v1996, 0.0
      %v2051 = vmax.f32 %v1997, 0.0
      %v2052 = vmax.f32 %v1998, 0.0
      %v2053 = vmax.f32 %v1999, 0.0
      %v2054 = vmax.f32 %v2000, 0.0
      %v2055 = vmax.f32 %v2001, 0.0
      %v2056 = vmax.f32 %v2002, 0.0
      %v2057 = vmax.f32 %v2003, 0.0
      %v2058 = vmax.f32 %v2004, 0.0
      %v2059 = vmax.f32 %v2005, 0.0
      %v2060 = vmax.f32 %v2006, 0.0
      %v2061 = vmax.f32 %v2007, 0.0
      %v2062 = vmax.f32 %v2008, 0.0
      %v2063 = vmax.f32 %v2009, 0.0
      %v2064 = vmax.f32 %v2010, 0.0
      %v2065 = vlaneseq
      %v2066 = vshrl.u32 %v2065, 7
      %v2067 = vadd.s32 %v2066, 8
      %v2068 = vadd.s32 %v2066, 16
      %vm2069 = vcmp.ge.s32.totalorder %v2066, 1
      %vm2070 = vcmp.ge.s32.totalorder %v2067, 1
      %vm2071 = vcmp.ge.s32.totalorder %v2068, 1
      %vm2072 = vmand 0, %vm2069
      %vm2073 = vmand 0, %vm2070
      %vm2074 = vmand 0, %vm2071
      %vm2075 = vmand 1, %vm2069
      %vm2076 = vmand 1, %vm2070
      %vm2077 = vmand 1, %vm2071
      %vm2078 = vcmp.le.s32.totalorder %v2066, 16
      %vm2079 = vcmp.le.s32.totalorder %v2067, 16
      %vm2080 = vcmp.le.s32.totalorder %v2068, 16
      %vm2081 = vmand %vm2072, %vm2078
      %vm2082 = vmand %vm2073, %vm2079
      %vm2083 = vmand %vm2074, %vm2080
      %vm2084 = vmand %vm2075, %vm2078
      %vm2085 = vmand %vm2076, %vm2079
      %vm2086 = vmand %vm2077, %vm2080
      %v2087 = vsel %vm2081, 1, 0
      %v2088 = vsel %vm2082, 1, 0
      %v2089 = vsel %vm2083, 1, 0
      %v2090 = vsel %vm2084, 1, 0
      %v2091 = vsel %vm2085, 1, 0
      %v2092 = vsel %vm2086, 1, 0
      %vm2093 = vcmp.eq.s32.totalorder %v2087, 1
      %vm2094 = vcmp.eq.s32.totalorder %v2088, 1
      %vm2095 = vcmp.eq.s32.totalorder %v2089, 1
      %vm2096 = vcmp.eq.s32.totalorder %v2090, 1
      %vm2097 = vcmp.eq.s32.totalorder %v2091, 1
      %vm2098 = vcmp.eq.s32.totalorder %v2092, 1
      %v2099 = vsel %vm2093, %v2011, 0.0
      %v2100 = vsel %vm2094, %v2012, 0.0
      %v2101 = vsel %vm2095, %v2013, 0.0
      %v2102 = vsel %vm2096, %v2014, 0.0
      %v2103 = vsel %vm2097, %v2015, 0.0
      %v2104 = vsel %vm2098, %v2016, 0.0
      %v2105 = vsel %vm2096, %v2017, 0.0
      %v2106 = vsel %vm2097, %v2018, 0.0
      %v2107 = vsel %vm2098, %v2019, 0.0
      %v2108 = vsel %vm2096, %v2020, 0.0
      %v2109 = vsel %vm2097, %v2021, 0.0
      %v2110 = vsel %vm2098, %v2022, 0.0
      %v2111 = vsel %vm2096, %v2023, 0.0
      %v2112 = vsel %vm2097, %v2024, 0.0
      %v2113 = vsel %vm2098, %v2025, 0.0
      %v2114 = vsel %vm2096, %v2026, 0.0
      %v2115 = vsel %vm2097, %v2027, 0.0
      %v2116 = vsel %vm2098, %v2028, 0.0
      %v2117 = vsel %vm2096, %v2029, 0.0
      %v2118 = vsel %vm2097, %v2030, 0.0
      %v2119 = vsel %vm2098, %v2031, 0.0
      %v2120 = vsel %vm2096, %v2032, 0.0
      %v2121 = vsel %vm2097, %v2033, 0.0
      %v2122 = vsel %vm2098, %v2034, 0.0
      %v2123 = vsel %vm2096, %v2035, 0.0
      %v2124 = vsel %vm2097, %v2036, 0.0
      %v2125 = vsel %vm2098, %v2037, 0.0
      %v2126 = vsel %vm2096, %v2038, 0.0
      %v2127 = vsel %vm2097, %v2039, 0.0
      %v2128 = vsel %vm2098, %v2040, 0.0
      %v2129 = vsel %vm2096, %v2041, 0.0
      %v2130 = vsel %vm2097, %v2042, 0.0
      %v2131 = vsel %vm2098, %v2043, 0.0
      %v2132 = vsel %vm2096, %v2044, 0.0
      %v2133 = vsel %vm2097, %v2045, 0.0
      %v2134 = vsel %vm2098, %v2046, 0.0
      %v2135 = vsel %vm2096, %v2047, 0.0
      %v2136 = vsel %vm2097, %v2048, 0.0
      %v2137 = vsel %vm2098, %v2049, 0.0
      %v2138 = vsel %vm2096, %v2050, 0.0
      %v2139 = vsel %vm2097, %v2051, 0.0
      %v2140 = vsel %vm2098, %v2052, 0.0
      %v2141 = vsel %vm2096, %v2053, 0.0
      %v2142 = vsel %vm2097, %v2054, 0.0
      %v2143 = vsel %vm2098, %v2055, 0.0
      %v2144 = vsel %vm2096, %v2056, 0.0
      %v2145 = vsel %vm2097, %v2057, 0.0
      %v2146 = vsel %vm2098, %v2058, 0.0
      %v2147 = vsel %vm2096, %v2059, 0.0
      %v2148 = vsel %vm2097, %v2060, 0.0
      %v2149 = vsel %vm2098, %v2061, 0.0
      %v2150 = vsel %vm2093, %v2062, 0.0
      %v2151 = vsel %vm2094, %v2063, 0.0
      %v2152 = vsel %vm2095, %v2064, 0.0
      %vm2153 = vcmask 64512
      %v2154 = vsel %vm2153, %v2099, 0.0
      %2155 = vadd.xlane.f32.xlu0 %v2154
      %v2156 = vpop.xlane.xlu0 %2155
      %v2157 = vsel %vm2153, %v2100, 0.0
      %2158 = vadd.xlane.f32.xlu0 %v2157
      %v2159 = vpop.xlane.xlu0 %2158
      %v2160 = vsel %vm2153, %v2101, 0.0
      %2161 = vadd.xlane.f32.xlu0 %v2160
      %v2162 = vpop.xlane.xlu0 %2161
      %v2163 = vsel %vm2153, %v2102, 0.0
      %2164 = vadd.xlane.f32.xlu0 %v2163
      %v2165 = vpop.xlane.xlu0 %2164
      %v2166 = vsel %vm2153, %v2103, 0.0
      %2167 = vadd.xlane.f32.xlu0 %v2166
      %v2168 = vpop.xlane.xlu0 %2167
      %v2169 = vsel %vm2153, %v2104, 0.0
      %2170 = vadd.xlane.f32.xlu0 %v2169
      %v2171 = vpop.xlane.xlu0 %2170
      %v2172 = vsel %vm2153, %v2105, 0.0
      %2173 = vadd.xlane.f32.xlu0 %v2172
      %v2174 = vpop.xlane.xlu0 %2173
      %v2175 = vsel %vm2153, %v2106, 0.0
      %2176 = vadd.xlane.f32.xlu0 %v2175
      %v2177 = vpop.xlane.xlu0 %2176
      %v2178 = vsel %vm2153, %v2107, 0.0
      %2179 = vadd.xlane.f32.xlu0 %v2178
      %v2180 = vpop.xlane.xlu0 %2179
      %v2181 = vsel %vm2153, %v2108, 0.0
      %2182 = vadd.xlane.f32.xlu0 %v2181
      %v2183 = vpop.xlane.xlu0 %2182
      %v2184 = vsel %vm2153, %v2109, 0.0
      %2185 = vadd.xlane.f32.xlu0 %v2184
      %v2186 = vpop.xlane.xlu0 %2185
      %v2187 = vsel %vm2153, %v2110, 0.0
      %2188 = vadd.xlane.f32.xlu0 %v2187
      %v2189 = vpop.xlane.xlu0 %2188
      %v2190 = vsel %vm2153, %v2111, 0.0
      %2191 = vadd.xlane.f32.xlu0 %v2190
      %v2192 = vpop.xlane.xlu0 %2191
      %v2193 = vsel %vm2153, %v2112, 0.0
      %2194 = vadd.xlane.f32.xlu0 %v2193
      %v2195 = vpop.xlane.xlu0 %2194
      %v2196 = vsel %vm2153, %v2113, 0.0
      %2197 = vadd.xlane.f32.xlu0 %v2196
      %v2198 = vpop.xlane.xlu0 %2197
      %v2199 = vsel %vm2153, %v2114, 0.0
      %2200 = vadd.xlane.f32.xlu0 %v2199
      %v2201 = vpop.xlane.xlu0 %2200
      %v2202 = vsel %vm2153, %v2115, 0.0
      %2203 = vadd.xlane.f32.xlu0 %v2202
      %v2204 = vpop.xlane.xlu0 %2203
      %v2205 = vsel %vm2153, %v2116, 0.0
      %2206 = vadd.xlane.f32.xlu0 %v2205
      %v2207 = vpop.xlane.xlu0 %2206
      %v2208 = vsel %vm2153, %v2117, 0.0
      %2209 = vadd.xlane.f32.xlu0 %v2208
      %v2210 = vpop.xlane.xlu0 %2209
      %v2211 = vsel %vm2153, %v2118, 0.0
      %2212 = vadd.xlane.f32.xlu0 %v2211
      %v2213 = vpop.xlane.xlu0 %2212
      %v2214 = vsel %vm2153, %v2119, 0.0
      %2215 = vadd.xlane.f32.xlu0 %v2214
      %v2216 = vpop.xlane.xlu0 %2215
      %v2217 = vsel %vm2153, %v2120, 0.0
      %2218 = vadd.xlane.f32.xlu0 %v2217
      %v2219 = vpop.xlane.xlu0 %2218
      %v2220 = vsel %vm2153, %v2121, 0.0
      %2221 = vadd.xlane.f32.xlu0 %v2220
      %v2222 = vpop.xlane.xlu0 %2221
      %v2223 = vsel %vm2153, %v2122, 0.0
      %2224 = vadd.xlane.f32.xlu0 %v2223
      %v2225 = vpop.xlane.xlu0 %2224
      %v2226 = vsel %vm2153, %v2123, 0.0
      %2227 = vadd.xlane.f32.xlu0 %v2226
      %v2228 = vpop.xlane.xlu0 %2227
      %v2229 = vsel %vm2153, %v2124, 0.0
      %2230 = vadd.xlane.f32.xlu0 %v2229
      %v2231 = vpop.xlane.xlu0 %2230
      %v2232 = vsel %vm2153, %v2125, 0.0
      %2233 = vadd.xlane.f32.xlu0 %v2232
      %v2234 = vpop.xlane.xlu0 %2233
      %v2235 = vsel %vm2153, %v2126, 0.0
      %2236 = vadd.xlane.f32.xlu0 %v2235
      %v2237 = vpop.xlane.xlu0 %2236
      %v2238 = vsel %vm2153, %v2127, 0.0
      %2239 = vadd.xlane.f32.xlu0 %v2238
      %v2240 = vpop.xlane.xlu0 %2239
      %v2241 = vsel %vm2153, %v2128, 0.0
      %2242 = vadd.xlane.f32.xlu0 %v2241
      %v2243 = vpop.xlane.xlu0 %2242
      %v2244 = vsel %vm2153, %v2129, 0.0
      %2245 = vadd.xlane.f32.xlu0 %v2244
      %v2246 = vpop.xlane.xlu0 %2245
      %v2247 = vsel %vm2153, %v2130, 0.0
      %2248 = vadd.xlane.f32.xlu0 %v2247
      %v2249 = vpop.xlane.xlu0 %2248
      %v2250 = vsel %vm2153, %v2131, 0.0
      %2251 = vadd.xlane.f32.xlu0 %v2250
      %v2252 = vpop.xlane.xlu0 %2251
      %v2253 = vsel %vm2153, %v2132, 0.0
      %2254 = vadd.xlane.f32.xlu0 %v2253
      %v2255 = vpop.xlane.xlu0 %2254
      %v2256 = vsel %vm2153, %v2133, 0.0
      %2257 = vadd.xlane.f32.xlu0 %v2256
      %v2258 = vpop.xlane.xlu0 %2257
      %v2259 = vsel %vm2153, %v2134, 0.0
      %2260 = vadd.xlane.f32.xlu0 %v2259
      %v2261 = vpop.xlane.xlu0 %2260
      %v2262 = vsel %vm2153, %v2135, 0.0
      %2263 = vadd.xlane.f32.xlu0 %v2262
      %v2264 = vpop.xlane.xlu0 %2263
      %v2265 = vsel %vm2153, %v2136, 0.0
      %2266 = vadd.xlane.f32.xlu0 %v2265
      %v2267 = vpop.xlane.xlu0 %2266
      %v2268 = vsel %vm2153, %v2137, 0.0
      %2269 = vadd.xlane.f32.xlu0 %v2268
      %v2270 = vpop.xlane.xlu0 %2269
      %v2271 = vsel %vm2153, %v2138, 0.0
      %2272 = vadd.xlane.f32.xlu0 %v2271
      %v2273 = vpop.xlane.xlu0 %2272
      %v2274 = vsel %vm2153, %v2139, 0.0
      %2275 = vadd.xlane.f32.xlu0 %v2274
      %v2276 = vpop.xlane.xlu0 %2275
      %v2277 = vsel %vm2153, %v2140, 0.0
      %2278 = vadd.xlane.f32.xlu0 %v2277
      %v2279 = vpop.xlane.xlu0 %2278
      %v2280 = vsel %vm2153, %v2141, 0.0
      %2281 = vadd.xlane.f32.xlu0 %v2280
      %v2282 = vpop.xlane.xlu0 %2281
      %v2283 = vsel %vm2153, %v2142, 0.0
      %2284 = vadd.xlane.f32.xlu0 %v2283
      %v2285 = vpop.xlane.xlu0 %2284
      %v2286 = vsel %vm2153, %v2143, 0.0
      %2287 = vadd.xlane.f32.xlu0 %v2286
      %v2288 = vpop.xlane.xlu0 %2287
      %v2289 = vsel %vm2153, %v2144, 0.0
      %2290 = vadd.xlane.f32.xlu0 %v2289
      %v2291 = vpop.xlane.xlu0 %2290
      %v2292 = vsel %vm2153, %v2145, 0.0
      %2293 = vadd.xlane.f32.xlu0 %v2292
      %v2294 = vpop.xlane.xlu0 %2293
      %v2295 = vsel %vm2153, %v2146, 0.0
      %2296 = vadd.xlane.f32.xlu0 %v2295
      %v2297 = vpop.xlane.xlu0 %2296
      %v2298 = vsel %vm2153, %v2147, 0.0
      %2299 = vadd.xlane.f32.xlu0 %v2298
      %v2300 = vpop.xlane.xlu0 %2299
      %v2301 = vsel %vm2153, %v2148, 0.0
      %2302 = vadd.xlane.f32.xlu0 %v2301
      %v2303 = vpop.xlane.xlu0 %2302
      %v2304 = vsel %vm2153, %v2149, 0.0
      %2305 = vadd.xlane.f32.xlu0 %v2304
      %v2306 = vpop.xlane.xlu0 %2305
      %v2307 = vsel %vm2153, %v2150, 0.0
      %2308 = vadd.xlane.f32.xlu0 %v2307
      %v2309 = vpop.xlane.xlu0 %2308
      %v2310 = vsel %vm2153, %v2151, 0.0
      %2311 = vadd.xlane.f32.xlu0 %v2310
      %v2312 = vpop.xlane.xlu0 %2311
      %v2313 = vsel %vm2153, %v2152, 0.0
      %2314 = vadd.xlane.f32.xlu0 %v2313
      %v2315 = vpop.xlane.xlu0 %2314
      %v2316 = vmul.f32 %v2099, %v2099
      %v2317 = vmul.f32 %v2100, %v2100
      %v2318 = vmul.f32 %v2101, %v2101
      %v2319 = vmul.f32 %v2102, %v2102
      %v2320 = vmul.f32 %v2103, %v2103
      %v2321 = vmul.f32 %v2104, %v2104
      %v2322 = vmul.f32 %v2105, %v2105
      %v2323 = vmul.f32 %v2106, %v2106
      %v2324 = vmul.f32 %v2107, %v2107
      %v2325 = vmul.f32 %v2108, %v2108
      %v2326 = vmul.f32 %v2109, %v2109
      %v2327 = vmul.f32 %v2110, %v2110
      %v2328 = vmul.f32 %v2111, %v2111
      %v2329 = vmul.f32 %v2112, %v2112
      %v2330 = vmul.f32 %v2113, %v2113
      %v2331 = vmul.f32 %v2114, %v2114
      %v2332 = vmul.f32 %v2115, %v2115
      %v2333 = vmul.f32 %v2116, %v2116
      %v2334 = vmul.f32 %v2117, %v2117
      %v2335 = vmul.f32 %v2118, %v2118
      %v2336 = vmul.f32 %v2119, %v2119
      %v2337 = vmul.f32 %v2120, %v2120
      %v2338 = vmul.f32 %v2121, %v2121
      %v2339 = vmul.f32 %v2122, %v2122
      %v2340 = vmul.f32 %v2123, %v2123
      %v2341 = vmul.f32 %v2124, %v2124
      %v2342 = vmul.f32 %v2125, %v2125
      %v2343 = vmul.f32 %v2126, %v2126
      %v2344 = vmul.f32 %v2127, %v2127
      %v2345 = vmul.f32 %v2128, %v2128
      %v2346 = vmul.f32 %v2129, %v2129
      %v2347 = vmul.f32 %v2130, %v2130
      %v2348 = vmul.f32 %v2131, %v2131
      %v2349 = vmul.f32 %v2132, %v2132
      %v2350 = vmul.f32 %v2133, %v2133
      %v2351 = vmul.f32 %v2134, %v2134
      %v2352 = vmul.f32 %v2135, %v2135
      %v2353 = vmul.f32 %v2136, %v2136
      %v2354 = vmul.f32 %v2137, %v2137
      %v2355 = vmul.f32 %v2138, %v2138
      %v2356 = vmul.f32 %v2139, %v2139
      %v2357 = vmul.f32 %v2140, %v2140
      %v2358 = vmul.f32 %v2141, %v2141
      %v2359 = vmul.f32 %v2142, %v2142
      %v2360 = vmul.f32 %v2143, %v2143
      %v2361 = vmul.f32 %v2144, %v2144
      %v2362 = vmul.f32 %v2145, %v2145
      %v2363 = vmul.f32 %v2146, %v2146
      %v2364 = vmul.f32 %v2147, %v2147
      %v2365 = vmul.f32 %v2148, %v2148
      %v2366 = vmul.f32 %v2149, %v2149
      %v2367 = vmul.f32 %v2150, %v2150
      %v2368 = vmul.f32 %v2151, %v2151
      %v2369 = vmul.f32 %v2152, %v2152
      %v2370 = vsel %vm2153, %v2316, 0.0
      %2371 = vadd.xlane.f32.xlu0 %v2370
      %v2372 = vpop.xlane.xlu0 %2371
      %v2373 = vsel %vm2153, %v2317, 0.0
      %2374 = vadd.xlane.f32.xlu0 %v2373
      %v2375 = vpop.xlane.xlu0 %2374
      %v2376 = vsel %vm2153, %v2318, 0.0
      %2377 = vadd.xlane.f32.xlu0 %v2376
      %v2378 = vpop.xlane.xlu0 %2377
      %v2379 = vsel %vm2153, %v2319, 0.0
      %2380 = vadd.xlane.f32.xlu0 %v2379
      %v2381 = vpop.xlane.xlu0 %2380
      %v2382 = vsel %vm2153, %v2320, 0.0
      %2383 = vadd.xlane.f32.xlu0 %v2382
      %v2384 = vpop.xlane.xlu0 %2383
      %v2385 = vsel %vm2153, %v2321, 0.0
      %2386 = vadd.xlane.f32.xlu0 %v2385
      %v2387 = vpop.xlane.xlu0 %2386
      %v2388 = vsel %vm2153, %v2322, 0.0
      %2389 = vadd.xlane.f32.xlu0 %v2388
      %v2390 = vpop.xlane.xlu0 %2389
      %v2391 = vsel %vm2153, %v2323, 0.0
      %2392 = vadd.xlane.f32.xlu0 %v2391
      %v2393 = vpop.xlane.xlu0 %2392
      %v2394 = vsel %vm2153, %v2324, 0.0
      %2395 = vadd.xlane.f32.xlu0 %v2394
      %v2396 = vpop.xlane.xlu0 %2395
      %v2397 = vsel %vm2153, %v2325, 0.0
      %2398 = vadd.xlane.f32.xlu0 %v2397
      %v2399 = vpop.xlane.xlu0 %2398
      %v2400 = vsel %vm2153, %v2326, 0.0
      %2401 = vadd.xlane.f32.xlu0 %v2400
      %v2402 = vpop.xlane.xlu0 %2401
      %v2403 = vsel %vm2153, %v2327, 0.0
      %2404 = vadd.xlane.f32.xlu0 %v2403
      %v2405 = vpop.xlane.xlu0 %2404
      %v2406 = vsel %vm2153, %v2328, 0.0
      %2407 = vadd.xlane.f32.xlu0 %v2406
      %v2408 = vpop.xlane.xlu0 %2407
      %v2409 = vsel %vm2153, %v2329, 0.0
      %2410 = vadd.xlane.f32.xlu0 %v2409
      %v2411 = vpop.xlane.xlu0 %2410
      %v2412 = vsel %vm2153, %v2330, 0.0
      %2413 = vadd.xlane.f32.xlu0 %v2412
      %v2414 = vpop.xlane.xlu0 %2413
      %v2415 = vsel %vm2153, %v2331, 0.0
      %2416 = vadd.xlane.f32.xlu0 %v2415
      %v2417 = vpop.xlane.xlu0 %2416
      %v2418 = vsel %vm2153, %v2332, 0.0
      %2419 = vadd.xlane.f32.xlu0 %v2418
      %v2420 = vpop.xlane.xlu0 %2419
      %v2421 = vsel %vm2153, %v2333, 0.0
      %2422 = vadd.xlane.f32.xlu0 %v2421
      %v2423 = vpop.xlane.xlu0 %2422
      %v2424 = vsel %vm2153, %v2334, 0.0
      %2425 = vadd.xlane.f32.xlu0 %v2424
      %v2426 = vpop.xlane.xlu0 %2425
      %v2427 = vsel %vm2153, %v2335, 0.0
      %2428 = vadd.xlane.f32.xlu0 %v2427
      %v2429 = vpop.xlane.xlu0 %2428
      %v2430 = vsel %vm2153, %v2336, 0.0
      %2431 = vadd.xlane.f32.xlu0 %v2430
      %v2432 = vpop.xlane.xlu0 %2431
      %v2433 = vsel %vm2153, %v2337, 0.0
      %2434 = vadd.xlane.f32.xlu0 %v2433
      %v2435 = vpop.xlane.xlu0 %2434
      %v2436 = vsel %vm2153, %v2338, 0.0
      %2437 = vadd.xlane.f32.xlu0 %v2436
      %v2438 = vpop.xlane.xlu0 %2437
      %v2439 = vsel %vm2153, %v2339, 0.0
      %2440 = vadd.xlane.f32.xlu0 %v2439
      %v2441 = vpop.xlane.xlu0 %2440
      %v2442 = vsel %vm2153, %v2340, 0.0
      %2443 = vadd.xlane.f32.xlu0 %v2442
      %v2444 = vpop.xlane.xlu0 %2443
      %v2445 = vsel %vm2153, %v2341, 0.0
      %2446 = vadd.xlane.f32.xlu0 %v2445
      %v2447 = vpop.xlane.xlu0 %2446
      %v2448 = vsel %vm2153, %v2342, 0.0
      %2449 = vadd.xlane.f32.xlu0 %v2448
      %v2450 = vpop.xlane.xlu0 %2449
      %v2451 = vsel %vm2153, %v2343, 0.0
      %2452 = vadd.xlane.f32.xlu0 %v2451
      %v2453 = vpop.xlane.xlu0 %2452
      %v2454 = vsel %vm2153, %v2344, 0.0
      %2455 = vadd.xlane.f32.xlu0 %v2454
      %v2456 = vpop.xlane.xlu0 %2455
      %v2457 = vsel %vm2153, %v2345, 0.0
      %2458 = vadd.xlane.f32.xlu0 %v2457
      %v2459 = vpop.xlane.xlu0 %2458
      %v2460 = vsel %vm2153, %v2346, 0.0
      %2461 = vadd.xlane.f32.xlu0 %v2460
      %v2462 = vpop.xlane.xlu0 %2461
      %v2463 = vsel %vm2153, %v2347, 0.0
      %2464 = vadd.xlane.f32.xlu0 %v2463
      %v2465 = vpop.xlane.xlu0 %2464
      %v2466 = vsel %vm2153, %v2348, 0.0
      %2467 = vadd.xlane.f32.xlu0 %v2466
      %v2468 = vpop.xlane.xlu0 %2467
      %v2469 = vsel %vm2153, %v2349, 0.0
      %2470 = vadd.xlane.f32.xlu0 %v2469
      %v2471 = vpop.xlane.xlu0 %2470
      %v2472 = vsel %vm2153, %v2350, 0.0
      %2473 = vadd.xlane.f32.xlu0 %v2472
      %v2474 = vpop.xlane.xlu0 %2473
      %v2475 = vsel %vm2153, %v2351, 0.0
      %2476 = vadd.xlane.f32.xlu0 %v2475
      %v2477 = vpop.xlane.xlu0 %2476
      %v2478 = vsel %vm2153, %v2352, 0.0
      %2479 = vadd.xlane.f32.xlu0 %v2478
      %v2480 = vpop.xlane.xlu0 %2479
      %v2481 = vsel %vm2153, %v2353, 0.0
      %2482 = vadd.xlane.f32.xlu0 %v2481
      %v2483 = vpop.xlane.xlu0 %2482
      %v2484 = vsel %vm2153, %v2354, 0.0
      %2485 = vadd.xlane.f32.xlu0 %v2484
      %v2486 = vpop.xlane.xlu0 %2485
      %v2487 = vsel %vm2153, %v2355, 0.0
      %2488 = vadd.xlane.f32.xlu0 %v2487
      %v2489 = vpop.xlane.xlu0 %2488
      %v2490 = vsel %vm2153, %v2356, 0.0
      %2491 = vadd.xlane.f32.xlu0 %v2490
      %v2492 = vpop.xlane.xlu0 %2491
      %v2493 = vsel %vm2153, %v2357, 0.0
      %2494 = vadd.xlane.f32.xlu0 %v2493
      %v2495 = vpop.xlane.xlu0 %2494
      %v2496 = vsel %vm2153, %v2358, 0.0
      %2497 = vadd.xlane.f32.xlu0 %v2496
      %v2498 = vpop.xlane.xlu0 %2497
      %v2499 = vsel %vm2153, %v2359, 0.0
      %2500 = vadd.xlane.f32.xlu0 %v2499
      %v2501 = vpop.xlane.xlu0 %2500
      %v2502 = vsel %vm2153, %v2360, 0.0
      %2503 = vadd.xlane.f32.xlu0 %v2502
      %v2504 = vpop.xlane.xlu0 %2503
      %v2505 = vsel %vm2153, %v2361, 0.0
      %2506 = vadd.xlane.f32.xlu0 %v2505
      %v2507 = vpop.xlane.xlu0 %2506
      %v2508 = vsel %vm2153, %v2362, 0.0
      %2509 = vadd.xlane.f32.xlu0 %v2508
      %v2510 = vpop.xlane.xlu0 %2509
      %v2511 = vsel %vm2153, %v2363, 0.0
      %2512 = vadd.xlane.f32.xlu0 %v2511
      %v2513 = vpop.xlane.xlu0 %2512
      %v2514 = vsel %vm2153, %v2364, 0.0
      %2515 = vadd.xlane.f32.xlu0 %v2514
      %v2516 = vpop.xlane.xlu0 %2515
      %v2517 = vsel %vm2153, %v2365, 0.0
      %2518 = vadd.xlane.f32.xlu0 %v2517
      %v2519 = vpop.xlane.xlu0 %2518
      %v2520 = vsel %vm2153, %v2366, 0.0
      %2521 = vadd.xlane.f32.xlu0 %v2520
      %v2522 = vpop.xlane.xlu0 %2521
      %v2523 = vsel %vm2153, %v2367, 0.0
      %2524 = vadd.xlane.f32.xlu0 %v2523
      %v2525 = vpop.xlane.xlu0 %2524
      %v2526 = vsel %vm2153, %v2368, 0.0
      %2527 = vadd.xlane.f32.xlu0 %v2526
      %v2528 = vpop.xlane.xlu0 %2527
      %v2529 = vsel %vm2153, %v2369, 0.0
      %2530 = vadd.xlane.f32.xlu0 %v2529
      %v2531 = vpop.xlane.xlu0 %2530
      %vm2586 = vcmask 1046528
      %v2587 = vrot.slane %v2156, 1
      %v2588 = vrot.slane %v2159, 1
      %v2589 = vsel %vm2586, %v2587, %v2588
      %v2590 = vrot.slane %v2162, 1
      %v2591 = vsel %vm2586, %v2588, %v2590
      %v2592 = vrot.slane %v2165, 1
      %v2593 = vrot.slane %v2168, 1
      %v2594 = vsel %vm2586, %v2592, %v2593
      %v2595 = vrot.slane %v2171, 1
      %v2596 = vsel %vm2586, %v2593, %v2595
      %v2597 = vrot.slane %v2174, 1
      %v2598 = vrot.slane %v2177, 1
      %v2599 = vsel %vm2586, %v2597, %v2598
      %v2600 = vrot.slane %v2180, 1
      %v2601 = vsel %vm2586, %v2598, %v2600
      %v2602 = vrot.slane %v2183, 1
      %v2603 = vrot.slane %v2186, 1
      %v2604 = vsel %vm2586, %v2602, %v2603
      %v2605 = vrot.slane %v2189, 1
      %v2606 = vsel %vm2586, %v2603, %v2605
      %v2607 = vrot.slane %v2192, 1
      %v2608 = vrot.slane %v2195, 1
      %v2609 = vsel %vm2586, %v2607, %v2608
      %v2610 = vrot.slane %v2198, 1
      %v2611 = vsel %vm2586, %v2608, %v2610
      %v2612 = vrot.slane %v2201, 1
      %v2613 = vrot.slane %v2204, 1
      %v2614 = vsel %vm2586, %v2612, %v2613
      %v2615 = vrot.slane %v2207, 1
      %v2616 = vsel %vm2586, %v2613, %v2615
      %v2617 = vrot.slane %v2210, 1
      %v2618 = vrot.slane %v2213, 1
      %v2619 = vsel %vm2586, %v2617, %v2618
      %v2620 = vrot.slane %v2216, 1
      %v2621 = vsel %vm2586, %v2618, %v2620
      %v2622 = vrot.slane %v2219, 1
      %v2623 = vrot.slane %v2222, 1
      %v2624 = vsel %vm2586, %v2622, %v2623
      %v2625 = vrot.slane %v2225, 1
      %v2626 = vsel %vm2586, %v2623, %v2625
      %v2627 = vrot.slane %v2228, 1
      %v2628 = vrot.slane %v2231, 1
      %v2629 = vsel %vm2586, %v2627, %v2628
      %v2630 = vrot.slane %v2234, 1
      %v2631 = vsel %vm2586, %v2628, %v2630
      %v2632 = vrot.slane %v2237, 1
      %v2633 = vrot.slane %v2240, 1
      %v2634 = vsel %vm2586, %v2632, %v2633
      %v2635 = vrot.slane %v2243, 1
      %v2636 = vsel %vm2586, %v2633, %v2635
      %v2637 = vrot.slane %v2246, 1
      %v2638 = vrot.slane %v2249, 1
      %v2639 = vsel %vm2586, %v2637, %v2638
      %v2640 = vrot.slane %v2252, 1
      %v2641 = vsel %vm2586, %v2638, %v2640
      %v2642 = vrot.slane %v2255, 1
      %v2643 = vrot.slane %v2258, 1
      %v2644 = vsel %vm2586, %v2642, %v2643
      %v2645 = vrot.slane %v2261, 1
      %v2646 = vsel %vm2586, %v2643, %v2645
      %v2647 = vrot.slane %v2264, 1
      %v2648 = vrot.slane %v2267, 1
      %v2649 = vsel %vm2586, %v2647, %v2648
      %v2650 = vrot.slane %v2270, 1
      %v2651 = vsel %vm2586, %v2648, %v2650
      %v2652 = vrot.slane %v2273, 1
      %v2653 = vrot.slane %v2276, 1
      %v2654 = vsel %vm2586, %v2652, %v2653
      %v2655 = vrot.slane %v2279, 1
      %v2656 = vsel %vm2586, %v2653, %v2655
      %v2657 = vrot.slane %v2282, 1
      %v2658 = vrot.slane %v2285, 1
      %v2659 = vsel %vm2586, %v2657, %v2658
      %v2660 = vrot.slane %v2288, 1
      %v2661 = vsel %vm2586, %v2658, %v2660
      %v2662 = vrot.slane %v2291, 1
      %v2663 = vrot.slane %v2294, 1
      %v2664 = vsel %vm2586, %v2662, %v2663
      %v2665 = vrot.slane %v2297, 1
      %v2666 = vsel %vm2586, %v2663, %v2665
      %v2667 = vrot.slane %v2300, 1
      %v2668 = vrot.slane %v2303, 1
      %v2669 = vsel %vm2586, %v2667, %v2668
      %v2670 = vrot.slane %v2306, 1
      %v2671 = vsel %vm2586, %v2668, %v2670
      %v2672 = vrot.slane %v2309, 1
      %v2673 = vrot.slane %v2312, 1
      %v2674 = vsel %vm2586, %v2672, %v2673
      %v2675 = vrot.slane %v2315, 1
      %v2676 = vsel %vm2586, %v2673, %v2675
      %v2713 = vadd.f32 %v2156, %v2589
      %v2714 = vadd.f32 %v2159, %v2591
      %v2715 = vadd.f32 %v2165, %v2594
      %v2716 = vadd.f32 %v2168, %v2596
      %v2717 = vadd.f32 %v2174, %v2599
      %v2718 = vadd.f32 %v2177, %v2601
      %v2719 = vadd.f32 %v2183, %v2604
      %v2720 = vadd.f32 %v2186, %v2606
      %v2721 = vadd.f32 %v2192, %v2609
      %v2722 = vadd.f32 %v2195, %v2611
      %v2723 = vadd.f32 %v2201, %v2614
      %v2724 = vadd.f32 %v2204, %v2616
      %v2725 = vadd.f32 %v2210, %v2619
      %v2726 = vadd.f32 %v2213, %v2621
      %v2727 = vadd.f32 %v2219, %v2624
      %v2728 = vadd.f32 %v2222, %v2626
      %v2729 = vadd.f32 %v2228, %v2629
      %v2730 = vadd.f32 %v2231, %v2631
      %v2731 = vadd.f32 %v2237, %v2634
      %v2732 = vadd.f32 %v2240, %v2636
      %v2733 = vadd.f32 %v2246, %v2639
      %v2734 = vadd.f32 %v2249, %v2641
      %v2735 = vadd.f32 %v2255, %v2644
      %v2736 = vadd.f32 %v2258, %v2646
      %v2737 = vadd.f32 %v2264, %v2649
      %v2738 = vadd.f32 %v2267, %v2651
      %v2739 = vadd.f32 %v2273, %v2654
      %v2740 = vadd.f32 %v2276, %v2656
      %v2741 = vadd.f32 %v2282, %v2659
      %v2742 = vadd.f32 %v2285, %v2661
      %v2743 = vadd.f32 %v2291, %v2664
      %v2744 = vadd.f32 %v2294, %v2666
      %v2745 = vadd.f32 %v2300, %v2669
      %v2746 = vadd.f32 %v2303, %v2671
      %v2747 = vadd.f32 %v2309, %v2674
      %v2748 = vadd.f32 %v2312, %v2676
      %vm2749 = vcmask 1045504
      %v2750 = vrot.slane %v2156, 2
      %v2751 = vrot.slane %v2159, 2
      %v2752 = vsel %vm2749, %v2750, %v2751
      %v2753 = vrot.slane %v2162, 2
      %v2754 = vsel %vm2749, %v2751, %v2753
      %v2755 = vrot.slane %v2165, 2
      %v2756 = vrot.slane %v2168, 2
      %v2757 = vsel %vm2749, %v2755, %v2756
      %v2758 = vrot.slane %v2171, 2
      %v2759 = vsel %vm2749, %v2756, %v2758
      %v2760 = vrot.slane %v2174, 2
      %v2761 = vrot.slane %v2177, 2
      %v2762 = vsel %vm2749, %v2760, %v2761
      %v2763 = vrot.slane %v2180, 2
      %v2764 = vsel %vm2749, %v2761, %v2763
      %v2765 = vrot.slane %v2183, 2
      %v2766 = vrot.slane %v2186, 2
      %v2767 = vsel %vm2749, %v2765, %v2766
      %v2768 = vrot.slane %v2189, 2
      %v2769 = vsel %vm2749, %v2766, %v2768
      %v2770 = vrot.slane %v2192, 2
      %v2771 = vrot.slane %v2195, 2
      %v2772 = vsel %vm2749, %v2770, %v2771
      %v2773 = vrot.slane %v2198, 2
      %v2774 = vsel %vm2749, %v2771, %v2773
      %v2775 = vrot.slane %v2201, 2
      %v2776 = vrot.slane %v2204, 2
      %v2777 = vsel %vm2749, %v2775, %v2776
      %v2778 = vrot.slane %v2207, 2
      %v2779 = vsel %vm2749, %v2776, %v2778
      %v2780 = vrot.slane %v2210, 2
      %v2781 = vrot.slane %v2213, 2
      %v2782 = vsel %vm2749, %v2780, %v2781
      %v2783 = vrot.slane %v2216, 2
      %v2784 = vsel %vm2749, %v2781, %v2783
      %v2785 = vrot.slane %v2219, 2
      %v2786 = vrot.slane %v2222, 2
      %v2787 = vsel %vm2749, %v2785, %v2786
      %v2788 = vrot.slane %v2225, 2
      %v2789 = vsel %vm2749, %v2786, %v2788
      %v2790 = vrot.slane %v2228, 2
      %v2791 = vrot.slane %v2231, 2
      %v2792 = vsel %vm2749, %v2790, %v2791
      %v2793 = vrot.slane %v2234, 2
      %v2794 = vsel %vm2749, %v2791, %v2793
      %v2795 = vrot.slane %v2237, 2
      %v2796 = vrot.slane %v2240, 2
      %v2797 = vsel %vm2749, %v2795, %v2796
      %v2798 = vrot.slane %v2243, 2
      %v2799 = vsel %vm2749, %v2796, %v2798
      %v2800 = vrot.slane %v2246, 2
      %v2801 = vrot.slane %v2249, 2
      %v2802 = vsel %vm2749, %v2800, %v2801
      %v2803 = vrot.slane %v2252, 2
      %v2804 = vsel %vm2749, %v2801, %v2803
      %v2805 = vrot.slane %v2255, 2
      %v2806 = vrot.slane %v2258, 2
      %v2807 = vsel %vm2749, %v2805, %v2806
      %v2808 = vrot.slane %v2261, 2
      %v2809 = vsel %vm2749, %v2806, %v2808
      %v2810 = vrot.slane %v2264, 2
      %v2811 = vrot.slane %v2267, 2
      %v2812 = vsel %vm2749, %v2810, %v2811
      %v2813 = vrot.slane %v2270, 2
      %v2814 = vsel %vm2749, %v2811, %v2813
      %v2815 = vrot.slane %v2273, 2
      %v2816 = vrot.slane %v2276, 2
      %v2817 = vsel %vm2749, %v2815, %v2816
      %v2818 = vrot.slane %v2279, 2
      %v2819 = vsel %vm2749, %v2816, %v2818
      %v2820 = vrot.slane %v2282, 2
      %v2821 = vrot.slane %v2285, 2
      %v2822 = vsel %vm2749, %v2820, %v2821
      %v2823 = vrot.slane %v2288, 2
      %v2824 = vsel %vm2749, %v2821, %v2823
      %v2825 = vrot.slane %v2291, 2
      %v2826 = vrot.slane %v2294, 2
      %v2827 = vsel %vm2749, %v2825, %v2826
      %v2828 = vrot.slane %v2297, 2
      %v2829 = vsel %vm2749, %v2826, %v2828
      %v2830 = vrot.slane %v2300, 2
      %v2831 = vrot.slane %v2303, 2
      %v2832 = vsel %vm2749, %v2830, %v2831
      %v2833 = vrot.slane %v2306, 2
      %v2834 = vsel %vm2749, %v2831, %v2833
      %v2835 = vrot.slane %v2309, 2
      %v2836 = vrot.slane %v2312, 2
      %v2837 = vsel %vm2749, %v2835, %v2836
      %v2838 = vrot.slane %v2315, 2
      %v2839 = vsel %vm2749, %v2836, %v2838
      %v2876 = vadd.f32 %v2713, %v2752
      %v2877 = vadd.f32 %v2714, %v2754
      %v2878 = vadd.f32 %v2715, %v2757
      %v2879 = vadd.f32 %v2716, %v2759
      %v2880 = vadd.f32 %v2717, %v2762
      %v2881 = vadd.f32 %v2718, %v2764
      %v2882 = vadd.f32 %v2719, %v2767
      %v2883 = vadd.f32 %v2720, %v2769
      %v2884 = vadd.f32 %v2721, %v2772
      %v2885 = vadd.f32 %v2722, %v2774
      %v2886 = vadd.f32 %v2723, %v2777
      %v2887 = vadd.f32 %v2724, %v2779
      %v2888 = vadd.f32 %v2725, %v2782
      %v2889 = vadd.f32 %v2726, %v2784
      %v2890 = vadd.f32 %v2727, %v2787
      %v2891 = vadd.f32 %v2728, %v2789
      %v2892 = vadd.f32 %v2729, %v2792
      %v2893 = vadd.f32 %v2730, %v2794
      %v2894 = vadd.f32 %v2731, %v2797
      %v2895 = vadd.f32 %v2732, %v2799
      %v2896 = vadd.f32 %v2733, %v2802
      %v2897 = vadd.f32 %v2734, %v2804
      %v2898 = vadd.f32 %v2735, %v2807
      %v2899 = vadd.f32 %v2736, %v2809
      %v2900 = vadd.f32 %v2737, %v2812
      %v2901 = vadd.f32 %v2738, %v2814
      %v2902 = vadd.f32 %v2739, %v2817
      %v2903 = vadd.f32 %v2740, %v2819
      %v2904 = vadd.f32 %v2741, %v2822
      %v2905 = vadd.f32 %v2742, %v2824
      %v2906 = vadd.f32 %v2743, %v2827
      %v2907 = vadd.f32 %v2744, %v2829
      %v2908 = vadd.f32 %v2745, %v2832
      %v2909 = vadd.f32 %v2746, %v2834
      %v2910 = vadd.f32 %v2747, %v2837
      %v2911 = vadd.f32 %v2748, %v2839
      %v2912 = vadd.f32 %v2876, %v2878
      %v2913 = vadd.f32 %v2877, %v2879
      %v2914 = vadd.f32 %v2878, %v2880
      %v2915 = vadd.f32 %v2879, %v2881
      %v2916 = vadd.f32 %v2880, %v2882
      %v2917 = vadd.f32 %v2881, %v2883
      %v2918 = vadd.f32 %v2882, %v2884
      %v2919 = vadd.f32 %v2883, %v2885
      %v2920 = vadd.f32 %v2884, %v2886
      %v2921 = vadd.f32 %v2885, %v2887
      %v2922 = vadd.f32 %v2886, %v2888
      %v2923 = vadd.f32 %v2887, %v2889
      %v2924 = vadd.f32 %v2888, %v2890
      %v2925 = vadd.f32 %v2889, %v2891
      %v2926 = vadd.f32 %v2890, %v2892
      %v2927 = vadd.f32 %v2891, %v2893
      %v2928 = vadd.f32 %v2892, %v2894
      %v2929 = vadd.f32 %v2893, %v2895
      %v2930 = vadd.f32 %v2894, %v2896
      %v2931 = vadd.f32 %v2895, %v2897
      %v2932 = vadd.f32 %v2896, %v2898
      %v2933 = vadd.f32 %v2897, %v2899
      %v2934 = vadd.f32 %v2898, %v2900
      %v2935 = vadd.f32 %v2899, %v2901
      %v2936 = vadd.f32 %v2900, %v2902
      %v2937 = vadd.f32 %v2901, %v2903
      %v2938 = vadd.f32 %v2902, %v2904
      %v2939 = vadd.f32 %v2903, %v2905
      %v2940 = vadd.f32 %v2904, %v2906
      %v2941 = vadd.f32 %v2905, %v2907
      %v2942 = vadd.f32 %v2906, %v2908
      %v2943 = vadd.f32 %v2907, %v2909
      %v2944 = vadd.f32 %v2912, %v2880
      %v2945 = vadd.f32 %v2913, %v2881
      %v2946 = vadd.f32 %v2914, %v2882
      %v2947 = vadd.f32 %v2915, %v2883
      %v2948 = vadd.f32 %v2916, %v2884
      %v2949 = vadd.f32 %v2917, %v2885
      %v2950 = vadd.f32 %v2918, %v2886
      %v2951 = vadd.f32 %v2919, %v2887
      %v2952 = vadd.f32 %v2920, %v2888
      %v2953 = vadd.f32 %v2921, %v2889
      %v2954 = vadd.f32 %v2922, %v2890
      %v2955 = vadd.f32 %v2923, %v2891
      %v2956 = vadd.f32 %v2924, %v2892
      %v2957 = vadd.f32 %v2925, %v2893
      %v2958 = vadd.f32 %v2926, %v2894
      %v2959 = vadd.f32 %v2927, %v2895
      %v2960 = vadd.f32 %v2928, %v2896
      %v2961 = vadd.f32 %v2929, %v2897
      %v2962 = vadd.f32 %v2930, %v2898
      %v2963 = vadd.f32 %v2931, %v2899
      %v2964 = vadd.f32 %v2932, %v2900
      %v2965 = vadd.f32 %v2933, %v2901
      %v2966 = vadd.f32 %v2934, %v2902
      %v2967 = vadd.f32 %v2935, %v2903
      %v2968 = vadd.f32 %v2936, %v2904
      %v2969 = vadd.f32 %v2937, %v2905
      %v2970 = vadd.f32 %v2938, %v2906
      %v2971 = vadd.f32 %v2939, %v2907
      %v2972 = vadd.f32 %v2940, %v2908
      %v2973 = vadd.f32 %v2941, %v2909
      %v2974 = vadd.f32 %v2942, %v2910
      %v2975 = vadd.f32 %v2943, %v2911
      %v3030 = vrot.slane %v2372, 1
      %v3031 = vrot.slane %v2375, 1
      %v3032 = vsel %vm2586, %v3030, %v3031
      %v3033 = vrot.slane %v2378, 1
      %v3034 = vsel %vm2586, %v3031, %v3033
      %v3035 = vrot.slane %v2381, 1
      %v3036 = vrot.slane %v2384, 1
      %v3037 = vsel %vm2586, %v3035, %v3036
      %v3038 = vrot.slane %v2387, 1
      %v3039 = vsel %vm2586, %v3036, %v3038
      %v3040 = vrot.slane %v2390, 1
      %v3041 = vrot.slane %v2393, 1
      %v3042 = vsel %vm2586, %v3040, %v3041
      %v3043 = vrot.slane %v2396, 1
      %v3044 = vsel %vm2586, %v3041, %v3043
      %v3045 = vrot.slane %v2399, 1
      %v3046 = vrot.slane %v2402, 1
      %v3047 = vsel %vm2586, %v3045, %v3046
      %v3048 = vrot.slane %v2405, 1
      %v3049 = vsel %vm2586, %v3046, %v3048
      %v3050 = vrot.slane %v2408, 1
      %v3051 = vrot.slane %v2411, 1
      %v3052 = vsel %vm2586, %v3050, %v3051
      %v3053 = vrot.slane %v2414, 1
      %v3054 = vsel %vm2586, %v3051, %v3053
      %v3055 = vrot.slane %v2417, 1
      %v3056 = vrot.slane %v2420, 1
      %v3057 = vsel %vm2586, %v3055, %v3056
      %v3058 = vrot.slane %v2423, 1
      %v3059 = vsel %vm2586, %v3056, %v3058
      %v3060 = vrot.slane %v2426, 1
      %v3061 = vrot.slane %v2429, 1
      %v3062 = vsel %vm2586, %v3060, %v3061
      %v3063 = vrot.slane %v2432, 1
      %v3064 = vsel %vm2586, %v3061, %v3063
      %v3065 = vrot.slane %v2435, 1
      %v3066 = vrot.slane %v2438, 1
      %v3067 = vsel %vm2586, %v3065, %v3066
      %v3068 = vrot.slane %v2441, 1
      %v3069 = vsel %vm2586, %v3066, %v3068
      %v3070 = vrot.slane %v2444, 1
      %v3071 = vrot.slane %v2447, 1
      %v3072 = vsel %vm2586, %v3070, %v3071
      %v3073 = vrot.slane %v2450, 1
      %v3074 = vsel %vm2586, %v3071, %v3073
      %v3075 = vrot.slane %v2453, 1
      %v3076 = vrot.slane %v2456, 1
      %v3077 = vsel %vm2586, %v3075, %v3076
      %v3078 = vrot.slane %v2459, 1
      %v3079 = vsel %vm2586, %v3076, %v3078
      %v3080 = vrot.slane %v2462, 1
      %v3081 = vrot.slane %v2465, 1
      %v3082 = vsel %vm2586, %v3080, %v3081
      %v3083 = vrot.slane %v2468, 1
      %v3084 = vsel %vm2586, %v3081, %v3083
      %v3085 = vrot.slane %v2471, 1
      %v3086 = vrot.slane %v2474, 1
      %v3087 = vsel %vm2586, %v3085, %v3086
      %v3088 = vrot.slane %v2477, 1
      %v3089 = vsel %vm2586, %v3086, %v3088
      %v3090 = vrot.slane %v2480, 1
      %v3091 = vrot.slane %v2483, 1
      %v3092 = vsel %vm2586, %v3090, %v3091
      %v3093 = vrot.slane %v2486, 1
      %v3094 = vsel %vm2586, %v3091, %v3093
      %v3095 = vrot.slane %v2489, 1
      %v3096 = vrot.slane %v2492, 1
      %v3097 = vsel %vm2586, %v3095, %v3096
      %v3098 = vrot.slane %v2495, 1
      %v3099 = vsel %vm2586, %v3096, %v3098
      %v3100 = vrot.slane %v2498, 1
      %v3101 = vrot.slane %v2501, 1
      %v3102 = vsel %vm2586, %v3100, %v3101
      %v3103 = vrot.slane %v2504, 1
      %v3104 = vsel %vm2586, %v3101, %v3103
      %v3105 = vrot.slane %v2507, 1
      %v3106 = vrot.slane %v2510, 1
      %v3107 = vsel %vm2586, %v3105, %v3106
      %v3108 = vrot.slane %v2513, 1
      %v3109 = vsel %vm2586, %v3106, %v3108
      %v3110 = vrot.slane %v2516, 1
      %v3111 = vrot.slane %v2519, 1
      %v3112 = vsel %vm2586, %v3110, %v3111
      %v3113 = vrot.slane %v2522, 1
      %v3114 = vsel %vm2586, %v3111, %v3113
      %v3115 = vrot.slane %v2525, 1
      %v3116 = vrot.slane %v2528, 1
      %v3117 = vsel %vm2586, %v3115, %v3116
      %v3118 = vrot.slane %v2531, 1
      %v3119 = vsel %vm2586, %v3116, %v3118
      %v3156 = vadd.f32 %v2372, %v3032
      %v3157 = vadd.f32 %v2375, %v3034
      %v3158 = vadd.f32 %v2381, %v3037
      %v3159 = vadd.f32 %v2384, %v3039
      %v3160 = vadd.f32 %v2390, %v3042
      %v3161 = vadd.f32 %v2393, %v3044
      %v3162 = vadd.f32 %v2399, %v3047
      %v3163 = vadd.f32 %v2402, %v3049
      %v3164 = vadd.f32 %v2408, %v3052
      %v3165 = vadd.f32 %v2411, %v3054
      %v3166 = vadd.f32 %v2417, %v3057
      %v3167 = vadd.f32 %v2420, %v3059
      %v3168 = vadd.f32 %v2426, %v3062
      %v3169 = vadd.f32 %v2429, %v3064
      %v3170 = vadd.f32 %v2435, %v3067
      %v3171 = vadd.f32 %v2438, %v3069
      %v3172 = vadd.f32 %v2444, %v3072
      %v3173 = vadd.f32 %v2447, %v3074
      %v3174 = vadd.f32 %v2453, %v3077
      %v3175 = vadd.f32 %v2456, %v3079
      %v3176 = vadd.f32 %v2462, %v3082
      %v3177 = vadd.f32 %v2465, %v3084
      %v3178 = vadd.f32 %v2471, %v3087
      %v3179 = vadd.f32 %v2474, %v3089
      %v3180 = vadd.f32 %v2480, %v3092
      %v3181 = vadd.f32 %v2483, %v3094
      %v3182 = vadd.f32 %v2489, %v3097
      %v3183 = vadd.f32 %v2492, %v3099
      %v3184 = vadd.f32 %v2498, %v3102
      %v3185 = vadd.f32 %v2501, %v3104
      %v3186 = vadd.f32 %v2507, %v3107
      %v3187 = vadd.f32 %v2510, %v3109
      %v3188 = vadd.f32 %v2516, %v3112
      %v3189 = vadd.f32 %v2519, %v3114
      %v3190 = vadd.f32 %v2525, %v3117
      %v3191 = vadd.f32 %v2528, %v3119
      %v3192 = vrot.slane %v2372, 2
      %v3193 = vrot.slane %v2375, 2
      %v3194 = vsel %vm2749, %v3192, %v3193
      %v3195 = vrot.slane %v2378, 2
      %v3196 = vsel %vm2749, %v3193, %v3195
      %v3197 = vrot.slane %v2381, 2
      %v3198 = vrot.slane %v2384, 2
      %v3199 = vsel %vm2749, %v3197, %v3198
      %v3200 = vrot.slane %v2387, 2
      %v3201 = vsel %vm2749, %v3198, %v3200
      %v3202 = vrot.slane %v2390, 2
      %v3203 = vrot.slane %v2393, 2
      %v3204 = vsel %vm2749, %v3202, %v3203
      %v3205 = vrot.slane %v2396, 2
      %v3206 = vsel %vm2749, %v3203, %v3205
      %v3207 = vrot.slane %v2399, 2
      %v3208 = vrot.slane %v2402, 2
      %v3209 = vsel %vm2749, %v3207, %v3208
      %v3210 = vrot.slane %v2405, 2
      %v3211 = vsel %vm2749, %v3208, %v3210
      %v3212 = vrot.slane %v2408, 2
      %v3213 = vrot.slane %v2411, 2
      %v3214 = vsel %vm2749, %v3212, %v3213
      %v3215 = vrot.slane %v2414, 2
      %v3216 = vsel %vm2749, %v3213, %v3215
      %v3217 = vrot.slane %v2417, 2
      %v3218 = vrot.slane %v2420, 2
      %v3219 = vsel %vm2749, %v3217, %v3218
      %v3220 = vrot.slane %v2423, 2
      %v3221 = vsel %vm2749, %v3218, %v3220
      %v3222 = vrot.slane %v2426, 2
      %v3223 = vrot.slane %v2429, 2
      %v3224 = vsel %vm2749, %v3222, %v3223
      %v3225 = vrot.slane %v2432, 2
      %v3226 = vsel %vm2749, %v3223, %v3225
      %v3227 = vrot.slane %v2435, 2
      %v3228 = vrot.slane %v2438, 2
      %v3229 = vsel %vm2749, %v3227, %v3228
      %v3230 = vrot.slane %v2441, 2
      %v3231 = vsel %vm2749, %v3228, %v3230
      %v3232 = vrot.slane %v2444, 2
      %v3233 = vrot.slane %v2447, 2
      %v3234 = vsel %vm2749, %v3232, %v3233
      %v3235 = vrot.slane %v2450, 2
      %v3236 = vsel %vm2749, %v3233, %v3235
      %v3237 = vrot.slane %v2453, 2
      %v3238 = vrot.slane %v2456, 2
      %v3239 = vsel %vm2749, %v3237, %v3238
      %v3240 = vrot.slane %v2459, 2
      %v3241 = vsel %vm2749, %v3238, %v3240
      %v3242 = vrot.slane %v2462, 2
      %v3243 = vrot.slane %v2465, 2
      %v3244 = vsel %vm2749, %v3242, %v3243
      %v3245 = vrot.slane %v2468, 2
      %v3246 = vsel %vm2749, %v3243, %v3245
      %v3247 = vrot.slane %v2471, 2
      %v3248 = vrot.slane %v2474, 2
      %v3249 = vsel %vm2749, %v3247, %v3248
      %v3250 = vrot.slane %v2477, 2
      %v3251 = vsel %vm2749, %v3248, %v3250
      %v3252 = vrot.slane %v2480, 2
      %v3253 = vrot.slane %v2483, 2
      %v3254 = vsel %vm2749, %v3252, %v3253
      %v3255 = vrot.slane %v2486, 2
      %v3256 = vsel %vm2749, %v3253, %v3255
      %v3257 = vrot.slane %v2489, 2
      %v3258 = vrot.slane %v2492, 2
      %v3259 = vsel %vm2749, %v3257, %v3258
      %v3260 = vrot.slane %v2495, 2
      %v3261 = vsel %vm2749, %v3258, %v3260
      %v3262 = vrot.slane %v2498, 2
      %v3263 = vrot.slane %v2501, 2
      %v3264 = vsel %vm2749, %v3262, %v3263
      %v3265 = vrot.slane %v2504, 2
      %v3266 = vsel %vm2749, %v3263, %v3265
      %v3267 = vrot.slane %v2507, 2
      %v3268 = vrot.slane %v2510, 2
      %v3269 = vsel %vm2749, %v3267, %v3268
      %v3270 = vrot.slane %v2513, 2
      %v3271 = vsel %vm2749, %v3268, %v3270
      %v3272 = vrot.slane %v2516, 2
      %v3273 = vrot.slane %v2519, 2
      %v3274 = vsel %vm2749, %v3272, %v3273
      %v3275 = vrot.slane %v2522, 2
      %v3276 = vsel %vm2749, %v3273, %v3275
      %v3277 = vrot.slane %v2525, 2
      %v3278 = vrot.slane %v2528, 2
      %v3279 = vsel %vm2749, %v3277, %v3278
      %v3280 = vrot.slane %v2531, 2
      %v3281 = vsel %vm2749, %v3278, %v3280
      %v3318 = vadd.f32 %v3156, %v3194
      %v3319 = vadd.f32 %v3157, %v3196
      %v3320 = vadd.f32 %v3158, %v3199
      %v3321 = vadd.f32 %v3159, %v3201
      %v3322 = vadd.f32 %v3160, %v3204
      %v3323 = vadd.f32 %v3161, %v3206
      %v3324 = vadd.f32 %v3162, %v3209
      %v3325 = vadd.f32 %v3163, %v3211
      %v3326 = vadd.f32 %v3164, %v3214
      %v3327 = vadd.f32 %v3165, %v3216
      %v3328 = vadd.f32 %v3166, %v3219
      %v3329 = vadd.f32 %v3167, %v3221
      %v3330 = vadd.f32 %v3168, %v3224
      %v3331 = vadd.f32 %v3169, %v3226
      %v3332 = vadd.f32 %v3170, %v3229
      %v3333 = vadd.f32 %v3171, %v3231
      %v3334 = vadd.f32 %v3172, %v3234
      %v3335 = vadd.f32 %v3173, %v3236
      %v3336 = vadd.f32 %v3174, %v3239
      %v3337 = vadd.f32 %v3175, %v3241
      %v3338 = vadd.f32 %v3176, %v3244
      %v3339 = vadd.f32 %v3177, %v3246
      %v3340 = vadd.f32 %v3178, %v3249
      %v3341 = vadd.f32 %v3179, %v3251
      %v3342 = vadd.f32 %v3180, %v3254
      %v3343 = vadd.f32 %v3181, %v3256
      %v3344 = vadd.f32 %v3182, %v3259
      %v3345 = vadd.f32 %v3183, %v3261
      %v3346 = vadd.f32 %v3184, %v3264
      %v3347 = vadd.f32 %v3185, %v3266
      %v3348 = vadd.f32 %v3186, %v3269
      %v3349 = vadd.f32 %v3187, %v3271
      %v3350 = vadd.f32 %v3188, %v3274
      %v3351 = vadd.f32 %v3189, %v3276
      %v3352 = vadd.f32 %v3190, %v3279
      %v3353 = vadd.f32 %v3191, %v3281
      %v3354 = vadd.f32 %v3318, %v3320
      %v3355 = vadd.f32 %v3319, %v3321
      %v3356 = vadd.f32 %v3320, %v3322
      %v3357 = vadd.f32 %v3321, %v3323
      %v3358 = vadd.f32 %v3322, %v3324
      %v3359 = vadd.f32 %v3323, %v3325
      %v3360 = vadd.f32 %v3324, %v3326
      %v3361 = vadd.f32 %v3325, %v3327
      %v3362 = vadd.f32 %v3326, %v3328
      %v3363 = vadd.f32 %v3327, %v3329
      %v3364 = vadd.f32 %v3328, %v3330
      %v3365 = vadd.f32 %v3329, %v3331
      %v3366 = vadd.f32 %v3330, %v3332
      %v3367 = vadd.f32 %v3331, %v3333
      %v3368 = vadd.f32 %v3332, %v3334
      %v3369 = vadd.f32 %v3333, %v3335
      %v3370 = vadd.f32 %v3334, %v3336
      %v3371 = vadd.f32 %v3335, %v3337
      %v3372 = vadd.f32 %v3336, %v3338
      %v3373 = vadd.f32 %v3337, %v3339
      %v3374 = vadd.f32 %v3338, %v3340
      %v3375 = vadd.f32 %v3339, %v3341
      %v3376 = vadd.f32 %v3340, %v3342
      %v3377 = vadd.f32 %v3341, %v3343
      %v3378 = vadd.f32 %v3342, %v3344
      %v3379 = vadd.f32 %v3343, %v3345
      %v3380 = vadd.f32 %v3344, %v3346
      %v3381 = vadd.f32 %v3345, %v3347
      %v3382 = vadd.f32 %v3346, %v3348
      %v3383 = vadd.f32 %v3347, %v3349
      %v3384 = vadd.f32 %v3348, %v3350
      %v3385 = vadd.f32 %v3349, %v3351
      %v3386 = vadd.f32 %v3354, %v3322
      %v3387 = vadd.f32 %v3355, %v3323
      %v3388 = vadd.f32 %v3356, %v3324
      %v3389 = vadd.f32 %v3357, %v3325
      %v3390 = vadd.f32 %v3358, %v3326
      %v3391 = vadd.f32 %v3359, %v3327
      %v3392 = vadd.f32 %v3360, %v3328
      %v3393 = vadd.f32 %v3361, %v3329
      %v3394 = vadd.f32 %v3362, %v3330
      %v3395 = vadd.f32 %v3363, %v3331
      %v3396 = vadd.f32 %v3364, %v3332
      %v3397 = vadd.f32 %v3365, %v3333
      %v3398 = vadd.f32 %v3366, %v3334
      %v3399 = vadd.f32 %v3367, %v3335
      %v3400 = vadd.f32 %v3368, %v3336
      %v3401 = vadd.f32 %v3369, %v3337
      %v3402 = vadd.f32 %v3370, %v3338
      %v3403 = vadd.f32 %v3371, %v3339
      %v3404 = vadd.f32 %v3372, %v3340
      %v3405 = vadd.f32 %v3373, %v3341
      %v3406 = vadd.f32 %v3374, %v3342
      %v3407 = vadd.f32 %v3375, %v3343
      %v3408 = vadd.f32 %v3376, %v3344
      %v3409 = vadd.f32 %v3377, %v3345
      %v3410 = vadd.f32 %v3378, %v3346
      %v3411 = vadd.f32 %v3379, %v3347
      %v3412 = vadd.f32 %v3380, %v3348
      %v3413 = vadd.f32 %v3381, %v3349
      %v3414 = vadd.f32 %v3382, %v3350
      %v3415 = vadd.f32 %v3383, %v3351
      %v3416 = vadd.f32 %v3384, %v3352
      %v3417 = vadd.f32 %v3385, %v3353
      %v3418 = vld [vmem:[%s4] sm:$0xff]
      %v3467 = vrot.slane %v2099, 1
      %v3468 = vrot.slane %v2100, 1
      %v3469 = vsel %vm2586, %v3467, %v3468
      %v3470 = vrot.slane %v2101, 1
      %v3471 = vsel %vm2586, %v3468, %v3470
      %v3472 = vrot.slane %v2102, 1
      %v3473 = vrot.slane %v2103, 1
      %v3474 = vsel %vm2586, %v3472, %v3473
      %v3475 = vrot.slane %v2104, 1
      %v3476 = vsel %vm2586, %v3473, %v3475
      %v3477 = vrot.slane %v2105, 1
      %v3478 = vrot.slane %v2106, 1
      %v3479 = vsel %vm2586, %v3477, %v3478
      %v3480 = vrot.slane %v2107, 1
      %v3481 = vsel %vm2586, %v3478, %v3480
      %v3482 = vrot.slane %v2108, 1
      %v3483 = vrot.slane %v2109, 1
      %v3484 = vsel %vm2586, %v3482, %v3483
      %v3485 = vrot.slane %v2110, 1
      %v3486 = vsel %vm2586, %v3483, %v3485
      %v3487 = vrot.slane %v2111, 1
      %v3488 = vrot.slane %v2112, 1
      %v3489 = vsel %vm2586, %v3487, %v3488
      %v3490 = vrot.slane %v2113, 1
      %v3491 = vsel %vm2586, %v3488, %v3490
      %v3492 = vrot.slane %v2114, 1
      %v3493 = vrot.slane %v2115, 1
      %v3494 = vsel %vm2586, %v3492, %v3493
      %v3495 = vrot.slane %v2116, 1
      %v3496 = vsel %vm2586, %v3493, %v3495
      %v3497 = vrot.slane %v2117, 1
      %v3498 = vrot.slane %v2118, 1
      %v3499 = vsel %vm2586, %v3497, %v3498
      %v3500 = vrot.slane %v2119, 1
      %v3501 = vsel %vm2586, %v3498, %v3500
      %v3502 = vrot.slane %v2120, 1
      %v3503 = vrot.slane %v2121, 1
      %v3504 = vsel %vm2586, %v3502, %v3503
      %v3505 = vrot.slane %v2122, 1
      %v3506 = vsel %vm2586, %v3503, %v3505
      %v3507 = vrot.slane %v2123, 1
      %v3508 = vrot.slane %v2124, 1
      %v3509 = vsel %vm2586, %v3507, %v3508
      %v3510 = vrot.slane %v2125, 1
      %v3511 = vsel %vm2586, %v3508, %v3510
      %v3512 = vrot.slane %v2126, 1
      %v3513 = vrot.slane %v2127, 1
      %v3514 = vsel %vm2586, %v3512, %v3513
      %v3515 = vrot.slane %v2128, 1
      %v3516 = vsel %vm2586, %v3513, %v3515
      %v3517 = vrot.slane %v2129, 1
      %v3518 = vrot.slane %v2130, 1
      %v3519 = vsel %vm2586, %v3517, %v3518
      %v3520 = vrot.slane %v2131, 1
      %v3521 = vsel %vm2586, %v3518, %v3520
      %v3522 = vrot.slane %v2132, 1
      %v3523 = vrot.slane %v2133, 1
      %v3524 = vsel %vm2586, %v3522, %v3523
      %v3525 = vrot.slane %v2134, 1
      %v3526 = vsel %vm2586, %v3523, %v3525
      %v3527 = vrot.slane %v2135, 1
      %v3528 = vrot.slane %v2136, 1
      %v3529 = vsel %vm2586, %v3527, %v3528
      %v3530 = vrot.slane %v2137, 1
      %v3531 = vsel %vm2586, %v3528, %v3530
      %v3532 = vrot.slane %v2138, 1
      %v3533 = vrot.slane %v2139, 1
      %v3534 = vsel %vm2586, %v3532, %v3533
      %v3535 = vrot.slane %v2140, 1
      %v3536 = vsel %vm2586, %v3533, %v3535
      %v3537 = vrot.slane %v2141, 1
      %v3538 = vrot.slane %v2142, 1
      %v3539 = vsel %vm2586, %v3537, %v3538
      %v3540 = vrot.slane %v2143, 1
      %v3541 = vsel %vm2586, %v3538, %v3540
      %v3542 = vrot.slane %v2144, 1
      %v3543 = vrot.slane %v2145, 1
      %v3544 = vsel %vm2586, %v3542, %v3543
      %v3545 = vrot.slane %v2146, 1
      %v3546 = vsel %vm2586, %v3543, %v3545
      %s3547 = scalar_lea.vmem %s4, 8
      %v3548 = vld [vmem:[%s3547] sm:$0xff]
      %v3549 = vsel %vm2153, %v3469, 0
      %v3551 = vsel %vm2153, %v3471, 0
      %v3553 = vsel %vm2153, %v3474, 0
      %v3555 = vsel %vm2153, %v3476, 0
      %v3557 = vsel %vm2153, %v3479, 0
      %v3559 = vsel %vm2153, %v3481, 0
      %v3561 = vsel %vm2153, %v3484, 0
      %v3563 = vsel %vm2153, %v3486, 0
      %v3565 = vsel %vm2153, %v3489, 0
      %v3567 = vsel %vm2153, %v3491, 0
      %v3569 = vsel %vm2153, %v3494, 0
      %v3571 = vsel %vm2153, %v3496, 0
      %v3573 = vsel %vm2153, %v3499, 0
      %v3575 = vsel %vm2153, %v3501, 0
      %v3577 = vsel %vm2153, %v3504, 0
      %v3579 = vsel %vm2153, %v3506, 0
      %v3581 = vsel %vm2153, %v3509, 0
      %v3583 = vsel %vm2153, %v3511, 0
      %v3585 = vsel %vm2153, %v3514, 0
      %v3587 = vsel %vm2153, %v3516, 0
      %v3589 = vsel %vm2153, %v3519, 0
      %v3591 = vsel %vm2153, %v3521, 0
      %v3593 = vsel %vm2153, %v3524, 0
      %v3595 = vsel %vm2153, %v3526, 0
      %v3597 = vsel %vm2153, %v3529, 0
      %v3599 = vsel %vm2153, %v3531, 0
      %v3601 = vsel %vm2153, %v3534, 0
      %v3603 = vsel %vm2153, %v3536, 0
      %v3605 = vsel %vm2153, %v3539, 0
      %v3607 = vsel %vm2153, %v3541, 0
      %v3609 = vsel %vm2153, %v3544, 0
      %v3611 = vsel %vm2153, %v3546, 0
      %3613 = vmatprep.subr.mxu0 0.0
      %3614 = vmatpush1.msra.mxu0 %v3548
      %3615 = vmatprep.subr.mxu0 0.0
      %3616 = vmatpush1.msra.mxu0 0.0
      %3617 = vmatprep.subr.mxu0 0.0
      %3618 = vmatpush1.msra.mxu0 0.0
      %3619 = vmatprep.subr.mxu0 0.0
      %3620 = vmatpush1.msra.mxu0 0.0
      %3621 = vmatprep.subr.mxu0 0.0
      %3622 = vmatpush1.msra.mxu0 0.0
      %3623 = vmatprep.subr.mxu0 0.0
      %3624 = vmatpush1.msra.mxu0 0.0
      %3625 = vmatprep.subr.mxu0 0.0
      %3626 = vmatpush1.msra.mxu0 0.0
      %3627 = vmatprep.subr.mxu0 0.0
      %3628 = vmatpush1.msra.mxu0 0.0
      %3629 = vmatprep.subr.mxu0 0.0
      %3630 = vmatpush1.msra.mxu0 0.0
      %3631 = vmatprep.subr.mxu0 0.0
      %3632 = vmatpush1.msra.mxu0 0.0
      %3633 = vmatprep.subr.mxu0 0.0
      %3634 = vmatpush1.msra.mxu0 0.0
      %3635 = vmatprep.subr.mxu0 0.0
      %3636 = vmatpush1.msra.mxu0 0.0
      %3637 = vmatprep.subr.mxu0 0.0
      %3638 = vmatpush1.msra.mxu0 0.0
      %3639 = vmatprep.subr.mxu0 0.0
      %3640 = vmatpush1.msra.mxu0 0.0
      %3641 = vmatprep.subr.mxu0 0.0
      %3642 = vmatpush1.msra.mxu0 0.0
      %3643 = vmatprep.subr.mxu0 0.0
      %3644 = vmatpush1.msra.mxu0 0.0
      %3645 = vmatprep.subr.mxu0 0.0
      %3646 = vmatpush1.msra.mxu0 0.0
      %3647 = vmatprep.subr.mxu0 0.0
      %3648 = vmatpush1.msra.mxu0 0.0
      %3649 = vmatprep.subr.mxu0 0.0
      %3650 = vmatpush1.msra.mxu0 0.0
      %3651 = vmatprep.subr.mxu0 0.0
      %3652 = vmatpush1.msra.mxu0 0.0
      %3653 = vmatprep.subr.mxu0 0.0
      %3654 = vmatpush1.msra.mxu0 0.0
      %3655 = vmatprep.subr.mxu0 0.0
      %3656 = vmatpush1.msra.mxu0 0.0
      %3657 = vmatprep.subr.mxu0 0.0
      %3658 = vmatpush1.msra.mxu0 0.0
      %3659 = vmatprep.subr.mxu0 0.0
      %3660 = vmatpush1.msra.mxu0 0.0
      %3661 = vmatprep.subr.mxu0 0.0
      %3662 = vmatpush1.msra.mxu0 0.0
      %3663 = vmatprep.subr.mxu0 0.0
      %3664 = vmatpush1.msra.mxu0 0.0
      %3665 = vmatprep.subr.mxu0 0.0
      %3666 = vmatpush1.msra.mxu0 0.0
      %3667 = vmatprep.subr.mxu0 0.0
      %3668 = vmatpush1.msra.mxu0 0.0
      %3669 = vmatprep.subr.mxu0 0.0
      %3670 = vmatpush1.msra.mxu0 0.0
      %3671 = vmatprep.subr.mxu0 0.0
      %3672 = vmatpush1.msra.mxu0 0.0
      %3673 = vmatprep.subr.mxu0 0.0
      %3674 = vmatpush1.msra.mxu0 0.0
      %3675 = vmatprep.subr.mxu0 0.0
      %3676 = vmatpush1.msra.mxu0 0.0
      %3677 = vmatprep.mubr.f32.mxu0 0.0
      %3678 = vmatmul.mubr.f32.gmra.mrb[0].mxu0 %v3549
      %v3679 = vpop.f32.mrb[0].mxu0
      %v3680 = vadd.f32 0.0, %v3679
      %v3681 = vpop.f32.mrb[0].mxu0
      %3682 = vmatprep.mubr.f32.mxu0 0.0
      %3683 = vmatmul.mubr.f32.gmra.mrb[0].mxu0 %v3551
      %v3684 = vpop.f32.mrb[0].mxu0
      %v3685 = vadd.f32 0.0, %v3684
      %v3686 = vpop.f32.mrb[0].mxu0
      %3687 = vmatprep.mubr.f32.mxu0 0.0
      %3688 = vmatmul.mubr.f32.gmra.mrb[0].mxu0 %v3553
      %v3689 = vpop.f32.mrb[0].mxu0
      %v3690 = vadd.f32 0.0, %v3689
      %v3691 = vpop.f32.mrb[0].mxu0
      %3692 = vmatprep.mubr.f32.mxu0 0.0
      %3693 = vmatmul.mubr.f32.gmra.mrb[0].mxu0 %v3555
      %v3694 = vpop.f32.mrb[0].mxu0
      %v3695 = vadd.f32 0.0, %v3694
      %v3696 = vpop.f32.mrb[0].mxu0
      %3697 = vmatprep.mubr.f32.mxu0 0.0
      %3698 = vmatmul.mubr.f32.gmra.mrb[0].mxu0 %v3557
      %v3699 = vpop.f32.mrb[0].mxu0
      %v3700 = vadd.f32 0.0, %v3699
      %v3701 = vpop.f32.mrb[0].mxu0
      %3702 = vmatprep.mubr.f32.mxu0 0.0
      %3703 = vmatmul.mubr.f32.gmra.mrb[0].mxu0 %v3559
      %v3704 = vpop.f32.mrb[0].mxu0
      %v3705 = vadd.f32 0.0, %v3704
      %v3706 = vpop.f32.mrb[0].mxu0
      %3707 = vmatprep.mubr.f32.mxu0 0.0
      %3708 = vmatmul.mubr.f32.gmra.mrb[0].mxu0 %v3561
      %v3709 = vpop.f32.mrb[0].mxu0
      %v3710 = vadd.f32 0.0, %v3709
      %v3711 = vpop.f32.mrb[0].mxu0
      %3712 = vmatprep.mubr.f32.mxu0 0.0
      %3713 = vmatmul.mubr.f32.gmra.mrb[0].mxu0 %v3563
      %v3714 = vpop.f32.mrb[0].mxu0
      %v3715 = vadd.f32 0.0, %v3714
      %v3716 = vpop.f32.mrb[0].mxu0
      %3717 = vmatprep.mubr.f32.mxu0 0.0
      %3718 = vmatmul.mubr.f32.gmra.mrb[0].mxu0 %v3565
      %v3719 = vpop.f32.mrb[0].mxu0
      %v3720 = vadd.f32 0.0, %v3719
      %v3721 = vpop.f32.mrb[0].mxu0
      %3722 = vmatprep.mubr.f32.mxu0 0.0
      %3723 = vmatmul.mubr.f32.gmra.mrb[0].mxu0 %v3567
      %v3724 = vpop.f32.mrb[0].mxu0
      %v3725 = vadd.f32 0.0, %v3724
      %v3726 = vpop.f32.mrb[0].mxu0
      %3727 = vmatprep.mubr.f32.mxu0 0.0
      %3728 = vmatmul.mubr.f32.gmra.mrb[0].mxu0 %v3569
      %v3729 = vpop.f32.mrb[0].mxu0
      %v3730 = vadd.f32 0.0, %v3729
      %v3731 = vpop.f32.mrb[0].mxu0
      %3732 = vmatprep.mubr.f32.mxu0 0.0
      %3733 = vmatmul.mubr.f32.gmra.mrb[0].mxu0 %v3571
      %v3734 = vpop.f32.mrb[0].mxu0
      %v3735 = vadd.f32 0.0, %v3734
      %v3736 = vpop.f32.mrb[0].mxu0
      %3737 = vmatprep.mubr.f32.mxu0 0.0
      %3738 = vmatmul.mubr.f32.gmra.mrb[0].mxu0 %v3573
      %v3739 = vpop.f32.mrb[0].mxu0
      %v3740 = vadd.f32 0.0, %v3739
      %v3741 = vpop.f32.mrb[0].mxu0
      %3742 = vmatprep.mubr.f32.mxu0 0.0
      %3743 = vmatmul.mubr.f32.gmra.mrb[0].mxu0 %v3575
      %v3744 = vpop.f32.mrb[0].mxu0
      %v3745 = vadd.f32 0.0, %v3744
      %v3746 = vpop.f32.mrb[0].mxu0
      %3747 = vmatprep.mubr.f32.mxu0 0.0
      %3748 = vmatmul.mubr.f32.gmra.mrb[0].mxu0 %v3577
      %v3749 = vpop.f32.mrb[0].mxu0
      %v3750 = vadd.f32 0.0, %v3749
      %v3751 = vpop.f32.mrb[0].mxu0
      %3752 = vmatprep.mubr.f32.mxu0 0.0
      %3753 = vmatmul.mubr.f32.gmra.mrb[0].mxu0 %v3579
      %v3754 = vpop.f32.mrb[0].mxu0
      %v3755 = vadd.f32 0.0, %v3754
      %v3756 = vpop.f32.mrb[0].mxu0
      %3757 = vmatprep.mubr.f32.mxu0 0.0
      %3758 = vmatmul.mubr.f32.gmra.mrb[0].mxu0 %v3581
      %v3759 = vpop.f32.mrb[0].mxu0
      %v3760 = vadd.f32 0.0, %v3759
      %v3761 = vpop.f32.mrb[0].mxu0
      %3762 = vmatprep.mubr.f32.mxu0 0.0
      %3763 = vmatmul.mubr.f32.gmra.mrb[0].mxu0 %v3583
      %v3764 = vpop.f32.mrb[0].mxu0
      %v3765 = vadd.f32 0.0, %v3764
      %v3766 = vpop.f32.mrb[0].mxu0
      %3767 = vmatprep.mubr.f32.mxu0 0.0
      %3768 = vmatmul.mubr.f32.gmra.mrb[0].mxu0 %v3585
      %v3769 = vpop.f32.mrb[0].mxu0
      %v3770 = vadd.f32 0.0, %v3769
      %v3771 = vpop.f32.mrb[0].mxu0
      %3772 = vmatprep.mubr.f32.mxu0 0.0
      %3773 = vmatmul.mubr.f32.gmra.mrb[0].mxu0 %v3587
      %v3774 = vpop.f32.mrb[0].mxu0
      %v3775 = vadd.f32 0.0, %v3774
      %v3776 = vpop.f32.mrb[0].mxu0
      %3777 = vmatprep.mubr.f32.mxu0 0.0
      %3778 = vmatmul.mubr.f32.gmra.mrb[0].mxu0 %v3589
      %v3779 = vpop.f32.mrb[0].mxu0
      %v3780 = vadd.f32 0.0, %v3779
      %v3781 = vpop.f32.mrb[0].mxu0
      %3782 = vmatprep.mubr.f32.mxu0 0.0
      %3783 = vmatmul.mubr.f32.gmra.mrb[0].mxu0 %v3591
      %v3784 = vpop.f32.mrb[0].mxu0
      %v3785 = vadd.f32 0.0, %v3784
      %v3786 = vpop.f32.mrb[0].mxu0
      %3787 = vmatprep.mubr.f32.mxu0 0.0
      %3788 = vmatmul.mubr.f32.gmra.mrb[0].mxu0 %v3593
      %v3789 = vpop.f32.mrb[0].mxu0
      %v3790 = vadd.f32 0.0, %v3789
      %v3791 = vpop.f32.mrb[0].mxu0
      %3792 = vmatprep.mubr.f32.mxu0 0.0
      %3793 = vmatmul.mubr.f32.gmra.mrb[0].mxu0 %v3595
      %v3794 = vpop.f32.mrb[0].mxu0
      %v3795 = vadd.f32 0.0, %v3794
      %v3796 = vpop.f32.mrb[0].mxu0
      %3797 = vmatprep.mubr.f32.mxu0 0.0
      %3798 = vmatmul.mubr.f32.gmra.mrb[0].mxu0 %v3597
      %v3799 = vpop.f32.mrb[0].mxu0
      %v3800 = vadd.f32 0.0, %v3799
      %v3801 = vpop.f32.mrb[0].mxu0
      %3802 = vmatprep.mubr.f32.mxu0 0.0
      %3803 = vmatmul.mubr.f32.gmra.mrb[0].mxu0 %v3599
      %v3804 = vpop.f32.mrb[0].mxu0
      %v3805 = vadd.f32 0.0, %v3804
      %v3806 = vpop.f32.mrb[0].mxu0
      %3807 = vmatprep.mubr.f32.mxu0 0.0
      %3808 = vmatmul.mubr.f32.gmra.mrb[0].mxu0 %v3601
      %v3809 = vpop.f32.mrb[0].mxu0
      %v3810 = vadd.f32 0.0, %v3809
      %v3811 = vpop.f32.mrb[0].mxu0
      %3812 = vmatprep.mubr.f32.mxu0 0.0
      %3813 = vmatmul.mubr.f32.gmra.mrb[0].mxu0 %v3603
      %v3814 = vpop.f32.mrb[0].mxu0
      %v3815 = vadd.f32 0.0, %v3814
      %v3816 = vpop.f32.mrb[0].mxu0
      %3817 = vmatprep.mubr.f32.mxu0 0.0
      %3818 = vmatmul.mubr.f32.gmra.mrb[0].mxu0 %v3605
      %v3819 = vpop.f32.mrb[0].mxu0
      %v3820 = vadd.f32 0.0, %v3819
      %v3821 = vpop.f32.mrb[0].mxu0
      %3822 = vmatprep.mubr.f32.mxu0 0.0
      %3823 = vmatmul.mubr.f32.gmra.mrb[0].mxu0 %v3607
      %v3824 = vpop.f32.mrb[0].mxu0
      %v3825 = vadd.f32 0.0, %v3824
      %v3826 = vpop.f32.mrb[0].mxu0
      %3827 = vmatprep.mubr.f32.mxu0 0.0
      %3828 = vmatmul.mubr.f32.gmra.mrb[0].mxu0 %v3609
      %v3829 = vpop.f32.mrb[0].mxu0
      %v3830 = vadd.f32 0.0, %v3829
      %v3831 = vpop.f32.mrb[0].mxu0
      %3832 = vmatprep.mubr.f32.mxu0 0.0
      %3833 = vmatmul.mubr.f32.gmra.mrb[0].mxu0 %v3611
      %v3834 = vpop.f32.mrb[0].mxu0
      %v3835 = vadd.f32 0.0, %v3834
      %v3836 = vpop.f32.mrb[0].mxu0
      %3837 = vdwg.mxu0
      %v3838 = vsel %vm2153, %v2099, 0
      %v3840 = vsel %vm2153, %v2100, 0
      %v3842 = vsel %vm2153, %v2102, 0
      %v3844 = vsel %vm2153, %v2103, 0
      %v3846 = vsel %vm2153, %v2105, 0
      %v3848 = vsel %vm2153, %v2106, 0
      %v3850 = vsel %vm2153, %v2108, 0
      %v3852 = vsel %vm2153, %v2109, 0
      %v3854 = vsel %vm2153, %v2111, 0
      %v3856 = vsel %vm2153, %v2112, 0
      %v3858 = vsel %vm2153, %v2114, 0
      %v3860 = vsel %vm2153, %v2115, 0
      %v3862 = vsel %vm2153, %v2117, 0
      %v3864 = vsel %vm2153, %v2118, 0
      %v3866 = vsel %vm2153, %v2120, 0
      %v3868 = vsel %vm2153, %v2121, 0
      %v3870 = vsel %vm2153, %v2123, 0
      %v3872 = vsel %vm2153, %v2124, 0
      %v3874 = vsel %vm2153, %v2126, 0
      %v3876 = vsel %vm2153, %v2127, 0
      %v3878 = vsel %vm2153, %v2129, 0
      %v3880 = vsel %vm2153, %v2130, 0
      %v3882 = vsel %vm2153, %v2132, 0
      %v3884 = vsel %vm2153, %v2133, 0
      %v3886 = vsel %vm2153, %v2135, 0
      %v3888 = vsel %vm2153, %v2136, 0
      %v3890 = vsel %vm2153, %v2138, 0
      %v3892 = vsel %vm2153, %v2139, 0
      %v3894 = vsel %vm2153, %v2141, 0
      %v3896 = vsel %vm2153, %v2142, 0
      %v3898 = vsel %vm2153, %v2144, 0
      %v3900 = vsel %vm2153, %v2145, 0
      %3902 = vmatprep.subr.mxu0 0.0
      %3903 = vmatpush1.msra.mxu0 %v3418
      %3904 = vmatprep.subr.mxu0 0.0
      %3905 = vmatpush1.msra.mxu0 0.0
      %3906 = vmatprep.subr.mxu0 0.0
      %3907 = vmatpush1.msra.mxu0 0.0
      %3908 = vmatprep.subr.mxu0 0.0
      %3909 = vmatpush1.msra.mxu0 0.0
      %3910 = vmatprep.subr.mxu0 0.0
      %3911 = vmatpush1.msra.mxu0 0.0
      %3912 = vmatprep.subr.mxu0 0.0
      %3913 = vmatpush1.msra.mxu0 0.0
      %3914 = vmatprep.subr.mxu0 0.0
      %3915 = vmatpush1.msra.mxu0 0.0
      %3916 = vmatprep.subr.mxu0 0.0
      %3917 = vmatpush1.msra.mxu0 0.0
      %3918 = vmatprep.subr.mxu0 0.0
      %3919 = vmatpush1.msra.mxu0 0.0
      %3920 = vmatprep.subr.mxu0 0.0
      %3921 = vmatpush1.msra.mxu0 0.0
      %3922 = vmatprep.subr.mxu0 0.0
      %3923 = vmatpush1.msra.mxu0 0.0
      %3924 = vmatprep.subr.mxu0 0.0
      %3925 = vmatpush1.msra.mxu0 0.0
      %3926 = vmatprep.subr.mxu0 0.0
      %3927 = vmatpush1.msra.mxu0 0.0
      %3928 = vmatprep.subr.mxu0 0.0
      %3929 = vmatpush1.msra.mxu0 0.0
      %3930 = vmatprep.subr.mxu0 0.0
      %3931 = vmatpush1.msra.mxu0 0.0
      %3932 = vmatprep.subr.mxu0 0.0
      %3933 = vmatpush1.msra.mxu0 0.0
      %3934 = vmatprep.subr.mxu0 0.0
      %3935 = vmatpush1.msra.mxu0 0.0
      %3936 = vmatprep.subr.mxu0 0.0
      %3937 = vmatpush1.msra.mxu0 0.0
      %3938 = vmatprep.subr.mxu0 0.0
      %3939 = vmatpush1.msra.mxu0 0.0
      %3940 = vmatprep.subr.mxu0 0.0
      %3941 = vmatpush1.msra.mxu0 0.0
      %3942 = vmatprep.subr.mxu0 0.0
      %3943 = vmatpush1.msra.mxu0 0.0
      %3944 = vmatprep.subr.mxu0 0.0
      %3945 = vmatpush1.msra.mxu0 0.0
      %3946 = vmatprep.subr.mxu0 0.0
      %3947 = vmatpush1.msra.mxu0 0.0
      %3948 = vmatprep.subr.mxu0 0.0
      %3949 = vmatpush1.msra.mxu0 0.0
      %3950 = vmatprep.subr.mxu0 0.0
      %3951 = vmatpush1.msra.mxu0 0.0
      %3952 = vmatprep.subr.mxu0 0.0
      %3953 = vmatpush1.msra.mxu0 0.0
      %3954 = vmatprep.subr.mxu0 0.0
      %3955 = vmatpush1.msra.mxu0 0.0
      %3956 = vmatprep.subr.mxu0 0.0
      %3957 = vmatpush1.msra.mxu0 0.0
      %3958 = vmatprep.subr.mxu0 0.0
      %3959 = vmatpush1.msra.mxu0 0.0
      %3960 = vmatprep.subr.mxu0 0.0
      %3961 = vmatpush1.msra.mxu0 0.0
      %3962 = vmatprep.subr.mxu0 0.0
      %3963 = vmatpush1.msra.mxu0 0.0
      %3964 = vmatprep.subr.mxu0 0.0
      %3965 = vmatpush1.msra.mxu0 0.0
      %3966 = vmatprep.mubr.f32.mxu0 0.0
      %3967 = vmatmul.mubr.f32.gmra.mrb[0].mxu0 %v3838
      %v3968 = vpop.f32.mrb[0].mxu0
      %v3969 = vadd.f32 %v3680, %v3968
      %v3970 = vpop.f32.mrb[0].mxu0
      %3971 = vmatprep.mubr.f32.mxu0 0.0
      %3972 = vmatmul.mubr.f32.gmra.mrb[0].mxu0 %v3840
      %v3973 = vpop.f32.mrb[0].mxu0
      %v3974 = vadd.f32 %v3685, %v3973
      %v3975 = vpop.f32.mrb[0].mxu0
      %3976 = vmatprep.mubr.f32.mxu0 0.0
      %3977 = vmatmul.mubr.f32.gmra.mrb[0].mxu0 %v3842
      %v3978 = vpop.f32.mrb[0].mxu0
      %v3979 = vadd.f32 %v3690, %v3978
      %v3980 = vpop.f32.mrb[0].mxu0
      %3981 = vmatprep.mubr.f32.mxu0 0.0
      %3982 = vmatmul.mubr.f32.gmra.mrb[0].mxu0 %v3844
      %v3983 = vpop.f32.mrb[0].mxu0
      %v3984 = vadd.f32 %v3695, %v3983
      %v3985 = vpop.f32.mrb[0].mxu0
      %3986 = vmatprep.mubr.f32.mxu0 0.0
      %3987 = vmatmul.mubr.f32.gmra.mrb[0].mxu0 %v3846
      %v3988 = vpop.f32.mrb[0].mxu0
      %v3989 = vadd.f32 %v3700, %v3988
      %v3990 = vpop.f32.mrb[0].mxu0
      %3991 = vmatprep.mubr.f32.mxu0 0.0
      %3992 = vmatmul.mubr.f32.gmra.mrb[0].mxu0 %v3848
      %v3993 = vpop.f32.mrb[0].mxu0
      %v3994 = vadd.f32 %v3705, %v3993
      %v3995 = vpop.f32.mrb[0].mxu0
      %3996 = vmatprep.mubr.f32.mxu0 0.0
      %3997 = vmatmul.mubr.f32.gmra.mrb[0].mxu0 %v3850
      %v3998 = vpop.f32.mrb[0].mxu0
      %v3999 = vadd.f32 %v3710, %v3998
      %v4000 = vpop.f32.mrb[0].mxu0
      %4001 = vmatprep.mubr.f32.mxu0 0.0
      %4002 = vmatmul.mubr.f32.gmra.mrb[0].mxu0 %v3852
      %v4003 = vpop.f32.mrb[0].mxu0
      %v4004 = vadd.f32 %v3715, %v4003
      %v4005 = vpop.f32.mrb[0].mxu0
      %4006 = vmatprep.mubr.f32.mxu0 0.0
      %4007 = vmatmul.mubr.f32.gmra.mrb[0].mxu0 %v3854
      %v4008 = vpop.f32.mrb[0].mxu0
      %v4009 = vadd.f32 %v3720, %v4008
      %v4010 = vpop.f32.mrb[0].mxu0
      %4011 = vmatprep.mubr.f32.mxu0 0.0
      %4012 = vmatmul.mubr.f32.gmra.mrb[0].mxu0 %v3856
      %v4013 = vpop.f32.mrb[0].mxu0
      %v4014 = vadd.f32 %v3725, %v4013
      %v4015 = vpop.f32.mrb[0].mxu0
      %4016 = vmatprep.mubr.f32.mxu0 0.0
      %4017 = vmatmul.mubr.f32.gmra.mrb[0].mxu0 %v3858
      %v4018 = vpop.f32.mrb[0].mxu0
      %v4019 = vadd.f32 %v3730, %v4018
      %v4020 = vpop.f32.mrb[0].mxu0
      %4021 = vmatprep.mubr.f32.mxu0 0.0
      %4022 = vmatmul.mubr.f32.gmra.mrb[0].mxu0 %v3860
      %v4023 = vpop.f32.mrb[0].mxu0
      %v4024 = vadd.f32 %v3735, %v4023
      %v4025 = vpop.f32.mrb[0].mxu0
      %4026 = vmatprep.mubr.f32.mxu0 0.0
      %4027 = vmatmul.mubr.f32.gmra.mrb[0].mxu0 %v3862
      %v4028 = vpop.f32.mrb[0].mxu0
      %v4029 = vadd.f32 %v3740, %v4028
      %v4030 = vpop.f32.mrb[0].mxu0
      %4031 = vmatprep.mubr.f32.mxu0 0.0
      %4032 = vmatmul.mubr.f32.gmra.mrb[0].mxu0 %v3864
      %v4033 = vpop.f32.mrb[0].mxu0
      %v4034 = vadd.f32 %v3745, %v4033
      %v4035 = vpop.f32.mrb[0].mxu0
      %4036 = vmatprep.mubr.f32.mxu0 0.0
      %4037 = vmatmul.mubr.f32.gmra.mrb[0].mxu0 %v3866
      %v4038 = vpop.f32.mrb[0].mxu0
      %v4039 = vadd.f32 %v3750, %v4038
      %v4040 = vpop.f32.mrb[0].mxu0
      %4041 = vmatprep.mubr.f32.mxu0 0.0
      %4042 = vmatmul.mubr.f32.gmra.mrb[0].mxu0 %v3868
      %v4043 = vpop.f32.mrb[0].mxu0
      %v4044 = vadd.f32 %v3755, %v4043
      %v4045 = vpop.f32.mrb[0].mxu0
      %4046 = vmatprep.mubr.f32.mxu0 0.0
      %4047 = vmatmul.mubr.f32.gmra.mrb[0].mxu0 %v3870
      %v4048 = vpop.f32.mrb[0].mxu0
      %v4049 = vadd.f32 %v3760, %v4048
      %v4050 = vpop.f32.mrb[0].mxu0
      %4051 = vmatprep.mubr.f32.mxu0 0.0
      %4052 = vmatmul.mubr.f32.gmra.mrb[0].mxu0 %v3872
      %v4053 = vpop.f32.mrb[0].mxu0
      %v4054 = vadd.f32 %v3765, %v4053
      %v4055 = vpop.f32.mrb[0].mxu0
      %4056 = vmatprep.mubr.f32.mxu0 0.0
      %4057 = vmatmul.mubr.f32.gmra.mrb[0].mxu0 %v3874
      %v4058 = vpop.f32.mrb[0].mxu0
      %v4059 = vadd.f32 %v3770, %v4058
      %v4060 = vpop.f32.mrb[0].mxu0
      %4061 = vmatprep.mubr.f32.mxu0 0.0
      %4062 = vmatmul.mubr.f32.gmra.mrb[0].mxu0 %v3876
      %v4063 = vpop.f32.mrb[0].mxu0
      %v4064 = vadd.f32 %v3775, %v4063
      %v4065 = vpop.f32.mrb[0].mxu0
      %4066 = vmatprep.mubr.f32.mxu0 0.0
      %4067 = vmatmul.mubr.f32.gmra.mrb[0].mxu0 %v3878
      %v4068 = vpop.f32.mrb[0].mxu0
      %v4069 = vadd.f32 %v3780, %v4068
      %v4070 = vpop.f32.mrb[0].mxu0
      %4071 = vmatprep.mubr.f32.mxu0 0.0
      %4072 = vmatmul.mubr.f32.gmra.mrb[0].mxu0 %v3880
      %v4073 = vpop.f32.mrb[0].mxu0
      %v4074 = vadd.f32 %v3785, %v4073
      %v4075 = vpop.f32.mrb[0].mxu0
      %4076 = vmatprep.mubr.f32.mxu0 0.0
      %4077 = vmatmul.mubr.f32.gmra.mrb[0].mxu0 %v3882
      %v4078 = vpop.f32.mrb[0].mxu0
      %v4079 = vadd.f32 %v3790, %v4078
      %v4080 = vpop.f32.mrb[0].mxu0
      %4081 = vmatprep.mubr.f32.mxu0 0.0
      %4082 = vmatmul.mubr.f32.gmra.mrb[0].mxu0 %v3884
      %v4083 = vpop.f32.mrb[0].mxu0
      %v4084 = vadd.f32 %v3795, %v4083
      %v4085 = vpop.f32.mrb[0].mxu0
      %4086 = vmatprep.mubr.f32.mxu0 0.0
      %4087 = vmatmul.mubr.f32.gmra.mrb[0].mxu0 %v3886
      %v4088 = vpop.f32.mrb[0].mxu0
      %v4089 = vadd.f32 %v3800, %v4088
      %v4090 = vpop.f32.mrb[0].mxu0
      %4091 = vmatprep.mubr.f32.mxu0 0.0
      %4092 = vmatmul.mubr.f32.gmra.mrb[0].mxu0 %v3888
      %v4093 = vpop.f32.mrb[0].mxu0
      %v4094 = vadd.f32 %v3805, %v4093
      %v4095 = vpop.f32.mrb[0].mxu0
      %4096 = vmatprep.mubr.f32.mxu0 0.0
      %4097 = vmatmul.mubr.f32.gmra.mrb[0].mxu0 %v3890
      %v4098 = vpop.f32.mrb[0].mxu0
      %v4099 = vadd.f32 %v3810, %v4098
      %v4100 = vpop.f32.mrb[0].mxu0
      %4101 = vmatprep.mubr.f32.mxu0 0.0
      %4102 = vmatmul.mubr.f32.gmra.mrb[0].mxu0 %v3892
      %v4103 = vpop.f32.mrb[0].mxu0
      %v4104 = vadd.f32 %v3815, %v4103
      %v4105 = vpop.f32.mrb[0].mxu0
      %4106 = vmatprep.mubr.f32.mxu0 0.0
      %4107 = vmatmul.mubr.f32.gmra.mrb[0].mxu0 %v3894
      %v4108 = vpop.f32.mrb[0].mxu0
      %v4109 = vadd.f32 %v3820, %v4108
      %v4110 = vpop.f32.mrb[0].mxu0
      %4111 = vmatprep.mubr.f32.mxu0 0.0
      %4112 = vmatmul.mubr.f32.gmra.mrb[0].mxu0 %v3896
      %v4113 = vpop.f32.mrb[0].mxu0
      %v4114 = vadd.f32 %v3825, %v4113
      %v4115 = vpop.f32.mrb[0].mxu0
      %4116 = vmatprep.mubr.f32.mxu0 0.0
      %4117 = vmatmul.mubr.f32.gmra.mrb[0].mxu0 %v3898
      %v4118 = vpop.f32.mrb[0].mxu0
      %v4119 = vadd.f32 %v3830, %v4118
      %v4120 = vpop.f32.mrb[0].mxu0
      %4121 = vmatprep.mubr.f32.mxu0 0.0
      %4122 = vmatmul.mubr.f32.gmra.mrb[0].mxu0 %v3900
      %v4123 = vpop.f32.mrb[0].mxu0
      %v4124 = vadd.f32 %v3835, %v4123
      %v4125 = vpop.f32.mrb[0].mxu0
      %4126 = vdwg.mxu0
      %v4127 = vrot.slane %v2099, 2
      %v4128 = vrot.slane %v2100, 2
      %v4129 = vsel %vm2749, %v4127, %v4128
      %v4130 = vrot.slane %v2101, 2
      %v4131 = vsel %vm2749, %v4128, %v4130
      %v4132 = vrot.slane %v2102, 2
      %v4133 = vrot.slane %v2103, 2
      %v4134 = vsel %vm2749, %v4132, %v4133
      %v4135 = vrot.slane %v2104, 2
      %v4136 = vsel %vm2749, %v4133, %v4135
      %v4137 = vrot.slane %v2105, 2
      %v4138 = vrot.slane %v2106, 2
      %v4139 = vsel %vm2749, %v4137, %v4138
      %v4140 = vrot.slane %v2107, 2
      %v4141 = vsel %vm2749, %v4138, %v4140
      %v4142 = vrot.slane %v2108, 2
      %v4143 = vrot.slane %v2109, 2
      %v4144 = vsel %vm2749, %v4142, %v4143
      %v4145 = vrot.slane %v2110, 2
      %v4146 = vsel %vm2749, %v4143, %v4145
      %v4147 = vrot.slane %v2111, 2
      %v4148 = vrot.slane %v2112, 2
      %v4149 = vsel %vm2749, %v4147, %v4148
      %v4150 = vrot.slane %v2113, 2
      %v4151 = vsel %vm2749, %v4148, %v4150
      %v4152 = vrot.slane %v2114, 2
      %v4153 = vrot.slane %v2115, 2
      %v4154 = vsel %vm2749, %v4152, %v4153
      %v4155 = vrot.slane %v2116, 2
      %v4156 = vsel %vm2749, %v4153, %v4155
      %v4157 = vrot.slane %v2117, 2
      %v4158 = vrot.slane %v2118, 2
      %v4159 = vsel %vm2749, %v4157, %v4158
      %v4160 = vrot.slane %v2119, 2
      %v4161 = vsel %vm2749, %v4158, %v4160
      %v4162 = vrot.slane %v2120, 2
      %v4163 = vrot.slane %v2121, 2
      %v4164 = vsel %vm2749, %v4162, %v4163
      %v4165 = vrot.slane %v2122, 2
      %v4166 = vsel %vm2749, %v4163, %v4165
      %v4167 = vrot.slane %v2123, 2
      %v4168 = vrot.slane %v2124, 2
      %v4169 = vsel %vm2749, %v4167, %v4168
      %v4170 = vrot.slane %v2125, 2
      %v4171 = vsel %vm2749, %v4168, %v4170
      %v4172 = vrot.slane %v2126, 2
      %v4173 = vrot.slane %v2127, 2
      %v4174 = vsel %vm2749, %v4172, %v4173
      %v4175 = vrot.slane %v2128, 2
      %v4176 = vsel %vm2749, %v4173, %v4175
      %v4177 = vrot.slane %v2129, 2
      %v4178 = vrot.slane %v2130, 2
      %v4179 = vsel %vm2749, %v4177, %v4178
      %v4180 = vrot.slane %v2131, 2
      %v4181 = vsel %vm2749, %v4178, %v4180
      %v4182 = vrot.slane %v2132, 2
      %v4183 = vrot.slane %v2133, 2
      %v4184 = vsel %vm2749, %v4182, %v4183
      %v4185 = vrot.slane %v2134, 2
      %v4186 = vsel %vm2749, %v4183, %v4185
      %v4187 = vrot.slane %v2135, 2
      %v4188 = vrot.slane %v2136, 2
      %v4189 = vsel %vm2749, %v4187, %v4188
      %v4190 = vrot.slane %v2137, 2
      %v4191 = vsel %vm2749, %v4188, %v4190
      %v4192 = vrot.slane %v2138, 2
      %v4193 = vrot.slane %v2139, 2
      %v4194 = vsel %vm2749, %v4192, %v4193
      %v4195 = vrot.slane %v2140, 2
      %v4196 = vsel %vm2749, %v4193, %v4195
      %v4197 = vrot.slane %v2141, 2
      %v4198 = vrot.slane %v2142, 2
      %v4199 = vsel %vm2749, %v4197, %v4198
      %v4200 = vrot.slane %v2143, 2
      %v4201 = vsel %vm2749, %v4198, %v4200
      %v4202 = vrot.slane %v2144, 2
      %v4203 = vrot.slane %v2145, 2
      %v4204 = vsel %vm2749, %v4202, %v4203
      %v4205 = vrot.slane %v2146, 2
      %v4206 = vsel %vm2749, %v4203, %v4205
      %s4207 = scalar_lea.vmem %s4, 16
      %v4208 = vld [vmem:[%s4207] sm:$0xff]
      %v4209 = vsel %vm2153, %v4129, 0
      %v4211 = vsel %vm2153, %v4131, 0
      %v4213 = vsel %vm2153, %v4134, 0
      %v4215 = vsel %vm2153, %v4136, 0
      %v4217 = vsel %vm2153, %v4139, 0
      %v4219 = vsel %vm2153, %v4141, 0
      %v4221 = vsel %vm2153, %v4144, 0
      %v4223 = vsel %vm2153, %v4146, 0
      %v4225 = vsel %vm2153, %v4149, 0
      %v4227 = vsel %vm2153, %v4151, 0
      %v4229 = vsel %vm2153, %v4154, 0
      %v4231 = vsel %vm2153, %v4156, 0
      %v4233 = vsel %vm2153, %v4159, 0
      %v4235 = vsel %vm2153, %v4161, 0
      %v4237 = vsel %vm2153, %v4164, 0
      %v4239 = vsel %vm2153, %v4166, 0
      %v4241 = vsel %vm2153, %v4169, 0
      %v4243 = vsel %vm2153, %v4171, 0
      %v4245 = vsel %vm2153, %v4174, 0
      %v4247 = vsel %vm2153, %v4176, 0
      %v4249 = vsel %vm2153, %v4179, 0
      %v4251 = vsel %vm2153, %v4181, 0
      %v4253 = vsel %vm2153, %v4184, 0
      %v4255 = vsel %vm2153, %v4186, 0
      %v4257 = vsel %vm2153, %v4189, 0
      %v4259 = vsel %vm2153, %v4191, 0
      %v4261 = vsel %vm2153, %v4194, 0
      %v4263 = vsel %vm2153, %v4196, 0
      %v4265 = vsel %vm2153, %v4199, 0
      %v4267 = vsel %vm2153, %v4201, 0
      %v4269 = vsel %vm2153, %v4204, 0
      %v4271 = vsel %vm2153, %v4206, 0
      %4273 = vmatprep.subr.mxu0 0.0
      %4274 = vmatpush1.msra.mxu0 %v4208
      %4275 = vmatprep.subr.mxu0 0.0
      %4276 = vmatpush1.msra.mxu0 0.0
      %4277 = vmatprep.subr.mxu0 0.0
      %4278 = vmatpush1.msra.mxu0 0.0
      %4279 = vmatprep.subr.mxu0 0.0
      %4280 = vmatpush1.msra.mxu0 0.0
      %4281 = vmatprep.subr.mxu0 0.0
      %4282 = vmatpush1.msra.mxu0 0.0
      %4283 = vmatprep.subr.mxu0 0.0
      %4284 = vmatpush1.msra.mxu0 0.0
      %4285 = vmatprep.subr.mxu0 0.0
      %4286 = vmatpush1.msra.mxu0 0.0
      %4287 = vmatprep.subr.mxu0 0.0
      %4288 = vmatpush1.msra.mxu0 0.0
      %4289 = vmatprep.subr.mxu0 0.0
      %4290 = vmatpush1.msra.mxu0 0.0
      %4291 = vmatprep.subr.mxu0 0.0
      %4292 = vmatpush1.msra.mxu0 0.0
      %4293 = vmatprep.subr.mxu0 0.0
      %4294 = vmatpush1.msra.mxu0 0.0
      %4295 = vmatprep.subr.mxu0 0.0
      %4296 = vmatpush1.msra.mxu0 0.0
      %4297 = vmatprep.subr.mxu0 0.0
      %4298 = vmatpush1.msra.mxu0 0.0
      %4299 = vmatprep.subr.mxu0 0.0
      %4300 = vmatpush1.msra.mxu0 0.0
      %4301 = vmatprep.subr.mxu0 0.0
      %4302 = vmatpush1.msra.mxu0 0.0
      %4303 = vmatprep.subr.mxu0 0.0
      %4304 = vmatpush1.msra.mxu0 0.0
      %4305 = vmatprep.subr.mxu0 0.0
      %4306 = vmatpush1.msra.mxu0 0.0
      %4307 = vmatprep.subr.mxu0 0.0
      %4308 = vmatpush1.msra.mxu0 0.0
      %4309 = vmatprep.subr.mxu0 0.0
      %4310 = vmatpush1.msra.mxu0 0.0
      %4311 = vmatprep.subr.mxu0 0.0
      %4312 = vmatpush1.msra.mxu0 0.0
      %4313 = vmatprep.subr.mxu0 0.0
      %4314 = vmatpush1.msra.mxu0 0.0
      %4315 = vmatprep.subr.mxu0 0.0
      %4316 = vmatpush1.msra.mxu0 0.0
      %4317 = vmatprep.subr.mxu0 0.0
      %4318 = vmatpush1.msra.mxu0 0.0
      %4319 = vmatprep.subr.mxu0 0.0
      %4320 = vmatpush1.msra.mxu0 0.0
      %4321 = vmatprep.subr.mxu0 0.0
      %4322 = vmatpush1.msra.mxu0 0.0
      %4323 = vmatprep.subr.mxu0 0.0
      %4324 = vmatpush1.msra.mxu0 0.0
      %4325 = vmatprep.subr.mxu0 0.0
      %4326 = vmatpush1.msra.mxu0 0.0
      %4327 = vmatprep.subr.mxu0 0.0
      %4328 = vmatpush1.msra.mxu0 0.0
      %4329 = vmatprep.subr.mxu0 0.0
      %4330 = vmatpush1.msra.mxu0 0.0
      %4331 = vmatprep.subr.mxu0 0.0
      %4332 = vmatpush1.msra.mxu0 0.0
      %4333 = vmatprep.subr.mxu0 0.0
      %4334 = vmatpush1.msra.mxu0 0.0
      %4335 = vmatprep.subr.mxu0 0.0
      %4336 = vmatpush1.msra.mxu0 0.0
      %4337 = vmatprep.mubr.f32.mxu0 0.0
      %4338 = vmatmul.mubr.f32.gmra.mrb[0].mxu0 %v4209
      %v4339 = vpop.f32.mrb[0].mxu0
      %v4340 = vadd.f32 0.0, %v4339
      %v4341 = vpop.f32.mrb[0].mxu0
      %4342 = vmatprep.mubr.f32.mxu0 0.0
      %4343 = vmatmul.mubr.f32.gmra.mrb[0].mxu0 %v4211
      %v4344 = vpop.f32.mrb[0].mxu0
      %v4345 = vadd.f32 0.0, %v4344
      %v4346 = vpop.f32.mrb[0].mxu0
      %4347 = vmatprep.mubr.f32.mxu0 0.0
      %4348 = vmatmul.mubr.f32.gmra.mrb[0].mxu0 %v4213
      %v4349 = vpop.f32.mrb[0].mxu0
      %v4350 = vadd.f32 0.0, %v4349
      %v4351 = vpop.f32.mrb[0].mxu0
      %4352 = vmatprep.mubr.f32.mxu0 0.0
      %4353 = vmatmul.mubr.f32.gmra.mrb[0].mxu0 %v4215
      %v4354 = vpop.f32.mrb[0].mxu0
      %v4355 = vadd.f32 0.0, %v4354
      %v4356 = vpop.f32.mrb[0].mxu0
      %4357 = vmatprep.mubr.f32.mxu0 0.0
      %4358 = vmatmul.mubr.f32.gmra.mrb[0].mxu0 %v4217
      %v4359 = vpop.f32.mrb[0].mxu0
      %v4360 = vadd.f32 0.0, %v4359
      %v4361 = vpop.f32.mrb[0].mxu0
      %4362 = vmatprep.mubr.f32.mxu0 0.0
      %4363 = vmatmul.mubr.f32.gmra.mrb[0].mxu0 %v4219
      %v4364 = vpop.f32.mrb[0].mxu0
      %v4365 = vadd.f32 0.0, %v4364
      %v4366 = vpop.f32.mrb[0].mxu0
      %4367 = vmatprep.mubr.f32.mxu0 0.0
      %4368 = vmatmul.mubr.f32.gmra.mrb[0].mxu0 %v4221
      %v4369 = vpop.f32.mrb[0].mxu0
      %v4370 = vadd.f32 0.0, %v4369
      %v4371 = vpop.f32.mrb[0].mxu0
      %4372 = vmatprep.mubr.f32.mxu0 0.0
      %4373 = vmatmul.mubr.f32.gmra.mrb[0].mxu0 %v4223
      %v4374 = vpop.f32.mrb[0].mxu0
      %v4375 = vadd.f32 0.0, %v4374
      %v4376 = vpop.f32.mrb[0].mxu0
      %4377 = vmatprep.mubr.f32.mxu0 0.0
      %4378 = vmatmul.mubr.f32.gmra.mrb[0].mxu0 %v4225
      %v4379 = vpop.f32.mrb[0].mxu0
      %v4380 = vadd.f32 0.0, %v4379
      %v4381 = vpop.f32.mrb[0].mxu0
      %4382 = vmatprep.mubr.f32.mxu0 0.0
      %4383 = vmatmul.mubr.f32.gmra.mrb[0].mxu0 %v4227
      %v4384 = vpop.f32.mrb[0].mxu0
      %v4385 = vadd.f32 0.0, %v4384
      %v4386 = vpop.f32.mrb[0].mxu0
      %4387 = vmatprep.mubr.f32.mxu0 0.0
      %4388 = vmatmul.mubr.f32.gmra.mrb[0].mxu0 %v4229
      %v4389 = vpop.f32.mrb[0].mxu0
      %v4390 = vadd.f32 0.0, %v4389
      %v4391 = vpop.f32.mrb[0].mxu0
      %4392 = vmatprep.mubr.f32.mxu0 0.0
      %4393 = vmatmul.mubr.f32.gmra.mrb[0].mxu0 %v4231
      %v4394 = vpop.f32.mrb[0].mxu0
      %v4395 = vadd.f32 0.0, %v4394
      %v4396 = vpop.f32.mrb[0].mxu0
      %4397 = vmatprep.mubr.f32.mxu0 0.0
      %4398 = vmatmul.mubr.f32.gmra.mrb[0].mxu0 %v4233
      %v4399 = vpop.f32.mrb[0].mxu0
      %v4400 = vadd.f32 0.0, %v4399
      %v4401 = vpop.f32.mrb[0].mxu0
      %4402 = vmatprep.mubr.f32.mxu0 0.0
      %4403 = vmatmul.mubr.f32.gmra.mrb[0].mxu0 %v4235
      %v4404 = vpop.f32.mrb[0].mxu0
      %v4405 = vadd.f32 0.0, %v4404
      %v4406 = vpop.f32.mrb[0].mxu0
      %4407 = vmatprep.mubr.f32.mxu0 0.0
      %4408 = vmatmul.mubr.f32.gmra.mrb[0].mxu0 %v4237
      %v4409 = vpop.f32.mrb[0].mxu0
      %v4410 = vadd.f32 0.0, %v4409
      %v4411 = vpop.f32.mrb[0].mxu0
      %4412 = vmatprep.mubr.f32.mxu0 0.0
      %4413 = vmatmul.mubr.f32.gmra.mrb[0].mxu0 %v4239
      %v4414 = vpop.f32.mrb[0].mxu0
      %v4415 = vadd.f32 0.0, %v4414
      %v4416 = vpop.f32.mrb[0].mxu0
      %4417 = vmatprep.mubr.f32.mxu0 0.0
      %4418 = vmatmul.mubr.f32.gmra.mrb[0].mxu0 %v4241
      %v4419 = vpop.f32.mrb[0].mxu0
      %v4420 = vadd.f32 0.0, %v4419
      %v4421 = vpop.f32.mrb[0].mxu0
      %4422 = vmatprep.mubr.f32.mxu0 0.0
      %4423 = vmatmul.mubr.f32.gmra.mrb[0].mxu0 %v4243
      %v4424 = vpop.f32.mrb[0].mxu0
      %v4425 = vadd.f32 0.0, %v4424
      %v4426 = vpop.f32.mrb[0].mxu0
      %4427 = vmatprep.mubr.f32.mxu0 0.0
      %4428 = vmatmul.mubr.f32.gmra.mrb[0].mxu0 %v4245
      %v4429 = vpop.f32.mrb[0].mxu0
      %v4430 = vadd.f32 0.0, %v4429
      %v4431 = vpop.f32.mrb[0].mxu0
      %4432 = vmatprep.mubr.f32.mxu0 0.0
      %4433 = vmatmul.mubr.f32.gmra.mrb[0].mxu0 %v4247
      %v4434 = vpop.f32.mrb[0].mxu0
      %v4435 = vadd.f32 0.0, %v4434
      %v4436 = vpop.f32.mrb[0].mxu0
      %4437 = vmatprep.mubr.f32.mxu0 0.0
      %4438 = vmatmul.mubr.f32.gmra.mrb[0].mxu0 %v4249
      %v4439 = vpop.f32.mrb[0].mxu0
      %v4440 = vadd.f32 0.0, %v4439
      %v4441 = vpop.f32.mrb[0].mxu0
      %4442 = vmatprep.mubr.f32.mxu0 0.0
      %4443 = vmatmul.mubr.f32.gmra.mrb[0].mxu0 %v4251
      %v4444 = vpop.f32.mrb[0].mxu0
      %v4445 = vadd.f32 0.0, %v4444
      %v4446 = vpop.f32.mrb[0].mxu0
      %4447 = vmatprep.mubr.f32.mxu0 0.0
      %4448 = vmatmul.mubr.f32.gmra.mrb[0].mxu0 %v4253
      %v4449 = vpop.f32.mrb[0].mxu0
      %v4450 = vadd.f32 0.0, %v4449
      %v4451 = vpop.f32.mrb[0].mxu0
      %4452 = vmatprep.mubr.f32.mxu0 0.0
      %4453 = vmatmul.mubr.f32.gmra.mrb[0].mxu0 %v4255
      %v4454 = vpop.f32.mrb[0].mxu0
      %v4455 = vadd.f32 0.0, %v4454
      %v4456 = vpop.f32.mrb[0].mxu0
      %4457 = vmatprep.mubr.f32.mxu0 0.0
      %4458 = vmatmul.mubr.f32.gmra.mrb[0].mxu0 %v4257
      %v4459 = vpop.f32.mrb[0].mxu0
      %v4460 = vadd.f32 0.0, %v4459
      %v4461 = vpop.f32.mrb[0].mxu0
      %4462 = vmatprep.mubr.f32.mxu0 0.0
      %4463 = vmatmul.mubr.f32.gmra.mrb[0].mxu0 %v4259
      %v4464 = vpop.f32.mrb[0].mxu0
      %v4465 = vadd.f32 0.0, %v4464
      %v4466 = vpop.f32.mrb[0].mxu0
      %4467 = vmatprep.mubr.f32.mxu0 0.0
      %4468 = vmatmul.mubr.f32.gmra.mrb[0].mxu0 %v4261
      %v4469 = vpop.f32.mrb[0].mxu0
      %v4470 = vadd.f32 0.0, %v4469
      %v4471 = vpop.f32.mrb[0].mxu0
      %4472 = vmatprep.mubr.f32.mxu0 0.0
      %4473 = vmatmul.mubr.f32.gmra.mrb[0].mxu0 %v4263
      %v4474 = vpop.f32.mrb[0].mxu0
      %v4475 = vadd.f32 0.0, %v4474
      %v4476 = vpop.f32.mrb[0].mxu0
      %4477 = vmatprep.mubr.f32.mxu0 0.0
      %4478 = vmatmul.mubr.f32.gmra.mrb[0].mxu0 %v4265
      %v4479 = vpop.f32.mrb[0].mxu0
      %v4480 = vadd.f32 0.0, %v4479
      %v4481 = vpop.f32.mrb[0].mxu0
      %4482 = vmatprep.mubr.f32.mxu0 0.0
      %4483 = vmatmul.mubr.f32.gmra.mrb[0].mxu0 %v4267
      %v4484 = vpop.f32.mrb[0].mxu0
      %v4485 = vadd.f32 0.0, %v4484
      %v4486 = vpop.f32.mrb[0].mxu0
      %4487 = vmatprep.mubr.f32.mxu0 0.0
      %4488 = vmatmul.mubr.f32.gmra.mrb[0].mxu0 %v4269
      %v4489 = vpop.f32.mrb[0].mxu0
      %v4490 = vadd.f32 0.0, %v4489
      %v4491 = vpop.f32.mrb[0].mxu0
      %4492 = vmatprep.mubr.f32.mxu0 0.0
      %4493 = vmatmul.mubr.f32.gmra.mrb[0].mxu0 %v4271
      %v4494 = vpop.f32.mrb[0].mxu0
      %v4495 = vadd.f32 0.0, %v4494
      %v4496 = vpop.f32.mrb[0].mxu0
      %4497 = vdwg.mxu0
      %v4498 = vadd.f32 %v3969, %v4340
      %v4499 = vadd.f32 %v3974, %v4345
      %v4500 = vadd.f32 %v3979, %v4350
      %v4501 = vadd.f32 %v3984, %v4355
      %v4502 = vadd.f32 %v3989, %v4360
      %v4503 = vadd.f32 %v3994, %v4365
      %v4504 = vadd.f32 %v3999, %v4370
      %v4505 = vadd.f32 %v4004, %v4375
      %v4506 = vadd.f32 %v4009, %v4380
      %v4507 = vadd.f32 %v4014, %v4385
      %v4508 = vadd.f32 %v4019, %v4390
      %v4509 = vadd.f32 %v4024, %v4395
      %v4510 = vadd.f32 %v4029, %v4400
      %v4511 = vadd.f32 %v4034, %v4405
      %v4512 = vadd.f32 %v4039, %v4410
      %v4513 = vadd.f32 %v4044, %v4415
      %v4514 = vadd.f32 %v4049, %v4420
      %v4515 = vadd.f32 %v4054, %v4425
      %v4516 = vadd.f32 %v4059, %v4430
      %v4517 = vadd.f32 %v4064, %v4435
      %v4518 = vadd.f32 %v4069, %v4440
      %v4519 = vadd.f32 %v4074, %v4445
      %v4520 = vadd.f32 %v4079, %v4450
      %v4521 = vadd.f32 %v4084, %v4455
      %v4522 = vadd.f32 %v4089, %v4460
      %v4523 = vadd.f32 %v4094, %v4465
      %v4524 = vadd.f32 %v4099, %v4470
      %v4525 = vadd.f32 %v4104, %v4475
      %v4526 = vadd.f32 %v4109, %v4480
      %v4527 = vadd.f32 %v4114, %v4485
      %v4528 = vadd.f32 %v4119, %v4490
      %v4529 = vadd.f32 %v4124, %v4495
      %s4530 = scalar_lea.vmem %s4, 24
      %v4531 = vld [vmem:[%s4530] sm:$0xff]
      %v4533 = vsel %vm2153, %v2147, 0
      %v4536 = vsel %vm2153, %v2148, 0
      %4538 = vmatprep.subr.mxu0 0.0
      %4539 = vmatpush1.msra.mxu0 %v4531
      %4540 = vmatprep.subr.mxu0 0.0
      %4541 = vmatpush1.msra.mxu0 0.0
      %4542 = vmatprep.subr.mxu0 0.0
      %4543 = vmatpush1.msra.mxu0 0.0
      %4544 = vmatprep.subr.mxu0 0.0
      %4545 = vmatpush1.msra.mxu0 0.0
      %4546 = vmatprep.subr.mxu0 0.0
      %4547 = vmatpush1.msra.mxu0 0.0
      %4548 = vmatprep.subr.mxu0 0.0
      %4549 = vmatpush1.msra.mxu0 0.0
      %4550 = vmatprep.subr.mxu0 0.0
      %4551 = vmatpush1.msra.mxu0 0.0
      %4552 = vmatprep.subr.mxu0 0.0
      %4553 = vmatpush1.msra.mxu0 0.0
      %4554 = vmatprep.subr.mxu0 0.0
      %4555 = vmatpush1.msra.mxu0 0.0
      %4556 = vmatprep.subr.mxu0 0.0
      %4557 = vmatpush1.msra.mxu0 0.0
      %4558 = vmatprep.subr.mxu0 0.0
      %4559 = vmatpush1.msra.mxu0 0.0
      %4560 = vmatprep.subr.mxu0 0.0
      %4561 = vmatpush1.msra.mxu0 0.0
      %4562 = vmatprep.subr.mxu0 0.0
      %4563 = vmatpush1.msra.mxu0 0.0
      %4564 = vmatprep.subr.mxu0 0.0
      %4565 = vmatpush1.msra.mxu0 0.0
      %4566 = vmatprep.subr.mxu0 0.0
      %4567 = vmatpush1.msra.mxu0 0.0
      %4568 = vmatprep.subr.mxu0 0.0
      %4569 = vmatpush1.msra.mxu0 0.0
      %4570 = vmatprep.subr.mxu0 0.0
      %4571 = vmatpush1.msra.mxu0 0.0
      %4572 = vmatprep.subr.mxu0 0.0
      %4573 = vmatpush1.msra.mxu0 0.0
      %4574 = vmatprep.subr.mxu0 0.0
      %4575 = vmatpush1.msra.mxu0 0.0
      %4576 = vmatprep.subr.mxu0 0.0
      %4577 = vmatpush1.msra.mxu0 0.0
      %4578 = vmatprep.subr.mxu0 0.0
      %4579 = vmatpush1.msra.mxu0 0.0
      %4580 = vmatprep.subr.mxu0 0.0
      %4581 = vmatpush1.msra.mxu0 0.0
      %4582 = vmatprep.subr.mxu0 0.0
      %4583 = vmatpush1.msra.mxu0 0.0
      %4584 = vmatprep.subr.mxu0 0.0
      %4585 = vmatpush1.msra.mxu0 0.0
      %4586 = vmatprep.subr.mxu0 0.0
      %4587 = vmatpush1.msra.mxu0 0.0
      %4588 = vmatprep.subr.mxu0 0.0
      %4589 = vmatpush1.msra.mxu0 0.0
      %4590 = vmatprep.subr.mxu0 0.0
      %4591 = vmatpush1.msra.mxu0 0.0
      %4592 = vmatprep.subr.mxu0 0.0
      %4593 = vmatpush1.msra.mxu0 0.0
      %4594 = vmatprep.subr.mxu0 0.0
      %4595 = vmatpush1.msra.mxu0 0.0
      %4596 = vmatprep.subr.mxu0 0.0
      %4597 = vmatpush1.msra.mxu0 0.0
      %4598 = vmatprep.subr.mxu0 0.0
      %4599 = vmatpush1.msra.mxu0 0.0
      %4600 = vmatprep.subr.mxu0 0.0
      %4601 = vmatpush1.msra.mxu0 0.0
      %4602 = vmatprep.mubr.f32.mxu0 0.0
      %4603 = vmatmul.mubr.f32.gmra.mrb[0].mxu0 %v3842
      %v4604 = vpop.f32.mrb[0].mxu0
      %v4605 = vadd.f32 0.0, %v4604
      %v4606 = vpop.f32.mrb[0].mxu0
      %4607 = vmatprep.mubr.f32.mxu0 0.0
      %4608 = vmatmul.mubr.f32.gmra.mrb[0].mxu0 %v3844
      %v4609 = vpop.f32.mrb[0].mxu0
      %v4610 = vadd.f32 0.0, %v4609
      %v4611 = vpop.f32.mrb[0].mxu0
      %4612 = vmatprep.mubr.f32.mxu0 0.0
      %4613 = vmatmul.mubr.f32.gmra.mrb[0].mxu0 %v3846
      %v4614 = vpop.f32.mrb[0].mxu0
      %v4615 = vadd.f32 0.0, %v4614
      %v4616 = vpop.f32.mrb[0].mxu0
      %4617 = vmatprep.mubr.f32.mxu0 0.0
      %4618 = vmatmul.mubr.f32.gmra.mrb[0].mxu0 %v3848
      %v4619 = vpop.f32.mrb[0].mxu0
      %v4620 = vadd.f32 0.0, %v4619
      %v4621 = vpop.f32.mrb[0].mxu0
      %4622 = vmatprep.mubr.f32.mxu0 0.0
      %4623 = vmatmul.mubr.f32.gmra.mrb[0].mxu0 %v3850
      %v4624 = vpop.f32.mrb[0].mxu0
      %v4625 = vadd.f32 0.0, %v4624
      %v4626 = vpop.f32.mrb[0].mxu0
      %4627 = vmatprep.mubr.f32.mxu0 0.0
      %4628 = vmatmul.mubr.f32.gmra.mrb[0].mxu0 %v3852
      %v4629 = vpop.f32.mrb[0].mxu0
      %v4630 = vadd.f32 0.0, %v4629
      %v4631 = vpop.f32.mrb[0].mxu0
      %4632 = vmatprep.mubr.f32.mxu0 0.0
      %4633 = vmatmul.mubr.f32.gmra.mrb[0].mxu0 %v3854
      %v4634 = vpop.f32.mrb[0].mxu0
      %v4635 = vadd.f32 0.0, %v4634
      %v4636 = vpop.f32.mrb[0].mxu0
      %4637 = vmatprep.mubr.f32.mxu0 0.0
      %4638 = vmatmul.mubr.f32.gmra.mrb[0].mxu0 %v3856
      %v4639 = vpop.f32.mrb[0].mxu0
      %v4640 = vadd.f32 0.0, %v4639
      %v4641 = vpop.f32.mrb[0].mxu0
      %4642 = vmatprep.mubr.f32.mxu0 0.0
      %4643 = vmatmul.mubr.f32.gmra.mrb[0].mxu0 %v3858
      %v4644 = vpop.f32.mrb[0].mxu0
      %v4645 = vadd.f32 0.0, %v4644
      %v4646 = vpop.f32.mrb[0].mxu0
      %4647 = vmatprep.mubr.f32.mxu0 0.0
      %4648 = vmatmul.mubr.f32.gmra.mrb[0].mxu0 %v3860
      %v4649 = vpop.f32.mrb[0].mxu0
      %v4650 = vadd.f32 0.0, %v4649
      %v4651 = vpop.f32.mrb[0].mxu0
      %4652 = vmatprep.mubr.f32.mxu0 0.0
      %4653 = vmatmul.mubr.f32.gmra.mrb[0].mxu0 %v3862
      %v4654 = vpop.f32.mrb[0].mxu0
      %v4655 = vadd.f32 0.0, %v4654
      %v4656 = vpop.f32.mrb[0].mxu0
      %4657 = vmatprep.mubr.f32.mxu0 0.0
      %4658 = vmatmul.mubr.f32.gmra.mrb[0].mxu0 %v3864
      %v4659 = vpop.f32.mrb[0].mxu0
      %v4660 = vadd.f32 0.0, %v4659
      %v4661 = vpop.f32.mrb[0].mxu0
      %4662 = vmatprep.mubr.f32.mxu0 0.0
      %4663 = vmatmul.mubr.f32.gmra.mrb[0].mxu0 %v3866
      %v4664 = vpop.f32.mrb[0].mxu0
      %v4665 = vadd.f32 0.0, %v4664
      %v4666 = vpop.f32.mrb[0].mxu0
      %4667 = vmatprep.mubr.f32.mxu0 0.0
      %4668 = vmatmul.mubr.f32.gmra.mrb[0].mxu0 %v3868
      %v4669 = vpop.f32.mrb[0].mxu0
      %v4670 = vadd.f32 0.0, %v4669
      %v4671 = vpop.f32.mrb[0].mxu0
      %4672 = vmatprep.mubr.f32.mxu0 0.0
      %4673 = vmatmul.mubr.f32.gmra.mrb[0].mxu0 %v3870
      %v4674 = vpop.f32.mrb[0].mxu0
      %v4675 = vadd.f32 0.0, %v4674
      %v4676 = vpop.f32.mrb[0].mxu0
      %4677 = vmatprep.mubr.f32.mxu0 0.0
      %4678 = vmatmul.mubr.f32.gmra.mrb[0].mxu0 %v3872
      %v4679 = vpop.f32.mrb[0].mxu0
      %v4680 = vadd.f32 0.0, %v4679
      %v4681 = vpop.f32.mrb[0].mxu0
      %4682 = vmatprep.mubr.f32.mxu0 0.0
      %4683 = vmatmul.mubr.f32.gmra.mrb[0].mxu0 %v3874
      %v4684 = vpop.f32.mrb[0].mxu0
      %v4685 = vadd.f32 0.0, %v4684
      %v4686 = vpop.f32.mrb[0].mxu0
      %4687 = vmatprep.mubr.f32.mxu0 0.0
      %4688 = vmatmul.mubr.f32.gmra.mrb[0].mxu0 %v3876
      %v4689 = vpop.f32.mrb[0].mxu0
      %v4690 = vadd.f32 0.0, %v4689
      %v4691 = vpop.f32.mrb[0].mxu0
      %4692 = vmatprep.mubr.f32.mxu0 0.0
      %4693 = vmatmul.mubr.f32.gmra.mrb[0].mxu0 %v3878
      %v4694 = vpop.f32.mrb[0].mxu0
      %v4695 = vadd.f32 0.0, %v4694
      %v4696 = vpop.f32.mrb[0].mxu0
      %4697 = vmatprep.mubr.f32.mxu0 0.0
      %4698 = vmatmul.mubr.f32.gmra.mrb[0].mxu0 %v3880
      %v4699 = vpop.f32.mrb[0].mxu0
      %v4700 = vadd.f32 0.0, %v4699
      %v4701 = vpop.f32.mrb[0].mxu0
      %4702 = vmatprep.mubr.f32.mxu0 0.0
      %4703 = vmatmul.mubr.f32.gmra.mrb[0].mxu0 %v3882
      %v4704 = vpop.f32.mrb[0].mxu0
      %v4705 = vadd.f32 0.0, %v4704
      %v4706 = vpop.f32.mrb[0].mxu0
      %4707 = vmatprep.mubr.f32.mxu0 0.0
      %4708 = vmatmul.mubr.f32.gmra.mrb[0].mxu0 %v3884
      %v4709 = vpop.f32.mrb[0].mxu0
      %v4710 = vadd.f32 0.0, %v4709
      %v4711 = vpop.f32.mrb[0].mxu0
      %4712 = vmatprep.mubr.f32.mxu0 0.0
      %4713 = vmatmul.mubr.f32.gmra.mrb[0].mxu0 %v3886
      %v4714 = vpop.f32.mrb[0].mxu0
      %v4715 = vadd.f32 0.0, %v4714
      %v4716 = vpop.f32.mrb[0].mxu0
      %4717 = vmatprep.mubr.f32.mxu0 0.0
      %4718 = vmatmul.mubr.f32.gmra.mrb[0].mxu0 %v3888
      %v4719 = vpop.f32.mrb[0].mxu0
      %v4720 = vadd.f32 0.0, %v4719
      %v4721 = vpop.f32.mrb[0].mxu0
      %4722 = vmatprep.mubr.f32.mxu0 0.0
      %4723 = vmatmul.mubr.f32.gmra.mrb[0].mxu0 %v3890
      %v4724 = vpop.f32.mrb[0].mxu0
      %v4725 = vadd.f32 0.0, %v4724
      %v4726 = vpop.f32.mrb[0].mxu0
      %4727 = vmatprep.mubr.f32.mxu0 0.0
      %4728 = vmatmul.mubr.f32.gmra.mrb[0].mxu0 %v3892
      %v4729 = vpop.f32.mrb[0].mxu0
      %v4730 = vadd.f32 0.0, %v4729
      %v4731 = vpop.f32.mrb[0].mxu0
      %4732 = vmatprep.mubr.f32.mxu0 0.0
      %4733 = vmatmul.mubr.f32.gmra.mrb[0].mxu0 %v3894
      %v4734 = vpop.f32.mrb[0].mxu0
      %v4735 = vadd.f32 0.0, %v4734
      %v4736 = vpop.f32.mrb[0].mxu0
      %4737 = vmatprep.mubr.f32.mxu0 0.0
      %4738 = vmatmul.mubr.f32.gmra.mrb[0].mxu0 %v3896
      %v4739 = vpop.f32.mrb[0].mxu0
      %v4740 = vadd.f32 0.0, %v4739
      %v4741 = vpop.f32.mrb[0].mxu0
      %4742 = vmatprep.mubr.f32.mxu0 0.0
      %4743 = vmatmul.mubr.f32.gmra.mrb[0].mxu0 %v3898
      %v4744 = vpop.f32.mrb[0].mxu0
      %v4745 = vadd.f32 0.0, %v4744
      %v4746 = vpop.f32.mrb[0].mxu0
      %4747 = vmatprep.mubr.f32.mxu0 0.0
      %4748 = vmatmul.mubr.f32.gmra.mrb[0].mxu0 %v3900
      %v4749 = vpop.f32.mrb[0].mxu0
      %v4750 = vadd.f32 0.0, %v4749
      %v4751 = vpop.f32.mrb[0].mxu0
      %4752 = vmatprep.mubr.f32.mxu0 0.0
      %4753 = vmatmul.mubr.f32.gmra.mrb[0].mxu0 %v4533
      %v4754 = vpop.f32.mrb[0].mxu0
      %v4755 = vadd.f32 0.0, %v4754
      %v4756 = vpop.f32.mrb[0].mxu0
      %4757 = vmatprep.mubr.f32.mxu0 0.0
      %4758 = vmatmul.mubr.f32.gmra.mrb[0].mxu0 %v4536
      %v4759 = vpop.f32.mrb[0].mxu0
      %v4760 = vadd.f32 0.0, %v4759
      %v4761 = vpop.f32.mrb[0].mxu0
      %4762 = vdwg.mxu0
      %v4763 = vadd.f32 %v4498, %v4605
      %v4764 = vadd.f32 %v4499, %v4610
      %v4765 = vadd.f32 %v4500, %v4615
      %v4766 = vadd.f32 %v4501, %v4620
      %v4767 = vadd.f32 %v4502, %v4625
      %v4768 = vadd.f32 %v4503, %v4630
      %v4769 = vadd.f32 %v4504, %v4635
      %v4770 = vadd.f32 %v4505, %v4640
      %v4771 = vadd.f32 %v4506, %v4645
      %v4772 = vadd.f32 %v4507, %v4650
      %v4773 = vadd.f32 %v4508, %v4655
      %v4774 = vadd.f32 %v4509, %v4660
      %v4775 = vadd.f32 %v4510, %v4665
      %v4776 = vadd.f32 %v4511, %v4670
      %v4777 = vadd.f32 %v4512, %v4675
      %v4778 = vadd.f32 %v4513, %v4680
      %v4779 = vadd.f32 %v4514, %v4685
      %v4780 = vadd.f32 %v4515, %v4690
      %v4781 = vadd.f32 %v4516, %v4695
      %v4782 = vadd.f32 %v4517, %v4700
      %v4783 = vadd.f32 %v4518, %v4705
      %v4784 = vadd.f32 %v4519, %v4710
      %v4785 = vadd.f32 %v4520, %v4715
      %v4786 = vadd.f32 %v4521, %v4720
      %v4787 = vadd.f32 %v4522, %v4725
      %v4788 = vadd.f32 %v4523, %v4730
      %v4789 = vadd.f32 %v4524, %v4735
      %v4790 = vadd.f32 %v4525, %v4740
      %v4791 = vadd.f32 %v4526, %v4745
      %v4792 = vadd.f32 %v4527, %v4750
      %v4793 = vadd.f32 %v4528, %v4755
      %v4794 = vadd.f32 %v4529, %v4760
      %v4796 = vrot.slane %v2147, 1
      %v4797 = vrot.slane %v2148, 1
      %v4798 = vsel %vm2586, %v4796, %v4797
      %v4799 = vrot.slane %v2149, 1
      %v4800 = vsel %vm2586, %v4797, %v4799
      %s4801 = scalar_lea.vmem %s4, 32
      %v4802 = vld [vmem:[%s4801] sm:$0xff]
      %v4803 = vsel %vm2153, %v4798, 0
      %v4805 = vsel %vm2153, %v4800, 0
      %4807 = vmatprep.subr.mxu0 0.0
      %4808 = vmatpush1.msra.mxu0 %v4802
      %4809 = vmatprep.subr.mxu0 0.0
      %4810 = vmatpush1.msra.mxu0 0.0
      %4811 = vmatprep.subr.mxu0 0.0
      %4812 = vmatpush1.msra.mxu0 0.0
      %4813 = vmatprep.subr.mxu0 0.0
      %4814 = vmatpush1.msra.mxu0 0.0
      %4815 = vmatprep.subr.mxu0 0.0
      %4816 = vmatpush1.msra.mxu0 0.0
      %4817 = vmatprep.subr.mxu0 0.0
      %4818 = vmatpush1.msra.mxu0 0.0
      %4819 = vmatprep.subr.mxu0 0.0
      %4820 = vmatpush1.msra.mxu0 0.0
      %4821 = vmatprep.subr.mxu0 0.0
      %4822 = vmatpush1.msra.mxu0 0.0
      %4823 = vmatprep.subr.mxu0 0.0
      %4824 = vmatpush1.msra.mxu0 0.0
      %4825 = vmatprep.subr.mxu0 0.0
      %4826 = vmatpush1.msra.mxu0 0.0
      %4827 = vmatprep.subr.mxu0 0.0
      %4828 = vmatpush1.msra.mxu0 0.0
      %4829 = vmatprep.subr.mxu0 0.0
      %4830 = vmatpush1.msra.mxu0 0.0
      %4831 = vmatprep.subr.mxu0 0.0
      %4832 = vmatpush1.msra.mxu0 0.0
      %4833 = vmatprep.subr.mxu0 0.0
      %4834 = vmatpush1.msra.mxu0 0.0
      %4835 = vmatprep.subr.mxu0 0.0
      %4836 = vmatpush1.msra.mxu0 0.0
      %4837 = vmatprep.subr.mxu0 0.0
      %4838 = vmatpush1.msra.mxu0 0.0
      %4839 = vmatprep.subr.mxu0 0.0
      %4840 = vmatpush1.msra.mxu0 0.0
      %4841 = vmatprep.subr.mxu0 0.0
      %4842 = vmatpush1.msra.mxu0 0.0
      %4843 = vmatprep.subr.mxu0 0.0
      %4844 = vmatpush1.msra.mxu0 0.0
      %4845 = vmatprep.subr.mxu0 0.0
      %4846 = vmatpush1.msra.mxu0 0.0
      %4847 = vmatprep.subr.mxu0 0.0
      %4848 = vmatpush1.msra.mxu0 0.0
      %4849 = vmatprep.subr.mxu0 0.0
      %4850 = vmatpush1.msra.mxu0 0.0
      %4851 = vmatprep.subr.mxu0 0.0
      %4852 = vmatpush1.msra.mxu0 0.0
      %4853 = vmatprep.subr.mxu0 0.0
      %4854 = vmatpush1.msra.mxu0 0.0
      %4855 = vmatprep.subr.mxu0 0.0
      %4856 = vmatpush1.msra.mxu0 0.0
      %4857 = vmatprep.subr.mxu0 0.0
      %4858 = vmatpush1.msra.mxu0 0.0
      %4859 = vmatprep.subr.mxu0 0.0
      %4860 = vmatpush1.msra.mxu0 0.0
      %4861 = vmatprep.subr.mxu0 0.0
      %4862 = vmatpush1.msra.mxu0 0.0
      %4863 = vmatprep.subr.mxu0 0.0
      %4864 = vmatpush1.msra.mxu0 0.0
      %4865 = vmatprep.subr.mxu0 0.0
      %4866 = vmatpush1.msra.mxu0 0.0
      %4867 = vmatprep.subr.mxu0 0.0
      %4868 = vmatpush1.msra.mxu0 0.0
      %4869 = vmatprep.subr.mxu0 0.0
      %4870 = vmatpush1.msra.mxu0 0.0
      %4871 = vmatprep.mubr.f32.mxu0 0.0
      %4872 = vmatmul.mubr.f32.gmra.mrb[0].mxu0 %v3553
      %v4873 = vpop.f32.mrb[0].mxu0
      %v4874 = vadd.f32 0.0, %v4873
      %v4875 = vpop.f32.mrb[0].mxu0
      %4876 = vmatprep.mubr.f32.mxu0 0.0
      %4877 = vmatmul.mubr.f32.gmra.mrb[0].mxu0 %v3555
      %v4878 = vpop.f32.mrb[0].mxu0
      %v4879 = vadd.f32 0.0, %v4878
      %v4880 = vpop.f32.mrb[0].mxu0
      %4881 = vmatprep.mubr.f32.mxu0 0.0
      %4882 = vmatmul.mubr.f32.gmra.mrb[0].mxu0 %v3557
      %v4883 = vpop.f32.mrb[0].mxu0
      %v4884 = vadd.f32 0.0, %v4883
      %v4885 = vpop.f32.mrb[0].mxu0
      %4886 = vmatprep.mubr.f32.mxu0 0.0
      %4887 = vmatmul.mubr.f32.gmra.mrb[0].mxu0 %v3559
      %v4888 = vpop.f32.mrb[0].mxu0
      %v4889 = vadd.f32 0.0, %v4888
      %v4890 = vpop.f32.mrb[0].mxu0
      %4891 = vmatprep.mubr.f32.mxu0 0.0
      %4892 = vmatmul.mubr.f32.gmra.mrb[0].mxu0 %v3561
      %v4893 = vpop.f32.mrb[0].mxu0
      %v4894 = vadd.f32 0.0, %v4893
      %v4895 = vpop.f32.mrb[0].mxu0
      %4896 = vmatprep.mubr.f32.mxu0 0.0
      %4897 = vmatmul.mubr.f32.gmra.mrb[0].mxu0 %v3563
      %v4898 = vpop.f32.mrb[0].mxu0
      %v4899 = vadd.f32 0.0, %v4898
      %v4900 = vpop.f32.mrb[0].mxu0
      %4901 = vmatprep.mubr.f32.mxu0 0.0
      %4902 = vmatmul.mubr.f32.gmra.mrb[0].mxu0 %v3565
      %v4903 = vpop.f32.mrb[0].mxu0
      %v4904 = vadd.f32 0.0, %v4903
      %v4905 = vpop.f32.mrb[0].mxu0
      %4906 = vmatprep.mubr.f32.mxu0 0.0
      %4907 = vmatmul.mubr.f32.gmra.mrb[0].mxu0 %v3567
      %v4908 = vpop.f32.mrb[0].mxu0
      %v4909 = vadd.f32 0.0, %v4908
      %v4910 = vpop.f32.mrb[0].mxu0
      %4911 = vmatprep.mubr.f32.mxu0 0.0
      %4912 = vmatmul.mubr.f32.gmra.mrb[0].mxu0 %v3569
      %v4913 = vpop.f32.mrb[0].mxu0
      %v4914 = vadd.f32 0.0, %v4913
      %v4915 = vpop.f32.mrb[0].mxu0
      %4916 = vmatprep.mubr.f32.mxu0 0.0
      %4917 = vmatmul.mubr.f32.gmra.mrb[0].mxu0 %v3571
      %v4918 = vpop.f32.mrb[0].mxu0
      %v4919 = vadd.f32 0.0, %v4918
      %v4920 = vpop.f32.mrb[0].mxu0
      %4921 = vmatprep.mubr.f32.mxu0 0.0
      %4922 = vmatmul.mubr.f32.gmra.mrb[0].mxu0 %v3573
      %v4923 = vpop.f32.mrb[0].mxu0
      %v4924 = vadd.f32 0.0, %v4923
      %v4925 = vpop.f32.mrb[0].mxu0
      %4926 = vmatprep.mubr.f32.mxu0 0.0
      %4927 = vmatmul.mubr.f32.gmra.mrb[0].mxu0 %v3575
      %v4928 = vpop.f32.mrb[0].mxu0
      %v4929 = vadd.f32 0.0, %v4928
      %v4930 = vpop.f32.mrb[0].mxu0
      %4931 = vmatprep.mubr.f32.mxu0 0.0
      %4932 = vmatmul.mubr.f32.gmra.mrb[0].mxu0 %v3577
      %v4933 = vpop.f32.mrb[0].mxu0
      %v4934 = vadd.f32 0.0, %v4933
      %v4935 = vpop.f32.mrb[0].mxu0
      %4936 = vmatprep.mubr.f32.mxu0 0.0
      %4937 = vmatmul.mubr.f32.gmra.mrb[0].mxu0 %v3579
      %v4938 = vpop.f32.mrb[0].mxu0
      %v4939 = vadd.f32 0.0, %v4938
      %v4940 = vpop.f32.mrb[0].mxu0
      %4941 = vmatprep.mubr.f32.mxu0 0.0
      %4942 = vmatmul.mubr.f32.gmra.mrb[0].mxu0 %v3581
      %v4943 = vpop.f32.mrb[0].mxu0
      %v4944 = vadd.f32 0.0, %v4943
      %v4945 = vpop.f32.mrb[0].mxu0
      %4946 = vmatprep.mubr.f32.mxu0 0.0
      %4947 = vmatmul.mubr.f32.gmra.mrb[0].mxu0 %v3583
      %v4948 = vpop.f32.mrb[0].mxu0
      %v4949 = vadd.f32 0.0, %v4948
      %v4950 = vpop.f32.mrb[0].mxu0
      %4951 = vmatprep.mubr.f32.mxu0 0.0
      %4952 = vmatmul.mubr.f32.gmra.mrb[0].mxu0 %v3585
      %v4953 = vpop.f32.mrb[0].mxu0
      %v4954 = vadd.f32 0.0, %v4953
      %v4955 = vpop.f32.mrb[0].mxu0
      %4956 = vmatprep.mubr.f32.mxu0 0.0
      %4957 = vmatmul.mubr.f32.gmra.mrb[0].mxu0 %v3587
      %v4958 = vpop.f32.mrb[0].mxu0
      %v4959 = vadd.f32 0.0, %v4958
      %v4960 = vpop.f32.mrb[0].mxu0
      %4961 = vmatprep.mubr.f32.mxu0 0.0
      %4962 = vmatmul.mubr.f32.gmra.mrb[0].mxu0 %v3589
      %v4963 = vpop.f32.mrb[0].mxu0
      %v4964 = vadd.f32 0.0, %v4963
      %v4965 = vpop.f32.mrb[0].mxu0
      %4966 = vmatprep.mubr.f32.mxu0 0.0
      %4967 = vmatmul.mubr.f32.gmra.mrb[0].mxu0 %v3591
      %v4968 = vpop.f32.mrb[0].mxu0
      %v4969 = vadd.f32 0.0, %v4968
      %v4970 = vpop.f32.mrb[0].mxu0
      %4971 = vmatprep.mubr.f32.mxu0 0.0
      %4972 = vmatmul.mubr.f32.gmra.mrb[0].mxu0 %v3593
      %v4973 = vpop.f32.mrb[0].mxu0
      %v4974 = vadd.f32 0.0, %v4973
      %v4975 = vpop.f32.mrb[0].mxu0
      %4976 = vmatprep.mubr.f32.mxu0 0.0
      %4977 = vmatmul.mubr.f32.gmra.mrb[0].mxu0 %v3595
      %v4978 = vpop.f32.mrb[0].mxu0
      %v4979 = vadd.f32 0.0, %v4978
      %v4980 = vpop.f32.mrb[0].mxu0
      %4981 = vmatprep.mubr.f32.mxu0 0.0
      %4982 = vmatmul.mubr.f32.gmra.mrb[0].mxu0 %v3597
      %v4983 = vpop.f32.mrb[0].mxu0
      %v4984 = vadd.f32 0.0, %v4983
      %v4985 = vpop.f32.mrb[0].mxu0
      %4986 = vmatprep.mubr.f32.mxu0 0.0
      %4987 = vmatmul.mubr.f32.gmra.mrb[0].mxu0 %v3599
      %v4988 = vpop.f32.mrb[0].mxu0
      %v4989 = vadd.f32 0.0, %v4988
      %v4990 = vpop.f32.mrb[0].mxu0
      %4991 = vmatprep.mubr.f32.mxu0 0.0
      %4992 = vmatmul.mubr.f32.gmra.mrb[0].mxu0 %v3601
      %v4993 = vpop.f32.mrb[0].mxu0
      %v4994 = vadd.f32 0.0, %v4993
      %v4995 = vpop.f32.mrb[0].mxu0
      %4996 = vmatprep.mubr.f32.mxu0 0.0
      %4997 = vmatmul.mubr.f32.gmra.mrb[0].mxu0 %v3603
      %v4998 = vpop.f32.mrb[0].mxu0
      %v4999 = vadd.f32 0.0, %v4998
      %v5000 = vpop.f32.mrb[0].mxu0
      %5001 = vmatprep.mubr.f32.mxu0 0.0
      %5002 = vmatmul.mubr.f32.gmra.mrb[0].mxu0 %v3605
      %v5003 = vpop.f32.mrb[0].mxu0
      %v5004 = vadd.f32 0.0, %v5003
      %v5005 = vpop.f32.mrb[0].mxu0
      %5006 = vmatprep.mubr.f32.mxu0 0.0
      %5007 = vmatmul.mubr.f32.gmra.mrb[0].mxu0 %v3607
      %v5008 = vpop.f32.mrb[0].mxu0
      %v5009 = vadd.f32 0.0, %v5008
      %v5010 = vpop.f32.mrb[0].mxu0
      %5011 = vmatprep.mubr.f32.mxu0 0.0
      %5012 = vmatmul.mubr.f32.gmra.mrb[0].mxu0 %v3609
      %v5013 = vpop.f32.mrb[0].mxu0
      %v5014 = vadd.f32 0.0, %v5013
      %v5015 = vpop.f32.mrb[0].mxu0
      %5016 = vmatprep.mubr.f32.mxu0 0.0
      %5017 = vmatmul.mubr.f32.gmra.mrb[0].mxu0 %v3611
      %v5018 = vpop.f32.mrb[0].mxu0
      %v5019 = vadd.f32 0.0, %v5018
      %v5020 = vpop.f32.mrb[0].mxu0
      %5021 = vmatprep.mubr.f32.mxu0 0.0
      %5022 = vmatmul.mubr.f32.gmra.mrb[0].mxu0 %v4803
      %v5023 = vpop.f32.mrb[0].mxu0
      %v5024 = vadd.f32 0.0, %v5023
      %v5025 = vpop.f32.mrb[0].mxu0
      %5026 = vmatprep.mubr.f32.mxu0 0.0
      %5027 = vmatmul.mubr.f32.gmra.mrb[0].mxu0 %v4805
      %v5028 = vpop.f32.mrb[0].mxu0
      %v5029 = vadd.f32 0.0, %v5028
      %v5030 = vpop.f32.mrb[0].mxu0
      %5031 = vdwg.mxu0
      %v5032 = vadd.f32 %v4763, %v4874
      %v5033 = vadd.f32 %v4764, %v4879
      %v5034 = vadd.f32 %v4765, %v4884
      %v5035 = vadd.f32 %v4766, %v4889
      %v5036 = vadd.f32 %v4767, %v4894
      %v5037 = vadd.f32 %v4768, %v4899
      %v5038 = vadd.f32 %v4769, %v4904
      %v5039 = vadd.f32 %v4770, %v4909
      %v5040 = vadd.f32 %v4771, %v4914
      %v5041 = vadd.f32 %v4772, %v4919
      %v5042 = vadd.f32 %v4773, %v4924
      %v5043 = vadd.f32 %v4774, %v4929
      %v5044 = vadd.f32 %v4775, %v4934
      %v5045 = vadd.f32 %v4776, %v4939
      %v5046 = vadd.f32 %v4777, %v4944
      %v5047 = vadd.f32 %v4778, %v4949
      %v5048 = vadd.f32 %v4779, %v4954
      %v5049 = vadd.f32 %v4780, %v4959
      %v5050 = vadd.f32 %v4781, %v4964
      %v5051 = vadd.f32 %v4782, %v4969
      %v5052 = vadd.f32 %v4783, %v4974
      %v5053 = vadd.f32 %v4784, %v4979
      %v5054 = vadd.f32 %v4785, %v4984
      %v5055 = vadd.f32 %v4786, %v4989
      %v5056 = vadd.f32 %v4787, %v4994
      %v5057 = vadd.f32 %v4788, %v4999
      %v5058 = vadd.f32 %v4789, %v5004
      %v5059 = vadd.f32 %v4790, %v5009
      %v5060 = vadd.f32 %v4791, %v5014
      %v5061 = vadd.f32 %v4792, %v5019
      %v5062 = vadd.f32 %v4793, %v5024
      %v5063 = vadd.f32 %v4794, %v5029
      %v5064 = vrot.slane %v2147, 2
      %v5065 = vrot.slane %v2148, 2
      %v5066 = vsel %vm2749, %v5064, %v5065
      %v5067 = vrot.slane %v2149, 2
      %v5068 = vsel %vm2749, %v5065, %v5067
      %s5069 = scalar_lea.vmem %s4, 40
      %v5070 = vld [vmem:[%s5069] sm:$0xff]
      %v5071 = vsel %vm2153, %v5066, 0
      %v5073 = vsel %vm2153, %v5068, 0
      %5075 = vmatprep.subr.mxu0 0.0
      %5076 = vmatpush1.msra.mxu0 %v5070
      %5077 = vmatprep.subr.mxu0 0.0
      %5078 = vmatpush1.msra.mxu0 0.0
      %5079 = vmatprep.subr.mxu0 0.0
      %5080 = vmatpush1.msra.mxu0 0.0
      %5081 = vmatprep.subr.mxu0 0.0
      %5082 = vmatpush1.msra.mxu0 0.0
      %5083 = vmatprep.subr.mxu0 0.0
      %5084 = vmatpush1.msra.mxu0 0.0
      %5085 = vmatprep.subr.mxu0 0.0
      %5086 = vmatpush1.msra.mxu0 0.0
      %5087 = vmatprep.subr.mxu0 0.0
      %5088 = vmatpush1.msra.mxu0 0.0
      %5089 = vmatprep.subr.mxu0 0.0
      %5090 = vmatpush1.msra.mxu0 0.0
      %5091 = vmatprep.subr.mxu0 0.0
      %5092 = vmatpush1.msra.mxu0 0.0
      %5093 = vmatprep.subr.mxu0 0.0
      %5094 = vmatpush1.msra.mxu0 0.0
      %5095 = vmatprep.subr.mxu0 0.0
      %5096 = vmatpush1.msra.mxu0 0.0
      %5097 = vmatprep.subr.mxu0 0.0
      %5098 = vmatpush1.msra.mxu0 0.0
      %5099 = vmatprep.subr.mxu0 0.0
      %5100 = vmatpush1.msra.mxu0 0.0
      %5101 = vmatprep.subr.mxu0 0.0
      %5102 = vmatpush1.msra.mxu0 0.0
      %5103 = vmatprep.subr.mxu0 0.0
      %5104 = vmatpush1.msra.mxu0 0.0
      %5105 = vmatprep.subr.mxu0 0.0
      %5106 = vmatpush1.msra.mxu0 0.0
      %5107 = vmatprep.subr.mxu0 0.0
      %5108 = vmatpush1.msra.mxu0 0.0
      %5109 = vmatprep.subr.mxu0 0.0
      %5110 = vmatpush1.msra.mxu0 0.0
      %5111 = vmatprep.subr.mxu0 0.0
      %5112 = vmatpush1.msra.mxu0 0.0
      %5113 = vmatprep.subr.mxu0 0.0
      %5114 = vmatpush1.msra.mxu0 0.0
      %5115 = vmatprep.subr.mxu0 0.0
      %5116 = vmatpush1.msra.mxu0 0.0
      %5117 = vmatprep.subr.mxu0 0.0
      %5118 = vmatpush1.msra.mxu0 0.0
      %5119 = vmatprep.subr.mxu0 0.0
      %5120 = vmatpush1.msra.mxu0 0.0
      %5121 = vmatprep.subr.mxu0 0.0
      %5122 = vmatpush1.msra.mxu0 0.0
      %5123 = vmatprep.subr.mxu0 0.0
      %5124 = vmatpush1.msra.mxu0 0.0
      %5125 = vmatprep.subr.mxu0 0.0
      %5126 = vmatpush1.msra.mxu0 0.0
      %5127 = vmatprep.subr.mxu0 0.0
      %5128 = vmatpush1.msra.mxu0 0.0
      %5129 = vmatprep.subr.mxu0 0.0
      %5130 = vmatpush1.msra.mxu0 0.0
      %5131 = vmatprep.subr.mxu0 0.0
      %5132 = vmatpush1.msra.mxu0 0.0
      %5133 = vmatprep.subr.mxu0 0.0
      %5134 = vmatpush1.msra.mxu0 0.0
      %5135 = vmatprep.subr.mxu0 0.0
      %5136 = vmatpush1.msra.mxu0 0.0
      %5137 = vmatprep.subr.mxu0 0.0
      %5138 = vmatpush1.msra.mxu0 0.0
      %5139 = vmatprep.mubr.f32.mxu0 0.0
      %5140 = vmatmul.mubr.f32.gmra.mrb[0].mxu0 %v4213
      %v5141 = vpop.f32.mrb[0].mxu0
      %v5142 = vadd.f32 0.0, %v5141
      %v5143 = vpop.f32.mrb[0].mxu0
      %5144 = vmatprep.mubr.f32.mxu0 0.0
      %5145 = vmatmul.mubr.f32.gmra.mrb[0].mxu0 %v4215
      %v5146 = vpop.f32.mrb[0].mxu0
      %v5147 = vadd.f32 0.0, %v5146
      %v5148 = vpop.f32.mrb[0].mxu0
      %5149 = vmatprep.mubr.f32.mxu0 0.0
      %5150 = vmatmul.mubr.f32.gmra.mrb[0].mxu0 %v4217
      %v5151 = vpop.f32.mrb[0].mxu0
      %v5152 = vadd.f32 0.0, %v5151
      %v5153 = vpop.f32.mrb[0].mxu0
      %5154 = vmatprep.mubr.f32.mxu0 0.0
      %5155 = vmatmul.mubr.f32.gmra.mrb[0].mxu0 %v4219
      %v5156 = vpop.f32.mrb[0].mxu0
      %v5157 = vadd.f32 0.0, %v5156
      %v5158 = vpop.f32.mrb[0].mxu0
      %5159 = vmatprep.mubr.f32.mxu0 0.0
      %5160 = vmatmul.mubr.f32.gmra.mrb[0].mxu0 %v4221
      %v5161 = vpop.f32.mrb[0].mxu0
      %v5162 = vadd.f32 0.0, %v5161
      %v5163 = vpop.f32.mrb[0].mxu0
      %5164 = vmatprep.mubr.f32.mxu0 0.0
      %5165 = vmatmul.mubr.f32.gmra.mrb[0].mxu0 %v4223
      %v5166 = vpop.f32.mrb[0].mxu0
      %v5167 = vadd.f32 0.0, %v5166
      %v5168 = vpop.f32.mrb[0].mxu0
      %5169 = vmatprep.mubr.f32.mxu0 0.0
      %5170 = vmatmul.mubr.f32.gmra.mrb[0].mxu0 %v4225
      %v5171 = vpop.f32.mrb[0].mxu0
      %v5172 = vadd.f32 0.0, %v5171
      %v5173 = vpop.f32.mrb[0].mxu0
      %5174 = vmatprep.mubr.f32.mxu0 0.0
      %5175 = vmatmul.mubr.f32.gmra.mrb[0].mxu0 %v4227
      %v5176 = vpop.f32.mrb[0].mxu0
      %v5177 = vadd.f32 0.0, %v5176
      %v5178 = vpop.f32.mrb[0].mxu0
      %5179 = vmatprep.mubr.f32.mxu0 0.0
      %5180 = vmatmul.mubr.f32.gmra.mrb[0].mxu0 %v4229
      %v5181 = vpop.f32.mrb[0].mxu0
      %v5182 = vadd.f32 0.0, %v5181
      %v5183 = vpop.f32.mrb[0].mxu0
      %5184 = vmatprep.mubr.f32.mxu0 0.0
      %5185 = vmatmul.mubr.f32.gmra.mrb[0].mxu0 %v4231
      %v5186 = vpop.f32.mrb[0].mxu0
      %v5187 = vadd.f32 0.0, %v5186
      %v5188 = vpop.f32.mrb[0].mxu0
      %5189 = vmatprep.mubr.f32.mxu0 0.0
      %5190 = vmatmul.mubr.f32.gmra.mrb[0].mxu0 %v4233
      %v5191 = vpop.f32.mrb[0].mxu0
      %v5192 = vadd.f32 0.0, %v5191
      %v5193 = vpop.f32.mrb[0].mxu0
      %5194 = vmatprep.mubr.f32.mxu0 0.0
      %5195 = vmatmul.mubr.f32.gmra.mrb[0].mxu0 %v4235
      %v5196 = vpop.f32.mrb[0].mxu0
      %v5197 = vadd.f32 0.0, %v5196
      %v5198 = vpop.f32.mrb[0].mxu0
      %5199 = vmatprep.mubr.f32.mxu0 0.0
      %5200 = vmatmul.mubr.f32.gmra.mrb[0].mxu0 %v4237
      %v5201 = vpop.f32.mrb[0].mxu0
      %v5202 = vadd.f32 0.0, %v5201
      %v5203 = vpop.f32.mrb[0].mxu0
      %5204 = vmatprep.mubr.f32.mxu0 0.0
      %5205 = vmatmul.mubr.f32.gmra.mrb[0].mxu0 %v4239
      %v5206 = vpop.f32.mrb[0].mxu0
      %v5207 = vadd.f32 0.0, %v5206
      %v5208 = vpop.f32.mrb[0].mxu0
      %5209 = vmatprep.mubr.f32.mxu0 0.0
      %5210 = vmatmul.mubr.f32.gmra.mrb[0].mxu0 %v4241
      %v5211 = vpop.f32.mrb[0].mxu0
      %v5212 = vadd.f32 0.0, %v5211
      %v5213 = vpop.f32.mrb[0].mxu0
      %5214 = vmatprep.mubr.f32.mxu0 0.0
      %5215 = vmatmul.mubr.f32.gmra.mrb[0].mxu0 %v4243
      %v5216 = vpop.f32.mrb[0].mxu0
      %v5217 = vadd.f32 0.0, %v5216
      %v5218 = vpop.f32.mrb[0].mxu0
      %5219 = vmatprep.mubr.f32.mxu0 0.0
      %5220 = vmatmul.mubr.f32.gmra.mrb[0].mxu0 %v4245
      %v5221 = vpop.f32.mrb[0].mxu0
      %v5222 = vadd.f32 0.0, %v5221
      %v5223 = vpop.f32.mrb[0].mxu0
      %5224 = vmatprep.mubr.f32.mxu0 0.0
      %5225 = vmatmul.mubr.f32.gmra.mrb[0].mxu0 %v4247
      %v5226 = vpop.f32.mrb[0].mxu0
      %v5227 = vadd.f32 0.0, %v5226
      %v5228 = vpop.f32.mrb[0].mxu0
      %5229 = vmatprep.mubr.f32.mxu0 0.0
      %5230 = vmatmul.mubr.f32.gmra.mrb[0].mxu0 %v4249
      %v5231 = vpop.f32.mrb[0].mxu0
      %v5232 = vadd.f32 0.0, %v5231
      %v5233 = vpop.f32.mrb[0].mxu0
      %5234 = vmatprep.mubr.f32.mxu0 0.0
      %5235 = vmatmul.mubr.f32.gmra.mrb[0].mxu0 %v4251
      %v5236 = vpop.f32.mrb[0].mxu0
      %v5237 = vadd.f32 0.0, %v5236
      %v5238 = vpop.f32.mrb[0].mxu0
      %5239 = vmatprep.mubr.f32.mxu0 0.0
      %5240 = vmatmul.mubr.f32.gmra.mrb[0].mxu0 %v4253
      %v5241 = vpop.f32.mrb[0].mxu0
      %v5242 = vadd.f32 0.0, %v5241
      %v5243 = vpop.f32.mrb[0].mxu0
      %5244 = vmatprep.mubr.f32.mxu0 0.0
      %5245 = vmatmul.mubr.f32.gmra.mrb[0].mxu0 %v4255
      %v5246 = vpop.f32.mrb[0].mxu0
      %v5247 = vadd.f32 0.0, %v5246
      %v5248 = vpop.f32.mrb[0].mxu0
      %5249 = vmatprep.mubr.f32.mxu0 0.0
      %5250 = vmatmul.mubr.f32.gmra.mrb[0].mxu0 %v4257
      %v5251 = vpop.f32.mrb[0].mxu0
      %v5252 = vadd.f32 0.0, %v5251
      %v5253 = vpop.f32.mrb[0].mxu0
      %5254 = vmatprep.mubr.f32.mxu0 0.0
      %5255 = vmatmul.mubr.f32.gmra.mrb[0].mxu0 %v4259
      %v5256 = vpop.f32.mrb[0].mxu0
      %v5257 = vadd.f32 0.0, %v5256
      %v5258 = vpop.f32.mrb[0].mxu0
      %5259 = vmatprep.mubr.f32.mxu0 0.0
      %5260 = vmatmul.mubr.f32.gmra.mrb[0].mxu0 %v4261
      %v5261 = vpop.f32.mrb[0].mxu0
      %v5262 = vadd.f32 0.0, %v5261
      %v5263 = vpop.f32.mrb[0].mxu0
      %5264 = vmatprep.mubr.f32.mxu0 0.0
      %5265 = vmatmul.mubr.f32.gmra.mrb[0].mxu0 %v4263
      %v5266 = vpop.f32.mrb[0].mxu0
      %v5267 = vadd.f32 0.0, %v5266
      %v5268 = vpop.f32.mrb[0].mxu0
      %5269 = vmatprep.mubr.f32.mxu0 0.0
      %5270 = vmatmul.mubr.f32.gmra.mrb[0].mxu0 %v4265
      %v5271 = vpop.f32.mrb[0].mxu0
      %v5272 = vadd.f32 0.0, %v5271
      %v5273 = vpop.f32.mrb[0].mxu0
      %5274 = vmatprep.mubr.f32.mxu0 0.0
      %5275 = vmatmul.mubr.f32.gmra.mrb[0].mxu0 %v4267
      %v5276 = vpop.f32.mrb[0].mxu0
      %v5277 = vadd.f32 0.0, %v5276
      %v5278 = vpop.f32.mrb[0].mxu0
      %5279 = vmatprep.mubr.f32.mxu0 0.0
      %5280 = vmatmul.mubr.f32.gmra.mrb[0].mxu0 %v4269
      %v5281 = vpop.f32.mrb[0].mxu0
      %v5282 = vadd.f32 0.0, %v5281
      %v5283 = vpop.f32.mrb[0].mxu0
      %5284 = vmatprep.mubr.f32.mxu0 0.0
      %5285 = vmatmul.mubr.f32.gmra.mrb[0].mxu0 %v4271
      %v5286 = vpop.f32.mrb[0].mxu0
      %v5287 = vadd.f32 0.0, %v5286
      %v5288 = vpop.f32.mrb[0].mxu0
      %5289 = vmatprep.mubr.f32.mxu0 0.0
      %5290 = vmatmul.mubr.f32.gmra.mrb[0].mxu0 %v5071
      %v5291 = vpop.f32.mrb[0].mxu0
      %v5292 = vadd.f32 0.0, %v5291
      %v5293 = vpop.f32.mrb[0].mxu0
      %5294 = vmatprep.mubr.f32.mxu0 0.0
      %5295 = vmatmul.mubr.f32.gmra.mrb[0].mxu0 %v5073
      %v5296 = vpop.f32.mrb[0].mxu0
      %v5297 = vadd.f32 0.0, %v5296
      %v5298 = vpop.f32.mrb[0].mxu0
      %5299 = vdwg.mxu0
      %v5300 = vadd.f32 %v5032, %v5142
      %v5301 = vadd.f32 %v5033, %v5147
      %v5302 = vadd.f32 %v5034, %v5152
      %v5303 = vadd.f32 %v5035, %v5157
      %v5304 = vadd.f32 %v5036, %v5162
      %v5305 = vadd.f32 %v5037, %v5167
      %v5306 = vadd.f32 %v5038, %v5172
      %v5307 = vadd.f32 %v5039, %v5177
      %v5308 = vadd.f32 %v5040, %v5182
      %v5309 = vadd.f32 %v5041, %v5187
      %v5310 = vadd.f32 %v5042, %v5192
      %v5311 = vadd.f32 %v5043, %v5197
      %v5312 = vadd.f32 %v5044, %v5202
      %v5313 = vadd.f32 %v5045, %v5207
      %v5314 = vadd.f32 %v5046, %v5212
      %v5315 = vadd.f32 %v5047, %v5217
      %v5316 = vadd.f32 %v5048, %v5222
      %v5317 = vadd.f32 %v5049, %v5227
      %v5318 = vadd.f32 %v5050, %v5232
      %v5319 = vadd.f32 %v5051, %v5237
      %v5320 = vadd.f32 %v5052, %v5242
      %v5321 = vadd.f32 %v5053, %v5247
      %v5322 = vadd.f32 %v5054, %v5252
      %v5323 = vadd.f32 %v5055, %v5257
      %v5324 = vadd.f32 %v5056, %v5262
      %v5325 = vadd.f32 %v5057, %v5267
      %v5326 = vadd.f32 %v5058, %v5272
      %v5327 = vadd.f32 %v5059, %v5277
      %v5328 = vadd.f32 %v5060, %v5282
      %v5329 = vadd.f32 %v5061, %v5287
      %v5330 = vadd.f32 %v5062, %v5292
      %v5331 = vadd.f32 %v5063, %v5297
      %s5332 = scalar_lea.vmem %s4, 48
      %v5333 = vld [vmem:[%s5332] sm:$0xff]
      %v5335 = vsel %vm2153, %v2150, 0
      %v5338 = vsel %vm2153, %v2151, 0
      %5340 = vmatprep.subr.mxu0 0.0
      %5341 = vmatpush1.msra.mxu0 %v5333
      %5342 = vmatprep.subr.mxu0 0.0
      %5343 = vmatpush1.msra.mxu0 0.0
      %5344 = vmatprep.subr.mxu0 0.0
      %5345 = vmatpush1.msra.mxu0 0.0
      %5346 = vmatprep.subr.mxu0 0.0
      %5347 = vmatpush1.msra.mxu0 0.0
      %5348 = vmatprep.subr.mxu0 0.0
      %5349 = vmatpush1.msra.mxu0 0.0
      %5350 = vmatprep.subr.mxu0 0.0
      %5351 = vmatpush1.msra.mxu0 0.0
      %5352 = vmatprep.subr.mxu0 0.0
      %5353 = vmatpush1.msra.mxu0 0.0
      %5354 = vmatprep.subr.mxu0 0.0
      %5355 = vmatpush1.msra.mxu0 0.0
      %5356 = vmatprep.subr.mxu0 0.0
      %5357 = vmatpush1.msra.mxu0 0.0
      %5358 = vmatprep.subr.mxu0 0.0
      %5359 = vmatpush1.msra.mxu0 0.0
      %5360 = vmatprep.subr.mxu0 0.0
      %5361 = vmatpush1.msra.mxu0 0.0
      %5362 = vmatprep.subr.mxu0 0.0
      %5363 = vmatpush1.msra.mxu0 0.0
      %5364 = vmatprep.subr.mxu0 0.0
      %5365 = vmatpush1.msra.mxu0 0.0
      %5366 = vmatprep.subr.mxu0 0.0
      %5367 = vmatpush1.msra.mxu0 0.0
      %5368 = vmatprep.subr.mxu0 0.0
      %5369 = vmatpush1.msra.mxu0 0.0
      %5370 = vmatprep.subr.mxu0 0.0
      %5371 = vmatpush1.msra.mxu0 0.0
      %5372 = vmatprep.subr.mxu0 0.0
      %5373 = vmatpush1.msra.mxu0 0.0
      %5374 = vmatprep.subr.mxu0 0.0
      %5375 = vmatpush1.msra.mxu0 0.0
      %5376 = vmatprep.subr.mxu0 0.0
      %5377 = vmatpush1.msra.mxu0 0.0
      %5378 = vmatprep.subr.mxu0 0.0
      %5379 = vmatpush1.msra.mxu0 0.0
      %5380 = vmatprep.subr.mxu0 0.0
      %5381 = vmatpush1.msra.mxu0 0.0
      %5382 = vmatprep.subr.mxu0 0.0
      %5383 = vmatpush1.msra.mxu0 0.0
      %5384 = vmatprep.subr.mxu0 0.0
      %5385 = vmatpush1.msra.mxu0 0.0
      %5386 = vmatprep.subr.mxu0 0.0
      %5387 = vmatpush1.msra.mxu0 0.0
      %5388 = vmatprep.subr.mxu0 0.0
      %5389 = vmatpush1.msra.mxu0 0.0
      %5390 = vmatprep.subr.mxu0 0.0
      %5391 = vmatpush1.msra.mxu0 0.0
      %5392 = vmatprep.subr.mxu0 0.0
      %5393 = vmatpush1.msra.mxu0 0.0
      %5394 = vmatprep.subr.mxu0 0.0
      %5395 = vmatpush1.msra.mxu0 0.0
      %5396 = vmatprep.subr.mxu0 0.0
      %5397 = vmatpush1.msra.mxu0 0.0
      %5398 = vmatprep.subr.mxu0 0.0
      %5399 = vmatpush1.msra.mxu0 0.0
      %5400 = vmatprep.subr.mxu0 0.0
      %5401 = vmatpush1.msra.mxu0 0.0
      %5402 = vmatprep.subr.mxu0 0.0
      %5403 = vmatpush1.msra.mxu0 0.0
      %5404 = vmatprep.mubr.f32.mxu0 0.0
      %5405 = vmatmul.mubr.f32.gmra.mrb[0].mxu0 %v3846
      %v5406 = vpop.f32.mrb[0].mxu0
      %v5407 = vadd.f32 0.0, %v5406
      %v5408 = vpop.f32.mrb[0].mxu0
      %5409 = vmatprep.mubr.f32.mxu0 0.0
      %5410 = vmatmul.mubr.f32.gmra.mrb[0].mxu0 %v3848
      %v5411 = vpop.f32.mrb[0].mxu0
      %v5412 = vadd.f32 0.0, %v5411
      %v5413 = vpop.f32.mrb[0].mxu0
      %5414 = vmatprep.mubr.f32.mxu0 0.0
      %5415 = vmatmul.mubr.f32.gmra.mrb[0].mxu0 %v3850
      %v5416 = vpop.f32.mrb[0].mxu0
      %v5417 = vadd.f32 0.0, %v5416
      %v5418 = vpop.f32.mrb[0].mxu0
      %5419 = vmatprep.mubr.f32.mxu0 0.0
      %5420 = vmatmul.mubr.f32.gmra.mrb[0].mxu0 %v3852
      %v5421 = vpop.f32.mrb[0].mxu0
      %v5422 = vadd.f32 0.0, %v5421
      %v5423 = vpop.f32.mrb[0].mxu0
      %5424 = vmatprep.mubr.f32.mxu0 0.0
      %5425 = vmatmul.mubr.f32.gmra.mrb[0].mxu0 %v3854
      %v5426 = vpop.f32.mrb[0].mxu0
      %v5427 = vadd.f32 0.0, %v5426
      %v5428 = vpop.f32.mrb[0].mxu0
      %5429 = vmatprep.mubr.f32.mxu0 0.0
      %5430 = vmatmul.mubr.f32.gmra.mrb[0].mxu0 %v3856
      %v5431 = vpop.f32.mrb[0].mxu0
      %v5432 = vadd.f32 0.0, %v5431
      %v5433 = vpop.f32.mrb[0].mxu0
      %5434 = vmatprep.mubr.f32.mxu0 0.0
      %5435 = vmatmul.mubr.f32.gmra.mrb[0].mxu0 %v3858
      %v5436 = vpop.f32.mrb[0].mxu0
      %v5437 = vadd.f32 0.0, %v5436
      %v5438 = vpop.f32.mrb[0].mxu0
      %5439 = vmatprep.mubr.f32.mxu0 0.0
      %5440 = vmatmul.mubr.f32.gmra.mrb[0].mxu0 %v3860
      %v5441 = vpop.f32.mrb[0].mxu0
      %v5442 = vadd.f32 0.0, %v5441
      %v5443 = vpop.f32.mrb[0].mxu0
      %5444 = vmatprep.mubr.f32.mxu0 0.0
      %5445 = vmatmul.mubr.f32.gmra.mrb[0].mxu0 %v3862
      %v5446 = vpop.f32.mrb[0].mxu0
      %v5447 = vadd.f32 0.0, %v5446
      %v5448 = vpop.f32.mrb[0].mxu0
      %5449 = vmatprep.mubr.f32.mxu0 0.0
      %5450 = vmatmul.mubr.f32.gmra.mrb[0].mxu0 %v3864
      %v5451 = vpop.f32.mrb[0].mxu0
      %v5452 = vadd.f32 0.0, %v5451
      %v5453 = vpop.f32.mrb[0].mxu0
      %5454 = vmatprep.mubr.f32.mxu0 0.0
      %5455 = vmatmul.mubr.f32.gmra.mrb[0].mxu0 %v3866
      %v5456 = vpop.f32.mrb[0].mxu0
      %v5457 = vadd.f32 0.0, %v5456
      %v5458 = vpop.f32.mrb[0].mxu0
      %5459 = vmatprep.mubr.f32.mxu0 0.0
      %5460 = vmatmul.mubr.f32.gmra.mrb[0].mxu0 %v3868
      %v5461 = vpop.f32.mrb[0].mxu0
      %v5462 = vadd.f32 0.0, %v5461
      %v5463 = vpop.f32.mrb[0].mxu0
      %5464 = vmatprep.mubr.f32.mxu0 0.0
      %5465 = vmatmul.mubr.f32.gmra.mrb[0].mxu0 %v3870
      %v5466 = vpop.f32.mrb[0].mxu0
      %v5467 = vadd.f32 0.0, %v5466
      %v5468 = vpop.f32.mrb[0].mxu0
      %5469 = vmatprep.mubr.f32.mxu0 0.0
      %5470 = vmatmul.mubr.f32.gmra.mrb[0].mxu0 %v3872
      %v5471 = vpop.f32.mrb[0].mxu0
      %v5472 = vadd.f32 0.0, %v5471
      %v5473 = vpop.f32.mrb[0].mxu0
      %5474 = vmatprep.mubr.f32.mxu0 0.0
      %5475 = vmatmul.mubr.f32.gmra.mrb[0].mxu0 %v3874
      %v5476 = vpop.f32.mrb[0].mxu0
      %v5477 = vadd.f32 0.0, %v5476
      %v5478 = vpop.f32.mrb[0].mxu0
      %5479 = vmatprep.mubr.f32.mxu0 0.0
      %5480 = vmatmul.mubr.f32.gmra.mrb[0].mxu0 %v3876
      %v5481 = vpop.f32.mrb[0].mxu0
      %v5482 = vadd.f32 0.0, %v5481
      %v5483 = vpop.f32.mrb[0].mxu0
      %5484 = vmatprep.mubr.f32.mxu0 0.0
      %5485 = vmatmul.mubr.f32.gmra.mrb[0].mxu0 %v3878
      %v5486 = vpop.f32.mrb[0].mxu0
      %v5487 = vadd.f32 0.0, %v5486
      %v5488 = vpop.f32.mrb[0].mxu0
      %5489 = vmatprep.mubr.f32.mxu0 0.0
      %5490 = vmatmul.mubr.f32.gmra.mrb[0].mxu0 %v3880
      %v5491 = vpop.f32.mrb[0].mxu0
      %v5492 = vadd.f32 0.0, %v5491
      %v5493 = vpop.f32.mrb[0].mxu0
      %5494 = vmatprep.mubr.f32.mxu0 0.0
      %5495 = vmatmul.mubr.f32.gmra.mrb[0].mxu0 %v3882
      %v5496 = vpop.f32.mrb[0].mxu0
      %v5497 = vadd.f32 0.0, %v5496
      %v5498 = vpop.f32.mrb[0].mxu0
      %5499 = vmatprep.mubr.f32.mxu0 0.0
      %5500 = vmatmul.mubr.f32.gmra.mrb[0].mxu0 %v3884
      %v5501 = vpop.f32.mrb[0].mxu0
      %v5502 = vadd.f32 0.0, %v5501
      %v5503 = vpop.f32.mrb[0].mxu0
      %5504 = vmatprep.mubr.f32.mxu0 0.0
      %5505 = vmatmul.mubr.f32.gmra.mrb[0].mxu0 %v3886
      %v5506 = vpop.f32.mrb[0].mxu0
      %v5507 = vadd.f32 0.0, %v5506
      %v5508 = vpop.f32.mrb[0].mxu0
      %5509 = vmatprep.mubr.f32.mxu0 0.0
      %5510 = vmatmul.mubr.f32.gmra.mrb[0].mxu0 %v3888
      %v5511 = vpop.f32.mrb[0].mxu0
      %v5512 = vadd.f32 0.0, %v5511
      %v5513 = vpop.f32.mrb[0].mxu0
      %5514 = vmatprep.mubr.f32.mxu0 0.0
      %5515 = vmatmul.mubr.f32.gmra.mrb[0].mxu0 %v3890
      %v5516 = vpop.f32.mrb[0].mxu0
      %v5517 = vadd.f32 0.0, %v5516
      %v5518 = vpop.f32.mrb[0].mxu0
      %5519 = vmatprep.mubr.f32.mxu0 0.0
      %5520 = vmatmul.mubr.f32.gmra.mrb[0].mxu0 %v3892
      %v5521 = vpop.f32.mrb[0].mxu0
      %v5522 = vadd.f32 0.0, %v5521
      %v5523 = vpop.f32.mrb[0].mxu0
      %5524 = vmatprep.mubr.f32.mxu0 0.0
      %5525 = vmatmul.mubr.f32.gmra.mrb[0].mxu0 %v3894
      %v5526 = vpop.f32.mrb[0].mxu0
      %v5527 = vadd.f32 0.0, %v5526
      %v5528 = vpop.f32.mrb[0].mxu0
      %5529 = vmatprep.mubr.f32.mxu0 0.0
      %5530 = vmatmul.mubr.f32.gmra.mrb[0].mxu0 %v3896
      %v5531 = vpop.f32.mrb[0].mxu0
      %v5532 = vadd.f32 0.0, %v5531
      %v5533 = vpop.f32.mrb[0].mxu0
      %5534 = vmatprep.mubr.f32.mxu0 0.0
      %5535 = vmatmul.mubr.f32.gmra.mrb[0].mxu0 %v3898
      %v5536 = vpop.f32.mrb[0].mxu0
      %v5537 = vadd.f32 0.0, %v5536
      %v5538 = vpop.f32.mrb[0].mxu0
      %5539 = vmatprep.mubr.f32.mxu0 0.0
      %5540 = vmatmul.mubr.f32.gmra.mrb[0].mxu0 %v3900
      %v5541 = vpop.f32.mrb[0].mxu0
      %v5542 = vadd.f32 0.0, %v5541
      %v5543 = vpop.f32.mrb[0].mxu0
      %5544 = vmatprep.mubr.f32.mxu0 0.0
      %5545 = vmatmul.mubr.f32.gmra.mrb[0].mxu0 %v4533
      %v5546 = vpop.f32.mrb[0].mxu0
      %v5547 = vadd.f32 0.0, %v5546
      %v5548 = vpop.f32.mrb[0].mxu0
      %5549 = vmatprep.mubr.f32.mxu0 0.0
      %5550 = vmatmul.mubr.f32.gmra.mrb[0].mxu0 %v4536
      %v5551 = vpop.f32.mrb[0].mxu0
      %v5552 = vadd.f32 0.0, %v5551
      %v5553 = vpop.f32.mrb[0].mxu0
      %5554 = vmatprep.mubr.f32.mxu0 0.0
      %5555 = vmatmul.mubr.f32.gmra.mrb[0].mxu0 %v5335
      %v5556 = vpop.f32.mrb[0].mxu0
      %v5557 = vadd.f32 0.0, %v5556
      %v5558 = vpop.f32.mrb[0].mxu0
      %5559 = vmatprep.mubr.f32.mxu0 0.0
      %5560 = vmatmul.mubr.f32.gmra.mrb[0].mxu0 %v5338
      %v5561 = vpop.f32.mrb[0].mxu0
      %v5562 = vadd.f32 0.0, %v5561
      %v5563 = vpop.f32.mrb[0].mxu0
      %5564 = vdwg.mxu0
      %v5565 = vadd.f32 %v5300, %v5407
      %v5566 = vadd.f32 %v5301, %v5412
      %v5567 = vadd.f32 %v5302, %v5417
      %v5568 = vadd.f32 %v5303, %v5422
      %v5569 = vadd.f32 %v5304, %v5427
      %v5570 = vadd.f32 %v5305, %v5432
      %v5571 = vadd.f32 %v5306, %v5437
      %v5572 = vadd.f32 %v5307, %v5442
      %v5573 = vadd.f32 %v5308, %v5447
      %v5574 = vadd.f32 %v5309, %v5452
      %v5575 = vadd.f32 %v5310, %v5457
      %v5576 = vadd.f32 %v5311, %v5462
      %v5577 = vadd.f32 %v5312, %v5467
      %v5578 = vadd.f32 %v5313, %v5472
      %v5579 = vadd.f32 %v5314, %v5477
      %v5580 = vadd.f32 %v5315, %v5482
      %v5581 = vadd.f32 %v5316, %v5487
      %v5582 = vadd.f32 %v5317, %v5492
      %v5583 = vadd.f32 %v5318, %v5497
      %v5584 = vadd.f32 %v5319, %v5502
      %v5585 = vadd.f32 %v5320, %v5507
      %v5586 = vadd.f32 %v5321, %v5512
      %v5587 = vadd.f32 %v5322, %v5517
      %v5588 = vadd.f32 %v5323, %v5522
      %v5589 = vadd.f32 %v5324, %v5527
      %v5590 = vadd.f32 %v5325, %v5532
      %v5591 = vadd.f32 %v5326, %v5537
      %v5592 = vadd.f32 %v5327, %v5542
      %v5593 = vadd.f32 %v5328, %v5547
      %v5594 = vadd.f32 %v5329, %v5552
      %v5595 = vadd.f32 %v5330, %v5557
      %v5596 = vadd.f32 %v5331, %v5562
      %v5598 = vrot.slane %v2150, 1
      %v5599 = vrot.slane %v2151, 1
      %v5600 = vsel %vm2586, %v5598, %v5599
      %v5601 = vrot.slane %v2152, 1
      %v5602 = vsel %vm2586, %v5599, %v5601
      %s5603 = scalar_lea.vmem %s4, 56
      %v5604 = vld [vmem:[%s5603] sm:$0xff]
      %v5605 = vsel %vm2153, %v5600, 0
      %v5607 = vsel %vm2153, %v5602, 0
      %5609 = vmatprep.subr.mxu0 0.0
      %5610 = vmatpush1.msra.mxu0 %v5604
      %5611 = vmatprep.subr.mxu0 0.0
      %5612 = vmatpush1.msra.mxu0 0.0
      %5613 = vmatprep.subr.mxu0 0.0
      %5614 = vmatpush1.msra.mxu0 0.0
      %5615 = vmatprep.subr.mxu0 0.0
      %5616 = vmatpush1.msra.mxu0 0.0
      %5617 = vmatprep.subr.mxu0 0.0
      %5618 = vmatpush1.msra.mxu0 0.0
      %5619 = vmatprep.subr.mxu0 0.0
      %5620 = vmatpush1.msra.mxu0 0.0
      %5621 = vmatprep.subr.mxu0 0.0
      %5622 = vmatpush1.msra.mxu0 0.0
      %5623 = vmatprep.subr.mxu0 0.0
      %5624 = vmatpush1.msra.mxu0 0.0
      %5625 = vmatprep.subr.mxu0 0.0
      %5626 = vmatpush1.msra.mxu0 0.0
      %5627 = vmatprep.subr.mxu0 0.0
      %5628 = vmatpush1.msra.mxu0 0.0
      %5629 = vmatprep.subr.mxu0 0.0
      %5630 = vmatpush1.msra.mxu0 0.0
      %5631 = vmatprep.subr.mxu0 0.0
      %5632 = vmatpush1.msra.mxu0 0.0
      %5633 = vmatprep.subr.mxu0 0.0
      %5634 = vmatpush1.msra.mxu0 0.0
      %5635 = vmatprep.subr.mxu0 0.0
      %5636 = vmatpush1.msra.mxu0 0.0
      %5637 = vmatprep.subr.mxu0 0.0
      %5638 = vmatpush1.msra.mxu0 0.0
      %5639 = vmatprep.subr.mxu0 0.0
      %5640 = vmatpush1.msra.mxu0 0.0
      %5641 = vmatprep.subr.mxu0 0.0
      %5642 = vmatpush1.msra.mxu0 0.0
      %5643 = vmatprep.subr.mxu0 0.0
      %5644 = vmatpush1.msra.mxu0 0.0
      %5645 = vmatprep.subr.mxu0 0.0
      %5646 = vmatpush1.msra.mxu0 0.0
      %5647 = vmatprep.subr.mxu0 0.0
      %5648 = vmatpush1.msra.mxu0 0.0
      %5649 = vmatprep.subr.mxu0 0.0
      %5650 = vmatpush1.msra.mxu0 0.0
      %5651 = vmatprep.subr.mxu0 0.0
      %5652 = vmatpush1.msra.mxu0 0.0
      %5653 = vmatprep.subr.mxu0 0.0
      %5654 = vmatpush1.msra.mxu0 0.0
      %5655 = vmatprep.subr.mxu0 0.0
      %5656 = vmatpush1.msra.mxu0 0.0
      %5657 = vmatprep.subr.mxu0 0.0
      %5658 = vmatpush1.msra.mxu0 0.0
      %5659 = vmatprep.subr.mxu0 0.0
      %5660 = vmatpush1.msra.mxu0 0.0
      %5661 = vmatprep.subr.mxu0 0.0
      %5662 = vmatpush1.msra.mxu0 0.0
      %5663 = vmatprep.subr.mxu0 0.0
      %5664 = vmatpush1.msra.mxu0 0.0
      %5665 = vmatprep.subr.mxu0 0.0
      %5666 = vmatpush1.msra.mxu0 0.0
      %5667 = vmatprep.subr.mxu0 0.0
      %5668 = vmatpush1.msra.mxu0 0.0
      %5669 = vmatprep.subr.mxu0 0.0
      %5670 = vmatpush1.msra.mxu0 0.0
      %5671 = vmatprep.subr.mxu0 0.0
      %5672 = vmatpush1.msra.mxu0 0.0
      %5673 = vmatprep.mubr.f32.mxu0 0.0
      %5674 = vmatmul.mubr.f32.gmra.mrb[0].mxu0 %v3557
      %v5675 = vpop.f32.mrb[0].mxu0
      %v5676 = vadd.f32 0.0, %v5675
      %v5677 = vpop.f32.mrb[0].mxu0
      %5678 = vmatprep.mubr.f32.mxu0 0.0
      %5679 = vmatmul.mubr.f32.gmra.mrb[0].mxu0 %v3559
      %v5680 = vpop.f32.mrb[0].mxu0
      %v5681 = vadd.f32 0.0, %v5680
      %v5682 = vpop.f32.mrb[0].mxu0
      %5683 = vmatprep.mubr.f32.mxu0 0.0
      %5684 = vmatmul.mubr.f32.gmra.mrb[0].mxu0 %v3561
      %v5685 = vpop.f32.mrb[0].mxu0
      %v5686 = vadd.f32 0.0, %v5685
      %v5687 = vpop.f32.mrb[0].mxu0
      %5688 = vmatprep.mubr.f32.mxu0 0.0
      %5689 = vmatmul.mubr.f32.gmra.mrb[0].mxu0 %v3563
      %v5690 = vpop.f32.mrb[0].mxu0
      %v5691 = vadd.f32 0.0, %v5690
      %v5692 = vpop.f32.mrb[0].mxu0
      %5693 = vmatprep.mubr.f32.mxu0 0.0
      %5694 = vmatmul.mubr.f32.gmra.mrb[0].mxu0 %v3565
      %v5695 = vpop.f32.mrb[0].mxu0
      %v5696 = vadd.f32 0.0, %v5695
      %v5697 = vpop.f32.mrb[0].mxu0
      %5698 = vmatprep.mubr.f32.mxu0 0.0
      %5699 = vmatmul.mubr.f32.gmra.mrb[0].mxu0 %v3567
      %v5700 = vpop.f32.mrb[0].mxu0
      %v5701 = vadd.f32 0.0, %v5700
      %v5702 = vpop.f32.mrb[0].mxu0
      %5703 = vmatprep.mubr.f32.mxu0 0.0
      %5704 = vmatmul.mubr.f32.gmra.mrb[0].mxu0 %v3569
      %v5705 = vpop.f32.mrb[0].mxu0
      %v5706 = vadd.f32 0.0, %v5705
      %v5707 = vpop.f32.mrb[0].mxu0
      %5708 = vmatprep.mubr.f32.mxu0 0.0
      %5709 = vmatmul.mubr.f32.gmra.mrb[0].mxu0 %v3571
      %v5710 = vpop.f32.mrb[0].mxu0
      %v5711 = vadd.f32 0.0, %v5710
      %v5712 = vpop.f32.mrb[0].mxu0
      %5713 = vmatprep.mubr.f32.mxu0 0.0
      %5714 = vmatmul.mubr.f32.gmra.mrb[0].mxu0 %v3573
      %v5715 = vpop.f32.mrb[0].mxu0
      %v5716 = vadd.f32 0.0, %v5715
      %v5717 = vpop.f32.mrb[0].mxu0
      %5718 = vmatprep.mubr.f32.mxu0 0.0
      %5719 = vmatmul.mubr.f32.gmra.mrb[0].mxu0 %v3575
      %v5720 = vpop.f32.mrb[0].mxu0
      %v5721 = vadd.f32 0.0, %v5720
      %v5722 = vpop.f32.mrb[0].mxu0
      %5723 = vmatprep.mubr.f32.mxu0 0.0
      %5724 = vmatmul.mubr.f32.gmra.mrb[0].mxu0 %v3577
      %v5725 = vpop.f32.mrb[0].mxu0
      %v5726 = vadd.f32 0.0, %v5725
      %v5727 = vpop.f32.mrb[0].mxu0
      %5728 = vmatprep.mubr.f32.mxu0 0.0
      %5729 = vmatmul.mubr.f32.gmra.mrb[0].mxu0 %v3579
      %v5730 = vpop.f32.mrb[0].mxu0
      %v5731 = vadd.f32 0.0, %v5730
      %v5732 = vpop.f32.mrb[0].mxu0
      %5733 = vmatprep.mubr.f32.mxu0 0.0
      %5734 = vmatmul.mubr.f32.gmra.mrb[0].mxu0 %v3581
      %v5735 = vpop.f32.mrb[0].mxu0
      %v5736 = vadd.f32 0.0, %v5735
      %v5737 = vpop.f32.mrb[0].mxu0
      %5738 = vmatprep.mubr.f32.mxu0 0.0
      %5739 = vmatmul.mubr.f32.gmra.mrb[0].mxu0 %v3583
      %v5740 = vpop.f32.mrb[0].mxu0
      %v5741 = vadd.f32 0.0, %v5740
      %v5742 = vpop.f32.mrb[0].mxu0
      %5743 = vmatprep.mubr.f32.mxu0 0.0
      %5744 = vmatmul.mubr.f32.gmra.mrb[0].mxu0 %v3585
      %v5745 = vpop.f32.mrb[0].mxu0
      %v5746 = vadd.f32 0.0, %v5745
      %v5747 = vpop.f32.mrb[0].mxu0
      %5748 = vmatprep.mubr.f32.mxu0 0.0
      %5749 = vmatmul.mubr.f32.gmra.mrb[0].mxu0 %v3587
      %v5750 = vpop.f32.mrb[0].mxu0
      %v5751 = vadd.f32 0.0, %v5750
      %v5752 = vpop.f32.mrb[0].mxu0
      %5753 = vmatprep.mubr.f32.mxu0 0.0
      %5754 = vmatmul.mubr.f32.gmra.mrb[0].mxu0 %v3589
      %v5755 = vpop.f32.mrb[0].mxu0
      %v5756 = vadd.f32 0.0, %v5755
      %v5757 = vpop.f32.mrb[0].mxu0
      %5758 = vmatprep.mubr.f32.mxu0 0.0
      %5759 = vmatmul.mubr.f32.gmra.mrb[0].mxu0 %v3591
      %v5760 = vpop.f32.mrb[0].mxu0
      %v5761 = vadd.f32 0.0, %v5760
      %v5762 = vpop.f32.mrb[0].mxu0
      %5763 = vmatprep.mubr.f32.mxu0 0.0
      %5764 = vmatmul.mubr.f32.gmra.mrb[0].mxu0 %v3593
      %v5765 = vpop.f32.mrb[0].mxu0
      %v5766 = vadd.f32 0.0, %v5765
      %v5767 = vpop.f32.mrb[0].mxu0
      %5768 = vmatprep.mubr.f32.mxu0 0.0
      %5769 = vmatmul.mubr.f32.gmra.mrb[0].mxu0 %v3595
      %v5770 = vpop.f32.mrb[0].mxu0
      %v5771 = vadd.f32 0.0, %v5770
      %v5772 = vpop.f32.mrb[0].mxu0
      %5773 = vmatprep.mubr.f32.mxu0 0.0
      %5774 = vmatmul.mubr.f32.gmra.mrb[0].mxu0 %v3597
      %v5775 = vpop.f32.mrb[0].mxu0
      %v5776 = vadd.f32 0.0, %v5775
      %v5777 = vpop.f32.mrb[0].mxu0
      %5778 = vmatprep.mubr.f32.mxu0 0.0
      %5779 = vmatmul.mubr.f32.gmra.mrb[0].mxu0 %v3599
      %v5780 = vpop.f32.mrb[0].mxu0
      %v5781 = vadd.f32 0.0, %v5780
      %v5782 = vpop.f32.mrb[0].mxu0
      %5783 = vmatprep.mubr.f32.mxu0 0.0
      %5784 = vmatmul.mubr.f32.gmra.mrb[0].mxu0 %v3601
      %v5785 = vpop.f32.mrb[0].mxu0
      %v5786 = vadd.f32 0.0, %v5785
      %v5787 = vpop.f32.mrb[0].mxu0
      %5788 = vmatprep.mubr.f32.mxu0 0.0
      %5789 = vmatmul.mubr.f32.gmra.mrb[0].mxu0 %v3603
      %v5790 = vpop.f32.mrb[0].mxu0
      %v5791 = vadd.f32 0.0, %v5790
      %v5792 = vpop.f32.mrb[0].mxu0
      %5793 = vmatprep.mubr.f32.mxu0 0.0
      %5794 = vmatmul.mubr.f32.gmra.mrb[0].mxu0 %v3605
      %v5795 = vpop.f32.mrb[0].mxu0
      %v5796 = vadd.f32 0.0, %v5795
      %v5797 = vpop.f32.mrb[0].mxu0
      %5798 = vmatprep.mubr.f32.mxu0 0.0
      %5799 = vmatmul.mubr.f32.gmra.mrb[0].mxu0 %v3607
      %v5800 = vpop.f32.mrb[0].mxu0
      %v5801 = vadd.f32 0.0, %v5800
      %v5802 = vpop.f32.mrb[0].mxu0
      %5803 = vmatprep.mubr.f32.mxu0 0.0
      %5804 = vmatmul.mubr.f32.gmra.mrb[0].mxu0 %v3609
      %v5805 = vpop.f32.mrb[0].mxu0
      %v5806 = vadd.f32 0.0, %v5805
      %v5807 = vpop.f32.mrb[0].mxu0
      %5808 = vmatprep.mubr.f32.mxu0 0.0
      %5809 = vmatmul.mubr.f32.gmra.mrb[0].mxu0 %v3611
      %v5810 = vpop.f32.mrb[0].mxu0
      %v5811 = vadd.f32 0.0, %v5810
      %v5812 = vpop.f32.mrb[0].mxu0
      %5813 = vmatprep.mubr.f32.mxu0 0.0
      %5814 = vmatmul.mubr.f32.gmra.mrb[0].mxu0 %v4803
      %v5815 = vpop.f32.mrb[0].mxu0
      %v5816 = vadd.f32 0.0, %v5815
      %v5817 = vpop.f32.mrb[0].mxu0
      %5818 = vmatprep.mubr.f32.mxu0 0.0
      %5819 = vmatmul.mubr.f32.gmra.mrb[0].mxu0 %v4805
      %v5820 = vpop.f32.mrb[0].mxu0
      %v5821 = vadd.f32 0.0, %v5820
      %v5822 = vpop.f32.mrb[0].mxu0
      %5823 = vmatprep.mubr.f32.mxu0 0.0
      %5824 = vmatmul.mubr.f32.gmra.mrb[0].mxu0 %v5605
      %v5825 = vpop.f32.mrb[0].mxu0
      %v5826 = vadd.f32 0.0, %v5825
      %v5827 = vpop.f32.mrb[0].mxu0
      %5828 = vmatprep.mubr.f32.mxu0 0.0
      %5829 = vmatmul.mubr.f32.gmra.mrb[0].mxu0 %v5607
      %v5830 = vpop.f32.mrb[0].mxu0
      %v5831 = vadd.f32 0.0, %v5830
      %v5832 = vpop.f32.mrb[0].mxu0
      %5833 = vdwg.mxu0
      %v5834 = vadd.f32 %v5565, %v5676
      %v5835 = vadd.f32 %v5566, %v5681
      %v5836 = vadd.f32 %v5567, %v5686
      %v5837 = vadd.f32 %v5568, %v5691
      %v5838 = vadd.f32 %v5569, %v5696
      %v5839 = vadd.f32 %v5570, %v5701
      %v5840 = vadd.f32 %v5571, %v5706
      %v5841 = vadd.f32 %v5572, %v5711
      %v5842 = vadd.f32 %v5573, %v5716
      %v5843 = vadd.f32 %v5574, %v5721
      %v5844 = vadd.f32 %v5575, %v5726
      %v5845 = vadd.f32 %v5576, %v5731
      %v5846 = vadd.f32 %v5577, %v5736
      %v5847 = vadd.f32 %v5578, %v5741
      %v5848 = vadd.f32 %v5579, %v5746
      %v5849 = vadd.f32 %v5580, %v5751
      %v5850 = vadd.f32 %v5581, %v5756
      %v5851 = vadd.f32 %v5582, %v5761
      %v5852 = vadd.f32 %v5583, %v5766
      %v5853 = vadd.f32 %v5584, %v5771
      %v5854 = vadd.f32 %v5585, %v5776
      %v5855 = vadd.f32 %v5586, %v5781
      %v5856 = vadd.f32 %v5587, %v5786
      %v5857 = vadd.f32 %v5588, %v5791
      %v5858 = vadd.f32 %v5589, %v5796
      %v5859 = vadd.f32 %v5590, %v5801
      %v5860 = vadd.f32 %v5591, %v5806
      %v5861 = vadd.f32 %v5592, %v5811
      %v5862 = vadd.f32 %v5593, %v5816
      %v5863 = vadd.f32 %v5594, %v5821
      %v5864 = vadd.f32 %v5595, %v5826
      %v5865 = vadd.f32 %v5596, %v5831
      %v5866 = vrot.slane %v2150, 2
      %v5867 = vrot.slane %v2151, 2
      %v5868 = vsel %vm2749, %v5866, %v5867
      %v5869 = vrot.slane %v2152, 2
      %v5870 = vsel %vm2749, %v5867, %v5869
      %s5871 = scalar_lea.vmem %s4, 64
      %v5872 = vld [vmem:[%s5871] sm:$0xff]
      %v5873 = vsel %vm2153, %v5868, 0
      %v5875 = vsel %vm2153, %v5870, 0
      %5877 = vmatprep.subr.mxu0 0.0
      %5878 = vmatpush1.msra.mxu0 %v5872
      %5879 = vmatprep.subr.mxu0 0.0
      %5880 = vmatpush1.msra.mxu0 0.0
      %5881 = vmatprep.subr.mxu0 0.0
      %5882 = vmatpush1.msra.mxu0 0.0
      %5883 = vmatprep.subr.mxu0 0.0
      %5884 = vmatpush1.msra.mxu0 0.0
      %5885 = vmatprep.subr.mxu0 0.0
      %5886 = vmatpush1.msra.mxu0 0.0
      %5887 = vmatprep.subr.mxu0 0.0
      %5888 = vmatpush1.msra.mxu0 0.0
      %5889 = vmatprep.subr.mxu0 0.0
      %5890 = vmatpush1.msra.mxu0 0.0
      %5891 = vmatprep.subr.mxu0 0.0
      %5892 = vmatpush1.msra.mxu0 0.0
      %5893 = vmatprep.subr.mxu0 0.0
      %5894 = vmatpush1.msra.mxu0 0.0
      %5895 = vmatprep.subr.mxu0 0.0
      %5896 = vmatpush1.msra.mxu0 0.0
      %5897 = vmatprep.subr.mxu0 0.0
      %5898 = vmatpush1.msra.mxu0 0.0
      %5899 = vmatprep.subr.mxu0 0.0
      %5900 = vmatpush1.msra.mxu0 0.0
      %5901 = vmatprep.subr.mxu0 0.0
      %5902 = vmatpush1.msra.mxu0 0.0
      %5903 = vmatprep.subr.mxu0 0.0
      %5904 = vmatpush1.msra.mxu0 0.0
      %5905 = vmatprep.subr.mxu0 0.0
      %5906 = vmatpush1.msra.mxu0 0.0
      %5907 = vmatprep.subr.mxu0 0.0
      %5908 = vmatpush1.msra.mxu0 0.0
      %5909 = vmatprep.subr.mxu0 0.0
      %5910 = vmatpush1.msra.mxu0 0.0
      %5911 = vmatprep.subr.mxu0 0.0
      %5912 = vmatpush1.msra.mxu0 0.0
      %5913 = vmatprep.subr.mxu0 0.0
      %5914 = vmatpush1.msra.mxu0 0.0
      %5915 = vmatprep.subr.mxu0 0.0
      %5916 = vmatpush1.msra.mxu0 0.0
      %5917 = vmatprep.subr.mxu0 0.0
      %5918 = vmatpush1.msra.mxu0 0.0
      %5919 = vmatprep.subr.mxu0 0.0
      %5920 = vmatpush1.msra.mxu0 0.0
      %5921 = vmatprep.subr.mxu0 0.0
      %5922 = vmatpush1.msra.mxu0 0.0
      %5923 = vmatprep.subr.mxu0 0.0
      %5924 = vmatpush1.msra.mxu0 0.0
      %5925 = vmatprep.subr.mxu0 0.0
      %5926 = vmatpush1.msra.mxu0 0.0
      %5927 = vmatprep.subr.mxu0 0.0
      %5928 = vmatpush1.msra.mxu0 0.0
      %5929 = vmatprep.subr.mxu0 0.0
      %5930 = vmatpush1.msra.mxu0 0.0
      %5931 = vmatprep.subr.mxu0 0.0
      %5932 = vmatpush1.msra.mxu0 0.0
      %5933 = vmatprep.subr.mxu0 0.0
      %5934 = vmatpush1.msra.mxu0 0.0
      %5935 = vmatprep.subr.mxu0 0.0
      %5936 = vmatpush1.msra.mxu0 0.0
      %5937 = vmatprep.subr.mxu0 0.0
      %5938 = vmatpush1.msra.mxu0 0.0
      %5939 = vmatprep.subr.mxu0 0.0
      %5940 = vmatpush1.msra.mxu0 0.0
      %5941 = vmatprep.mubr.f32.mxu0 0.0
      %5942 = vmatmul.mubr.f32.gmra.mrb[0].mxu0 %v4217
      %v5943 = vpop.f32.mrb[0].mxu0
      %v5944 = vadd.f32 0.0, %v5943
      %v5945 = vpop.f32.mrb[0].mxu0
      %5946 = vmatprep.mubr.f32.mxu0 0.0
      %5947 = vmatmul.mubr.f32.gmra.mrb[0].mxu0 %v4219
      %v5948 = vpop.f32.mrb[0].mxu0
      %v5949 = vadd.f32 0.0, %v5948
      %v5950 = vpop.f32.mrb[0].mxu0
      %5951 = vmatprep.mubr.f32.mxu0 0.0
      %5952 = vmatmul.mubr.f32.gmra.mrb[0].mxu0 %v4221
      %v5953 = vpop.f32.mrb[0].mxu0
      %v5954 = vadd.f32 0.0, %v5953
      %v5955 = vpop.f32.mrb[0].mxu0
      %5956 = vmatprep.mubr.f32.mxu0 0.0
      %5957 = vmatmul.mubr.f32.gmra.mrb[0].mxu0 %v4223
      %v5958 = vpop.f32.mrb[0].mxu0
      %v5959 = vadd.f32 0.0, %v5958
      %v5960 = vpop.f32.mrb[0].mxu0
      %5961 = vmatprep.mubr.f32.mxu0 0.0
      %5962 = vmatmul.mubr.f32.gmra.mrb[0].mxu0 %v4225
      %v5963 = vpop.f32.mrb[0].mxu0
      %v5964 = vadd.f32 0.0, %v5963
      %v5965 = vpop.f32.mrb[0].mxu0
      %5966 = vmatprep.mubr.f32.mxu0 0.0
      %5967 = vmatmul.mubr.f32.gmra.mrb[0].mxu0 %v4227
      %v5968 = vpop.f32.mrb[0].mxu0
      %v5969 = vadd.f32 0.0, %v5968
      %v5970 = vpop.f32.mrb[0].mxu0
      %5971 = vmatprep.mubr.f32.mxu0 0.0
      %5972 = vmatmul.mubr.f32.gmra.mrb[0].mxu0 %v4229
      %v5973 = vpop.f32.mrb[0].mxu0
      %v5974 = vadd.f32 0.0, %v5973
      %v5975 = vpop.f32.mrb[0].mxu0
      %5976 = vmatprep.mubr.f32.mxu0 0.0
      %5977 = vmatmul.mubr.f32.gmra.mrb[0].mxu0 %v4231
      %v5978 = vpop.f32.mrb[0].mxu0
      %v5979 = vadd.f32 0.0, %v5978
      %v5980 = vpop.f32.mrb[0].mxu0
      %5981 = vmatprep.mubr.f32.mxu0 0.0
      %5982 = vmatmul.mubr.f32.gmra.mrb[0].mxu0 %v4233
      %v5983 = vpop.f32.mrb[0].mxu0
      %v5984 = vadd.f32 0.0, %v5983
      %v5985 = vpop.f32.mrb[0].mxu0
      %5986 = vmatprep.mubr.f32.mxu0 0.0
      %5987 = vmatmul.mubr.f32.gmra.mrb[0].mxu0 %v4235
      %v5988 = vpop.f32.mrb[0].mxu0
      %v5989 = vadd.f32 0.0, %v5988
      %v5990 = vpop.f32.mrb[0].mxu0
      %5991 = vmatprep.mubr.f32.mxu0 0.0
      %5992 = vmatmul.mubr.f32.gmra.mrb[0].mxu0 %v4237
      %v5993 = vpop.f32.mrb[0].mxu0
      %v5994 = vadd.f32 0.0, %v5993
      %v5995 = vpop.f32.mrb[0].mxu0
      %5996 = vmatprep.mubr.f32.mxu0 0.0
      %5997 = vmatmul.mubr.f32.gmra.mrb[0].mxu0 %v4239
      %v5998 = vpop.f32.mrb[0].mxu0
      %v5999 = vadd.f32 0.0, %v5998
      %v6000 = vpop.f32.mrb[0].mxu0
      %6001 = vmatprep.mubr.f32.mxu0 0.0
      %6002 = vmatmul.mubr.f32.gmra.mrb[0].mxu0 %v4241
      %v6003 = vpop.f32.mrb[0].mxu0
      %v6004 = vadd.f32 0.0, %v6003
      %v6005 = vpop.f32.mrb[0].mxu0
      %6006 = vmatprep.mubr.f32.mxu0 0.0
      %6007 = vmatmul.mubr.f32.gmra.mrb[0].mxu0 %v4243
      %v6008 = vpop.f32.mrb[0].mxu0
      %v6009 = vadd.f32 0.0, %v6008
      %v6010 = vpop.f32.mrb[0].mxu0
      %6011 = vmatprep.mubr.f32.mxu0 0.0
      %6012 = vmatmul.mubr.f32.gmra.mrb[0].mxu0 %v4245
      %v6013 = vpop.f32.mrb[0].mxu0
      %v6014 = vadd.f32 0.0, %v6013
      %v6015 = vpop.f32.mrb[0].mxu0
      %6016 = vmatprep.mubr.f32.mxu0 0.0
      %6017 = vmatmul.mubr.f32.gmra.mrb[0].mxu0 %v4247
      %v6018 = vpop.f32.mrb[0].mxu0
      %v6019 = vadd.f32 0.0, %v6018
      %v6020 = vpop.f32.mrb[0].mxu0
      %6021 = vmatprep.mubr.f32.mxu0 0.0
      %6022 = vmatmul.mubr.f32.gmra.mrb[0].mxu0 %v4249
      %v6023 = vpop.f32.mrb[0].mxu0
      %v6024 = vadd.f32 0.0, %v6023
      %v6025 = vpop.f32.mrb[0].mxu0
      %6026 = vmatprep.mubr.f32.mxu0 0.0
      %6027 = vmatmul.mubr.f32.gmra.mrb[0].mxu0 %v4251
      %v6028 = vpop.f32.mrb[0].mxu0
      %v6029 = vadd.f32 0.0, %v6028
      %v6030 = vpop.f32.mrb[0].mxu0
      %6031 = vmatprep.mubr.f32.mxu0 0.0
      %6032 = vmatmul.mubr.f32.gmra.mrb[0].mxu0 %v4253
      %v6033 = vpop.f32.mrb[0].mxu0
      %v6034 = vadd.f32 0.0, %v6033
      %v6035 = vpop.f32.mrb[0].mxu0
      %6036 = vmatprep.mubr.f32.mxu0 0.0
      %6037 = vmatmul.mubr.f32.gmra.mrb[0].mxu0 %v4255
      %v6038 = vpop.f32.mrb[0].mxu0
      %v6039 = vadd.f32 0.0, %v6038
      %v6040 = vpop.f32.mrb[0].mxu0
      %6041 = vmatprep.mubr.f32.mxu0 0.0
      %6042 = vmatmul.mubr.f32.gmra.mrb[0].mxu0 %v4257
      %v6043 = vpop.f32.mrb[0].mxu0
      %v6044 = vadd.f32 0.0, %v6043
      %v6045 = vpop.f32.mrb[0].mxu0
      %6046 = vmatprep.mubr.f32.mxu0 0.0
      %6047 = vmatmul.mubr.f32.gmra.mrb[0].mxu0 %v4259
      %v6048 = vpop.f32.mrb[0].mxu0
      %v6049 = vadd.f32 0.0, %v6048
      %v6050 = vpop.f32.mrb[0].mxu0
      %6051 = vmatprep.mubr.f32.mxu0 0.0
      %6052 = vmatmul.mubr.f32.gmra.mrb[0].mxu0 %v4261
      %v6053 = vpop.f32.mrb[0].mxu0
      %v6054 = vadd.f32 0.0, %v6053
      %v6055 = vpop.f32.mrb[0].mxu0
      %6056 = vmatprep.mubr.f32.mxu0 0.0
      %6057 = vmatmul.mubr.f32.gmra.mrb[0].mxu0 %v4263
      %v6058 = vpop.f32.mrb[0].mxu0
      %v6059 = vadd.f32 0.0, %v6058
      %v6060 = vpop.f32.mrb[0].mxu0
      %6061 = vmatprep.mubr.f32.mxu0 0.0
      %6062 = vmatmul.mubr.f32.gmra.mrb[0].mxu0 %v4265
      %v6063 = vpop.f32.mrb[0].mxu0
      %v6064 = vadd.f32 0.0, %v6063
      %v6065 = vpop.f32.mrb[0].mxu0
      %6066 = vmatprep.mubr.f32.mxu0 0.0
      %6067 = vmatmul.mubr.f32.gmra.mrb[0].mxu0 %v4267
      %v6068 = vpop.f32.mrb[0].mxu0
      %v6069 = vadd.f32 0.0, %v6068
      %v6070 = vpop.f32.mrb[0].mxu0
      %6071 = vmatprep.mubr.f32.mxu0 0.0
      %6072 = vmatmul.mubr.f32.gmra.mrb[0].mxu0 %v4269
      %v6073 = vpop.f32.mrb[0].mxu0
      %v6074 = vadd.f32 0.0, %v6073
      %v6075 = vpop.f32.mrb[0].mxu0
      %6076 = vmatprep.mubr.f32.mxu0 0.0
      %6077 = vmatmul.mubr.f32.gmra.mrb[0].mxu0 %v4271
      %v6078 = vpop.f32.mrb[0].mxu0
      %v6079 = vadd.f32 0.0, %v6078
      %v6080 = vpop.f32.mrb[0].mxu0
      %6081 = vmatprep.mubr.f32.mxu0 0.0
      %6082 = vmatmul.mubr.f32.gmra.mrb[0].mxu0 %v5071
      %v6083 = vpop.f32.mrb[0].mxu0
      %v6084 = vadd.f32 0.0, %v6083
      %v6085 = vpop.f32.mrb[0].mxu0
      %6086 = vmatprep.mubr.f32.mxu0 0.0
      %6087 = vmatmul.mubr.f32.gmra.mrb[0].mxu0 %v5073
      %v6088 = vpop.f32.mrb[0].mxu0
      %v6089 = vadd.f32 0.0, %v6088
      %v6090 = vpop.f32.mrb[0].mxu0
      %6091 = vmatprep.mubr.f32.mxu0 0.0
      %6092 = vmatmul.mubr.f32.gmra.mrb[0].mxu0 %v5873
      %v6093 = vpop.f32.mrb[0].mxu0
      %v6094 = vadd.f32 0.0, %v6093
      %v6095 = vpop.f32.mrb[0].mxu0
      %6096 = vmatprep.mubr.f32.mxu0 0.0
      %6097 = vmatmul.mubr.f32.gmra.mrb[0].mxu0 %v5875
      %v6098 = vpop.f32.mrb[0].mxu0
      %v6099 = vadd.f32 0.0, %v6098
      %v6100 = vpop.f32.mrb[0].mxu0
      %6101 = vdwg.mxu0
      %v6102 = vadd.f32 %v5834, %v5944
      %v6103 = vadd.f32 %v5835, %v5949
      %v6104 = vadd.f32 %v5836, %v5954
      %v6105 = vadd.f32 %v5837, %v5959
      %v6106 = vadd.f32 %v5838, %v5964
      %v6107 = vadd.f32 %v5839, %v5969
      %v6108 = vadd.f32 %v5840, %v5974
      %v6109 = vadd.f32 %v5841, %v5979
      %v6110 = vadd.f32 %v5842, %v5984
      %v6111 = vadd.f32 %v5843, %v5989
      %v6112 = vadd.f32 %v5844, %v5994
      %v6113 = vadd.f32 %v5845, %v5999
      %v6114 = vadd.f32 %v5846, %v6004
      %v6115 = vadd.f32 %v5847, %v6009
      %v6116 = vadd.f32 %v5848, %v6014
      %v6117 = vadd.f32 %v5849, %v6019
      %v6118 = vadd.f32 %v5850, %v6024
      %v6119 = vadd.f32 %v5851, %v6029
      %v6120 = vadd.f32 %v5852, %v6034
      %v6121 = vadd.f32 %v5853, %v6039
      %v6122 = vadd.f32 %v5854, %v6044
      %v6123 = vadd.f32 %v5855, %v6049
      %v6124 = vadd.f32 %v5856, %v6054
      %v6125 = vadd.f32 %v5857, %v6059
      %v6126 = vadd.f32 %v5858, %v6064
      %v6127 = vadd.f32 %v5859, %v6069
      %v6128 = vadd.f32 %v5860, %v6074
      %v6129 = vadd.f32 %v5861, %v6079
      %v6130 = vadd.f32 %v5862, %v6084
      %v6131 = vadd.f32 %v5863, %v6089
      %v6132 = vadd.f32 %v5864, %v6094
      %v6133 = vadd.f32 %v5865, %v6099
      %v6134 = vmul.f32 %v2944, 0.013888889
      %v6135 = vmul.f32 %v2945, 0.013888889
      %v6136 = vmul.f32 %v2946, 0.013888889
      %v6137 = vmul.f32 %v2947, 0.013888889
      %v6138 = vmul.f32 %v2948, 0.013888889
      %v6139 = vmul.f32 %v2949, 0.013888889
      %v6140 = vmul.f32 %v2950, 0.013888889
      %v6141 = vmul.f32 %v2951, 0.013888889
      %v6142 = vmul.f32 %v2952, 0.013888889
      %v6143 = vmul.f32 %v2953, 0.013888889
      %v6144 = vmul.f32 %v2954, 0.013888889
      %v6145 = vmul.f32 %v2955, 0.013888889
      %v6146 = vmul.f32 %v2956, 0.013888889
      %v6147 = vmul.f32 %v2957, 0.013888889
      %v6148 = vmul.f32 %v2958, 0.013888889
      %v6149 = vmul.f32 %v2959, 0.013888889
      %v6150 = vmul.f32 %v2960, 0.013888889
      %v6151 = vmul.f32 %v2961, 0.013888889
      %v6152 = vmul.f32 %v2962, 0.013888889
      %v6153 = vmul.f32 %v2963, 0.013888889
      %v6154 = vmul.f32 %v2964, 0.013888889
      %v6155 = vmul.f32 %v2965, 0.013888889
      %v6156 = vmul.f32 %v2966, 0.013888889
      %v6157 = vmul.f32 %v2967, 0.013888889
      %v6158 = vmul.f32 %v2968, 0.013888889
      %v6159 = vmul.f32 %v2969, 0.013888889
      %v6160 = vmul.f32 %v2970, 0.013888889
      %v6161 = vmul.f32 %v2971, 0.013888889
      %v6162 = vmul.f32 %v2972, 0.013888889
      %v6163 = vmul.f32 %v2973, 0.013888889
      %v6164 = vmul.f32 %v2974, 0.013888889
      %v6165 = vmul.f32 %v2975, 0.013888889
      %v6166 = vmul.f32 %v3386, 0.013888889
      %v6167 = vmul.f32 %v3387, 0.013888889
      %v6168 = vmul.f32 %v3388, 0.013888889
      %v6169 = vmul.f32 %v3389, 0.013888889
      %v6170 = vmul.f32 %v3390, 0.013888889
      %v6171 = vmul.f32 %v3391, 0.013888889
      %v6172 = vmul.f32 %v3392, 0.013888889
      %v6173 = vmul.f32 %v3393, 0.013888889
      %v6174 = vmul.f32 %v3394, 0.013888889
      %v6175 = vmul.f32 %v3395, 0.013888889
      %v6176 = vmul.f32 %v3396, 0.013888889
      %v6177 = vmul.f32 %v3397, 0.013888889
      %v6178 = vmul.f32 %v3398, 0.013888889
      %v6179 = vmul.f32 %v3399, 0.013888889
      %v6180 = vmul.f32 %v3400, 0.013888889
      %v6181 = vmul.f32 %v3401, 0.013888889
      %v6182 = vmul.f32 %v3402, 0.013888889
      %v6183 = vmul.f32 %v3403, 0.013888889
      %v6184 = vmul.f32 %v3404, 0.013888889
      %v6185 = vmul.f32 %v3405, 0.013888889
      %v6186 = vmul.f32 %v3406, 0.013888889
      %v6187 = vmul.f32 %v3407, 0.013888889
      %v6188 = vmul.f32 %v3408, 0.013888889
      %v6189 = vmul.f32 %v3409, 0.013888889
      %v6190 = vmul.f32 %v3410, 0.013888889
      %v6191 = vmul.f32 %v3411, 0.013888889
      %v6192 = vmul.f32 %v3412, 0.013888889
      %v6193 = vmul.f32 %v3413, 0.013888889
      %v6194 = vmul.f32 %v3414, 0.013888889
      %v6195 = vmul.f32 %v3415, 0.013888889
      %v6196 = vmul.f32 %v3416, 0.013888889
      %v6197 = vmul.f32 %v3417, 0.013888889
      %v6198 = vmul.f32 %v6134, %v6134
      %v6199 = vmul.f32 %v6135, %v6135
      %v6200 = vmul.f32 %v6136, %v6136
      %v6201 = vmul.f32 %v6137, %v6137
      %v6202 = vmul.f32 %v6138, %v6138
      %v6203 = vmul.f32 %v6139, %v6139
      %v6204 = vmul.f32 %v6140, %v6140
      %v6205 = vmul.f32 %v6141, %v6141
      %v6206 = vmul.f32 %v6142, %v6142
      %v6207 = vmul.f32 %v6143, %v6143
      %v6208 = vmul.f32 %v6144, %v6144
      %v6209 = vmul.f32 %v6145, %v6145
      %v6210 = vmul.f32 %v6146, %v6146
      %v6211 = vmul.f32 %v6147, %v6147
      %v6212 = vmul.f32 %v6148, %v6148
      %v6213 = vmul.f32 %v6149, %v6149
      %v6214 = vmul.f32 %v6150, %v6150
      %v6215 = vmul.f32 %v6151, %v6151
      %v6216 = vmul.f32 %v6152, %v6152
      %v6217 = vmul.f32 %v6153, %v6153
      %v6218 = vmul.f32 %v6154, %v6154
      %v6219 = vmul.f32 %v6155, %v6155
      %v6220 = vmul.f32 %v6156, %v6156
      %v6221 = vmul.f32 %v6157, %v6157
      %v6222 = vmul.f32 %v6158, %v6158
      %v6223 = vmul.f32 %v6159, %v6159
      %v6224 = vmul.f32 %v6160, %v6160
      %v6225 = vmul.f32 %v6161, %v6161
      %v6226 = vmul.f32 %v6162, %v6162
      %v6227 = vmul.f32 %v6163, %v6163
      %v6228 = vmul.f32 %v6164, %v6164
      %v6229 = vmul.f32 %v6165, %v6165
      %v6230 = vsub.f32 %v6166, %v6198
      %v6231 = vsub.f32 %v6167, %v6199
      %v6232 = vsub.f32 %v6168, %v6200
      %v6233 = vsub.f32 %v6169, %v6201
      %v6234 = vsub.f32 %v6170, %v6202
      %v6235 = vsub.f32 %v6171, %v6203
      %v6236 = vsub.f32 %v6172, %v6204
      %v6237 = vsub.f32 %v6173, %v6205
      %v6238 = vsub.f32 %v6174, %v6206
      %v6239 = vsub.f32 %v6175, %v6207
      %v6240 = vsub.f32 %v6176, %v6208
      %v6241 = vsub.f32 %v6177, %v6209
      %v6242 = vsub.f32 %v6178, %v6210
      %v6243 = vsub.f32 %v6179, %v6211
      %v6244 = vsub.f32 %v6180, %v6212
      %v6245 = vsub.f32 %v6181, %v6213
      %v6246 = vsub.f32 %v6182, %v6214
      %v6247 = vsub.f32 %v6183, %v6215
      %v6248 = vsub.f32 %v6184, %v6216
      %v6249 = vsub.f32 %v6185, %v6217
      %v6250 = vsub.f32 %v6186, %v6218
      %v6251 = vsub.f32 %v6187, %v6219
      %v6252 = vsub.f32 %v6188, %v6220
      %v6253 = vsub.f32 %v6189, %v6221
      %v6254 = vsub.f32 %v6190, %v6222
      %v6255 = vsub.f32 %v6191, %v6223
      %v6256 = vsub.f32 %v6192, %v6224
      %v6257 = vsub.f32 %v6193, %v6225
      %v6258 = vsub.f32 %v6194, %v6226
      %v6259 = vsub.f32 %v6195, %v6227
      %v6260 = vsub.f32 %v6196, %v6228
      %v6261 = vsub.f32 %v6197, %v6229
      %v6262 = vmax.f32 %v6230, 0.0
      %v6263 = vmax.f32 %v6231, 0.0
      %v6264 = vmax.f32 %v6232, 0.0
      %v6265 = vmax.f32 %v6233, 0.0
      %v6266 = vmax.f32 %v6234, 0.0
      %v6267 = vmax.f32 %v6235, 0.0
      %v6268 = vmax.f32 %v6236, 0.0
      %v6269 = vmax.f32 %v6237, 0.0
      %v6270 = vmax.f32 %v6238, 0.0
      %v6271 = vmax.f32 %v6239, 0.0
      %v6272 = vmax.f32 %v6240, 0.0
      %v6273 = vmax.f32 %v6241, 0.0
      %v6274 = vmax.f32 %v6242, 0.0
      %v6275 = vmax.f32 %v6243, 0.0
      %v6276 = vmax.f32 %v6244, 0.0
      %v6277 = vmax.f32 %v6245, 0.0
      %v6278 = vmax.f32 %v6246, 0.0
      %v6279 = vmax.f32 %v6247, 0.0
      %v6280 = vmax.f32 %v6248, 0.0
      %v6281 = vmax.f32 %v6249, 0.0
      %v6282 = vmax.f32 %v6250, 0.0
      %v6283 = vmax.f32 %v6251, 0.0
      %v6284 = vmax.f32 %v6252, 0.0
      %v6285 = vmax.f32 %v6253, 0.0
      %v6286 = vmax.f32 %v6254, 0.0
      %v6287 = vmax.f32 %v6255, 0.0
      %v6288 = vmax.f32 %v6256, 0.0
      %v6289 = vmax.f32 %v6257, 0.0
      %v6290 = vmax.f32 %v6258, 0.0
      %v6291 = vmax.f32 %v6259, 0.0
      %v6292 = vmax.f32 %v6260, 0.0
      %v6293 = vmax.f32 %v6261, 0.0
      %v6294 = vadd.f32 %v6262, 1e-05
      %v6295 = vadd.f32 %v6263, 1e-05
      %v6296 = vadd.f32 %v6264, 1e-05
      %v6297 = vadd.f32 %v6265, 1e-05
      %v6298 = vadd.f32 %v6266, 1e-05
      %v6299 = vadd.f32 %v6267, 1e-05
      %v6300 = vadd.f32 %v6268, 1e-05
      %v6301 = vadd.f32 %v6269, 1e-05
      %v6302 = vadd.f32 %v6270, 1e-05
      %v6303 = vadd.f32 %v6271, 1e-05
      %v6304 = vadd.f32 %v6272, 1e-05
      %v6305 = vadd.f32 %v6273, 1e-05
      %v6306 = vadd.f32 %v6274, 1e-05
      %v6307 = vadd.f32 %v6275, 1e-05
      %v6308 = vadd.f32 %v6276, 1e-05
      %v6309 = vadd.f32 %v6277, 1e-05
      %v6310 = vadd.f32 %v6278, 1e-05
      %v6311 = vadd.f32 %v6279, 1e-05
      %v6312 = vadd.f32 %v6280, 1e-05
      %v6313 = vadd.f32 %v6281, 1e-05
      %v6314 = vadd.f32 %v6282, 1e-05
      %v6315 = vadd.f32 %v6283, 1e-05
      %v6316 = vadd.f32 %v6284, 1e-05
      %v6317 = vadd.f32 %v6285, 1e-05
      %v6318 = vadd.f32 %v6286, 1e-05
      %v6319 = vadd.f32 %v6287, 1e-05
      %v6320 = vadd.f32 %v6288, 1e-05
      %v6321 = vadd.f32 %v6289, 1e-05
      %v6322 = vadd.f32 %v6290, 1e-05
      %v6323 = vadd.f32 %v6291, 1e-05
      %v6324 = vadd.f32 %v6292, 1e-05
      %v6325 = vadd.f32 %v6293, 1e-05
      %v6326 = vrsqrt.pop %v6294
      %v6327 = vrsqrt.pop %v6295
      %v6328 = vrsqrt.pop %v6296
      %v6329 = vrsqrt.pop %v6297
      %v6330 = vrsqrt.pop %v6298
      %v6331 = vrsqrt.pop %v6299
      %v6332 = vrsqrt.pop %v6300
      %v6333 = vrsqrt.pop %v6301
      %v6334 = vrsqrt.pop %v6302
      %v6335 = vrsqrt.pop %v6303
      %v6336 = vrsqrt.pop %v6304
      %v6337 = vrsqrt.pop %v6305
      %v6338 = vrsqrt.pop %v6306
      %v6339 = vrsqrt.pop %v6307
      %v6340 = vrsqrt.pop %v6308
      %v6341 = vrsqrt.pop %v6309
      %v6342 = vrsqrt.pop %v6310
      %v6343 = vrsqrt.pop %v6311
      %v6344 = vrsqrt.pop %v6312
      %v6345 = vrsqrt.pop %v6313
      %v6346 = vrsqrt.pop %v6314
      %v6347 = vrsqrt.pop %v6315
      %v6348 = vrsqrt.pop %v6316
      %v6349 = vrsqrt.pop %v6317
      %v6350 = vrsqrt.pop %v6318
      %v6351 = vrsqrt.pop %v6319
      %v6352 = vrsqrt.pop %v6320
      %v6353 = vrsqrt.pop %v6321
      %v6354 = vrsqrt.pop %v6322
      %v6355 = vrsqrt.pop %v6323
      %v6356 = vrsqrt.pop %v6324
      %v6357 = vrsqrt.pop %v6325
      %6359 = vset.pattern.permute.xlu0 0
      %6360 = vperm.xlu0 %6359, %v6326
      %v6361 = vpop.permute.xlu0 %6360
      %6364 = vset.pattern.permute.xlu0 0
      %6365 = vperm.xlu0 %6364, %v6327
      %v6366 = vpop.permute.xlu0 %6365
      %6369 = vset.pattern.permute.xlu0 0
      %6370 = vperm.xlu0 %6369, %v6328
      %v6371 = vpop.permute.xlu0 %6370
      %6374 = vset.pattern.permute.xlu0 0
      %6375 = vperm.xlu0 %6374, %v6329
      %v6376 = vpop.permute.xlu0 %6375
      %6379 = vset.pattern.permute.xlu0 0
      %6380 = vperm.xlu0 %6379, %v6330
      %v6381 = vpop.permute.xlu0 %6380
      %6384 = vset.pattern.permute.xlu0 0
      %6385 = vperm.xlu0 %6384, %v6331
      %v6386 = vpop.permute.xlu0 %6385
      %6389 = vset.pattern.permute.xlu0 0
      %6390 = vperm.xlu0 %6389, %v6332
      %v6391 = vpop.permute.xlu0 %6390
      %6394 = vset.pattern.permute.xlu0 0
      %6395 = vperm.xlu0 %6394, %v6333
      %v6396 = vpop.permute.xlu0 %6395
      %6399 = vset.pattern.permute.xlu0 0
      %6400 = vperm.xlu0 %6399, %v6334
      %v6401 = vpop.permute.xlu0 %6400
      %6404 = vset.pattern.permute.xlu0 0
      %6405 = vperm.xlu0 %6404, %v6335
      %v6406 = vpop.permute.xlu0 %6405
      %6409 = vset.pattern.permute.xlu0 0
      %6410 = vperm.xlu0 %6409, %v6336
      %v6411 = vpop.permute.xlu0 %6410
      %6414 = vset.pattern.permute.xlu0 0
      %6415 = vperm.xlu0 %6414, %v6337
      %v6416 = vpop.permute.xlu0 %6415
      %6419 = vset.pattern.permute.xlu0 0
      %6420 = vperm.xlu0 %6419, %v6338
      %v6421 = vpop.permute.xlu0 %6420
      %6424 = vset.pattern.permute.xlu0 0
      %6425 = vperm.xlu0 %6424, %v6339
      %v6426 = vpop.permute.xlu0 %6425
      %6429 = vset.pattern.permute.xlu0 0
      %6430 = vperm.xlu0 %6429, %v6340
      %v6431 = vpop.permute.xlu0 %6430
      %6434 = vset.pattern.permute.xlu0 0
      %6435 = vperm.xlu0 %6434, %v6341
      %v6436 = vpop.permute.xlu0 %6435
      %6439 = vset.pattern.permute.xlu0 0
      %6440 = vperm.xlu0 %6439, %v6342
      %v6441 = vpop.permute.xlu0 %6440
      %6444 = vset.pattern.permute.xlu0 0
      %6445 = vperm.xlu0 %6444, %v6343
      %v6446 = vpop.permute.xlu0 %6445
      %6449 = vset.pattern.permute.xlu0 0
      %6450 = vperm.xlu0 %6449, %v6344
      %v6451 = vpop.permute.xlu0 %6450
      %6454 = vset.pattern.permute.xlu0 0
      %6455 = vperm.xlu0 %6454, %v6345
      %v6456 = vpop.permute.xlu0 %6455
      %6459 = vset.pattern.permute.xlu0 0
      %6460 = vperm.xlu0 %6459, %v6346
      %v6461 = vpop.permute.xlu0 %6460
      %6464 = vset.pattern.permute.xlu0 0
      %6465 = vperm.xlu0 %6464, %v6347
      %v6466 = vpop.permute.xlu0 %6465
      %6469 = vset.pattern.permute.xlu0 0
      %6470 = vperm.xlu0 %6469, %v6348
      %v6471 = vpop.permute.xlu0 %6470
      %6474 = vset.pattern.permute.xlu0 0
      %6475 = vperm.xlu0 %6474, %v6349
      %v6476 = vpop.permute.xlu0 %6475
      %6479 = vset.pattern.permute.xlu0 0
      %6480 = vperm.xlu0 %6479, %v6350
      %v6481 = vpop.permute.xlu0 %6480
      %6484 = vset.pattern.permute.xlu0 0
      %6485 = vperm.xlu0 %6484, %v6351
      %v6486 = vpop.permute.xlu0 %6485
      %6489 = vset.pattern.permute.xlu0 0
      %6490 = vperm.xlu0 %6489, %v6352
      %v6491 = vpop.permute.xlu0 %6490
      %6494 = vset.pattern.permute.xlu0 0
      %6495 = vperm.xlu0 %6494, %v6353
      %v6496 = vpop.permute.xlu0 %6495
      %6499 = vset.pattern.permute.xlu0 0
      %6500 = vperm.xlu0 %6499, %v6354
      %v6501 = vpop.permute.xlu0 %6500
      %6504 = vset.pattern.permute.xlu0 0
      %6505 = vperm.xlu0 %6504, %v6355
      %v6506 = vpop.permute.xlu0 %6505
      %6509 = vset.pattern.permute.xlu0 0
      %6510 = vperm.xlu0 %6509, %v6356
      %v6511 = vpop.permute.xlu0 %6510
      %6514 = vset.pattern.permute.xlu0 0
      %6515 = vperm.xlu0 %6514, %v6357
      %v6516 = vpop.permute.xlu0 %6515
      %v6518 = vmul.f32 %v6361, %v6102
      %v6519 = vmul.f32 %v6366, %v6103
      %v6520 = vmul.f32 %v6371, %v6104
      %v6521 = vmul.f32 %v6376, %v6105
      %v6522 = vmul.f32 %v6381, %v6106
      %v6523 = vmul.f32 %v6386, %v6107
      %v6524 = vmul.f32 %v6391, %v6108
      %v6525 = vmul.f32 %v6396, %v6109
      %v6526 = vmul.f32 %v6401, %v6110
      %v6527 = vmul.f32 %v6406, %v6111
      %v6528 = vmul.f32 %v6411, %v6112
      %v6529 = vmul.f32 %v6416, %v6113
      %v6530 = vmul.f32 %v6421, %v6114
      %v6531 = vmul.f32 %v6426, %v6115
      %v6532 = vmul.f32 %v6431, %v6116
      %v6533 = vmul.f32 %v6436, %v6117
      %v6534 = vmul.f32 %v6441, %v6118
      %v6535 = vmul.f32 %v6446, %v6119
      %v6536 = vmul.f32 %v6451, %v6120
      %v6537 = vmul.f32 %v6456, %v6121
      %v6538 = vmul.f32 %v6461, %v6122
      %v6539 = vmul.f32 %v6466, %v6123
      %v6540 = vmul.f32 %v6471, %v6124
      %v6541 = vmul.f32 %v6476, %v6125
      %v6542 = vmul.f32 %v6481, %v6126
      %v6543 = vmul.f32 %v6486, %v6127
      %v6544 = vmul.f32 %v6491, %v6128
      %v6545 = vmul.f32 %v6496, %v6129
      %v6546 = vmul.f32 %v6501, %v6130
      %v6547 = vmul.f32 %v6506, %v6131
      %v6548 = vmul.f32 %v6511, %v6132
      %v6549 = vmul.f32 %v6516, %v6133
      %v6550 = vld [vmem:[%s5] sm:$0x1]
      %v6551 = vmul.f32 %v6134, %v6326
      %v6552 = vmul.f32 %v6135, %v6327
      %v6553 = vmul.f32 %v6136, %v6328
      %v6554 = vmul.f32 %v6137, %v6329
      %v6555 = vmul.f32 %v6138, %v6330
      %v6556 = vmul.f32 %v6139, %v6331
      %v6557 = vmul.f32 %v6140, %v6332
      %v6558 = vmul.f32 %v6141, %v6333
      %v6559 = vmul.f32 %v6142, %v6334
      %v6560 = vmul.f32 %v6143, %v6335
      %v6561 = vmul.f32 %v6144, %v6336
      %v6562 = vmul.f32 %v6145, %v6337
      %v6563 = vmul.f32 %v6146, %v6338
      %v6564 = vmul.f32 %v6147, %v6339
      %v6565 = vmul.f32 %v6148, %v6340
      %v6566 = vmul.f32 %v6149, %v6341
      %v6567 = vmul.f32 %v6150, %v6342
      %v6568 = vmul.f32 %v6151, %v6343
      %v6569 = vmul.f32 %v6152, %v6344
      %v6570 = vmul.f32 %v6153, %v6345
      %v6571 = vmul.f32 %v6154, %v6346
      %v6572 = vmul.f32 %v6155, %v6347
      %v6573 = vmul.f32 %v6156, %v6348
      %v6574 = vmul.f32 %v6157, %v6349
      %v6575 = vmul.f32 %v6158, %v6350
      %v6576 = vmul.f32 %v6159, %v6351
      %v6577 = vmul.f32 %v6160, %v6352
      %v6578 = vmul.f32 %v6161, %v6353
      %v6579 = vmul.f32 %v6162, %v6354
      %v6580 = vmul.f32 %v6163, %v6355
      %v6581 = vmul.f32 %v6164, %v6356
      %v6582 = vmul.f32 %v6165, %v6357
      %v6583 = vld [vmem:[%s6] sm:$0x1]
      %6585 = vset.pattern.permute.xlu0 0
      %6586 = vperm.xlu0 %6585, %v6551
      %v6587 = vpop.permute.xlu0 %6586
      %6590 = vset.pattern.permute.xlu0 0
      %6591 = vperm.xlu0 %6590, %v6552
      %v6592 = vpop.permute.xlu0 %6591
      %6595 = vset.pattern.permute.xlu0 0
      %6596 = vperm.xlu0 %6595, %v6553
      %v6597 = vpop.permute.xlu0 %6596
      %6600 = vset.pattern.permute.xlu0 0
      %6601 = vperm.xlu0 %6600, %v6554
      %v6602 = vpop.permute.xlu0 %6601
      %6605 = vset.pattern.permute.xlu0 0
      %6606 = vperm.xlu0 %6605, %v6555
      %v6607 = vpop.permute.xlu0 %6606
      %6610 = vset.pattern.permute.xlu0 0
      %6611 = vperm.xlu0 %6610, %v6556
      %v6612 = vpop.permute.xlu0 %6611
      %6615 = vset.pattern.permute.xlu0 0
      %6616 = vperm.xlu0 %6615, %v6557
      %v6617 = vpop.permute.xlu0 %6616
      %6620 = vset.pattern.permute.xlu0 0
      %6621 = vperm.xlu0 %6620, %v6558
      %v6622 = vpop.permute.xlu0 %6621
      %6625 = vset.pattern.permute.xlu0 0
      %6626 = vperm.xlu0 %6625, %v6559
      %v6627 = vpop.permute.xlu0 %6626
      %6630 = vset.pattern.permute.xlu0 0
      %6631 = vperm.xlu0 %6630, %v6560
      %v6632 = vpop.permute.xlu0 %6631
      %6635 = vset.pattern.permute.xlu0 0
      %6636 = vperm.xlu0 %6635, %v6561
      %v6637 = vpop.permute.xlu0 %6636
      %6640 = vset.pattern.permute.xlu0 0
      %6641 = vperm.xlu0 %6640, %v6562
      %v6642 = vpop.permute.xlu0 %6641
      %6645 = vset.pattern.permute.xlu0 0
      %6646 = vperm.xlu0 %6645, %v6563
      %v6647 = vpop.permute.xlu0 %6646
      %6650 = vset.pattern.permute.xlu0 0
      %6651 = vperm.xlu0 %6650, %v6564
      %v6652 = vpop.permute.xlu0 %6651
      %6655 = vset.pattern.permute.xlu0 0
      %6656 = vperm.xlu0 %6655, %v6565
      %v6657 = vpop.permute.xlu0 %6656
      %6660 = vset.pattern.permute.xlu0 0
      %6661 = vperm.xlu0 %6660, %v6566
      %v6662 = vpop.permute.xlu0 %6661
      %6665 = vset.pattern.permute.xlu0 0
      %6666 = vperm.xlu0 %6665, %v6567
      %v6667 = vpop.permute.xlu0 %6666
      %6670 = vset.pattern.permute.xlu0 0
      %6671 = vperm.xlu0 %6670, %v6568
      %v6672 = vpop.permute.xlu0 %6671
      %6675 = vset.pattern.permute.xlu0 0
      %6676 = vperm.xlu0 %6675, %v6569
      %v6677 = vpop.permute.xlu0 %6676
      %6680 = vset.pattern.permute.xlu0 0
      %6681 = vperm.xlu0 %6680, %v6570
      %v6682 = vpop.permute.xlu0 %6681
      %6685 = vset.pattern.permute.xlu0 0
      %6686 = vperm.xlu0 %6685, %v6571
      %v6687 = vpop.permute.xlu0 %6686
      %6690 = vset.pattern.permute.xlu0 0
      %6691 = vperm.xlu0 %6690, %v6572
      %v6692 = vpop.permute.xlu0 %6691
      %6695 = vset.pattern.permute.xlu0 0
      %6696 = vperm.xlu0 %6695, %v6573
      %v6697 = vpop.permute.xlu0 %6696
      %6700 = vset.pattern.permute.xlu0 0
      %6701 = vperm.xlu0 %6700, %v6574
      %v6702 = vpop.permute.xlu0 %6701
      %6705 = vset.pattern.permute.xlu0 0
      %6706 = vperm.xlu0 %6705, %v6575
      %v6707 = vpop.permute.xlu0 %6706
      %6710 = vset.pattern.permute.xlu0 0
      %6711 = vperm.xlu0 %6710, %v6576
      %v6712 = vpop.permute.xlu0 %6711
      %6715 = vset.pattern.permute.xlu0 0
      %6716 = vperm.xlu0 %6715, %v6577
      %v6717 = vpop.permute.xlu0 %6716
      %6720 = vset.pattern.permute.xlu0 0
      %6721 = vperm.xlu0 %6720, %v6578
      %v6722 = vpop.permute.xlu0 %6721
      %6725 = vset.pattern.permute.xlu0 0
      %6726 = vperm.xlu0 %6725, %v6579
      %v6727 = vpop.permute.xlu0 %6726
      %6730 = vset.pattern.permute.xlu0 0
      %6731 = vperm.xlu0 %6730, %v6580
      %v6732 = vpop.permute.xlu0 %6731
      %6735 = vset.pattern.permute.xlu0 0
      %6736 = vperm.xlu0 %6735, %v6581
      %v6737 = vpop.permute.xlu0 %6736
      %6740 = vset.pattern.permute.xlu0 0
      %6741 = vperm.xlu0 %6740, %v6582
      %v6742 = vpop.permute.xlu0 %6741
      %v6745 = vlaneseq
      %v6746 = vshrl.u32 %v6745, 7
      %v6747 = vsub.s32 0, %v6746
      %v6748 = vrot.slane %v6583, %v6747
      %v6750 = vmul.f32 %v6587, %v6748
      %v6751 = vmul.f32 %v6592, %v6748
      %v6752 = vmul.f32 %v6597, %v6748
      %v6753 = vmul.f32 %v6602, %v6748
      %v6754 = vmul.f32 %v6607, %v6748
      %v6755 = vmul.f32 %v6612, %v6748
      %v6756 = vmul.f32 %v6617, %v6748
      %v6757 = vmul.f32 %v6622, %v6748
      %v6758 = vmul.f32 %v6627, %v6748
      %v6759 = vmul.f32 %v6632, %v6748
      %v6760 = vmul.f32 %v6637, %v6748
      %v6761 = vmul.f32 %v6642, %v6748
      %v6762 = vmul.f32 %v6647, %v6748
      %v6763 = vmul.f32 %v6652, %v6748
      %v6764 = vmul.f32 %v6657, %v6748
      %v6765 = vmul.f32 %v6662, %v6748
      %v6766 = vmul.f32 %v6667, %v6748
      %v6767 = vmul.f32 %v6672, %v6748
      %v6768 = vmul.f32 %v6677, %v6748
      %v6769 = vmul.f32 %v6682, %v6748
      %v6770 = vmul.f32 %v6687, %v6748
      %v6771 = vmul.f32 %v6692, %v6748
      %v6772 = vmul.f32 %v6697, %v6748
      %v6773 = vmul.f32 %v6702, %v6748
      %v6774 = vmul.f32 %v6707, %v6748
      %v6775 = vmul.f32 %v6712, %v6748
      %v6776 = vmul.f32 %v6717, %v6748
      %v6777 = vmul.f32 %v6722, %v6748
      %v6778 = vmul.f32 %v6727, %v6748
      %v6779 = vmul.f32 %v6732, %v6748
      %v6780 = vmul.f32 %v6737, %v6748
      %v6781 = vmul.f32 %v6742, %v6748
      %v6783 = vlaneseq
      %v6784 = vshrl.u32 %v6783, 7
      %v6785 = vsub.s32 0, %v6784
      %v6786 = vrot.slane %v6550, %v6785
      %v6788 = vsub.f32 %v6786, %v6750
      %v6789 = vsub.f32 %v6786, %v6751
      %v6790 = vsub.f32 %v6786, %v6752
      %v6791 = vsub.f32 %v6786, %v6753
      %v6792 = vsub.f32 %v6786, %v6754
      %v6793 = vsub.f32 %v6786, %v6755
      %v6794 = vsub.f32 %v6786, %v6756
      %v6795 = vsub.f32 %v6786, %v6757
      %v6796 = vsub.f32 %v6786, %v6758
      %v6797 = vsub.f32 %v6786, %v6759
      %v6798 = vsub.f32 %v6786, %v6760
      %v6799 = vsub.f32 %v6786, %v6761
      %v6800 = vsub.f32 %v6786, %v6762
      %v6801 = vsub.f32 %v6786, %v6763
      %v6802 = vsub.f32 %v6786, %v6764
      %v6803 = vsub.f32 %v6786, %v6765
      %v6804 = vsub.f32 %v6786, %v6766
      %v6805 = vsub.f32 %v6786, %v6767
      %v6806 = vsub.f32 %v6786, %v6768
      %v6807 = vsub.f32 %v6786, %v6769
      %v6808 = vsub.f32 %v6786, %v6770
      %v6809 = vsub.f32 %v6786, %v6771
      %v6810 = vsub.f32 %v6786, %v6772
      %v6811 = vsub.f32 %v6786, %v6773
      %v6812 = vsub.f32 %v6786, %v6774
      %v6813 = vsub.f32 %v6786, %v6775
      %v6814 = vsub.f32 %v6786, %v6776
      %v6815 = vsub.f32 %v6786, %v6777
      %v6816 = vsub.f32 %v6786, %v6778
      %v6817 = vsub.f32 %v6786, %v6779
      %v6818 = vsub.f32 %v6786, %v6780
      %v6819 = vsub.f32 %v6786, %v6781
      %v6820 = vadd.f32 %v6518, %v6788
      %v6821 = vadd.f32 %v6519, %v6789
      %v6822 = vadd.f32 %v6520, %v6790
      %v6823 = vadd.f32 %v6521, %v6791
      %v6824 = vadd.f32 %v6522, %v6792
      %v6825 = vadd.f32 %v6523, %v6793
      %v6826 = vadd.f32 %v6524, %v6794
      %v6827 = vadd.f32 %v6525, %v6795
      %v6828 = vadd.f32 %v6526, %v6796
      %v6829 = vadd.f32 %v6527, %v6797
      %v6830 = vadd.f32 %v6528, %v6798
      %v6831 = vadd.f32 %v6529, %v6799
      %v6832 = vadd.f32 %v6530, %v6800
      %v6833 = vadd.f32 %v6531, %v6801
      %v6834 = vadd.f32 %v6532, %v6802
      %v6835 = vadd.f32 %v6533, %v6803
      %v6836 = vadd.f32 %v6534, %v6804
      %v6837 = vadd.f32 %v6535, %v6805
      %v6838 = vadd.f32 %v6536, %v6806
      %v6839 = vadd.f32 %v6537, %v6807
      %v6840 = vadd.f32 %v6538, %v6808
      %v6841 = vadd.f32 %v6539, %v6809
      %v6842 = vadd.f32 %v6540, %v6810
      %v6843 = vadd.f32 %v6541, %v6811
      %v6844 = vadd.f32 %v6542, %v6812
      %v6845 = vadd.f32 %v6543, %v6813
      %v6846 = vadd.f32 %v6544, %v6814
      %v6847 = vadd.f32 %v6545, %v6815
      %v6848 = vadd.f32 %v6546, %v6816
      %v6849 = vadd.f32 %v6547, %v6817
      %v6850 = vadd.f32 %v6548, %v6818
      %v6851 = vadd.f32 %v6549, %v6819
      %v6852 = vmax.f32 %v6820, 0.0
      %v6853 = vmax.f32 %v6821, 0.0
      %v6854 = vmax.f32 %v6822, 0.0
      %v6855 = vmax.f32 %v6823, 0.0
      %v6856 = vmax.f32 %v6824, 0.0
      %v6857 = vmax.f32 %v6825, 0.0
      %v6858 = vmax.f32 %v6826, 0.0
      %v6859 = vmax.f32 %v6827, 0.0
      %v6860 = vmax.f32 %v6828, 0.0
      %v6861 = vmax.f32 %v6829, 0.0
      %v6862 = vmax.f32 %v6830, 0.0
      %v6863 = vmax.f32 %v6831, 0.0
      %v6864 = vmax.f32 %v6832, 0.0
      %v6865 = vmax.f32 %v6833, 0.0
      %v6866 = vmax.f32 %v6834, 0.0
      %v6867 = vmax.f32 %v6835, 0.0
      %v6868 = vmax.f32 %v6836, 0.0
      %v6869 = vmax.f32 %v6837, 0.0
      %v6870 = vmax.f32 %v6838, 0.0
      %v6871 = vmax.f32 %v6839, 0.0
      %v6872 = vmax.f32 %v6840, 0.0
      %v6873 = vmax.f32 %v6841, 0.0
      %v6874 = vmax.f32 %v6842, 0.0
      %v6875 = vmax.f32 %v6843, 0.0
      %v6876 = vmax.f32 %v6844, 0.0
      %v6877 = vmax.f32 %v6845, 0.0
      %v6878 = vmax.f32 %v6846, 0.0
      %v6879 = vmax.f32 %v6847, 0.0
      %v6880 = vmax.f32 %v6848, 0.0
      %v6881 = vmax.f32 %v6849, 0.0
      %v6882 = vmax.f32 %v6850, 0.0
      %v6883 = vmax.f32 %v6851, 0.0
      %v6884 = vld [vmem:[%s7] sm:$0xff]
      %v6885 = vld [vmem:[%s8] sm:$0x1]
      %v6886 = vld [vmem:[%s9] sm:$0x1]
      %v6887 = vsel %vm2153, %v6852, 0.0
      %6888 = vadd.xlane.f32.xlu0 %v6887
      %v6889 = vpop.xlane.xlu0 %6888
      %v6890 = vsel %vm2153, %v6853, 0.0
      %6891 = vadd.xlane.f32.xlu0 %v6890
      %v6892 = vpop.xlane.xlu0 %6891
      %v6893 = vsel %vm2153, %v6854, 0.0
      %6894 = vadd.xlane.f32.xlu0 %v6893
      %v6895 = vpop.xlane.xlu0 %6894
      %v6896 = vsel %vm2153, %v6855, 0.0
      %6897 = vadd.xlane.f32.xlu0 %v6896
      %v6898 = vpop.xlane.xlu0 %6897
      %v6899 = vsel %vm2153, %v6856, 0.0
      %6900 = vadd.xlane.f32.xlu0 %v6899
      %v6901 = vpop.xlane.xlu0 %6900
      %v6902 = vsel %vm2153, %v6857, 0.0
      %6903 = vadd.xlane.f32.xlu0 %v6902
      %v6904 = vpop.xlane.xlu0 %6903
      %v6905 = vsel %vm2153, %v6858, 0.0
      %6906 = vadd.xlane.f32.xlu0 %v6905
      %v6907 = vpop.xlane.xlu0 %6906
      %v6908 = vsel %vm2153, %v6859, 0.0
      %6909 = vadd.xlane.f32.xlu0 %v6908
      %v6910 = vpop.xlane.xlu0 %6909
      %v6911 = vsel %vm2153, %v6860, 0.0
      %6912 = vadd.xlane.f32.xlu0 %v6911
      %v6913 = vpop.xlane.xlu0 %6912
      %v6914 = vsel %vm2153, %v6861, 0.0
      %6915 = vadd.xlane.f32.xlu0 %v6914
      %v6916 = vpop.xlane.xlu0 %6915
      %v6917 = vsel %vm2153, %v6862, 0.0
      %6918 = vadd.xlane.f32.xlu0 %v6917
      %v6919 = vpop.xlane.xlu0 %6918
      %v6920 = vsel %vm2153, %v6863, 0.0
      %6921 = vadd.xlane.f32.xlu0 %v6920
      %v6922 = vpop.xlane.xlu0 %6921
      %v6923 = vsel %vm2153, %v6864, 0.0
      %6924 = vadd.xlane.f32.xlu0 %v6923
      %v6925 = vpop.xlane.xlu0 %6924
      %v6926 = vsel %vm2153, %v6865, 0.0
      %6927 = vadd.xlane.f32.xlu0 %v6926
      %v6928 = vpop.xlane.xlu0 %6927
      %v6929 = vsel %vm2153, %v6866, 0.0
      %6930 = vadd.xlane.f32.xlu0 %v6929
      %v6931 = vpop.xlane.xlu0 %6930
      %v6932 = vsel %vm2153, %v6867, 0.0
      %6933 = vadd.xlane.f32.xlu0 %v6932
      %v6934 = vpop.xlane.xlu0 %6933
      %v6935 = vsel %vm2153, %v6868, 0.0
      %6936 = vadd.xlane.f32.xlu0 %v6935
      %v6937 = vpop.xlane.xlu0 %6936
      %v6938 = vsel %vm2153, %v6869, 0.0
      %6939 = vadd.xlane.f32.xlu0 %v6938
      %v6940 = vpop.xlane.xlu0 %6939
      %v6941 = vsel %vm2153, %v6870, 0.0
      %6942 = vadd.xlane.f32.xlu0 %v6941
      %v6943 = vpop.xlane.xlu0 %6942
      %v6944 = vsel %vm2153, %v6871, 0.0
      %6945 = vadd.xlane.f32.xlu0 %v6944
      %v6946 = vpop.xlane.xlu0 %6945
      %v6947 = vsel %vm2153, %v6872, 0.0
      %6948 = vadd.xlane.f32.xlu0 %v6947
      %v6949 = vpop.xlane.xlu0 %6948
      %v6950 = vsel %vm2153, %v6873, 0.0
      %6951 = vadd.xlane.f32.xlu0 %v6950
      %v6952 = vpop.xlane.xlu0 %6951
      %v6953 = vsel %vm2153, %v6874, 0.0
      %6954 = vadd.xlane.f32.xlu0 %v6953
      %v6955 = vpop.xlane.xlu0 %6954
      %v6956 = vsel %vm2153, %v6875, 0.0
      %6957 = vadd.xlane.f32.xlu0 %v6956
      %v6958 = vpop.xlane.xlu0 %6957
      %v6959 = vsel %vm2153, %v6876, 0.0
      %6960 = vadd.xlane.f32.xlu0 %v6959
      %v6961 = vpop.xlane.xlu0 %6960
      %v6962 = vsel %vm2153, %v6877, 0.0
      %6963 = vadd.xlane.f32.xlu0 %v6962
      %v6964 = vpop.xlane.xlu0 %6963
      %v6965 = vsel %vm2153, %v6878, 0.0
      %6966 = vadd.xlane.f32.xlu0 %v6965
      %v6967 = vpop.xlane.xlu0 %6966
      %v6968 = vsel %vm2153, %v6879, 0.0
      %6969 = vadd.xlane.f32.xlu0 %v6968
      %v6970 = vpop.xlane.xlu0 %6969
      %v6971 = vsel %vm2153, %v6880, 0.0
      %6972 = vadd.xlane.f32.xlu0 %v6971
      %v6973 = vpop.xlane.xlu0 %6972
      %v6974 = vsel %vm2153, %v6881, 0.0
      %6975 = vadd.xlane.f32.xlu0 %v6974
      %v6976 = vpop.xlane.xlu0 %6975
      %v6977 = vsel %vm2153, %v6882, 0.0
      %6978 = vadd.xlane.f32.xlu0 %v6977
      %v6979 = vpop.xlane.xlu0 %6978
      %v6980 = vsel %vm2153, %v6883, 0.0
      %6981 = vadd.xlane.f32.xlu0 %v6980
      %v6982 = vpop.xlane.xlu0 %6981
      %v6983 = vmul.f32 %v6852, %v6852
      %v6984 = vmul.f32 %v6853, %v6853
      %v6985 = vmul.f32 %v6854, %v6854
      %v6986 = vmul.f32 %v6855, %v6855
      %v6987 = vmul.f32 %v6856, %v6856
      %v6988 = vmul.f32 %v6857, %v6857
      %v6989 = vmul.f32 %v6858, %v6858
      %v6990 = vmul.f32 %v6859, %v6859
      %v6991 = vmul.f32 %v6860, %v6860
      %v6992 = vmul.f32 %v6861, %v6861
      %v6993 = vmul.f32 %v6862, %v6862
      %v6994 = vmul.f32 %v6863, %v6863
      %v6995 = vmul.f32 %v6864, %v6864
      %v6996 = vmul.f32 %v6865, %v6865
      %v6997 = vmul.f32 %v6866, %v6866
      %v6998 = vmul.f32 %v6867, %v6867
      %v6999 = vmul.f32 %v6868, %v6868
      %v7000 = vmul.f32 %v6869, %v6869
      %v7001 = vmul.f32 %v6870, %v6870
      %v7002 = vmul.f32 %v6871, %v6871
      %v7003 = vmul.f32 %v6872, %v6872
      %v7004 = vmul.f32 %v6873, %v6873
      %v7005 = vmul.f32 %v6874, %v6874
      %v7006 = vmul.f32 %v6875, %v6875
      %v7007 = vmul.f32 %v6876, %v6876
      %v7008 = vmul.f32 %v6877, %v6877
      %v7009 = vmul.f32 %v6878, %v6878
      %v7010 = vmul.f32 %v6879, %v6879
      %v7011 = vmul.f32 %v6880, %v6880
      %v7012 = vmul.f32 %v6881, %v6881
      %v7013 = vmul.f32 %v6882, %v6882
      %v7014 = vmul.f32 %v6883, %v6883
      %v7015 = vsel %vm2153, %v6983, 0.0
      %7016 = vadd.xlane.f32.xlu0 %v7015
      %v7017 = vpop.xlane.xlu0 %7016
      %v7018 = vsel %vm2153, %v6984, 0.0
      %7019 = vadd.xlane.f32.xlu0 %v7018
      %v7020 = vpop.xlane.xlu0 %7019
      %v7021 = vsel %vm2153, %v6985, 0.0
      %7022 = vadd.xlane.f32.xlu0 %v7021
      %v7023 = vpop.xlane.xlu0 %7022
      %v7024 = vsel %vm2153, %v6986, 0.0
      %7025 = vadd.xlane.f32.xlu0 %v7024
      %v7026 = vpop.xlane.xlu0 %7025
      %v7027 = vsel %vm2153, %v6987, 0.0
      %7028 = vadd.xlane.f32.xlu0 %v7027
      %v7029 = vpop.xlane.xlu0 %7028
      %v7030 = vsel %vm2153, %v6988, 0.0
      %7031 = vadd.xlane.f32.xlu0 %v7030
      %v7032 = vpop.xlane.xlu0 %7031
      %v7033 = vsel %vm2153, %v6989, 0.0
      %7034 = vadd.xlane.f32.xlu0 %v7033
      %v7035 = vpop.xlane.xlu0 %7034
      %v7036 = vsel %vm2153, %v6990, 0.0
      %7037 = vadd.xlane.f32.xlu0 %v7036
      %v7038 = vpop.xlane.xlu0 %7037
      %v7039 = vsel %vm2153, %v6991, 0.0
      %7040 = vadd.xlane.f32.xlu0 %v7039
      %v7041 = vpop.xlane.xlu0 %7040
      %v7042 = vsel %vm2153, %v6992, 0.0
      %7043 = vadd.xlane.f32.xlu0 %v7042
      %v7044 = vpop.xlane.xlu0 %7043
      %v7045 = vsel %vm2153, %v6993, 0.0
      %7046 = vadd.xlane.f32.xlu0 %v7045
      %v7047 = vpop.xlane.xlu0 %7046
      %v7048 = vsel %vm2153, %v6994, 0.0
      %7049 = vadd.xlane.f32.xlu0 %v7048
      %v7050 = vpop.xlane.xlu0 %7049
      %v7051 = vsel %vm2153, %v6995, 0.0
      %7052 = vadd.xlane.f32.xlu0 %v7051
      %v7053 = vpop.xlane.xlu0 %7052
      %v7054 = vsel %vm2153, %v6996, 0.0
      %7055 = vadd.xlane.f32.xlu0 %v7054
      %v7056 = vpop.xlane.xlu0 %7055
      %v7057 = vsel %vm2153, %v6997, 0.0
      %7058 = vadd.xlane.f32.xlu0 %v7057
      %v7059 = vpop.xlane.xlu0 %7058
      %v7060 = vsel %vm2153, %v6998, 0.0
      %7061 = vadd.xlane.f32.xlu0 %v7060
      %v7062 = vpop.xlane.xlu0 %7061
      %v7063 = vsel %vm2153, %v6999, 0.0
      %7064 = vadd.xlane.f32.xlu0 %v7063
      %v7065 = vpop.xlane.xlu0 %7064
      %v7066 = vsel %vm2153, %v7000, 0.0
      %7067 = vadd.xlane.f32.xlu0 %v7066
      %v7068 = vpop.xlane.xlu0 %7067
      %v7069 = vsel %vm2153, %v7001, 0.0
      %7070 = vadd.xlane.f32.xlu0 %v7069
      %v7071 = vpop.xlane.xlu0 %7070
      %v7072 = vsel %vm2153, %v7002, 0.0
      %7073 = vadd.xlane.f32.xlu0 %v7072
      %v7074 = vpop.xlane.xlu0 %7073
      %v7075 = vsel %vm2153, %v7003, 0.0
      %7076 = vadd.xlane.f32.xlu0 %v7075
      %v7077 = vpop.xlane.xlu0 %7076
      %v7078 = vsel %vm2153, %v7004, 0.0
      %7079 = vadd.xlane.f32.xlu0 %v7078
      %v7080 = vpop.xlane.xlu0 %7079
      %v7081 = vsel %vm2153, %v7005, 0.0
      %7082 = vadd.xlane.f32.xlu0 %v7081
      %v7083 = vpop.xlane.xlu0 %7082
      %v7084 = vsel %vm2153, %v7006, 0.0
      %7085 = vadd.xlane.f32.xlu0 %v7084
      %v7086 = vpop.xlane.xlu0 %7085
      %v7087 = vsel %vm2153, %v7007, 0.0
      %7088 = vadd.xlane.f32.xlu0 %v7087
      %v7089 = vpop.xlane.xlu0 %7088
      %v7090 = vsel %vm2153, %v7008, 0.0
      %7091 = vadd.xlane.f32.xlu0 %v7090
      %v7092 = vpop.xlane.xlu0 %7091
      %v7093 = vsel %vm2153, %v7009, 0.0
      %7094 = vadd.xlane.f32.xlu0 %v7093
      %v7095 = vpop.xlane.xlu0 %7094
      %v7096 = vsel %vm2153, %v7010, 0.0
      %7097 = vadd.xlane.f32.xlu0 %v7096
      %v7098 = vpop.xlane.xlu0 %7097
      %v7099 = vsel %vm2153, %v7011, 0.0
      %7100 = vadd.xlane.f32.xlu0 %v7099
      %v7101 = vpop.xlane.xlu0 %7100
      %v7102 = vsel %vm2153, %v7012, 0.0
      %7103 = vadd.xlane.f32.xlu0 %v7102
      %v7104 = vpop.xlane.xlu0 %7103
      %v7105 = vsel %vm2153, %v7013, 0.0
      %7106 = vadd.xlane.f32.xlu0 %v7105
      %v7107 = vpop.xlane.xlu0 %7106
      %v7108 = vsel %vm2153, %v7014, 0.0
      %7109 = vadd.xlane.f32.xlu0 %v7108
      %v7110 = vpop.xlane.xlu0 %7109
      %v7111 = vmul.f32 %v6889, 0.125
      %v7112 = vmul.f32 %v6892, 0.125
      %v7113 = vmul.f32 %v6895, 0.125
      %v7114 = vmul.f32 %v6898, 0.125
      %v7115 = vmul.f32 %v6901, 0.125
      %v7116 = vmul.f32 %v6904, 0.125
      %v7117 = vmul.f32 %v6907, 0.125
      %v7118 = vmul.f32 %v6910, 0.125
      %v7119 = vmul.f32 %v6913, 0.125
      %v7120 = vmul.f32 %v6916, 0.125
      %v7121 = vmul.f32 %v6919, 0.125
      %v7122 = vmul.f32 %v6922, 0.125
      %v7123 = vmul.f32 %v6925, 0.125
      %v7124 = vmul.f32 %v6928, 0.125
      %v7125 = vmul.f32 %v6931, 0.125
      %v7126 = vmul.f32 %v6934, 0.125
      %v7127 = vmul.f32 %v6937, 0.125
      %v7128 = vmul.f32 %v6940, 0.125
      %v7129 = vmul.f32 %v6943, 0.125
      %v7130 = vmul.f32 %v6946, 0.125
      %v7131 = vmul.f32 %v6949, 0.125
      %v7132 = vmul.f32 %v6952, 0.125
      %v7133 = vmul.f32 %v6955, 0.125
      %v7134 = vmul.f32 %v6958, 0.125
      %v7135 = vmul.f32 %v6961, 0.125
      %v7136 = vmul.f32 %v6964, 0.125
      %v7137 = vmul.f32 %v6967, 0.125
      %v7138 = vmul.f32 %v6970, 0.125
      %v7139 = vmul.f32 %v6973, 0.125
      %v7140 = vmul.f32 %v6976, 0.125
      %v7141 = vmul.f32 %v6979, 0.125
      %v7142 = vmul.f32 %v6982, 0.125
      %v7143 = vmul.f32 %v7017, 0.125
      %v7144 = vmul.f32 %v7020, 0.125
      %v7145 = vmul.f32 %v7023, 0.125
      %v7146 = vmul.f32 %v7026, 0.125
      %v7147 = vmul.f32 %v7029, 0.125
      %v7148 = vmul.f32 %v7032, 0.125
      %v7149 = vmul.f32 %v7035, 0.125
      %v7150 = vmul.f32 %v7038, 0.125
      %v7151 = vmul.f32 %v7041, 0.125
      %v7152 = vmul.f32 %v7044, 0.125
      %v7153 = vmul.f32 %v7047, 0.125
      %v7154 = vmul.f32 %v7050, 0.125
      %v7155 = vmul.f32 %v7053, 0.125
      %v7156 = vmul.f32 %v7056, 0.125
      %v7157 = vmul.f32 %v7059, 0.125
      %v7158 = vmul.f32 %v7062, 0.125
      %v7159 = vmul.f32 %v7065, 0.125
      %v7160 = vmul.f32 %v7068, 0.125
      %v7161 = vmul.f32 %v7071, 0.125
      %v7162 = vmul.f32 %v7074, 0.125
      %v7163 = vmul.f32 %v7077, 0.125
      %v7164 = vmul.f32 %v7080, 0.125
      %v7165 = vmul.f32 %v7083, 0.125
      %v7166 = vmul.f32 %v7086, 0.125
      %v7167 = vmul.f32 %v7089, 0.125
      %v7168 = vmul.f32 %v7092, 0.125
      %v7169 = vmul.f32 %v7095, 0.125
      %v7170 = vmul.f32 %v7098, 0.125
      %v7171 = vmul.f32 %v7101, 0.125
      %v7172 = vmul.f32 %v7104, 0.125
      %v7173 = vmul.f32 %v7107, 0.125
      %v7174 = vmul.f32 %v7110, 0.125
      %v7175 = vmul.f32 %v7111, %v7111
      %v7176 = vmul.f32 %v7112, %v7112
      %v7177 = vmul.f32 %v7113, %v7113
      %v7178 = vmul.f32 %v7114, %v7114
      %v7179 = vmul.f32 %v7115, %v7115
      %v7180 = vmul.f32 %v7116, %v7116
      %v7181 = vmul.f32 %v7117, %v7117
      %v7182 = vmul.f32 %v7118, %v7118
      %v7183 = vmul.f32 %v7119, %v7119
      %v7184 = vmul.f32 %v7120, %v7120
      %v7185 = vmul.f32 %v7121, %v7121
      %v7186 = vmul.f32 %v7122, %v7122
      %v7187 = vmul.f32 %v7123, %v7123
      %v7188 = vmul.f32 %v7124, %v7124
      %v7189 = vmul.f32 %v7125, %v7125
      %v7190 = vmul.f32 %v7126, %v7126
      %v7191 = vmul.f32 %v7127, %v7127
      %v7192 = vmul.f32 %v7128, %v7128
      %v7193 = vmul.f32 %v7129, %v7129
      %v7194 = vmul.f32 %v7130, %v7130
      %v7195 = vmul.f32 %v7131, %v7131
      %v7196 = vmul.f32 %v7132, %v7132
      %v7197 = vmul.f32 %v7133, %v7133
      %v7198 = vmul.f32 %v7134, %v7134
      %v7199 = vmul.f32 %v7135, %v7135
      %v7200 = vmul.f32 %v7136, %v7136
      %v7201 = vmul.f32 %v7137, %v7137
      %v7202 = vmul.f32 %v7138, %v7138
      %v7203 = vmul.f32 %v7139, %v7139
      %v7204 = vmul.f32 %v7140, %v7140
      %v7205 = vmul.f32 %v7141, %v7141
      %v7206 = vmul.f32 %v7142, %v7142
      %v7207 = vsub.f32 %v7143, %v7175
      %v7208 = vsub.f32 %v7144, %v7176
      %v7209 = vsub.f32 %v7145, %v7177
      %v7210 = vsub.f32 %v7146, %v7178
      %v7211 = vsub.f32 %v7147, %v7179
      %v7212 = vsub.f32 %v7148, %v7180
      %v7213 = vsub.f32 %v7149, %v7181
      %v7214 = vsub.f32 %v7150, %v7182
      %v7215 = vsub.f32 %v7151, %v7183
      %v7216 = vsub.f32 %v7152, %v7184
      %v7217 = vsub.f32 %v7153, %v7185
      %v7218 = vsub.f32 %v7154, %v7186
      %v7219 = vsub.f32 %v7155, %v7187
      %v7220 = vsub.f32 %v7156, %v7188
      %v7221 = vsub.f32 %v7157, %v7189
      %v7222 = vsub.f32 %v7158, %v7190
      %v7223 = vsub.f32 %v7159, %v7191
      %v7224 = vsub.f32 %v7160, %v7192
      %v7225 = vsub.f32 %v7161, %v7193
      %v7226 = vsub.f32 %v7162, %v7194
      %v7227 = vsub.f32 %v7163, %v7195
      %v7228 = vsub.f32 %v7164, %v7196
      %v7229 = vsub.f32 %v7165, %v7197
      %v7230 = vsub.f32 %v7166, %v7198
      %v7231 = vsub.f32 %v7167, %v7199
      %v7232 = vsub.f32 %v7168, %v7200
      %v7233 = vsub.f32 %v7169, %v7201
      %v7234 = vsub.f32 %v7170, %v7202
      %v7235 = vsub.f32 %v7171, %v7203
      %v7236 = vsub.f32 %v7172, %v7204
      %v7237 = vsub.f32 %v7173, %v7205
      %v7238 = vsub.f32 %v7174, %v7206
      %v7239 = vmax.f32 %v7207, 0.0
      %v7240 = vmax.f32 %v7208, 0.0
      %v7241 = vmax.f32 %v7209, 0.0
      %v7242 = vmax.f32 %v7210, 0.0
      %v7243 = vmax.f32 %v7211, 0.0
      %v7244 = vmax.f32 %v7212, 0.0
      %v7245 = vmax.f32 %v7213, 0.0
      %v7246 = vmax.f32 %v7214, 0.0
      %v7247 = vmax.f32 %v7215, 0.0
      %v7248 = vmax.f32 %v7216, 0.0
      %v7249 = vmax.f32 %v7217, 0.0
      %v7250 = vmax.f32 %v7218, 0.0
      %v7251 = vmax.f32 %v7219, 0.0
      %v7252 = vmax.f32 %v7220, 0.0
      %v7253 = vmax.f32 %v7221, 0.0
      %v7254 = vmax.f32 %v7222, 0.0
      %v7255 = vmax.f32 %v7223, 0.0
      %v7256 = vmax.f32 %v7224, 0.0
      %v7257 = vmax.f32 %v7225, 0.0
      %v7258 = vmax.f32 %v7226, 0.0
      %v7259 = vmax.f32 %v7227, 0.0
      %v7260 = vmax.f32 %v7228, 0.0
      %v7261 = vmax.f32 %v7229, 0.0
      %v7262 = vmax.f32 %v7230, 0.0
      %v7263 = vmax.f32 %v7231, 0.0
      %v7264 = vmax.f32 %v7232, 0.0
      %v7265 = vmax.f32 %v7233, 0.0
      %v7266 = vmax.f32 %v7234, 0.0
      %v7267 = vmax.f32 %v7235, 0.0
      %v7268 = vmax.f32 %v7236, 0.0
      %v7269 = vmax.f32 %v7237, 0.0
      %v7270 = vmax.f32 %v7238, 0.0
      %v7271 = vadd.f32 %v7239, 1e-05
      %v7272 = vadd.f32 %v7240, 1e-05
      %v7273 = vadd.f32 %v7241, 1e-05
      %v7274 = vadd.f32 %v7242, 1e-05
      %v7275 = vadd.f32 %v7243, 1e-05
      %v7276 = vadd.f32 %v7244, 1e-05
      %v7277 = vadd.f32 %v7245, 1e-05
      %v7278 = vadd.f32 %v7246, 1e-05
      %v7279 = vadd.f32 %v7247, 1e-05
      %v7280 = vadd.f32 %v7248, 1e-05
      %v7281 = vadd.f32 %v7249, 1e-05
      %v7282 = vadd.f32 %v7250, 1e-05
      %v7283 = vadd.f32 %v7251, 1e-05
      %v7284 = vadd.f32 %v7252, 1e-05
      %v7285 = vadd.f32 %v7253, 1e-05
      %v7286 = vadd.f32 %v7254, 1e-05
      %v7287 = vadd.f32 %v7255, 1e-05
      %v7288 = vadd.f32 %v7256, 1e-05
      %v7289 = vadd.f32 %v7257, 1e-05
      %v7290 = vadd.f32 %v7258, 1e-05
      %v7291 = vadd.f32 %v7259, 1e-05
      %v7292 = vadd.f32 %v7260, 1e-05
      %v7293 = vadd.f32 %v7261, 1e-05
      %v7294 = vadd.f32 %v7262, 1e-05
      %v7295 = vadd.f32 %v7263, 1e-05
      %v7296 = vadd.f32 %v7264, 1e-05
      %v7297 = vadd.f32 %v7265, 1e-05
      %v7298 = vadd.f32 %v7266, 1e-05
      %v7299 = vadd.f32 %v7267, 1e-05
      %v7300 = vadd.f32 %v7268, 1e-05
      %v7301 = vadd.f32 %v7269, 1e-05
      %v7302 = vadd.f32 %v7270, 1e-05
      %v7303 = vrsqrt.pop %v7271
      %v7304 = vrsqrt.pop %v7272
      %v7305 = vrsqrt.pop %v7273
      %v7306 = vrsqrt.pop %v7274
      %v7307 = vrsqrt.pop %v7275
      %v7308 = vrsqrt.pop %v7276
      %v7309 = vrsqrt.pop %v7277
      %v7310 = vrsqrt.pop %v7278
      %v7311 = vrsqrt.pop %v7279
      %v7312 = vrsqrt.pop %v7280
      %v7313 = vrsqrt.pop %v7281
      %v7314 = vrsqrt.pop %v7282
      %v7315 = vrsqrt.pop %v7283
      %v7316 = vrsqrt.pop %v7284
      %v7317 = vrsqrt.pop %v7285
      %v7318 = vrsqrt.pop %v7286
      %v7319 = vrsqrt.pop %v7287
      %v7320 = vrsqrt.pop %v7288
      %v7321 = vrsqrt.pop %v7289
      %v7322 = vrsqrt.pop %v7290
      %v7323 = vrsqrt.pop %v7291
      %v7324 = vrsqrt.pop %v7292
      %v7325 = vrsqrt.pop %v7293
      %v7326 = vrsqrt.pop %v7294
      %v7327 = vrsqrt.pop %v7295
      %v7328 = vrsqrt.pop %v7296
      %v7329 = vrsqrt.pop %v7297
      %v7330 = vrsqrt.pop %v7298
      %v7331 = vrsqrt.pop %v7299
      %v7332 = vrsqrt.pop %v7300
      %v7333 = vrsqrt.pop %v7301
      %v7334 = vrsqrt.pop %v7302
      %v7336 = vsel %vm2153, %v6852, 0
      %v7339 = vsel %vm2153, %v6853, 0
      %v7342 = vsel %vm2153, %v6854, 0
      %v7345 = vsel %vm2153, %v6855, 0
      %v7348 = vsel %vm2153, %v6856, 0
      %v7351 = vsel %vm2153, %v6857, 0
      %v7354 = vsel %vm2153, %v6858, 0
      %v7357 = vsel %vm2153, %v6859, 0
      %v7360 = vsel %vm2153, %v6860, 0
      %v7363 = vsel %vm2153, %v6861, 0
      %v7366 = vsel %vm2153, %v6862, 0
      %v7369 = vsel %vm2153, %v6863, 0
      %v7372 = vsel %vm2153, %v6864, 0
      %v7375 = vsel %vm2153, %v6865, 0
      %v7378 = vsel %vm2153, %v6866, 0
      %v7381 = vsel %vm2153, %v6867, 0
      %v7384 = vsel %vm2153, %v6868, 0
      %v7387 = vsel %vm2153, %v6869, 0
      %v7390 = vsel %vm2153, %v6870, 0
      %v7393 = vsel %vm2153, %v6871, 0
      %v7396 = vsel %vm2153, %v6872, 0
      %v7399 = vsel %vm2153, %v6873, 0
      %v7402 = vsel %vm2153, %v6874, 0
      %v7405 = vsel %vm2153, %v6875, 0
      %v7408 = vsel %vm2153, %v6876, 0
      %v7411 = vsel %vm2153, %v6877, 0
      %v7414 = vsel %vm2153, %v6878, 0
      %v7417 = vsel %vm2153, %v6879, 0
      %v7420 = vsel %vm2153, %v6880, 0
      %v7423 = vsel %vm2153, %v6881, 0
      %v7426 = vsel %vm2153, %v6882, 0
      %v7429 = vsel %vm2153, %v6883, 0
      %7431 = vmatprep.subr.mxu0 0.0
      %7432 = vmatpush1.msra.mxu0 %v6884
      %7433 = vmatprep.subr.mxu0 0.0
      %7434 = vmatpush1.msra.mxu0 0.0
      %7435 = vmatprep.subr.mxu0 0.0
      %7436 = vmatpush1.msra.mxu0 0.0
      %7437 = vmatprep.subr.mxu0 0.0
      %7438 = vmatpush1.msra.mxu0 0.0
      %7439 = vmatprep.subr.mxu0 0.0
      %7440 = vmatpush1.msra.mxu0 0.0
      %7441 = vmatprep.subr.mxu0 0.0
      %7442 = vmatpush1.msra.mxu0 0.0
      %7443 = vmatprep.subr.mxu0 0.0
      %7444 = vmatpush1.msra.mxu0 0.0
      %7445 = vmatprep.subr.mxu0 0.0
      %7446 = vmatpush1.msra.mxu0 0.0
      %7447 = vmatprep.subr.mxu0 0.0
      %7448 = vmatpush1.msra.mxu0 0.0
      %7449 = vmatprep.subr.mxu0 0.0
      %7450 = vmatpush1.msra.mxu0 0.0
      %7451 = vmatprep.subr.mxu0 0.0
      %7452 = vmatpush1.msra.mxu0 0.0
      %7453 = vmatprep.subr.mxu0 0.0
      %7454 = vmatpush1.msra.mxu0 0.0
      %7455 = vmatprep.subr.mxu0 0.0
      %7456 = vmatpush1.msra.mxu0 0.0
      %7457 = vmatprep.subr.mxu0 0.0
      %7458 = vmatpush1.msra.mxu0 0.0
      %7459 = vmatprep.subr.mxu0 0.0
      %7460 = vmatpush1.msra.mxu0 0.0
      %7461 = vmatprep.subr.mxu0 0.0
      %7462 = vmatpush1.msra.mxu0 0.0
      %7463 = vmatprep.subr.mxu0 0.0
      %7464 = vmatpush1.msra.mxu0 0.0
      %7465 = vmatprep.subr.mxu0 0.0
      %7466 = vmatpush1.msra.mxu0 0.0
      %7467 = vmatprep.subr.mxu0 0.0
      %7468 = vmatpush1.msra.mxu0 0.0
      %7469 = vmatprep.subr.mxu0 0.0
      %7470 = vmatpush1.msra.mxu0 0.0
      %7471 = vmatprep.subr.mxu0 0.0
      %7472 = vmatpush1.msra.mxu0 0.0
      %7473 = vmatprep.subr.mxu0 0.0
      %7474 = vmatpush1.msra.mxu0 0.0
      %7475 = vmatprep.subr.mxu0 0.0
      %7476 = vmatpush1.msra.mxu0 0.0
      %7477 = vmatprep.subr.mxu0 0.0
      %7478 = vmatpush1.msra.mxu0 0.0
      %7479 = vmatprep.subr.mxu0 0.0
      %7480 = vmatpush1.msra.mxu0 0.0
      %7481 = vmatprep.subr.mxu0 0.0
      %7482 = vmatpush1.msra.mxu0 0.0
      %7483 = vmatprep.subr.mxu0 0.0
      %7484 = vmatpush1.msra.mxu0 0.0
      %7485 = vmatprep.subr.mxu0 0.0
      %7486 = vmatpush1.msra.mxu0 0.0
      %7487 = vmatprep.subr.mxu0 0.0
      %7488 = vmatpush1.msra.mxu0 0.0
      %7489 = vmatprep.subr.mxu0 0.0
      %7490 = vmatpush1.msra.mxu0 0.0
      %7491 = vmatprep.subr.mxu0 0.0
      %7492 = vmatpush1.msra.mxu0 0.0
      %7493 = vmatprep.subr.mxu0 0.0
      %7494 = vmatpush1.msra.mxu0 0.0
      %7495 = vmatprep.mubr.f32.mxu0 0.0
      %7496 = vmatmul.mubr.f32.gmra.mrb[0].mxu0 %v7336
      %v7497 = vpop.f32.mrb[0].mxu0
      %v7498 = vadd.f32 0.0, %v7497
      %v7499 = vpop.f32.mrb[0].mxu0
      %7500 = vmatprep.mubr.f32.mxu0 0.0
      %7501 = vmatmul.mubr.f32.gmra.mrb[0].mxu0 %v7339
      %v7502 = vpop.f32.mrb[0].mxu0
      %v7503 = vadd.f32 0.0, %v7502
      %v7504 = vpop.f32.mrb[0].mxu0
      %7505 = vmatprep.mubr.f32.mxu0 0.0
      %7506 = vmatmul.mubr.f32.gmra.mrb[0].mxu0 %v7342
      %v7507 = vpop.f32.mrb[0].mxu0
      %v7508 = vadd.f32 0.0, %v7507
      %v7509 = vpop.f32.mrb[0].mxu0
      %7510 = vmatprep.mubr.f32.mxu0 0.0
      %7511 = vmatmul.mubr.f32.gmra.mrb[0].mxu0 %v7345
      %v7512 = vpop.f32.mrb[0].mxu0
      %v7513 = vadd.f32 0.0, %v7512
      %v7514 = vpop.f32.mrb[0].mxu0
      %7515 = vmatprep.mubr.f32.mxu0 0.0
      %7516 = vmatmul.mubr.f32.gmra.mrb[0].mxu0 %v7348
      %v7517 = vpop.f32.mrb[0].mxu0
      %v7518 = vadd.f32 0.0, %v7517
      %v7519 = vpop.f32.mrb[0].mxu0
      %7520 = vmatprep.mubr.f32.mxu0 0.0
      %7521 = vmatmul.mubr.f32.gmra.mrb[0].mxu0 %v7351
      %v7522 = vpop.f32.mrb[0].mxu0
      %v7523 = vadd.f32 0.0, %v7522
      %v7524 = vpop.f32.mrb[0].mxu0
      %7525 = vmatprep.mubr.f32.mxu0 0.0
      %7526 = vmatmul.mubr.f32.gmra.mrb[0].mxu0 %v7354
      %v7527 = vpop.f32.mrb[0].mxu0
      %v7528 = vadd.f32 0.0, %v7527
      %v7529 = vpop.f32.mrb[0].mxu0
      %7530 = vmatprep.mubr.f32.mxu0 0.0
      %7531 = vmatmul.mubr.f32.gmra.mrb[0].mxu0 %v7357
      %v7532 = vpop.f32.mrb[0].mxu0
      %v7533 = vadd.f32 0.0, %v7532
      %v7534 = vpop.f32.mrb[0].mxu0
      %7535 = vmatprep.mubr.f32.mxu0 0.0
      %7536 = vmatmul.mubr.f32.gmra.mrb[0].mxu0 %v7360
      %v7537 = vpop.f32.mrb[0].mxu0
      %v7538 = vadd.f32 0.0, %v7537
      %v7539 = vpop.f32.mrb[0].mxu0
      %7540 = vmatprep.mubr.f32.mxu0 0.0
      %7541 = vmatmul.mubr.f32.gmra.mrb[0].mxu0 %v7363
      %v7542 = vpop.f32.mrb[0].mxu0
      %v7543 = vadd.f32 0.0, %v7542
      %v7544 = vpop.f32.mrb[0].mxu0
      %7545 = vmatprep.mubr.f32.mxu0 0.0
      %7546 = vmatmul.mubr.f32.gmra.mrb[0].mxu0 %v7366
      %v7547 = vpop.f32.mrb[0].mxu0
      %v7548 = vadd.f32 0.0, %v7547
      %v7549 = vpop.f32.mrb[0].mxu0
      %7550 = vmatprep.mubr.f32.mxu0 0.0
      %7551 = vmatmul.mubr.f32.gmra.mrb[0].mxu0 %v7369
      %v7552 = vpop.f32.mrb[0].mxu0
      %v7553 = vadd.f32 0.0, %v7552
      %v7554 = vpop.f32.mrb[0].mxu0
      %7555 = vmatprep.mubr.f32.mxu0 0.0
      %7556 = vmatmul.mubr.f32.gmra.mrb[0].mxu0 %v7372
      %v7557 = vpop.f32.mrb[0].mxu0
      %v7558 = vadd.f32 0.0, %v7557
      %v7559 = vpop.f32.mrb[0].mxu0
      %7560 = vmatprep.mubr.f32.mxu0 0.0
      %7561 = vmatmul.mubr.f32.gmra.mrb[0].mxu0 %v7375
      %v7562 = vpop.f32.mrb[0].mxu0
      %v7563 = vadd.f32 0.0, %v7562
      %v7564 = vpop.f32.mrb[0].mxu0
      %7565 = vmatprep.mubr.f32.mxu0 0.0
      %7566 = vmatmul.mubr.f32.gmra.mrb[0].mxu0 %v7378
      %v7567 = vpop.f32.mrb[0].mxu0
      %v7568 = vadd.f32 0.0, %v7567
      %v7569 = vpop.f32.mrb[0].mxu0
      %7570 = vmatprep.mubr.f32.mxu0 0.0
      %7571 = vmatmul.mubr.f32.gmra.mrb[0].mxu0 %v7381
      %v7572 = vpop.f32.mrb[0].mxu0
      %v7573 = vadd.f32 0.0, %v7572
      %v7574 = vpop.f32.mrb[0].mxu0
      %7575 = vmatprep.mubr.f32.mxu0 0.0
      %7576 = vmatmul.mubr.f32.gmra.mrb[0].mxu0 %v7384
      %v7577 = vpop.f32.mrb[0].mxu0
      %v7578 = vadd.f32 0.0, %v7577
      %v7579 = vpop.f32.mrb[0].mxu0
      %7580 = vmatprep.mubr.f32.mxu0 0.0
      %7581 = vmatmul.mubr.f32.gmra.mrb[0].mxu0 %v7387
      %v7582 = vpop.f32.mrb[0].mxu0
      %v7583 = vadd.f32 0.0, %v7582
      %v7584 = vpop.f32.mrb[0].mxu0
      %7585 = vmatprep.mubr.f32.mxu0 0.0
      %7586 = vmatmul.mubr.f32.gmra.mrb[0].mxu0 %v7390
      %v7587 = vpop.f32.mrb[0].mxu0
      %v7588 = vadd.f32 0.0, %v7587
      %v7589 = vpop.f32.mrb[0].mxu0
      %7590 = vmatprep.mubr.f32.mxu0 0.0
      %7591 = vmatmul.mubr.f32.gmra.mrb[0].mxu0 %v7393
      %v7592 = vpop.f32.mrb[0].mxu0
      %v7593 = vadd.f32 0.0, %v7592
      %v7594 = vpop.f32.mrb[0].mxu0
      %7595 = vmatprep.mubr.f32.mxu0 0.0
      %7596 = vmatmul.mubr.f32.gmra.mrb[0].mxu0 %v7396
      %v7597 = vpop.f32.mrb[0].mxu0
      %v7598 = vadd.f32 0.0, %v7597
      %v7599 = vpop.f32.mrb[0].mxu0
      %7600 = vmatprep.mubr.f32.mxu0 0.0
      %7601 = vmatmul.mubr.f32.gmra.mrb[0].mxu0 %v7399
      %v7602 = vpop.f32.mrb[0].mxu0
      %v7603 = vadd.f32 0.0, %v7602
      %v7604 = vpop.f32.mrb[0].mxu0
      %7605 = vmatprep.mubr.f32.mxu0 0.0
      %7606 = vmatmul.mubr.f32.gmra.mrb[0].mxu0 %v7402
      %v7607 = vpop.f32.mrb[0].mxu0
      %v7608 = vadd.f32 0.0, %v7607
      %v7609 = vpop.f32.mrb[0].mxu0
      %7610 = vmatprep.mubr.f32.mxu0 0.0
      %7611 = vmatmul.mubr.f32.gmra.mrb[0].mxu0 %v7405
      %v7612 = vpop.f32.mrb[0].mxu0
      %v7613 = vadd.f32 0.0, %v7612
      %v7614 = vpop.f32.mrb[0].mxu0
      %7615 = vmatprep.mubr.f32.mxu0 0.0
      %7616 = vmatmul.mubr.f32.gmra.mrb[0].mxu0 %v7408
      %v7617 = vpop.f32.mrb[0].mxu0
      %v7618 = vadd.f32 0.0, %v7617
      %v7619 = vpop.f32.mrb[0].mxu0
      %7620 = vmatprep.mubr.f32.mxu0 0.0
      %7621 = vmatmul.mubr.f32.gmra.mrb[0].mxu0 %v7411
      %v7622 = vpop.f32.mrb[0].mxu0
      %v7623 = vadd.f32 0.0, %v7622
      %v7624 = vpop.f32.mrb[0].mxu0
      %7625 = vmatprep.mubr.f32.mxu0 0.0
      %7626 = vmatmul.mubr.f32.gmra.mrb[0].mxu0 %v7414
      %v7627 = vpop.f32.mrb[0].mxu0
      %v7628 = vadd.f32 0.0, %v7627
      %v7629 = vpop.f32.mrb[0].mxu0
      %7630 = vmatprep.mubr.f32.mxu0 0.0
      %7631 = vmatmul.mubr.f32.gmra.mrb[0].mxu0 %v7417
      %v7632 = vpop.f32.mrb[0].mxu0
      %v7633 = vadd.f32 0.0, %v7632
      %v7634 = vpop.f32.mrb[0].mxu0
      %7635 = vmatprep.mubr.f32.mxu0 0.0
      %7636 = vmatmul.mubr.f32.gmra.mrb[0].mxu0 %v7420
      %v7637 = vpop.f32.mrb[0].mxu0
      %v7638 = vadd.f32 0.0, %v7637
      %v7639 = vpop.f32.mrb[0].mxu0
      %7640 = vmatprep.mubr.f32.mxu0 0.0
      %7641 = vmatmul.mubr.f32.gmra.mrb[0].mxu0 %v7423
      %v7642 = vpop.f32.mrb[0].mxu0
      %v7643 = vadd.f32 0.0, %v7642
      %v7644 = vpop.f32.mrb[0].mxu0
      %7645 = vmatprep.mubr.f32.mxu0 0.0
      %7646 = vmatmul.mubr.f32.gmra.mrb[0].mxu0 %v7426
      %v7647 = vpop.f32.mrb[0].mxu0
      %v7648 = vadd.f32 0.0, %v7647
      %v7649 = vpop.f32.mrb[0].mxu0
      %7650 = vmatprep.mubr.f32.mxu0 0.0
      %7651 = vmatmul.mubr.f32.gmra.mrb[0].mxu0 %v7429
      %v7652 = vpop.f32.mrb[0].mxu0
      %v7653 = vadd.f32 0.0, %v7652
      %v7654 = vpop.f32.mrb[0].mxu0
      %7655 = vdwg.mxu0
      %v7656 = vmul.f32 %v7303, %v7498
      %v7657 = vmul.f32 %v7304, %v7503
      %v7658 = vmul.f32 %v7305, %v7508
      %v7659 = vmul.f32 %v7306, %v7513
      %v7660 = vmul.f32 %v7307, %v7518
      %v7661 = vmul.f32 %v7308, %v7523
      %v7662 = vmul.f32 %v7309, %v7528
      %v7663 = vmul.f32 %v7310, %v7533
      %v7664 = vmul.f32 %v7311, %v7538
      %v7665 = vmul.f32 %v7312, %v7543
      %v7666 = vmul.f32 %v7313, %v7548
      %v7667 = vmul.f32 %v7314, %v7553
      %v7668 = vmul.f32 %v7315, %v7558
      %v7669 = vmul.f32 %v7316, %v7563
      %v7670 = vmul.f32 %v7317, %v7568
      %v7671 = vmul.f32 %v7318, %v7573
      %v7672 = vmul.f32 %v7319, %v7578
      %v7673 = vmul.f32 %v7320, %v7583
      %v7674 = vmul.f32 %v7321, %v7588
      %v7675 = vmul.f32 %v7322, %v7593
      %v7676 = vmul.f32 %v7323, %v7598
      %v7677 = vmul.f32 %v7324, %v7603
      %v7678 = vmul.f32 %v7325, %v7608
      %v7679 = vmul.f32 %v7326, %v7613
      %v7680 = vmul.f32 %v7327, %v7618
      %v7681 = vmul.f32 %v7328, %v7623
      %v7682 = vmul.f32 %v7329, %v7628
      %v7683 = vmul.f32 %v7330, %v7633
      %v7684 = vmul.f32 %v7331, %v7638
      %v7685 = vmul.f32 %v7332, %v7643
      %v7686 = vmul.f32 %v7333, %v7648
      %v7687 = vmul.f32 %v7334, %v7653
      %v7688 = vmul.f32 %v7111, %v7303
      %v7689 = vmul.f32 %v7112, %v7304
      %v7690 = vmul.f32 %v7113, %v7305
      %v7691 = vmul.f32 %v7114, %v7306
      %v7692 = vmul.f32 %v7115, %v7307
      %v7693 = vmul.f32 %v7116, %v7308
      %v7694 = vmul.f32 %v7117, %v7309
      %v7695 = vmul.f32 %v7118, %v7310
      %v7696 = vmul.f32 %v7119, %v7311
      %v7697 = vmul.f32 %v7120, %v7312
      %v7698 = vmul.f32 %v7121, %v7313
      %v7699 = vmul.f32 %v7122, %v7314
      %v7700 = vmul.f32 %v7123, %v7315
      %v7701 = vmul.f32 %v7124, %v7316
      %v7702 = vmul.f32 %v7125, %v7317
      %v7703 = vmul.f32 %v7126, %v7318
      %v7704 = vmul.f32 %v7127, %v7319
      %v7705 = vmul.f32 %v7128, %v7320
      %v7706 = vmul.f32 %v7129, %v7321
      %v7707 = vmul.f32 %v7130, %v7322
      %v7708 = vmul.f32 %v7131, %v7323
      %v7709 = vmul.f32 %v7132, %v7324
      %v7710 = vmul.f32 %v7133, %v7325
      %v7711 = vmul.f32 %v7134, %v7326
      %v7712 = vmul.f32 %v7135, %v7327
      %v7713 = vmul.f32 %v7136, %v7328
      %v7714 = vmul.f32 %v7137, %v7329
      %v7715 = vmul.f32 %v7138, %v7330
      %v7716 = vmul.f32 %v7139, %v7331
      %v7717 = vmul.f32 %v7140, %v7332
      %v7718 = vmul.f32 %v7141, %v7333
      %v7719 = vmul.f32 %v7142, %v7334
      %v7721 = vlaneseq
      %v7722 = vshrl.u32 %v7721, 7
      %v7723 = vsub.s32 0, %v7722
      %v7724 = vrot.slane %v6886, %v7723
      %v7726 = vmul.f32 %v7688, %v7724
      %v7727 = vmul.f32 %v7689, %v7724
      %v7728 = vmul.f32 %v7690, %v7724
      %v7729 = vmul.f32 %v7691, %v7724
      %v7730 = vmul.f32 %v7692, %v7724
      %v7731 = vmul.f32 %v7693, %v7724
      %v7732 = vmul.f32 %v7694, %v7724
      %v7733 = vmul.f32 %v7695, %v7724
      %v7734 = vmul.f32 %v7696, %v7724
      %v7735 = vmul.f32 %v7697, %v7724
      %v7736 = vmul.f32 %v7698, %v7724
      %v7737 = vmul.f32 %v7699, %v7724
      %v7738 = vmul.f32 %v7700, %v7724
      %v7739 = vmul.f32 %v7701, %v7724
      %v7740 = vmul.f32 %v7702, %v7724
      %v7741 = vmul.f32 %v7703, %v7724
      %v7742 = vmul.f32 %v7704, %v7724
      %v7743 = vmul.f32 %v7705, %v7724
      %v7744 = vmul.f32 %v7706, %v7724
      %v7745 = vmul.f32 %v7707, %v7724
      %v7746 = vmul.f32 %v7708, %v7724
      %v7747 = vmul.f32 %v7709, %v7724
      %v7748 = vmul.f32 %v7710, %v7724
      %v7749 = vmul.f32 %v7711, %v7724
      %v7750 = vmul.f32 %v7712, %v7724
      %v7751 = vmul.f32 %v7713, %v7724
      %v7752 = vmul.f32 %v7714, %v7724
      %v7753 = vmul.f32 %v7715, %v7724
      %v7754 = vmul.f32 %v7716, %v7724
      %v7755 = vmul.f32 %v7717, %v7724
      %v7756 = vmul.f32 %v7718, %v7724
      %v7757 = vmul.f32 %v7719, %v7724
      %v7759 = vlaneseq
      %v7760 = vshrl.u32 %v7759, 7
      %v7761 = vsub.s32 0, %v7760
      %v7762 = vrot.slane %v6885, %v7761
      %v7764 = vsub.f32 %v7762, %v7726
      %v7765 = vsub.f32 %v7762, %v7727
      %v7766 = vsub.f32 %v7762, %v7728
      %v7767 = vsub.f32 %v7762, %v7729
      %v7768 = vsub.f32 %v7762, %v7730
      %v7769 = vsub.f32 %v7762, %v7731
      %v7770 = vsub.f32 %v7762, %v7732
      %v7771 = vsub.f32 %v7762, %v7733
      %v7772 = vsub.f32 %v7762, %v7734
      %v7773 = vsub.f32 %v7762, %v7735
      %v7774 = vsub.f32 %v7762, %v7736
      %v7775 = vsub.f32 %v7762, %v7737
      %v7776 = vsub.f32 %v7762, %v7738
      %v7777 = vsub.f32 %v7762, %v7739
      %v7778 = vsub.f32 %v7762, %v7740
      %v7779 = vsub.f32 %v7762, %v7741
      %v7780 = vsub.f32 %v7762, %v7742
      %v7781 = vsub.f32 %v7762, %v7743
      %v7782 = vsub.f32 %v7762, %v7744
      %v7783 = vsub.f32 %v7762, %v7745
      %v7784 = vsub.f32 %v7762, %v7746
      %v7785 = vsub.f32 %v7762, %v7747
      %v7786 = vsub.f32 %v7762, %v7748
      %v7787 = vsub.f32 %v7762, %v7749
      %v7788 = vsub.f32 %v7762, %v7750
      %v7789 = vsub.f32 %v7762, %v7751
      %v7790 = vsub.f32 %v7762, %v7752
      %v7791 = vsub.f32 %v7762, %v7753
      %v7792 = vsub.f32 %v7762, %v7754
      %v7793 = vsub.f32 %v7762, %v7755
      %v7794 = vsub.f32 %v7762, %v7756
      %v7795 = vsub.f32 %v7762, %v7757
      %v7796 = vadd.f32 %v7656, %v7764
      %v7797 = vadd.f32 %v7657, %v7765
      %v7798 = vadd.f32 %v7658, %v7766
      %v7799 = vadd.f32 %v7659, %v7767
      %v7800 = vadd.f32 %v7660, %v7768
      %v7801 = vadd.f32 %v7661, %v7769
      %v7802 = vadd.f32 %v7662, %v7770
      %v7803 = vadd.f32 %v7663, %v7771
      %v7804 = vadd.f32 %v7664, %v7772
      %v7805 = vadd.f32 %v7665, %v7773
      %v7806 = vadd.f32 %v7666, %v7774
      %v7807 = vadd.f32 %v7667, %v7775
      %v7808 = vadd.f32 %v7668, %v7776
      %v7809 = vadd.f32 %v7669, %v7777
      %v7810 = vadd.f32 %v7670, %v7778
      %v7811 = vadd.f32 %v7671, %v7779
      %v7812 = vadd.f32 %v7672, %v7780
      %v7813 = vadd.f32 %v7673, %v7781
      %v7814 = vadd.f32 %v7674, %v7782
      %v7815 = vadd.f32 %v7675, %v7783
      %v7816 = vadd.f32 %v7676, %v7784
      %v7817 = vadd.f32 %v7677, %v7785
      %v7818 = vadd.f32 %v7678, %v7786
      %v7819 = vadd.f32 %v7679, %v7787
      %v7820 = vadd.f32 %v7680, %v7788
      %v7821 = vadd.f32 %v7681, %v7789
      %v7822 = vadd.f32 %v7682, %v7790
      %v7823 = vadd.f32 %v7683, %v7791
      %v7824 = vadd.f32 %v7684, %v7792
      %v7825 = vadd.f32 %v7685, %v7793
      %v7826 = vadd.f32 %v7686, %v7794
      %v7827 = vadd.f32 %v7687, %v7795
      %v7876 = vrot.slane %v363, 1
      %v7877 = vrot.slane %v364, 1
      %v7878 = vsel %vm2586, %v7876, %v7877
      %v7879 = vrot.slane %v365, 1
      %v7880 = vsel %vm2586, %v7877, %v7879
      %v7881 = vrot.slane %v366, 1
      %v7882 = vrot.slane %v367, 1
      %v7883 = vsel %vm2586, %v7881, %v7882
      %v7884 = vrot.slane %v368, 1
      %v7885 = vsel %vm2586, %v7882, %v7884
      %v7886 = vrot.slane %v369, 1
      %v7887 = vrot.slane %v370, 1
      %v7888 = vsel %vm2586, %v7886, %v7887
      %v7889 = vrot.slane %v371, 1
      %v7890 = vsel %vm2586, %v7887, %v7889
      %v7891 = vrot.slane %v372, 1
      %v7892 = vrot.slane %v373, 1
      %v7893 = vsel %vm2586, %v7891, %v7892
      %v7894 = vrot.slane %v374, 1
      %v7895 = vsel %vm2586, %v7892, %v7894
      %v7896 = vrot.slane %v375, 1
      %v7897 = vrot.slane %v376, 1
      %v7898 = vsel %vm2586, %v7896, %v7897
      %v7899 = vrot.slane %v377, 1
      %v7900 = vsel %vm2586, %v7897, %v7899
      %v7901 = vrot.slane %v378, 1
      %v7902 = vrot.slane %v379, 1
      %v7903 = vsel %vm2586, %v7901, %v7902
      %v7904 = vrot.slane %v380, 1
      %v7905 = vsel %vm2586, %v7902, %v7904
      %v7906 = vrot.slane %v381, 1
      %v7907 = vrot.slane %v382, 1
      %v7908 = vsel %vm2586, %v7906, %v7907
      %v7909 = vrot.slane %v383, 1
      %v7910 = vsel %vm2586, %v7907, %v7909
      %v7911 = vrot.slane %v384, 1
      %v7912 = vrot.slane %v385, 1
      %v7913 = vsel %vm2586, %v7911, %v7912
      %v7914 = vrot.slane %v386, 1
      %v7915 = vsel %vm2586, %v7912, %v7914
      %v7916 = vrot.slane %v387, 1
      %v7917 = vrot.slane %v388, 1
      %v7918 = vsel %vm2586, %v7916, %v7917
      %v7919 = vrot.slane %v389, 1
      %v7920 = vsel %vm2586, %v7917, %v7919
      %v7921 = vrot.slane %v390, 1
      %v7922 = vrot.slane %v391, 1
      %v7923 = vsel %vm2586, %v7921, %v7922
      %v7924 = vrot.slane %v392, 1
      %v7925 = vsel %vm2586, %v7922, %v7924
      %v7926 = vrot.slane %v393, 1
      %v7927 = vrot.slane %v394, 1
      %v7928 = vsel %vm2586, %v7926, %v7927
      %v7929 = vrot.slane %v395, 1
      %v7930 = vsel %vm2586, %v7927, %v7929
      %v7931 = vrot.slane %v396, 1
      %v7932 = vrot.slane %v397, 1
      %v7933 = vsel %vm2586, %v7931, %v7932
      %v7934 = vrot.slane %v398, 1
      %v7935 = vsel %vm2586, %v7932, %v7934
      %v7936 = vrot.slane %v399, 1
      %v7937 = vrot.slane %v400, 1
      %v7938 = vsel %vm2586, %v7936, %v7937
      %v7939 = vrot.slane %v401, 1
      %v7940 = vsel %vm2586, %v7937, %v7939
      %v7941 = vrot.slane %v402, 1
      %v7942 = vrot.slane %v403, 1
      %v7943 = vsel %vm2586, %v7941, %v7942
      %v7944 = vrot.slane %v404, 1
      %v7945 = vsel %vm2586, %v7942, %v7944
      %v7946 = vrot.slane %v405, 1
      %v7947 = vrot.slane %v406, 1
      %v7948 = vsel %vm2586, %v7946, %v7947
      %v7949 = vrot.slane %v407, 1
      %v7950 = vsel %vm2586, %v7947, %v7949
      %v7951 = vrot.slane %v408, 1
      %v7952 = vrot.slane %v409, 1
      %v7953 = vsel %vm2586, %v7951, %v7952
      %v7954 = vrot.slane %v410, 1
      %v7955 = vsel %vm2586, %v7952, %v7954
      %v7988 = vadd.f32 %v7796, %v7878
      %v7989 = vadd.f32 %v7797, %v7880
      %v7990 = vadd.f32 %v7798, %v7883
      %v7991 = vadd.f32 %v7799, %v7885
      %v7992 = vadd.f32 %v7800, %v7888
      %v7993 = vadd.f32 %v7801, %v7890
      %v7994 = vadd.f32 %v7802, %v7893
      %v7995 = vadd.f32 %v7803, %v7895
      %v7996 = vadd.f32 %v7804, %v7898
      %v7997 = vadd.f32 %v7805, %v7900
      %v7998 = vadd.f32 %v7806, %v7903
      %v7999 = vadd.f32 %v7807, %v7905
      %v8000 = vadd.f32 %v7808, %v7908
      %v8001 = vadd.f32 %v7809, %v7910
      %v8002 = vadd.f32 %v7810, %v7913
      %v8003 = vadd.f32 %v7811, %v7915
      %v8004 = vadd.f32 %v7812, %v7918
      %v8005 = vadd.f32 %v7813, %v7920
      %v8006 = vadd.f32 %v7814, %v7923
      %v8007 = vadd.f32 %v7815, %v7925
      %v8008 = vadd.f32 %v7816, %v7928
      %v8009 = vadd.f32 %v7817, %v7930
      %v8010 = vadd.f32 %v7818, %v7933
      %v8011 = vadd.f32 %v7819, %v7935
      %v8012 = vadd.f32 %v7820, %v7938
      %v8013 = vadd.f32 %v7821, %v7940
      %v8014 = vadd.f32 %v7822, %v7943
      %v8015 = vadd.f32 %v7823, %v7945
      %v8016 = vadd.f32 %v7824, %v7948
      %v8017 = vadd.f32 %v7825, %v7950
      %v8018 = vadd.f32 %v7826, %v7953
      %v8019 = vadd.f32 %v7827, %v7955
      %8020 = vst.msk [vmem:[%s359] sm:$0xff] %vm471, %v7988
      %8021 = vst.msk [vmem:[%s359 + $0x8] sm:$0xff] %vm471, %v7989
      %8022 = vst.msk [vmem:[%s359 + $0x10] sm:$0xff] %vm471, %v7990
      %8023 = vst.msk [vmem:[%s359 + $0x18] sm:$0xff] %vm471, %v7991
      %8024 = vst.msk [vmem:[%s359 + $0x20] sm:$0xff] %vm471, %v7992
      %8025 = vst.msk [vmem:[%s359 + $0x28] sm:$0xff] %vm471, %v7993
      %8026 = vst.msk [vmem:[%s359 + $0x30] sm:$0xff] %vm471, %v7994
      %8027 = vst.msk [vmem:[%s359 + $0x38] sm:$0xff] %vm471, %v7995
      %8028 = vst.msk [vmem:[%s359 + $0x40] sm:$0xff] %vm471, %v7996
      %8029 = vst.msk [vmem:[%s359 + $0x48] sm:$0xff] %vm471, %v7997
      %8030 = vst.msk [vmem:[%s359 + $0x50] sm:$0xff] %vm471, %v7998
      %8031 = vst.msk [vmem:[%s359 + $0x58] sm:$0xff] %vm471, %v7999
      %8032 = vst.msk [vmem:[%s359 + $0x60] sm:$0xff] %vm471, %v8000
      %8033 = vst.msk [vmem:[%s359 + $0x68] sm:$0xff] %vm471, %v8001
      %8034 = vst.msk [vmem:[%s359 + $0x70] sm:$0xff] %vm471, %v8002
      %8035 = vst.msk [vmem:[%s359 + $0x78] sm:$0xff] %vm471, %v8003
      %8036 = vst.msk [vmem:[%s359 + $0x80] sm:$0xff] %vm471, %v8004
      %8037 = vst.msk [vmem:[%s359 + $0x88] sm:$0xff] %vm471, %v8005
      %8038 = vst.msk [vmem:[%s359 + $0x90] sm:$0xff] %vm471, %v8006
      %8039 = vst.msk [vmem:[%s359 + $0x98] sm:$0xff] %vm471, %v8007
      %8040 = vst.msk [vmem:[%s359 + $0xa0] sm:$0xff] %vm471, %v8008
      %8041 = vst.msk [vmem:[%s359 + $0xa8] sm:$0xff] %vm471, %v8009
      %8042 = vst.msk [vmem:[%s359 + $0xb0] sm:$0xff] %vm471, %v8010
      %8043 = vst.msk [vmem:[%s359 + $0xb8] sm:$0xff] %vm471, %v8011
      %8044 = vst.msk [vmem:[%s359 + $0xc0] sm:$0xff] %vm471, %v8012
      %8045 = vst.msk [vmem:[%s359 + $0xc8] sm:$0xff] %vm471, %v8013
      %8046 = vst.msk [vmem:[%s359 + $0xd0] sm:$0xff] %vm471, %v8014
      %8047 = vst.msk [vmem:[%s359 + $0xd8] sm:$0xff] %vm471, %v8015
      %8048 = vst.msk [vmem:[%s359 + $0xe0] sm:$0xff] %vm471, %v8016
      %8049 = vst.msk [vmem:[%s359 + $0xe8] sm:$0xff] %vm471, %v8017
      %8050 = vst.msk [vmem:[%s359 + $0xf0] sm:$0xff] %vm471, %v8018
      %8051 = vst.msk [vmem:[%s359 + $0xf8] sm:$0xff] %vm471, %v8019
      %p8052 = scmp.lt.s32.totalorder %s21, 1
      %s8053 = scalar_select %p8052, %s21, 1
      %s8054 = smul.addr %s8053, 32
      %s8055 = smul.addr %s8054, 8
      %s8056 = scalar_lea.vmem %s10, %s8055
      // Predicated region
      $region61: #{residual_bottleneck_kn1x1.1} parent=59 // pred_check
        %p8057 = pneg %p254
      $region62: #{residual_bottleneck_kn1x1.1} parent=59 // pred_check_branch
        %8059 = sbr.rel (%p8057) target = $region64
      $region63: #{residual_bottleneck_kn1x1.1} parent=59 // pred_region
        _
      $region64: #{residual_bottleneck_kn1x1.1} parent=59 // pred_fallthru
        _
    $region60: #{residual_bottleneck_kn1x1.1} parent=5 // pred_fallthru
      _
    %p8060 = scmp.le.s32.totalorder 2, %s16
    // Predicated region
    $region65: #{residual_bottleneck_kn1x1.1} parent=5 // pred_check
      %p8061 = pneg %p8060
    $region66: #{residual_bottleneck_kn1x1.1} parent=5 // pred_check_branch
      %8063 = sbr.rel (%p8061) target = $region68
    $region67: #{residual_bottleneck_kn1x1.1} parent=5 // pred_region
      %s8064 = ssub.s32 %s16, 2
      // Predicated region
      $region69: #{residual_bottleneck_kn1x1.1} parent=67 // pred_check
        %p8065 = pneg %p260
      $region70: #{residual_bottleneck_kn1x1.1} parent=67 // pred_check_branch
        %8067 = sbr.rel (%p8065) target = $region72
      $region71: #{residual_bottleneck_kn1x1.1} parent=67 // pred_region
        %p8068 = scmp.lt.s32.totalorder %s22, 1
        %s8069 = scalar_select %p8068, %s22, 1
        %s8070 = smul.addr %s8069, 32
        %s8071 = smul.addr %s8070, 8
        %s8072 = scalar_lea.vmem %s10, %s8071
      $region72: #{residual_bottleneck_kn1x1.1} parent=67 // pred_fallthru
        _
    $region68: #{residual_bottleneck_kn1x1.1} parent=5 // pred_fallthru
      _
  $region6: #{residual_bottleneck_kn1x1.1} parent=0 // loop_footer
    %s20 = sadd.s32 1, %s16
  $region7: #{residual_bottleneck_kn1x1.1} parent=0 // loop_footer_branch
    %15 = sbr.rel target = $region3
  $region8: #{residual_bottleneck_kn1x1.1} parent=0 // loop_exit
    _

</llo_original>
